<compile_context>
chip_gen: v7x
topology: tpu7x:2x2x1
jax: 0.10.0
libtpu: 0.0.40
codegen_flags: <defaults>
</compile_context>

<pallas_src>
import jax
import jax.numpy as jnp
from jax.experimental import pallas as pl
from jax.experimental.pallas import tpu as pltpu


def aux_head_kernel(x_ref, w1_ref, b1_ref, w2_ref, b2_ref, wc_ref, bc_ref, out_ref):
    # x_ref: (TILE_N, C*64) f32 — flattened NCHW activations.
    # NOTE: rows past the true batch in the last partial block carry undefined data;
    # this is safe because every op below is row-independent and the output write of
    # out-of-range rows is masked by the pipeline. Do NOT add batch-wise reductions.
    x = jnp.maximum(x_ref[...], 0.0).astype(jnp.bfloat16)               # ReLU + bf16 cast
    # Fused AvgPool(5, s=3) + Conv2d(C,128,1) + BN1 scale (folded into weight):
    # one bf16 matmul, K = 64*C, f32 accumulation.
    y = jnp.dot(x, w1_ref[...], preferred_element_type=jnp.float32)     # (TN, 512)
    y = jnp.maximum(y + b1_ref[...], 0.0).astype(jnp.bfloat16)          # BN1 shift + ReLU
    # Conv2d(128,768,2) on the 2x2 map + BN2 scale folded: (TN,512)@(512,768), no reshape.
    z = jnp.dot(y, w2_ref[...], preferred_element_type=jnp.float32)     # (TN, 768)
    z = jnp.maximum(z + b2_ref[...], 0.0).astype(jnp.bfloat16)          # BN2 shift + ReLU
    # Linear(768, num_classes) padded to a lane-dense 128-multiple output.
    out_ref[...] = (jnp.dot(z, wc_ref[...], preferred_element_type=jnp.float32)
                    + bc_ref[...])


def _round_up(x, m):
    return ((x + m - 1) // m) * m


def _plan_tiles(n, c, padded_classes):
    """Rows per grid step + explicit VMEM limit, budgeted against total VMEM use.

    Counts: single-buffered bf16 weights + f32 biases, double-buffered f32
    input/output tiles, and the in-kernel elementwise temps (bf16 relu'd x,
    f32+bf16 y, f32+bf16 z, f32 classifier accumulator).
    """
    k = c * 64
    weight_bytes = 2 * (k * 512 + 512 * 768 + 768 * padded_classes) \
                   + 4 * (512 + 768 + padded_classes)
    per_row = 2 * k * 4 + 2 * padded_classes * 4                     # pipelined buffers
    per_row += k * 2 + 512 * (4 + 2) + 768 * (4 + 2) + padded_classes * 4  # temps

    budget = 28 * 1024 * 1024        # safe across v5e/v6e/v7x with an explicit limit
    avail = max(budget - weight_bytes - (1 << 20), per_row)
    tile_n = max(8, min(1024, avail // per_row))
    tile_n = (tile_n // 8) * 8
    # Megacore: force >= 2 grid steps for medium/large batches so
    # dimension_semantics=("parallel",) can shard across v7x's 2 TensorCores.
    if n >= 16:
        tile_n = min(tile_n, _round_up(pl.cdiv(n, 2), 8))
    tile_n = max(1, min(tile_n, n))

    vmem_needed = weight_bytes + tile_n * per_row + (4 << 20)
    vmem_limit = int(min(max(vmem_needed, 20 << 20), 56 << 20))
    return tile_n, vmem_limit


def auxiliary_head(x_nchw, params, num_classes):
    """x_nchw: (N, C, 8, 8) float32, PyTorch layout. Returns (N, num_classes)."""
    (w1f, b1, w2f, b2, wc, bc) = params
    n, c, h, w = x_nchw.shape
    assert (h, w) == (8, 8), "AuxiliaryHead assumes 8x8 spatial input"
    k = c * 64
    assert w1f.shape == (k, 512), "folded pool+conv1 weight/channel mismatch"
    padded_classes = wc.shape[1]

    x_flat = x_nchw.reshape(n, k)      # contiguous reshape: no transpose, no copy pass

    tile_n, vmem_limit = _plan_tiles(n, c, padded_classes)
    grid = (pl.cdiv(n, tile_n),)

    cost = pl.CostEstimate(
        flops=2 * n * (k * 512 + 512 * 768 + 768 * padded_classes),
        transcendentals=0,
        bytes_accessed=int(x_flat.size * 4 + (w1f.size + w2f.size + wc.size) * 2
                           + (b1.size + b2.size + bc.size) * 4
                           + n * padded_classes * 4),
    )

    def build(weight_pipeline_mode):
        def resident(arr):   # weights: constant block index -> stay resident in VMEM
            return pl.BlockSpec(arr.shape, lambda i: (0, 0),
                                pipeline_mode=weight_pipeline_mode)
        return pl.pallas_call(
            aux_head_kernel,
            out_shape=jax.ShapeDtypeStruct((n, padded_classes), jnp.float32),
            grid=grid,
            in_specs=[
                pl.BlockSpec((tile_n, k), lambda i: (i, 0)),
                resident(w1f), resident(b1),
                resident(w2f), resident(b2),
                resident(wc), resident(bc),
            ],
            out_specs=pl.BlockSpec((tile_n, padded_classes), lambda i: (i, 0)),
            compiler_params=pltpu.CompilerParams(
                dimension_semantics=("parallel",),
                vmem_limit_bytes=vmem_limit),
            cost_estimate=cost,
        )

    # Weights never change block index -> single-buffer them (halves resident VMEM).
    # Fall back to default double buffering if this JAX build rejects pipeline_mode.
    try:
        out = build(pl.Buffered(1))(x_flat, w1f, b1, w2f, b2, wc, bc)
    except Exception:
        out = build(None)(x_flat, w1f, b1, w2f, b2, wc, bc)
    return out[:, :num_classes]


# ----------------------------- parameter packing -----------------------------

def fold_bn(gamma, beta, mean, var, eps=1e-5):
    scale = gamma / jnp.sqrt(var + eps)
    return scale, beta - mean * scale


def make_torch_params(key, C, num_classes):
    """Random parameters in PyTorch layouts (used by both the kernel and the ref)."""
    ks = jax.random.split(key, 12)
    p = {}
    p["w1"] = jax.random.normal(ks[0], (128, C, 1, 1), jnp.float32) * 0.1
    p["bn1"] = (1.0 + 0.1 * jax.random.normal(ks[1], (128,), jnp.float32),
                0.1 * jax.random.normal(ks[2], (128,), jnp.float32),
                0.1 * jax.random.normal(ks[3], (128,), jnp.float32),
                jnp.abs(jax.random.normal(ks[4], (128,), jnp.float32)) + 0.5)
    p["w2"] = jax.random.normal(ks[5], (768, 128, 2, 2), jnp.float32) * 0.05
    p["bn2"] = (1.0 + 0.1 * jax.random.normal(ks[6], (768,), jnp.float32),
                0.1 * jax.random.normal(ks[7], (768,), jnp.float32),
                0.1 * jax.random.normal(ks[8], (768,), jnp.float32),
                jnp.abs(jax.random.normal(ks[9], (768,), jnp.float32)) + 0.5)
    p["wc"] = jax.random.normal(ks[10], (num_classes, 768), jnp.float32) * 0.05
    p["bc"] = 0.1 * jax.random.normal(ks[11], (num_classes,), jnp.float32)
    return p


def pack_kernel_params(tp, C, num_classes):
    """Host-side, one-time transform of torch-layout params into kernel operands.

    BN scales are folded into the matmul weights (only the shifts remain as bias
    adds) and the weights are stored in bf16 (native MXU rate, half the DMA and
    VMEM); accumulation stays f32 inside the kernel.
    """
    # (64, 4)/25 pooling matrix: output position p = (oh, ow) row-major covers input
    # rows oh*3..oh*3+4, cols ow*3..ow*3+4 (all windows fully inside 8x8, so
    # count_include_pad is irrelevant: the divisor is always 25).
    P = jnp.zeros((8, 8, 4), jnp.float32)
    for p_idx, (i0, j0) in enumerate([(0, 0), (0, 3), (3, 0), (3, 3)]):
        P = P.at[i0:i0 + 5, j0:j0 + 5, p_idx].set(1.0 / 25.0)
    P = P.reshape(64, 4)

    w1 = jnp.transpose(tp["w1"][:, :, 0, 0], (1, 0))                 # (C, 128)
    # Folded pool + conv1 weight: W[(c, k), (p, oc)] = P[k, p] * w1[c, oc].
    # TODO(synk): for C > ~96 keep the pool as a separate (64, 4) matmul (or stream
    # w1f over a K-reduction grid axis with an f32 accumulator) instead of folding —
    # the folded weight is 64*C*512 elements and would crowd v7x's 64 MiB VMEM.
    w1f = jnp.einsum("kp,co->ckpo", P, w1).reshape(C * 64, 4 * 128)  # (64C, 512)

    s1, b1 = fold_bn(*tp["bn1"])
    s1 = jnp.tile(s1, 4)              # per-oc scale broadcast over the 4 pooled positions
    b1 = jnp.tile(b1, 4).reshape(1, 512)
    w1f = (w1f * s1[None, :]).astype(jnp.bfloat16)    # fold BN1 scale into the weight

    # Conv2d(128, 768, 2): (768, 128, 2, 2) -> (kh, kw, ic, oc) flat = (512, 768),
    # matching the (p = kh*2 + kw, ic) column ordering of the stage-1 output.
    w2f = jnp.transpose(tp["w2"], (2, 3, 1, 0)).reshape(4 * 128, 768)
    s2, b2 = fold_bn(*tp["bn2"])
    w2f = (w2f * s2[None, :]).astype(jnp.bfloat16)    # fold BN2 scale into the weight
    b2 = b2.reshape(1, 768)

    # Classifier zero-padded to a lane-dense width (multiple of 128), bf16.
    padded = ((num_classes + 127) // 128) * 128
    wc = jnp.zeros((768, padded), jnp.float32).at[:, :num_classes].set(tp["wc"].T)
    wc = wc.astype(jnp.bfloat16)
    bc = jnp.zeros((1, padded), jnp.float32).at[0, :num_classes].set(tp["bc"])

    return (w1f, b1, w2f, b2, wc, bc)


# ------------------------------- pure-JAX ref --------------------------------

def auxiliary_head_ref(x_nchw, tp, eps=1e-5):
    """Eval-mode re-implementation of the PyTorch module (NCHW, unfolded, f32)."""
    x = jnp.maximum(x_nchw, 0.0)
    # AvgPool2d(5, stride=3, padding=0): 8x8 -> 2x2, all windows fully inside.
    pooled = jnp.stack([
        jnp.stack([jnp.mean(x[:, :, oh * 3:oh * 3 + 5, ow * 3:ow * 3 + 5],
                            axis=(2, 3)) for ow in range(2)], axis=-1)
        for oh in range(2)], axis=-2)                                   # (N, C, 2, 2)
    y = jnp.einsum("ocij,nchw->nohw", tp["w1"], pooled)                 # 1x1 conv
    g1, be1, m1, v1 = tp["bn1"]
    y = ((y - m1[None, :, None, None]) / jnp.sqrt(v1[None, :, None, None] + eps)
         * g1[None, :, None, None] + be1[None, :, None, None])
    y = jnp.maximum(y, 0.0)
    z = jnp.einsum("oikl,nikl->no", tp["w2"], y)                        # 2x2 conv -> 1x1
    g2, be2, m2, v2 = tp["bn2"]
    z = (z - m2) / jnp.sqrt(v2 + eps) * g2 + be2
    z = jnp.maximum(z, 0.0)
    return z @ tp["wc"].T + tp["bc"]


if __name__ == "__main__":
    key = jax.random.PRNGKey(0)
    k_x, k_p = jax.random.split(key)

    N, C, H, W = 2, 16, 8, 8          # module assumes 8x8 spatial input
    num_classes = 10

    x = jax.random.normal(k_x, (N, C, H, W), jnp.float32)
    tp = make_torch_params(k_p, C, num_classes)
    params = pack_kernel_params(tp, C, num_classes)

    out = auxiliary_head(x, params, num_classes)
    out = jax.block_until_ready(out)

    ref = auxiliary_head_ref(x, tp)
    assert out.shape == (N, num_classes)
    # bf16 matmul operands (f32 accumulation): compare at bf16-appropriate tolerance.
    err = float(jnp.max(jnp.abs(out - ref)))
    scale = float(jnp.max(jnp.abs(ref)))
    assert err <= 2e-2 * scale + 2e-2, f"mismatch vs reference: err={err} scale={scale}"

    print("KERNEL_OK")
</pallas_src>

<mosaic_0001>
module attributes {stable_mosaic.version = 11 : i64} {
  func.func @aux_head_kernel(%arg0: i32, %arg1: memref<2x1024xf32, #tpu.memory_space<vmem>>, %arg2: memref<1024x512xbf16, #tpu.memory_space<vmem>>, %arg3: memref<1x512xf32, #tpu.memory_space<vmem>>, %arg4: memref<512x768xbf16, #tpu.memory_space<vmem>>, %arg5: memref<1x768xf32, #tpu.memory_space<vmem>>, %arg6: memref<768x128xbf16, #tpu.memory_space<vmem>>, %arg7: memref<1x128xf32, #tpu.memory_space<vmem>>, %arg8: memref<2x128xf32, #tpu.memory_space<vmem>>) attributes {dimension_semantics = [#tpu.dimension_semantics<parallel>], iteration_bounds = array<i64: 1>, scalar_prefetch = 0 : i64, scratch_operands = 0 : i64, tpu.core_type = #tpu.core_type<tc>, window_params = [{transform_indices = @transform_0, window_bounds = array<i64: 2, 1024>}, {pipeline_mode = #tpu.pipeline_mode<synchronous>, transform_indices = @transform_1, window_bounds = array<i64: 1024, 512>}, {pipeline_mode = #tpu.pipeline_mode<synchronous>, transform_indices = @transform_2, window_bounds = array<i64: 1, 512>}, {pipeline_mode = #tpu.pipeline_mode<synchronous>, transform_indices = @transform_3, window_bounds = array<i64: 512, 768>}, {pipeline_mode = #tpu.pipeline_mode<synchronous>, transform_indices = @transform_4, window_bounds = array<i64: 1, 768>}, {pipeline_mode = #tpu.pipeline_mode<synchronous>, transform_indices = @transform_5, window_bounds = array<i64: 768, 128>}, {pipeline_mode = #tpu.pipeline_mode<synchronous>, transform_indices = @transform_6, window_bounds = array<i64: 1, 128>}, {transform_indices = @transform_7, window_bounds = array<i64: 2, 128>}]} {
    %c0 = arith.constant 0 : index
    %c0_0 = arith.constant 0 : index
    %0 = vector.load %arg1[%c0, %c0_0] : memref<2x1024xf32, #tpu.memory_space<vmem>>, vector<2x1024xf32>
    %cst = arith.constant 0.000000e+00 : f32
    %1 = vector.broadcast %cst : f32 to vector<2x1024xf32>
    %2 = arith.maximumf %0, %1 : vector<2x1024xf32>
    %3 = arith.truncf %2 : vector<2x1024xf32> to vector<2x1024xbf16>
    %c0_1 = arith.constant 0 : index
    %c0_2 = arith.constant 0 : index
    %4 = vector.load %arg2[%c0_1, %c0_2] : memref<1024x512xbf16, #tpu.memory_space<vmem>>, vector<1024x512xbf16>
    %cst_3 = arith.constant dense<0.000000e+00> : vector<2x512xf32>
    %5 = tpu.matmul %3, %4, %cst_3 {dimension_numbers = #tpu.dot_dimension_numbers<[1], [0], [0], [1], [0, 0, 1, 1], [], []>} : vector<2x1024xbf16>, vector<1024x512xbf16>, vector<2x512xf32> -> vector<2x512xf32>
    %c0_4 = arith.constant 0 : index
    %c0_5 = arith.constant 0 : index
    %6 = vector.load %arg3[%c0_4, %c0_5] : memref<1x512xf32, #tpu.memory_space<vmem>>, vector<1x512xf32>
    %7 = vector.broadcast %6 : vector<1x512xf32> to vector<2x512xf32>
    %8 = arith.addf %5, %7 : vector<2x512xf32>
    %cst_6 = arith.constant 0.000000e+00 : f32
    %9 = vector.broadcast %cst_6 : f32 to vector<2x512xf32>
    %10 = arith.maximumf %8, %9 : vector<2x512xf32>
    %11 = arith.truncf %10 : vector<2x512xf32> to vector<2x512xbf16>
    %c0_7 = arith.constant 0 : index
    %c0_8 = arith.constant 0 : index
    %12 = vector.load %arg4[%c0_7, %c0_8] : memref<512x768xbf16, #tpu.memory_space<vmem>>, vector<512x768xbf16>
    %cst_9 = arith.constant dense<0.000000e+00> : vector<2x768xf32>
    %13 = tpu.matmul %11, %12, %cst_9 {dimension_numbers = #tpu.dot_dimension_numbers<[1], [0], [0], [1], [0, 0, 1, 1], [], []>} : vector<2x512xbf16>, vector<512x768xbf16>, vector<2x768xf32> -> vector<2x768xf32>
    %c0_10 = arith.constant 0 : index
    %c0_11 = arith.constant 0 : index
    %14 = vector.load %arg5[%c0_10, %c0_11] : memref<1x768xf32, #tpu.memory_space<vmem>>, vector<1x768xf32>
    %15 = vector.broadcast %14 : vector<1x768xf32> to vector<2x768xf32>
    %16 = arith.addf %13, %15 : vector<2x768xf32>
    %cst_12 = arith.constant 0.000000e+00 : f32
    %17 = vector.broadcast %cst_12 : f32 to vector<2x768xf32>
    %18 = arith.maximumf %16, %17 : vector<2x768xf32>
    %19 = arith.truncf %18 : vector<2x768xf32> to vector<2x768xbf16>
    %c0_13 = arith.constant 0 : index
    %c0_14 = arith.constant 0 : index
    %20 = vector.load %arg6[%c0_13, %c0_14] : memref<768x128xbf16, #tpu.memory_space<vmem>>, vector<768x128xbf16>
    %cst_15 = arith.constant dense<0.000000e+00> : vector<2x128xf32>
    %21 = tpu.matmul %19, %20, %cst_15 {dimension_numbers = #tpu.dot_dimension_numbers<[1], [0], [0], [1], [0, 0, 1, 1], [], []>} : vector<2x768xbf16>, vector<768x128xbf16>, vector<2x128xf32> -> vector<2x128xf32>
    %c0_16 = arith.constant 0 : index
    %c0_17 = arith.constant 0 : index
    %22 = vector.load %arg7[%c0_16, %c0_17] : memref<1x128xf32, #tpu.memory_space<vmem>>, vector<1x128xf32>
    %23 = vector.broadcast %22 : vector<1x128xf32> to vector<2x128xf32>
    %24 = arith.addf %21, %23 : vector<2x128xf32>
    %c0_18 = arith.constant 0 : index
    %c0_19 = arith.constant 0 : index
    %25 = vector.load %arg8[%c0_18, %c0_19] : memref<2x128xf32, #tpu.memory_space<vmem>>, vector<2x128xf32>
    tpu.vector_store %arg8[%c0_18, %c0_19], %24 {strides = array<i32>} : memref<2x128xf32, #tpu.memory_space<vmem>>, vector<2x128xf32>,
    return
  }
  func.func @transform_0(%arg0: i32) -> (i32, i32) {
    %c0_i32 = arith.constant 0 : i32
    %c0_i32_0 = arith.constant 0 : i32
    return %arg0, %c0_i32 : i32, i32
  }
  func.func @transform_1(%arg0: i32) -> (i32, i32) {
    %c0_i32 = arith.constant 0 : i32
    %c0_i32_0 = arith.constant 0 : i32
    %c0_i32_1 = arith.constant 0 : i32
    return %c0_i32, %c0_i32_0 : i32, i32
  }
  func.func @transform_2(%arg0: i32) -> (i32, i32) {
    %c0_i32 = arith.constant 0 : i32
    %c0_i32_0 = arith.constant 0 : i32
    %c0_i32_1 = arith.constant 0 : i32
    return %c0_i32, %c0_i32_0 : i32, i32
  }
  func.func @transform_3(%arg0: i32) -> (i32, i32) {
    %c0_i32 = arith.constant 0 : i32
    %c0_i32_0 = arith.constant 0 : i32
    %c0_i32_1 = arith.constant 0 : i32
    return %c0_i32, %c0_i32_0 : i32, i32
  }
  func.func @transform_4(%arg0: i32) -> (i32, i32) {
    %c0_i32 = arith.constant 0 : i32
    %c0_i32_0 = arith.constant 0 : i32
    %c0_i32_1 = arith.constant 0 : i32
    return %c0_i32, %c0_i32_0 : i32, i32
  }
  func.func @transform_5(%arg0: i32) -> (i32, i32) {
    %c0_i32 = arith.constant 0 : i32
    %c0_i32_0 = arith.constant 0 : i32
    %c0_i32_1 = arith.constant 0 : i32
    return %c0_i32, %c0_i32_0 : i32, i32
  }
  func.func @transform_6(%arg0: i32) -> (i32, i32) {
    %c0_i32 = arith.constant 0 : i32
    %c0_i32_0 = arith.constant 0 : i32
    %c0_i32_1 = arith.constant 0 : i32
    return %c0_i32, %c0_i32_0 : i32, i32
  }
  func.func @transform_7(%arg0: i32) -> (i32, i32) {
    %c0_i32 = arith.constant 0 : i32
    %c0_i32_0 = arith.constant 0 : i32
    return %arg0, %c0_i32 : i32, i32
  }
}

module attributes {stable_mosaic.version = 11 : i64} {
  func.func @aux_head_kernel(%arg0: i32, %arg1: memref<2x1024xf32, #tpu.memory_space<vmem>>, %arg2: memref<1024x512xbf16, #tpu.memory_space<vmem>>, %arg3: memref<1x512xf32, #tpu.memory_space<vmem>>, %arg4: memref<512x768xbf16, #tpu.memory_space<vmem>>, %arg5: memref<1x768xf32, #tpu.memory_space<vmem>>, %arg6: memref<768x128xbf16, #tpu.memory_space<vmem>>, %arg7: memref<1x128xf32, #tpu.memory_space<vmem>>, %arg8: memref<2x128xf32, #tpu.memory_space<vmem>>) attributes {dimension_semantics = [#tpu.dimension_semantics<parallel>], iteration_bounds = array<i64: 1>, scalar_prefetch = 0 : i64, scratch_operands = 0 : i64, tpu.core_type = #tpu.core_type<tc>, window_params = [{transform_indices = @transform_0, window_bounds = array<i64: 2, 1024>}, {pipeline_mode = #tpu.pipeline_mode<synchronous>, transform_indices = @transform_1, window_bounds = array<i64: 1024, 512>}, {pipeline_mode = #tpu.pipeline_mode<synchronous>, transform_indices = @transform_2, window_bounds = array<i64: 1, 512>}, {pipeline_mode = #tpu.pipeline_mode<synchronous>, transform_indices = @transform_3, window_bounds = array<i64: 512, 768>}, {pipeline_mode = #tpu.pipeline_mode<synchronous>, transform_indices = @transform_4, window_bounds = array<i64: 1, 768>}, {pipeline_mode = #tpu.pipeline_mode<synchronous>, transform_indices = @transform_5, window_bounds = array<i64: 768, 128>}, {pipeline_mode = #tpu.pipeline_mode<synchronous>, transform_indices = @transform_6, window_bounds = array<i64: 1, 128>}, {transform_indices = @transform_7, window_bounds = array<i64: 2, 128>}]} {
    %c0 = arith.constant 0 : index
    %c0_0 = arith.constant 0 : index
    %0 = vector.load %arg1[%c0, %c0_0] : memref<2x1024xf32, #tpu.memory_space<vmem>>, vector<2x1024xf32>
    %cst = arith.constant 0.000000e+00 : f32
    %1 = vector.broadcast %cst : f32 to vector<2x1024xf32>
    %2 = arith.maximumf %0, %1 : vector<2x1024xf32>
    %3 = arith.truncf %2 : vector<2x1024xf32> to vector<2x1024xbf16>
    %c0_1 = arith.constant 0 : index
    %c0_2 = arith.constant 0 : index
    %4 = vector.load %arg2[%c0_1, %c0_2] : memref<1024x512xbf16, #tpu.memory_space<vmem>>, vector<1024x512xbf16>
    %cst_3 = arith.constant dense<0.000000e+00> : vector<2x512xf32>
    %5 = tpu.matmul %3, %4, %cst_3 {dimension_numbers = #tpu.dot_dimension_numbers<[1], [0], [0], [1], [0, 0, 1, 1], [], []>} : vector<2x1024xbf16>, vector<1024x512xbf16>, vector<2x512xf32> -> vector<2x512xf32>
    %c0_4 = arith.constant 0 : index
    %c0_5 = arith.constant 0 : index
    %6 = vector.load %arg3[%c0_4, %c0_5] : memref<1x512xf32, #tpu.memory_space<vmem>>, vector<1x512xf32>
    %7 = vector.broadcast %6 : vector<1x512xf32> to vector<2x512xf32>
    %8 = arith.addf %5, %7 : vector<2x512xf32>
    %cst_6 = arith.constant 0.000000e+00 : f32
    %9 = vector.broadcast %cst_6 : f32 to vector<2x512xf32>
    %10 = arith.maximumf %8, %9 : vector<2x512xf32>
    %11 = arith.truncf %10 : vector<2x512xf32> to vector<2x512xbf16>
    %c0_7 = arith.constant 0 : index
    %c0_8 = arith.constant 0 : index
    %12 = vector.load %arg4[%c0_7, %c0_8] : memref<512x768xbf16, #tpu.memory_space<vmem>>, vector<512x768xbf16>
    %cst_9 = arith.constant dense<0.000000e+00> : vector<2x768xf32>
    %13 = tpu.matmul %11, %12, %cst_9 {dimension_numbers = #tpu.dot_dimension_numbers<[1], [0], [0], [1], [0, 0, 1, 1], [], []>} : vector<2x512xbf16>, vector<512x768xbf16>, vector<2x768xf32> -> vector<2x768xf32>
    %c0_10 = arith.constant 0 : index
    %c0_11 = arith.constant 0 : index
    %14 = vector.load %arg5[%c0_10, %c0_11] : memref<1x768xf32, #tpu.memory_space<vmem>>, vector<1x768xf32>
    %15 = vector.broadcast %14 : vector<1x768xf32> to vector<2x768xf32>
    %16 = arith.addf %13, %15 : vector<2x768xf32>
    %cst_12 = arith.constant 0.000000e+00 : f32
    %17 = vector.broadcast %cst_12 : f32 to vector<2x768xf32>
    %18 = arith.maximumf %16, %17 : vector<2x768xf32>
    %19 = arith.truncf %18 : vector<2x768xf32> to vector<2x768xbf16>
    %c0_13 = arith.constant 0 : index
    %c0_14 = arith.constant 0 : index
    %20 = vector.load %arg6[%c0_13, %c0_14] : memref<768x128xbf16, #tpu.memory_space<vmem>>, vector<768x128xbf16>
    %cst_15 = arith.constant dense<0.000000e+00> : vector<2x128xf32>
    %21 = tpu.matmul %19, %20, %cst_15 {dimension_numbers = #tpu.dot_dimension_numbers<[1], [0], [0], [1], [0, 0, 1, 1], [], []>} : vector<2x768xbf16>, vector<768x128xbf16>, vector<2x128xf32> -> vector<2x128xf32>
    %c0_16 = arith.constant 0 : index
    %c0_17 = arith.constant 0 : index
    %22 = vector.load %arg7[%c0_16, %c0_17] : memref<1x128xf32, #tpu.memory_space<vmem>>, vector<1x128xf32>
    %23 = vector.broadcast %22 : vector<1x128xf32> to vector<2x128xf32>
    %24 = arith.addf %21, %23 : vector<2x128xf32>
    %c0_18 = arith.constant 0 : index
    %c0_19 = arith.constant 0 : index
    %25 = vector.load %arg8[%c0_18, %c0_19] : memref<2x128xf32, #tpu.memory_space<vmem>>, vector<2x128xf32>
    tpu.vector_store %arg8[%c0_18, %c0_19], %24 {strides = array<i32>} : memref<2x128xf32, #tpu.memory_space<vmem>>, vector<2x128xf32>,
    return
  }
  func.func @transform_0(%arg0: i32) -> (i32, i32) {
    %c0_i32 = arith.constant 0 : i32
    %c0_i32_0 = arith.constant 0 : i32
    return %arg0, %c0_i32 : i32, i32
  }
  func.func @transform_1(%arg0: i32) -> (i32, i32) {
    %c0_i32 = arith.constant 0 : i32
    %c0_i32_0 = arith.constant 0 : i32
    %c0_i32_1 = arith.constant 0 : i32
    return %c0_i32, %c0_i32_0 : i32, i32
  }
  func.func @transform_2(%arg0: i32) -> (i32, i32) {
    %c0_i32 = arith.constant 0 : i32
    %c0_i32_0 = arith.constant 0 : i32
    %c0_i32_1 = arith.constant 0 : i32
    return %c0_i32, %c0_i32_0 : i32, i32
  }
  func.func @transform_3(%arg0: i32) -> (i32, i32) {
    %c0_i32 = arith.constant 0 : i32
    %c0_i32_0 = arith.constant 0 : i32
    %c0_i32_1 = arith.constant 0 : i32
    return %c0_i32, %c0_i32_0 : i32, i32
  }
  func.func @transform_4(%arg0: i32) -> (i32, i32) {
    %c0_i32 = arith.constant 0 : i32
    %c0_i32_0 = arith.constant 0 : i32
    %c0_i32_1 = arith.constant 0 : i32
    return %c0_i32, %c0_i32_0 : i32, i32
  }
  func.func @transform_5(%arg0: i32) -> (i32, i32) {
    %c0_i32 = arith.constant 0 : i32
    %c0_i32_0 = arith.constant 0 : i32
    %c0_i32_1 = arith.constant 0 : i32
    return %c0_i32, %c0_i32_0 : i32, i32
  }
  func.func @transform_6(%arg0: i32) -> (i32, i32) {
    %c0_i32 = arith.constant 0 : i32
    %c0_i32_0 = arith.constant 0 : i32
    %c0_i32_1 = arith.constant 0 : i32
    return %c0_i32, %c0_i32_0 : i32, i32
  }
  func.func @transform_7(%arg0: i32) -> (i32, i32) {
    %c0_i32 = arith.constant 0 : i32
    %c0_i32_0 = arith.constant 0 : i32
    return %arg0, %c0_i32 : i32, i32
  }
}

</mosaic_0001>

<llo_original>
// kernel: tpu_custom_call.1
$region0: #{tpu_custom_call.1}
  #allocation0 [shape = 'u32[]', space=smem, size = 0x4, offset = 0x4, fixed_abs, tag = 'smem constant byte address 0x4 - core index']
  #allocation1 [shape = 'u32[144,128]{1,0:T(1,128)}', space=vmem, size = 0x12000, scoped, tag = 'internal scratch']
  %s0 = inlined_call_operand.hbm [shape: f32[2,1024], index: 0, kind: input, shape index: {}]
  %s1 = inlined_call_operand.hbm [shape: bf16[1024,512], index: 1, kind: input, shape index: {}]
  %s2 = inlined_call_operand.vmem [shape: f32[1,512], index: 2, kind: input, shape index: {}]
  %s3 = inlined_call_operand.hbm [shape: bf16[512,768], index: 3, kind: input, shape index: {}]
  %s4 = inlined_call_operand.vmem [shape: f32[1,768], index: 4, kind: input, shape index: {}]
  %s5 = inlined_call_operand.hbm [shape: bf16[768,128], index: 5, kind: input, shape index: {}]
  %s6 = inlined_call_operand.vmem [shape: f32[1,128], index: 6, kind: input, shape index: {}]
  %s7 = inlined_call_operand.hbm [shape: f32[2,128], index: 7, kind: output, shape index: {}]
  %s8 = sld [smem:[#allocation0]]
  $region54: #{tpu_custom_call.1} parent=0
    _
  %s10 = ssub.s32 1, %s8
  %s11 = scalar_select 0, %s10, %s8
  $region1: #{tpu_custom_call.1} parent=0
    #allocation2 [shape = 'u8[8192]{0}', space=vmem, size = 0x2000, scoped, tag = 'input window, operand 0, single buffered']
    #allocation3 [shape = 's32[1]{0}', space=sflag, size = 0x4, scoped, tag = 'scoped memory for tpu_custom_call.1']
    #allocation4 [shape = 's32[1]{0}', space=sflag, size = 0x4, scoped, tag = 'scoped memory for tpu_custom_call.1']
    #allocation5 [shape = 'u8[1048576]{0}', space=vmem, size = 0x100000, scoped, tag = 'input window, operand 1, single buffered']
    #allocation6 [shape = 's32[1]{0}', space=sflag, size = 0x4, scoped, tag = 'scoped memory for tpu_custom_call.1']
    #allocation7 [shape = 'u8[786432]{0}', space=vmem, size = 0xc0000, scoped, tag = 'input window, operand 3, single buffered']
    #allocation8 [shape = 'u8[196608]{0}', space=vmem, size = 0x30000, scoped, tag = 'input window, operand 5, single buffered']
    #allocation9 [shape = 's32[1]{0}', space=sflag, size = 0x4, scoped, tag = 'scoped memory for tpu_custom_call.1']
    #allocation10 [shape = 'u8[1024]{0}', space=vmem, size = 0x400, scoped, tag = 'output window, operand 0, single buffered']
    %12 = vsyncpa [#allocation3], 0
    %13 = vsyncpa [#allocation6], 0
    %14 = vsyncpa [#allocation9], 0
    %15 = vsyncpa [#allocation4], 0
    // Predicated region
    $region2: #{tpu_custom_call.1} parent=1 // pred_check
      _
    $region3: #{tpu_custom_call.1} parent=1 // pred_check_branch
      %17 = sbr.rel (0) target = $region5
    $region4: #{tpu_custom_call.1} parent=1 // pred_region
      %s19 = ssub.s32 256, 256
      %20 = vsyncadd [#allocation3], %s19
      %s22 = sshll.u32 [#allocation2], 4
      %s23 = int_to_ptr.vmem [resolvable:$true] %s22
      %25 = dma.hbm_to_vmem [thread:$0]  %s0, 256, %s23, [#allocation3]
    $region5: #{tpu_custom_call.1} parent=1 // pred_fallthru
      _
    // Predicated region
    $region6: #{tpu_custom_call.1} parent=1 // pred_check
      _
    $region7: #{tpu_custom_call.1} parent=1 // pred_check_branch
      %27 = sbr.rel (0) target = $region9
    $region8: #{tpu_custom_call.1} parent=1 // pred_region
      %s29 = ssub.s32 32768, 32768
      %30 = vsyncadd [#allocation6], %s29
      %s31 = sshll.u32 [#allocation5], 4
      %s32 = int_to_ptr.vmem [resolvable:$true] %s31
      %37 = dma.hbm_to_vmem [thread:$0]  %s1, 32768, %s32, [#allocation6], 256, 256, 16
    $region9: #{tpu_custom_call.1} parent=1 // pred_fallthru
      _
    // Predicated region
    $region10: #{tpu_custom_call.1} parent=1 // pred_check
      _
    $region11: #{tpu_custom_call.1} parent=1 // pred_check_branch
      %39 = sbr.rel (0) target = $region13
    $region12: #{tpu_custom_call.1} parent=1 // pred_region
      _
    $region13: #{tpu_custom_call.1} parent=1 // pred_fallthru
      _
    // Predicated region
    $region14: #{tpu_custom_call.1} parent=1 // pred_check
      _
    $region15: #{tpu_custom_call.1} parent=1 // pred_check_branch
      %41 = sbr.rel (0) target = $region17
    $region16: #{tpu_custom_call.1} parent=1 // pred_region
      %s43 = ssub.s32 24576, 24576
      %44 = vsyncadd [#allocation6], %s43
      %s45 = sshll.u32 [#allocation7], 4
      %s46 = int_to_ptr.vmem [resolvable:$true] %s45
      %51 = dma.hbm_to_vmem [thread:$0]  %s3, 24576, %s46, [#allocation6], 384, 384, 24
    $region17: #{tpu_custom_call.1} parent=1 // pred_fallthru
      _
    // Predicated region
    $region18: #{tpu_custom_call.1} parent=1 // pred_check
      _
    $region19: #{tpu_custom_call.1} parent=1 // pred_check_branch
      %53 = sbr.rel (0) target = $region21
    $region20: #{tpu_custom_call.1} parent=1 // pred_region
      _
    $region21: #{tpu_custom_call.1} parent=1 // pred_fallthru
      _
    // Predicated region
    $region22: #{tpu_custom_call.1} parent=1 // pred_check
      _
    $region23: #{tpu_custom_call.1} parent=1 // pred_check_branch
      %55 = sbr.rel (0) target = $region25
    $region24: #{tpu_custom_call.1} parent=1 // pred_region
      %s57 = ssub.s32 6144, 6144
      %58 = vsyncadd [#allocation9], %s57
      %s59 = sshll.u32 [#allocation8], 4
      %s60 = int_to_ptr.vmem [resolvable:$true] %s59
      %65 = dma.hbm_to_vmem [thread:$0]  %s5, 6144, %s60, [#allocation9], 64, 64, 4
    $region25: #{tpu_custom_call.1} parent=1 // pred_fallthru
      _
    // Predicated region
    $region26: #{tpu_custom_call.1} parent=1 // pred_check
      _
    $region27: #{tpu_custom_call.1} parent=1 // pred_check_branch
      %67 = sbr.rel (0) target = $region29
    $region28: #{tpu_custom_call.1} parent=1 // pred_region
      _
    $region29: #{tpu_custom_call.1} parent=1 // pred_fallthru
      _
    // Predicated region
    $region30: #{tpu_custom_call.1} parent=1 // pred_check
      _
    $region31: #{tpu_custom_call.1} parent=1 // pred_check_branch
      %69 = sbr.rel (0) target = $region33
    $region32: #{tpu_custom_call.1} parent=1 // pred_region
      %70 = dma.done [#allocation3], 256
    $region33: #{tpu_custom_call.1} parent=1 // pred_fallthru
      _
    // Predicated region
    $region34: #{tpu_custom_call.1} parent=1 // pred_check
      _
    $region35: #{tpu_custom_call.1} parent=1 // pred_check_branch
      %72 = sbr.rel (0) target = $region37
    $region36: #{tpu_custom_call.1} parent=1 // pred_region
      %73 = dma.done [#allocation6], 32768
    $region37: #{tpu_custom_call.1} parent=1 // pred_fallthru
      _
    // Predicated region
    $region38: #{tpu_custom_call.1} parent=1 // pred_check
      _
    $region39: #{tpu_custom_call.1} parent=1 // pred_check_branch
      %75 = sbr.rel (0) target = $region41
    $region40: #{tpu_custom_call.1} parent=1 // pred_region
      %76 = dma.done [#allocation6], 24576
    $region41: #{tpu_custom_call.1} parent=1 // pred_fallthru
      _
    // Predicated region
    $region42: #{tpu_custom_call.1} parent=1 // pred_check
      _
    $region43: #{tpu_custom_call.1} parent=1 // pred_check_branch
      %78 = sbr.rel (0) target = $region45
    $region44: #{tpu_custom_call.1} parent=1 // pred_region
      %79 = dma.done [#allocation9], 6144
    $region45: #{tpu_custom_call.1} parent=1 // pred_fallthru
      _
    %v81 = vld [vmem:[#allocation2] sm:$0xff]
    %v82 = vld [vmem:[#allocation2 + $0x8] sm:$0xff]
    %v83 = vmax.f32 %v81, 0.0
    %v84 = vmax.f32 %v82, 0.0
    %v87 = vcombine.high %v83, %v83
    %v89 = vunpack.c.l.s4 1983009808
    %v90 = vunpack.c.0.s8 %v89
    %v91 = vlaneseq
    %v92 = vshrl.u32 %v91, 7
    %v93 = vsub.s32 %v90, %v92
    %v94 = vrot.slane %v83, %v93
    %v96 = vunpack.c.l.s4 1983009808
    %v97 = vunpack.c.0.s8 %v96
    %v98 = vlaneseq
    %v99 = vshrl.u32 %v98, 7
    %v100 = vsub.s32 %v97, %v99
    %v101 = vrot.slane %v87, %v100
    %v102 = vcombine.high %v94, %v94
    %v103 = vcombine.high %v101, %v101
    %v104 = vcombine.high %v84, %v84
    %v106 = vunpack.c.l.s4 1983009808
    %v107 = vunpack.c.0.s8 %v106
    %v108 = vlaneseq
    %v109 = vshrl.u32 %v108, 7
    %v110 = vsub.s32 %v107, %v109
    %v111 = vrot.slane %v84, %v110
    %v113 = vunpack.c.l.s4 1983009808
    %v114 = vunpack.c.0.s8 %v113
    %v115 = vlaneseq
    %v116 = vshrl.u32 %v115, 7
    %v117 = vsub.s32 %v114, %v116
    %v118 = vrot.slane %v104, %v117
    %v119 = vcombine.high %v111, %v111
    %v120 = vcombine.high %v118, %v118
    %v129 = vpack.c.bf16 %v94, %v94
    %v130 = vpack.c.bf16 %v102, %v102
    %v131 = vpack.c.bf16 %v101, %v101
    %v132 = vpack.c.bf16 %v103, %v103
    %v133 = vpack.c.bf16 %v111, %v111
    %v134 = vpack.c.bf16 %v119, %v119
    %v135 = vpack.c.bf16 %v118, %v118
    %v136 = vpack.c.bf16 %v120, %v120
    %v137 = vld [vmem:[#allocation5] sm:$0xff]
    %v138 = vld [vmem:[#allocation5 + $0x8] sm:$0xff]
    %v139 = vld [vmem:[#allocation5 + $0x10] sm:$0xff]
    %v140 = vld [vmem:[#allocation5 + $0x18] sm:$0xff]
    %v141 = vld [vmem:[#allocation5 + $0x20] sm:$0xff]
    %v142 = vld [vmem:[#allocation5 + $0x28] sm:$0xff]
    %v143 = vld [vmem:[#allocation5 + $0x30] sm:$0xff]
    %v144 = vld [vmem:[#allocation5 + $0x38] sm:$0xff]
    %v145 = vld [vmem:[#allocation5 + $0x40] sm:$0xff]
    %v146 = vld [vmem:[#allocation5 + $0x48] sm:$0xff]
    %v147 = vld [vmem:[#allocation5 + $0x50] sm:$0xff]
    %v148 = vld [vmem:[#allocation5 + $0x58] sm:$0xff]
    %v149 = vld [vmem:[#allocation5 + $0x60] sm:$0xff]
    %v150 = vld [vmem:[#allocation5 + $0x68] sm:$0xff]
    %v151 = vld [vmem:[#allocation5 + $0x70] sm:$0xff]
    %v152 = vld [vmem:[#allocation5 + $0x78] sm:$0xff]
    %v153 = vld [vmem:[#allocation5 + $0x80] sm:$0xff]
    %v154 = vld [vmem:[#allocation5 + $0x88] sm:$0xff]
    %v155 = vld [vmem:[#allocation5 + $0x90] sm:$0xff]
    %v156 = vld [vmem:[#allocation5 + $0x98] sm:$0xff]
    %v157 = vld [vmem:[#allocation5 + $0xa0] sm:$0xff]
    %v158 = vld [vmem:[#allocation5 + $0xa8] sm:$0xff]
    %v159 = vld [vmem:[#allocation5 + $0xb0] sm:$0xff]
    %v160 = vld [vmem:[#allocation5 + $0xb8] sm:$0xff]
    %v161 = vld [vmem:[#allocation5 + $0xc0] sm:$0xff]
    %v162 = vld [vmem:[#allocation5 + $0xc8] sm:$0xff]
    %v163 = vld [vmem:[#allocation5 + $0xd0] sm:$0xff]
    %v164 = vld [vmem:[#allocation5 + $0xd8] sm:$0xff]
    %v165 = vld [vmem:[#allocation5 + $0xe0] sm:$0xff]
    %v166 = vld [vmem:[#allocation5 + $0xe8] sm:$0xff]
    %v167 = vld [vmem:[#allocation5 + $0xf0] sm:$0xff]
    %v168 = vld [vmem:[#allocation5 + $0xf8] sm:$0xff]
    %v169 = vld [vmem:[#allocation5 + $0x100] sm:$0xff]
    %v170 = vld [vmem:[#allocation5 + $0x108] sm:$0xff]
    %v171 = vld [vmem:[#allocation5 + $0x110] sm:$0xff]
    %v172 = vld [vmem:[#allocation5 + $0x118] sm:$0xff]
    %v173 = vld [vmem:[#allocation5 + $0x120] sm:$0xff]
    %v174 = vld [vmem:[#allocation5 + $0x128] sm:$0xff]
    %v175 = vld [vmem:[#allocation5 + $0x130] sm:$0xff]
    %v176 = vld [vmem:[#allocation5 + $0x138] sm:$0xff]
    %v177 = vld [vmem:[#allocation5 + $0x140] sm:$0xff]
    %v178 = vld [vmem:[#allocation5 + $0x148] sm:$0xff]
    %v179 = vld [vmem:[#allocation5 + $0x150] sm:$0xff]
    %v180 = vld [vmem:[#allocation5 + $0x158] sm:$0xff]
    %v181 = vld [vmem:[#allocation5 + $0x160] sm:$0xff]
    %v182 = vld [vmem:[#allocation5 + $0x168] sm:$0xff]
    %v183 = vld [vmem:[#allocation5 + $0x170] sm:$0xff]
    %v184 = vld [vmem:[#allocation5 + $0x178] sm:$0xff]
    %v185 = vld [vmem:[#allocation5 + $0x180] sm:$0xff]
    %v186 = vld [vmem:[#allocation5 + $0x188] sm:$0xff]
    %v187 = vld [vmem:[#allocation5 + $0x190] sm:$0xff]
    %v188 = vld [vmem:[#allocation5 + $0x198] sm:$0xff]
    %v189 = vld [vmem:[#allocation5 + $0x1a0] sm:$0xff]
    %v190 = vld [vmem:[#allocation5 + $0x1a8] sm:$0xff]
    %v191 = vld [vmem:[#allocation5 + $0x1b0] sm:$0xff]
    %v192 = vld [vmem:[#allocation5 + $0x1b8] sm:$0xff]
    %v193 = vld [vmem:[#allocation5 + $0x1c0] sm:$0xff]
    %v194 = vld [vmem:[#allocation5 + $0x1c8] sm:$0xff]
    %v195 = vld [vmem:[#allocation5 + $0x1d0] sm:$0xff]
    %v196 = vld [vmem:[#allocation5 + $0x1d8] sm:$0xff]
    %v197 = vld [vmem:[#allocation5 + $0x1e0] sm:$0xff]
    %v198 = vld [vmem:[#allocation5 + $0x1e8] sm:$0xff]
    %v199 = vld [vmem:[#allocation5 + $0x1f0] sm:$0xff]
    %v200 = vld [vmem:[#allocation5 + $0x1f8] sm:$0xff]
    %v201 = vld [vmem:[#allocation5 + $0x200] sm:$0xff]
    %v202 = vld [vmem:[#allocation5 + $0x208] sm:$0xff]
    %v203 = vld [vmem:[#allocation5 + $0x210] sm:$0xff]
    %v204 = vld [vmem:[#allocation5 + $0x218] sm:$0xff]
    %v205 = vld [vmem:[#allocation5 + $0x220] sm:$0xff]
    %v206 = vld [vmem:[#allocation5 + $0x228] sm:$0xff]
    %v207 = vld [vmem:[#allocation5 + $0x230] sm:$0xff]
    %v208 = vld [vmem:[#allocation5 + $0x238] sm:$0xff]
    %v209 = vld [vmem:[#allocation5 + $0x240] sm:$0xff]
    %v210 = vld [vmem:[#allocation5 + $0x248] sm:$0xff]
    %v211 = vld [vmem:[#allocation5 + $0x250] sm:$0xff]
    %v212 = vld [vmem:[#allocation5 + $0x258] sm:$0xff]
    %v213 = vld [vmem:[#allocation5 + $0x260] sm:$0xff]
    %v214 = vld [vmem:[#allocation5 + $0x268] sm:$0xff]
    %v215 = vld [vmem:[#allocation5 + $0x270] sm:$0xff]
    %v216 = vld [vmem:[#allocation5 + $0x278] sm:$0xff]
    %v217 = vld [vmem:[#allocation5 + $0x280] sm:$0xff]
    %v218 = vld [vmem:[#allocation5 + $0x288] sm:$0xff]
    %v219 = vld [vmem:[#allocation5 + $0x290] sm:$0xff]
    %v220 = vld [vmem:[#allocation5 + $0x298] sm:$0xff]
    %v221 = vld [vmem:[#allocation5 + $0x2a0] sm:$0xff]
    %v222 = vld [vmem:[#allocation5 + $0x2a8] sm:$0xff]
    %v223 = vld [vmem:[#allocation5 + $0x2b0] sm:$0xff]
    %v224 = vld [vmem:[#allocation5 + $0x2b8] sm:$0xff]
    %v225 = vld [vmem:[#allocation5 + $0x2c0] sm:$0xff]
    %v226 = vld [vmem:[#allocation5 + $0x2c8] sm:$0xff]
    %v227 = vld [vmem:[#allocation5 + $0x2d0] sm:$0xff]
    %v228 = vld [vmem:[#allocation5 + $0x2d8] sm:$0xff]
    %v229 = vld [vmem:[#allocation5 + $0x2e0] sm:$0xff]
    %v230 = vld [vmem:[#allocation5 + $0x2e8] sm:$0xff]
    %v231 = vld [vmem:[#allocation5 + $0x2f0] sm:$0xff]
    %v232 = vld [vmem:[#allocation5 + $0x2f8] sm:$0xff]
    %v233 = vld [vmem:[#allocation5 + $0x300] sm:$0xff]
    %v234 = vld [vmem:[#allocation5 + $0x308] sm:$0xff]
    %v235 = vld [vmem:[#allocation5 + $0x310] sm:$0xff]
    %v236 = vld [vmem:[#allocation5 + $0x318] sm:$0xff]
    %v237 = vld [vmem:[#allocation5 + $0x320] sm:$0xff]
    %v238 = vld [vmem:[#allocation5 + $0x328] sm:$0xff]
    %v239 = vld [vmem:[#allocation5 + $0x330] sm:$0xff]
    %v240 = vld [vmem:[#allocation5 + $0x338] sm:$0xff]
    %v241 = vld [vmem:[#allocation5 + $0x340] sm:$0xff]
    %v242 = vld [vmem:[#allocation5 + $0x348] sm:$0xff]
    %v243 = vld [vmem:[#allocation5 + $0x350] sm:$0xff]
    %v244 = vld [vmem:[#allocation5 + $0x358] sm:$0xff]
    %v245 = vld [vmem:[#allocation5 + $0x360] sm:$0xff]
    %v246 = vld [vmem:[#allocation5 + $0x368] sm:$0xff]
    %v247 = vld [vmem:[#allocation5 + $0x370] sm:$0xff]
    %v248 = vld [vmem:[#allocation5 + $0x378] sm:$0xff]
    %v249 = vld [vmem:[#allocation5 + $0x380] sm:$0xff]
    %v250 = vld [vmem:[#allocation5 + $0x388] sm:$0xff]
    %v251 = vld [vmem:[#allocation5 + $0x390] sm:$0xff]
    %v252 = vld [vmem:[#allocation5 + $0x398] sm:$0xff]
    %v253 = vld [vmem:[#allocation5 + $0x3a0] sm:$0xff]
    %v254 = vld [vmem:[#allocation5 + $0x3a8] sm:$0xff]
    %v255 = vld [vmem:[#allocation5 + $0x3b0] sm:$0xff]
    %v256 = vld [vmem:[#allocation5 + $0x3b8] sm:$0xff]
    %v257 = vld [vmem:[#allocation5 + $0x3c0] sm:$0xff]
    %v258 = vld [vmem:[#allocation5 + $0x3c8] sm:$0xff]
    %v259 = vld [vmem:[#allocation5 + $0x3d0] sm:$0xff]
    %v260 = vld [vmem:[#allocation5 + $0x3d8] sm:$0xff]
    %v261 = vld [vmem:[#allocation5 + $0x3e0] sm:$0xff]
    %v262 = vld [vmem:[#allocation5 + $0x3e8] sm:$0xff]
    %v263 = vld [vmem:[#allocation5 + $0x3f0] sm:$0xff]
    %v264 = vld [vmem:[#allocation5 + $0x3f8] sm:$0xff]
    %v265 = vld [vmem:[#allocation5 + $0x400] sm:$0xff]
    %v266 = vld [vmem:[#allocation5 + $0x408] sm:$0xff]
    %v267 = vld [vmem:[#allocation5 + $0x410] sm:$0xff]
    %v268 = vld [vmem:[#allocation5 + $0x418] sm:$0xff]
    %v269 = vld [vmem:[#allocation5 + $0x420] sm:$0xff]
    %v270 = vld [vmem:[#allocation5 + $0x428] sm:$0xff]
    %v271 = vld [vmem:[#allocation5 + $0x430] sm:$0xff]
    %v272 = vld [vmem:[#allocation5 + $0x438] sm:$0xff]
    %v273 = vld [vmem:[#allocation5 + $0x440] sm:$0xff]
    %v274 = vld [vmem:[#allocation5 + $0x448] sm:$0xff]
    %v275 = vld [vmem:[#allocation5 + $0x450] sm:$0xff]
    %v276 = vld [vmem:[#allocation5 + $0x458] sm:$0xff]
    %v277 = vld [vmem:[#allocation5 + $0x460] sm:$0xff]
    %v278 = vld [vmem:[#allocation5 + $0x468] sm:$0xff]
    %v279 = vld [vmem:[#allocation5 + $0x470] sm:$0xff]
    %v280 = vld [vmem:[#allocation5 + $0x478] sm:$0xff]
    %v281 = vld [vmem:[#allocation5 + $0x480] sm:$0xff]
    %v282 = vld [vmem:[#allocation5 + $0x488] sm:$0xff]
    %v283 = vld [vmem:[#allocation5 + $0x490] sm:$0xff]
    %v284 = vld [vmem:[#allocation5 + $0x498] sm:$0xff]
    %v285 = vld [vmem:[#allocation5 + $0x4a0] sm:$0xff]
    %v286 = vld [vmem:[#allocation5 + $0x4a8] sm:$0xff]
    %v287 = vld [vmem:[#allocation5 + $0x4b0] sm:$0xff]
    %v288 = vld [vmem:[#allocation5 + $0x4b8] sm:$0xff]
    %v289 = vld [vmem:[#allocation5 + $0x4c0] sm:$0xff]
    %v290 = vld [vmem:[#allocation5 + $0x4c8] sm:$0xff]
    %v291 = vld [vmem:[#allocation5 + $0x4d0] sm:$0xff]
    %v292 = vld [vmem:[#allocation5 + $0x4d8] sm:$0xff]
    %v293 = vld [vmem:[#allocation5 + $0x4e0] sm:$0xff]
    %v294 = vld [vmem:[#allocation5 + $0x4e8] sm:$0xff]
    %v295 = vld [vmem:[#allocation5 + $0x4f0] sm:$0xff]
    %v296 = vld [vmem:[#allocation5 + $0x4f8] sm:$0xff]
    %v297 = vld [vmem:[#allocation5 + $0x500] sm:$0xff]
    %v298 = vld [vmem:[#allocation5 + $0x508] sm:$0xff]
    %v299 = vld [vmem:[#allocation5 + $0x510] sm:$0xff]
    %v300 = vld [vmem:[#allocation5 + $0x518] sm:$0xff]
    %v301 = vld [vmem:[#allocation5 + $0x520] sm:$0xff]
    %v302 = vld [vmem:[#allocation5 + $0x528] sm:$0xff]
    %v303 = vld [vmem:[#allocation5 + $0x530] sm:$0xff]
    %v304 = vld [vmem:[#allocation5 + $0x538] sm:$0xff]
    %v305 = vld [vmem:[#allocation5 + $0x540] sm:$0xff]
    %v306 = vld [vmem:[#allocation5 + $0x548] sm:$0xff]
    %v307 = vld [vmem:[#allocation5 + $0x550] sm:$0xff]
    %v308 = vld [vmem:[#allocation5 + $0x558] sm:$0xff]
    %v309 = vld [vmem:[#allocation5 + $0x560] sm:$0xff]
    %v310 = vld [vmem:[#allocation5 + $0x568] sm:$0xff]
    %v311 = vld [vmem:[#allocation5 + $0x570] sm:$0xff]
    %v312 = vld [vmem:[#allocation5 + $0x578] sm:$0xff]
    %v313 = vld [vmem:[#allocation5 + $0x580] sm:$0xff]
    %v314 = vld [vmem:[#allocation5 + $0x588] sm:$0xff]
    %v315 = vld [vmem:[#allocation5 + $0x590] sm:$0xff]
    %v316 = vld [vmem:[#allocation5 + $0x598] sm:$0xff]
    %v317 = vld [vmem:[#allocation5 + $0x5a0] sm:$0xff]
    %v318 = vld [vmem:[#allocation5 + $0x5a8] sm:$0xff]
    %v319 = vld [vmem:[#allocation5 + $0x5b0] sm:$0xff]
    %v320 = vld [vmem:[#allocation5 + $0x5b8] sm:$0xff]
    %v321 = vld [vmem:[#allocation5 + $0x5c0] sm:$0xff]
    %v322 = vld [vmem:[#allocation5 + $0x5c8] sm:$0xff]
    %v323 = vld [vmem:[#allocation5 + $0x5d0] sm:$0xff]
    %v324 = vld [vmem:[#allocation5 + $0x5d8] sm:$0xff]
    %v325 = vld [vmem:[#allocation5 + $0x5e0] sm:$0xff]
    %v326 = vld [vmem:[#allocation5 + $0x5e8] sm:$0xff]
    %v327 = vld [vmem:[#allocation5 + $0x5f0] sm:$0xff]
    %v328 = vld [vmem:[#allocation5 + $0x5f8] sm:$0xff]
    %v329 = vld [vmem:[#allocation5 + $0x600] sm:$0xff]
    %v330 = vld [vmem:[#allocation5 + $0x608] sm:$0xff]
    %v331 = vld [vmem:[#allocation5 + $0x610] sm:$0xff]
    %v332 = vld [vmem:[#allocation5 + $0x618] sm:$0xff]
    %v333 = vld [vmem:[#allocation5 + $0x620] sm:$0xff]
    %v334 = vld [vmem:[#allocation5 + $0x628] sm:$0xff]
    %v335 = vld [vmem:[#allocation5 + $0x630] sm:$0xff]
    %v336 = vld [vmem:[#allocation5 + $0x638] sm:$0xff]
    %v337 = vld [vmem:[#allocation5 + $0x640] sm:$0xff]
    %v338 = vld [vmem:[#allocation5 + $0x648] sm:$0xff]
    %v339 = vld [vmem:[#allocation5 + $0x650] sm:$0xff]
    %v340 = vld [vmem:[#allocation5 + $0x658] sm:$0xff]
    %v341 = vld [vmem:[#allocation5 + $0x660] sm:$0xff]
    %v342 = vld [vmem:[#allocation5 + $0x668] sm:$0xff]
    %v343 = vld [vmem:[#allocation5 + $0x670] sm:$0xff]
    %v344 = vld [vmem:[#allocation5 + $0x678] sm:$0xff]
    %v345 = vld [vmem:[#allocation5 + $0x680] sm:$0xff]
    %v346 = vld [vmem:[#allocation5 + $0x688] sm:$0xff]
    %v347 = vld [vmem:[#allocation5 + $0x690] sm:$0xff]
    %v348 = vld [vmem:[#allocation5 + $0x698] sm:$0xff]
    %v349 = vld [vmem:[#allocation5 + $0x6a0] sm:$0xff]
    %v350 = vld [vmem:[#allocation5 + $0x6a8] sm:$0xff]
    %v351 = vld [vmem:[#allocation5 + $0x6b0] sm:$0xff]
    %v352 = vld [vmem:[#allocation5 + $0x6b8] sm:$0xff]
    %v353 = vld [vmem:[#allocation5 + $0x6c0] sm:$0xff]
    %v354 = vld [vmem:[#allocation5 + $0x6c8] sm:$0xff]
    %v355 = vld [vmem:[#allocation5 + $0x6d0] sm:$0xff]
    %v356 = vld [vmem:[#allocation5 + $0x6d8] sm:$0xff]
    %v357 = vld [vmem:[#allocation5 + $0x6e0] sm:$0xff]
    %v358 = vld [vmem:[#allocation5 + $0x6e8] sm:$0xff]
    %v359 = vld [vmem:[#allocation5 + $0x6f0] sm:$0xff]
    %v360 = vld [vmem:[#allocation5 + $0x6f8] sm:$0xff]
    %v361 = vld [vmem:[#allocation5 + $0x700] sm:$0xff]
    %v362 = vld [vmem:[#allocation5 + $0x708] sm:$0xff]
    %v363 = vld [vmem:[#allocation5 + $0x710] sm:$0xff]
    %v364 = vld [vmem:[#allocation5 + $0x718] sm:$0xff]
    %v365 = vld [vmem:[#allocation5 + $0x720] sm:$0xff]
    %v366 = vld [vmem:[#allocation5 + $0x728] sm:$0xff]
    %v367 = vld [vmem:[#allocation5 + $0x730] sm:$0xff]
    %v368 = vld [vmem:[#allocation5 + $0x738] sm:$0xff]
    %v369 = vld [vmem:[#allocation5 + $0x740] sm:$0xff]
    %v370 = vld [vmem:[#allocation5 + $0x748] sm:$0xff]
    %v371 = vld [vmem:[#allocation5 + $0x750] sm:$0xff]
    %v372 = vld [vmem:[#allocation5 + $0x758] sm:$0xff]
    %v373 = vld [vmem:[#allocation5 + $0x760] sm:$0xff]
    %v374 = vld [vmem:[#allocation5 + $0x768] sm:$0xff]
    %v375 = vld [vmem:[#allocation5 + $0x770] sm:$0xff]
    %v376 = vld [vmem:[#allocation5 + $0x778] sm:$0xff]
    %v377 = vld [vmem:[#allocation5 + $0x780] sm:$0xff]
    %v378 = vld [vmem:[#allocation5 + $0x788] sm:$0xff]
    %v379 = vld [vmem:[#allocation5 + $0x790] sm:$0xff]
    %v380 = vld [vmem:[#allocation5 + $0x798] sm:$0xff]
    %v381 = vld [vmem:[#allocation5 + $0x7a0] sm:$0xff]
    %v382 = vld [vmem:[#allocation5 + $0x7a8] sm:$0xff]
    %v383 = vld [vmem:[#allocation5 + $0x7b0] sm:$0xff]
    %v384 = vld [vmem:[#allocation5 + $0x7b8] sm:$0xff]
    %v385 = vld [vmem:[#allocation5 + $0x7c0] sm:$0xff]
    %v386 = vld [vmem:[#allocation5 + $0x7c8] sm:$0xff]
    %v387 = vld [vmem:[#allocation5 + $0x7d0] sm:$0xff]
    %v388 = vld [vmem:[#allocation5 + $0x7d8] sm:$0xff]
    %v389 = vld [vmem:[#allocation5 + $0x7e0] sm:$0xff]
    %v390 = vld [vmem:[#allocation5 + $0x7e8] sm:$0xff]
    %v391 = vld [vmem:[#allocation5 + $0x7f0] sm:$0xff]
    %v392 = vld [vmem:[#allocation5 + $0x7f8] sm:$0xff]
    %v393 = vld [vmem:[%s2] sm:$0xf]
    %v395 = vlaneseq
    %v396 = vshrl.u32 %v395, 7
    %v397 = vsub.s32 0, %v396
    %v398 = vrot.slane %v393, %v397
    %v399 = vlaneseq
    %v400 = vshrl.u32 %v399, 7
    %v401 = vsub.s32 1, %v400
    %v402 = vrot.slane %v393, %v401
    %v403 = vlaneseq
    %v404 = vshrl.u32 %v403, 7
    %v405 = vsub.s32 2, %v404
    %v406 = vrot.slane %v393, %v405
    %v407 = vlaneseq
    %v408 = vshrl.u32 %v407, 7
    %v409 = vsub.s32 3, %v408
    %v410 = vrot.slane %v393, %v409
    %v671 = vunpack.c.l.b16 %v137
    %v672 = vunpack.c.h.b16 %v137
    %v673 = vunpack.c.l.b16 %v138
    %v674 = vunpack.c.h.b16 %v138
    %v675 = vunpack.c.l.b16 %v139
    %v676 = vunpack.c.h.b16 %v139
    %v677 = vunpack.c.l.b16 %v140
    %v678 = vunpack.c.h.b16 %v140
    %v679 = vunpack.c.l.b16 %v141
    %v680 = vunpack.c.h.b16 %v141
    %v681 = vunpack.c.l.b16 %v142
    %v682 = vunpack.c.h.b16 %v142
    %v683 = vunpack.c.l.b16 %v143
    %v684 = vunpack.c.h.b16 %v143
    %v685 = vunpack.c.l.b16 %v144
    %v686 = vunpack.c.h.b16 %v144
    %v687 = vunpack.c.l.b16 %v145
    %v688 = vunpack.c.h.b16 %v145
    %v689 = vunpack.c.l.b16 %v146
    %v690 = vunpack.c.h.b16 %v146
    %v691 = vunpack.c.l.b16 %v147
    %v692 = vunpack.c.h.b16 %v147
    %v693 = vunpack.c.l.b16 %v148
    %v694 = vunpack.c.h.b16 %v148
    %v695 = vunpack.c.l.b16 %v149
    %v696 = vunpack.c.h.b16 %v149
    %v697 = vunpack.c.l.b16 %v150
    %v698 = vunpack.c.h.b16 %v150
    %v699 = vunpack.c.l.b16 %v151
    %v700 = vunpack.c.h.b16 %v151
    %v701 = vunpack.c.l.b16 %v152
    %v702 = vunpack.c.h.b16 %v152
    %v703 = vunpack.c.l.b16 %v153
    %v704 = vunpack.c.h.b16 %v153
    %v705 = vunpack.c.l.b16 %v154
    %v706 = vunpack.c.h.b16 %v154
    %v707 = vunpack.c.l.b16 %v155
    %v708 = vunpack.c.h.b16 %v155
    %v709 = vunpack.c.l.b16 %v156
    %v710 = vunpack.c.h.b16 %v156
    %v711 = vunpack.c.l.b16 %v157
    %v712 = vunpack.c.h.b16 %v157
    %v713 = vunpack.c.l.b16 %v158
    %v714 = vunpack.c.h.b16 %v158
    %v715 = vunpack.c.l.b16 %v159
    %v716 = vunpack.c.h.b16 %v159
    %v717 = vunpack.c.l.b16 %v160
    %v718 = vunpack.c.h.b16 %v160
    %v719 = vunpack.c.l.b16 %v161
    %v720 = vunpack.c.h.b16 %v161
    %v721 = vunpack.c.l.b16 %v162
    %v722 = vunpack.c.h.b16 %v162
    %v723 = vunpack.c.l.b16 %v163
    %v724 = vunpack.c.h.b16 %v163
    %v725 = vunpack.c.l.b16 %v164
    %v726 = vunpack.c.h.b16 %v164
    %v727 = vunpack.c.l.b16 %v165
    %v728 = vunpack.c.h.b16 %v165
    %v729 = vunpack.c.l.b16 %v166
    %v730 = vunpack.c.h.b16 %v166
    %v731 = vunpack.c.l.b16 %v167
    %v732 = vunpack.c.h.b16 %v167
    %v733 = vunpack.c.l.b16 %v168
    %v734 = vunpack.c.h.b16 %v168
    %v735 = vunpack.c.l.b16 %v169
    %v736 = vunpack.c.h.b16 %v169
    %v737 = vunpack.c.l.b16 %v170
    %v738 = vunpack.c.h.b16 %v170
    %v739 = vunpack.c.l.b16 %v171
    %v740 = vunpack.c.h.b16 %v171
    %v741 = vunpack.c.l.b16 %v172
    %v742 = vunpack.c.h.b16 %v172
    %v743 = vunpack.c.l.b16 %v173
    %v744 = vunpack.c.h.b16 %v173
    %v745 = vunpack.c.l.b16 %v174
    %v746 = vunpack.c.h.b16 %v174
    %v747 = vunpack.c.l.b16 %v175
    %v748 = vunpack.c.h.b16 %v175
    %v749 = vunpack.c.l.b16 %v176
    %v750 = vunpack.c.h.b16 %v176
    %v751 = vunpack.c.l.b16 %v177
    %v752 = vunpack.c.h.b16 %v177
    %v753 = vunpack.c.l.b16 %v178
    %v754 = vunpack.c.h.b16 %v178
    %v755 = vunpack.c.l.b16 %v179
    %v756 = vunpack.c.h.b16 %v179
    %v757 = vunpack.c.l.b16 %v180
    %v758 = vunpack.c.h.b16 %v180
    %v759 = vunpack.c.l.b16 %v181
    %v760 = vunpack.c.h.b16 %v181
    %v761 = vunpack.c.l.b16 %v182
    %v762 = vunpack.c.h.b16 %v182
    %v763 = vunpack.c.l.b16 %v183
    %v764 = vunpack.c.h.b16 %v183
    %v765 = vunpack.c.l.b16 %v184
    %v766 = vunpack.c.h.b16 %v184
    %v767 = vunpack.c.l.b16 %v185
    %v768 = vunpack.c.h.b16 %v185
    %v769 = vunpack.c.l.b16 %v186
    %v770 = vunpack.c.h.b16 %v186
    %v771 = vunpack.c.l.b16 %v187
    %v772 = vunpack.c.h.b16 %v187
    %v773 = vunpack.c.l.b16 %v188
    %v774 = vunpack.c.h.b16 %v188
    %v775 = vunpack.c.l.b16 %v189
    %v776 = vunpack.c.h.b16 %v189
    %v777 = vunpack.c.l.b16 %v190
    %v778 = vunpack.c.h.b16 %v190
    %v779 = vunpack.c.l.b16 %v191
    %v780 = vunpack.c.h.b16 %v191
    %v781 = vunpack.c.l.b16 %v192
    %v782 = vunpack.c.h.b16 %v192
    %v783 = vunpack.c.l.b16 %v193
    %v784 = vunpack.c.h.b16 %v193
    %v785 = vunpack.c.l.b16 %v194
    %v786 = vunpack.c.h.b16 %v194
    %v787 = vunpack.c.l.b16 %v195
    %v788 = vunpack.c.h.b16 %v195
    %v789 = vunpack.c.l.b16 %v196
    %v790 = vunpack.c.h.b16 %v196
    %v791 = vunpack.c.l.b16 %v197
    %v792 = vunpack.c.h.b16 %v197
    %v793 = vunpack.c.l.b16 %v198
    %v794 = vunpack.c.h.b16 %v198
    %v795 = vunpack.c.l.b16 %v199
    %v796 = vunpack.c.h.b16 %v199
    %v797 = vunpack.c.l.b16 %v200
    %v798 = vunpack.c.h.b16 %v200
    %v799 = vunpack.c.l.b16 %v201
    %v800 = vunpack.c.h.b16 %v201
    %v801 = vunpack.c.l.b16 %v202
    %v802 = vunpack.c.h.b16 %v202
    %v803 = vunpack.c.l.b16 %v203
    %v804 = vunpack.c.h.b16 %v203
    %v805 = vunpack.c.l.b16 %v204
    %v806 = vunpack.c.h.b16 %v204
    %v807 = vunpack.c.l.b16 %v205
    %v808 = vunpack.c.h.b16 %v205
    %v809 = vunpack.c.l.b16 %v206
    %v810 = vunpack.c.h.b16 %v206
    %v811 = vunpack.c.l.b16 %v207
    %v812 = vunpack.c.h.b16 %v207
    %v813 = vunpack.c.l.b16 %v208
    %v814 = vunpack.c.h.b16 %v208
    %v815 = vunpack.c.l.b16 %v209
    %v816 = vunpack.c.h.b16 %v209
    %v817 = vunpack.c.l.b16 %v210
    %v818 = vunpack.c.h.b16 %v210
    %v819 = vunpack.c.l.b16 %v211
    %v820 = vunpack.c.h.b16 %v211
    %v821 = vunpack.c.l.b16 %v212
    %v822 = vunpack.c.h.b16 %v212
    %v823 = vunpack.c.l.b16 %v213
    %v824 = vunpack.c.h.b16 %v213
    %v825 = vunpack.c.l.b16 %v214
    %v826 = vunpack.c.h.b16 %v214
    %v827 = vunpack.c.l.b16 %v215
    %v828 = vunpack.c.h.b16 %v215
    %v829 = vunpack.c.l.b16 %v216
    %v830 = vunpack.c.h.b16 %v216
    %v831 = vunpack.c.l.b16 %v217
    %v832 = vunpack.c.h.b16 %v217
    %v833 = vunpack.c.l.b16 %v218
    %v834 = vunpack.c.h.b16 %v218
    %v835 = vunpack.c.l.b16 %v219
    %v836 = vunpack.c.h.b16 %v219
    %v837 = vunpack.c.l.b16 %v220
    %v838 = vunpack.c.h.b16 %v220
    %v839 = vunpack.c.l.b16 %v221
    %v840 = vunpack.c.h.b16 %v221
    %v841 = vunpack.c.l.b16 %v222
    %v842 = vunpack.c.h.b16 %v222
    %v843 = vunpack.c.l.b16 %v223
    %v844 = vunpack.c.h.b16 %v223
    %v845 = vunpack.c.l.b16 %v224
    %v846 = vunpack.c.h.b16 %v224
    %v847 = vunpack.c.l.b16 %v225
    %v848 = vunpack.c.h.b16 %v225
    %v849 = vunpack.c.l.b16 %v226
    %v850 = vunpack.c.h.b16 %v226
    %v851 = vunpack.c.l.b16 %v227
    %v852 = vunpack.c.h.b16 %v227
    %v853 = vunpack.c.l.b16 %v228
    %v854 = vunpack.c.h.b16 %v228
    %v855 = vunpack.c.l.b16 %v229
    %v856 = vunpack.c.h.b16 %v229
    %v857 = vunpack.c.l.b16 %v230
    %v858 = vunpack.c.h.b16 %v230
    %v859 = vunpack.c.l.b16 %v231
    %v860 = vunpack.c.h.b16 %v231
    %v861 = vunpack.c.l.b16 %v232
    %v862 = vunpack.c.h.b16 %v232
    %v863 = vunpack.c.l.b16 %v233
    %v864 = vunpack.c.h.b16 %v233
    %v865 = vunpack.c.l.b16 %v234
    %v866 = vunpack.c.h.b16 %v234
    %v867 = vunpack.c.l.b16 %v235
    %v868 = vunpack.c.h.b16 %v235
    %v869 = vunpack.c.l.b16 %v236
    %v870 = vunpack.c.h.b16 %v236
    %v871 = vunpack.c.l.b16 %v237
    %v872 = vunpack.c.h.b16 %v237
    %v873 = vunpack.c.l.b16 %v238
    %v874 = vunpack.c.h.b16 %v238
    %v875 = vunpack.c.l.b16 %v239
    %v876 = vunpack.c.h.b16 %v239
    %v877 = vunpack.c.l.b16 %v240
    %v878 = vunpack.c.h.b16 %v240
    %v879 = vunpack.c.l.b16 %v241
    %v880 = vunpack.c.h.b16 %v241
    %v881 = vunpack.c.l.b16 %v242
    %v882 = vunpack.c.h.b16 %v242
    %v883 = vunpack.c.l.b16 %v243
    %v884 = vunpack.c.h.b16 %v243
    %v885 = vunpack.c.l.b16 %v244
    %v886 = vunpack.c.h.b16 %v244
    %v887 = vunpack.c.l.b16 %v245
    %v888 = vunpack.c.h.b16 %v245
    %v889 = vunpack.c.l.b16 %v246
    %v890 = vunpack.c.h.b16 %v246
    %v891 = vunpack.c.l.b16 %v247
    %v892 = vunpack.c.h.b16 %v247
    %v893 = vunpack.c.l.b16 %v248
    %v894 = vunpack.c.h.b16 %v248
    %v895 = vunpack.c.l.b16 %v249
    %v896 = vunpack.c.h.b16 %v249
    %v897 = vunpack.c.l.b16 %v250
    %v898 = vunpack.c.h.b16 %v250
    %v899 = vunpack.c.l.b16 %v251
    %v900 = vunpack.c.h.b16 %v251
    %v901 = vunpack.c.l.b16 %v252
    %v902 = vunpack.c.h.b16 %v252
    %v903 = vunpack.c.l.b16 %v253
    %v904 = vunpack.c.h.b16 %v253
    %v905 = vunpack.c.l.b16 %v254
    %v906 = vunpack.c.h.b16 %v254
    %v907 = vunpack.c.l.b16 %v255
    %v908 = vunpack.c.h.b16 %v255
    %v909 = vunpack.c.l.b16 %v256
    %v910 = vunpack.c.h.b16 %v256
    %v911 = vunpack.c.l.b16 %v257
    %v912 = vunpack.c.h.b16 %v257
    %v913 = vunpack.c.l.b16 %v258
    %v914 = vunpack.c.h.b16 %v258
    %v915 = vunpack.c.l.b16 %v259
    %v916 = vunpack.c.h.b16 %v259
    %v917 = vunpack.c.l.b16 %v260
    %v918 = vunpack.c.h.b16 %v260
    %v919 = vunpack.c.l.b16 %v261
    %v920 = vunpack.c.h.b16 %v261
    %v921 = vunpack.c.l.b16 %v262
    %v922 = vunpack.c.h.b16 %v262
    %v923 = vunpack.c.l.b16 %v263
    %v924 = vunpack.c.h.b16 %v263
    %v925 = vunpack.c.l.b16 %v264
    %v926 = vunpack.c.h.b16 %v264
    %v927 = vunpack.c.l.b16 %v265
    %v928 = vunpack.c.h.b16 %v265
    %v929 = vunpack.c.l.b16 %v266
    %v930 = vunpack.c.h.b16 %v266
    %v931 = vunpack.c.l.b16 %v267
    %v932 = vunpack.c.h.b16 %v267
    %v933 = vunpack.c.l.b16 %v268
    %v934 = vunpack.c.h.b16 %v268
    %v935 = vunpack.c.l.b16 %v269
    %v936 = vunpack.c.h.b16 %v269
    %v937 = vunpack.c.l.b16 %v270
    %v938 = vunpack.c.h.b16 %v270
    %v939 = vunpack.c.l.b16 %v271
    %v940 = vunpack.c.h.b16 %v271
    %v941 = vunpack.c.l.b16 %v272
    %v942 = vunpack.c.h.b16 %v272
    %v943 = vunpack.c.l.b16 %v273
    %v944 = vunpack.c.h.b16 %v273
    %v945 = vunpack.c.l.b16 %v274
    %v946 = vunpack.c.h.b16 %v274
    %v947 = vunpack.c.l.b16 %v275
    %v948 = vunpack.c.h.b16 %v275
    %v949 = vunpack.c.l.b16 %v276
    %v950 = vunpack.c.h.b16 %v276
    %v951 = vunpack.c.l.b16 %v277
    %v952 = vunpack.c.h.b16 %v277
    %v953 = vunpack.c.l.b16 %v278
    %v954 = vunpack.c.h.b16 %v278
    %v955 = vunpack.c.l.b16 %v279
    %v956 = vunpack.c.h.b16 %v279
    %v957 = vunpack.c.l.b16 %v280
    %v958 = vunpack.c.h.b16 %v280
    %v959 = vunpack.c.l.b16 %v281
    %v960 = vunpack.c.h.b16 %v281
    %v961 = vunpack.c.l.b16 %v282
    %v962 = vunpack.c.h.b16 %v282
    %v963 = vunpack.c.l.b16 %v283
    %v964 = vunpack.c.h.b16 %v283
    %v965 = vunpack.c.l.b16 %v284
    %v966 = vunpack.c.h.b16 %v284
    %v967 = vunpack.c.l.b16 %v285
    %v968 = vunpack.c.h.b16 %v285
    %v969 = vunpack.c.l.b16 %v286
    %v970 = vunpack.c.h.b16 %v286
    %v971 = vunpack.c.l.b16 %v287
    %v972 = vunpack.c.h.b16 %v287
    %v973 = vunpack.c.l.b16 %v288
    %v974 = vunpack.c.h.b16 %v288
    %v975 = vunpack.c.l.b16 %v289
    %v976 = vunpack.c.h.b16 %v289
    %v977 = vunpack.c.l.b16 %v290
    %v978 = vunpack.c.h.b16 %v290
    %v979 = vunpack.c.l.b16 %v291
    %v980 = vunpack.c.h.b16 %v291
    %v981 = vunpack.c.l.b16 %v292
    %v982 = vunpack.c.h.b16 %v292
    %v983 = vunpack.c.l.b16 %v293
    %v984 = vunpack.c.h.b16 %v293
    %v985 = vunpack.c.l.b16 %v294
    %v986 = vunpack.c.h.b16 %v294
    %v987 = vunpack.c.l.b16 %v295
    %v988 = vunpack.c.h.b16 %v295
    %v989 = vunpack.c.l.b16 %v296
    %v990 = vunpack.c.h.b16 %v296
    %v991 = vunpack.c.l.b16 %v297
    %v992 = vunpack.c.h.b16 %v297
    %v993 = vunpack.c.l.b16 %v298
    %v994 = vunpack.c.h.b16 %v298
    %v995 = vunpack.c.l.b16 %v299
    %v996 = vunpack.c.h.b16 %v299
    %v997 = vunpack.c.l.b16 %v300
    %v998 = vunpack.c.h.b16 %v300
    %v999 = vunpack.c.l.b16 %v301
    %v1000 = vunpack.c.h.b16 %v301
    %v1001 = vunpack.c.l.b16 %v302
    %v1002 = vunpack.c.h.b16 %v302
    %v1003 = vunpack.c.l.b16 %v303
    %v1004 = vunpack.c.h.b16 %v303
    %v1005 = vunpack.c.l.b16 %v304
    %v1006 = vunpack.c.h.b16 %v304
    %v1007 = vunpack.c.l.b16 %v305
    %v1008 = vunpack.c.h.b16 %v305
    %v1009 = vunpack.c.l.b16 %v306
    %v1010 = vunpack.c.h.b16 %v306
    %v1011 = vunpack.c.l.b16 %v307
    %v1012 = vunpack.c.h.b16 %v307
    %v1013 = vunpack.c.l.b16 %v308
    %v1014 = vunpack.c.h.b16 %v308
    %v1015 = vunpack.c.l.b16 %v309
    %v1016 = vunpack.c.h.b16 %v309
    %v1017 = vunpack.c.l.b16 %v310
    %v1018 = vunpack.c.h.b16 %v310
    %v1019 = vunpack.c.l.b16 %v311
    %v1020 = vunpack.c.h.b16 %v311
    %v1021 = vunpack.c.l.b16 %v312
    %v1022 = vunpack.c.h.b16 %v312
    %v1023 = vunpack.c.l.b16 %v313
    %v1024 = vunpack.c.h.b16 %v313
    %v1025 = vunpack.c.l.b16 %v314
    %v1026 = vunpack.c.h.b16 %v314
    %v1027 = vunpack.c.l.b16 %v315
    %v1028 = vunpack.c.h.b16 %v315
    %v1029 = vunpack.c.l.b16 %v316
    %v1030 = vunpack.c.h.b16 %v316
    %v1031 = vunpack.c.l.b16 %v317
    %v1032 = vunpack.c.h.b16 %v317
    %v1033 = vunpack.c.l.b16 %v318
    %v1034 = vunpack.c.h.b16 %v318
    %v1035 = vunpack.c.l.b16 %v319
    %v1036 = vunpack.c.h.b16 %v319
    %v1037 = vunpack.c.l.b16 %v320
    %v1038 = vunpack.c.h.b16 %v320
    %v1039 = vunpack.c.l.b16 %v321
    %v1040 = vunpack.c.h.b16 %v321
    %v1041 = vunpack.c.l.b16 %v322
    %v1042 = vunpack.c.h.b16 %v322
    %v1043 = vunpack.c.l.b16 %v323
    %v1044 = vunpack.c.h.b16 %v323
    %v1045 = vunpack.c.l.b16 %v324
    %v1046 = vunpack.c.h.b16 %v324
    %v1047 = vunpack.c.l.b16 %v325
    %v1048 = vunpack.c.h.b16 %v325
    %v1049 = vunpack.c.l.b16 %v326
    %v1050 = vunpack.c.h.b16 %v326
    %v1051 = vunpack.c.l.b16 %v327
    %v1052 = vunpack.c.h.b16 %v327
    %v1053 = vunpack.c.l.b16 %v328
    %v1054 = vunpack.c.h.b16 %v328
    %v1055 = vunpack.c.l.b16 %v329
    %v1056 = vunpack.c.h.b16 %v329
    %v1057 = vunpack.c.l.b16 %v330
    %v1058 = vunpack.c.h.b16 %v330
    %v1059 = vunpack.c.l.b16 %v331
    %v1060 = vunpack.c.h.b16 %v331
    %v1061 = vunpack.c.l.b16 %v332
    %v1062 = vunpack.c.h.b16 %v332
    %v1063 = vunpack.c.l.b16 %v333
    %v1064 = vunpack.c.h.b16 %v333
    %v1065 = vunpack.c.l.b16 %v334
    %v1066 = vunpack.c.h.b16 %v334
    %v1067 = vunpack.c.l.b16 %v335
    %v1068 = vunpack.c.h.b16 %v335
    %v1069 = vunpack.c.l.b16 %v336
    %v1070 = vunpack.c.h.b16 %v336
    %v1071 = vunpack.c.l.b16 %v337
    %v1072 = vunpack.c.h.b16 %v337
    %v1073 = vunpack.c.l.b16 %v338
    %v1074 = vunpack.c.h.b16 %v338
    %v1075 = vunpack.c.l.b16 %v339
    %v1076 = vunpack.c.h.b16 %v339
    %v1077 = vunpack.c.l.b16 %v340
    %v1078 = vunpack.c.h.b16 %v340
    %v1079 = vunpack.c.l.b16 %v341
    %v1080 = vunpack.c.h.b16 %v341
    %v1081 = vunpack.c.l.b16 %v342
    %v1082 = vunpack.c.h.b16 %v342
    %v1083 = vunpack.c.l.b16 %v343
    %v1084 = vunpack.c.h.b16 %v343
    %v1085 = vunpack.c.l.b16 %v344
    %v1086 = vunpack.c.h.b16 %v344
    %v1087 = vunpack.c.l.b16 %v345
    %v1088 = vunpack.c.h.b16 %v345
    %v1089 = vunpack.c.l.b16 %v346
    %v1090 = vunpack.c.h.b16 %v346
    %v1091 = vunpack.c.l.b16 %v347
    %v1092 = vunpack.c.h.b16 %v347
    %v1093 = vunpack.c.l.b16 %v348
    %v1094 = vunpack.c.h.b16 %v348
    %v1095 = vunpack.c.l.b16 %v349
    %v1096 = vunpack.c.h.b16 %v349
    %v1097 = vunpack.c.l.b16 %v350
    %v1098 = vunpack.c.h.b16 %v350
    %v1099 = vunpack.c.l.b16 %v351
    %v1100 = vunpack.c.h.b16 %v351
    %v1101 = vunpack.c.l.b16 %v352
    %v1102 = vunpack.c.h.b16 %v352
    %v1103 = vunpack.c.l.b16 %v353
    %v1104 = vunpack.c.h.b16 %v353
    %v1105 = vunpack.c.l.b16 %v354
    %v1106 = vunpack.c.h.b16 %v354
    %v1107 = vunpack.c.l.b16 %v355
    %v1108 = vunpack.c.h.b16 %v355
    %v1109 = vunpack.c.l.b16 %v356
    %v1110 = vunpack.c.h.b16 %v356
    %v1111 = vunpack.c.l.b16 %v357
    %v1112 = vunpack.c.h.b16 %v357
    %v1113 = vunpack.c.l.b16 %v358
    %v1114 = vunpack.c.h.b16 %v358
    %v1115 = vunpack.c.l.b16 %v359
    %v1116 = vunpack.c.h.b16 %v359
    %v1117 = vunpack.c.l.b16 %v360
    %v1118 = vunpack.c.h.b16 %v360
    %v1119 = vunpack.c.l.b16 %v361
    %v1120 = vunpack.c.h.b16 %v361
    %v1121 = vunpack.c.l.b16 %v362
    %v1122 = vunpack.c.h.b16 %v362
    %v1123 = vunpack.c.l.b16 %v363
    %v1124 = vunpack.c.h.b16 %v363
    %v1125 = vunpack.c.l.b16 %v364
    %v1126 = vunpack.c.h.b16 %v364
    %v1127 = vunpack.c.l.b16 %v365
    %v1128 = vunpack.c.h.b16 %v365
    %v1129 = vunpack.c.l.b16 %v366
    %v1130 = vunpack.c.h.b16 %v366
    %v1131 = vunpack.c.l.b16 %v367
    %v1132 = vunpack.c.h.b16 %v367
    %v1133 = vunpack.c.l.b16 %v368
    %v1134 = vunpack.c.h.b16 %v368
    %v1135 = vunpack.c.l.b16 %v369
    %v1136 = vunpack.c.h.b16 %v369
    %v1137 = vunpack.c.l.b16 %v370
    %v1138 = vunpack.c.h.b16 %v370
    %v1139 = vunpack.c.l.b16 %v371
    %v1140 = vunpack.c.h.b16 %v371
    %v1141 = vunpack.c.l.b16 %v372
    %v1142 = vunpack.c.h.b16 %v372
    %v1143 = vunpack.c.l.b16 %v373
    %v1144 = vunpack.c.h.b16 %v373
    %v1145 = vunpack.c.l.b16 %v374
    %v1146 = vunpack.c.h.b16 %v374
    %v1147 = vunpack.c.l.b16 %v375
    %v1148 = vunpack.c.h.b16 %v375
    %v1149 = vunpack.c.l.b16 %v376
    %v1150 = vunpack.c.h.b16 %v376
    %v1151 = vunpack.c.l.b16 %v377
    %v1152 = vunpack.c.h.b16 %v377
    %v1153 = vunpack.c.l.b16 %v378
    %v1154 = vunpack.c.h.b16 %v378
    %v1155 = vunpack.c.l.b16 %v379
    %v1156 = vunpack.c.h.b16 %v379
    %v1157 = vunpack.c.l.b16 %v380
    %v1158 = vunpack.c.h.b16 %v380
    %v1159 = vunpack.c.l.b16 %v381
    %v1160 = vunpack.c.h.b16 %v381
    %v1161 = vunpack.c.l.b16 %v382
    %v1162 = vunpack.c.h.b16 %v382
    %v1163 = vunpack.c.l.b16 %v383
    %v1164 = vunpack.c.h.b16 %v383
    %v1165 = vunpack.c.l.b16 %v384
    %v1166 = vunpack.c.h.b16 %v384
    %v1167 = vunpack.c.l.b16 %v385
    %v1168 = vunpack.c.h.b16 %v385
    %v1169 = vunpack.c.l.b16 %v386
    %v1170 = vunpack.c.h.b16 %v386
    %v1171 = vunpack.c.l.b16 %v387
    %v1172 = vunpack.c.h.b16 %v387
    %v1173 = vunpack.c.l.b16 %v388
    %v1174 = vunpack.c.h.b16 %v388
    %v1175 = vunpack.c.l.b16 %v389
    %v1176 = vunpack.c.h.b16 %v389
    %v1177 = vunpack.c.l.b16 %v390
    %v1178 = vunpack.c.h.b16 %v390
    %v1179 = vunpack.c.l.b16 %v391
    %v1180 = vunpack.c.h.b16 %v391
    %v1181 = vunpack.c.l.b16 %v392
    %v1182 = vunpack.c.h.b16 %v392
    %v1183 = vpack.c.b16 %v675, %v671
    %v1184 = vpack.c.b16 %v676, %v672
    %v1185 = vpack.c.b16 %v677, %v673
    %v1186 = vpack.c.b16 %v678, %v674
    %v1187 = vpack.c.b16 %v683, %v679
    %v1188 = vpack.c.b16 %v684, %v680
    %v1189 = vpack.c.b16 %v685, %v681
    %v1190 = vpack.c.b16 %v686, %v682
    %v1191 = vpack.c.b16 %v691, %v687
    %v1192 = vpack.c.b16 %v692, %v688
    %v1193 = vpack.c.b16 %v693, %v689
    %v1194 = vpack.c.b16 %v694, %v690
    %v1195 = vpack.c.b16 %v699, %v695
    %v1196 = vpack.c.b16 %v700, %v696
    %v1197 = vpack.c.b16 %v701, %v697
    %v1198 = vpack.c.b16 %v702, %v698
    %v1199 = vpack.c.b16 %v707, %v703
    %v1200 = vpack.c.b16 %v708, %v704
    %v1201 = vpack.c.b16 %v709, %v705
    %v1202 = vpack.c.b16 %v710, %v706
    %v1203 = vpack.c.b16 %v715, %v711
    %v1204 = vpack.c.b16 %v716, %v712
    %v1205 = vpack.c.b16 %v717, %v713
    %v1206 = vpack.c.b16 %v718, %v714
    %v1207 = vpack.c.b16 %v723, %v719
    %v1208 = vpack.c.b16 %v724, %v720
    %v1209 = vpack.c.b16 %v725, %v721
    %v1210 = vpack.c.b16 %v726, %v722
    %v1211 = vpack.c.b16 %v731, %v727
    %v1212 = vpack.c.b16 %v732, %v728
    %v1213 = vpack.c.b16 %v733, %v729
    %v1214 = vpack.c.b16 %v734, %v730
    %v1215 = vpack.c.b16 %v739, %v735
    %v1216 = vpack.c.b16 %v740, %v736
    %v1217 = vpack.c.b16 %v741, %v737
    %v1218 = vpack.c.b16 %v742, %v738
    %v1219 = vpack.c.b16 %v747, %v743
    %v1220 = vpack.c.b16 %v748, %v744
    %v1221 = vpack.c.b16 %v749, %v745
    %v1222 = vpack.c.b16 %v750, %v746
    %v1223 = vpack.c.b16 %v755, %v751
    %v1224 = vpack.c.b16 %v756, %v752
    %v1225 = vpack.c.b16 %v757, %v753
    %v1226 = vpack.c.b16 %v758, %v754
    %v1227 = vpack.c.b16 %v763, %v759
    %v1228 = vpack.c.b16 %v764, %v760
    %v1229 = vpack.c.b16 %v765, %v761
    %v1230 = vpack.c.b16 %v766, %v762
    %v1231 = vpack.c.b16 %v771, %v767
    %v1232 = vpack.c.b16 %v772, %v768
    %v1233 = vpack.c.b16 %v773, %v769
    %v1234 = vpack.c.b16 %v774, %v770
    %v1235 = vpack.c.b16 %v779, %v775
    %v1236 = vpack.c.b16 %v780, %v776
    %v1237 = vpack.c.b16 %v781, %v777
    %v1238 = vpack.c.b16 %v782, %v778
    %v1239 = vpack.c.b16 %v787, %v783
    %v1240 = vpack.c.b16 %v788, %v784
    %v1241 = vpack.c.b16 %v789, %v785
    %v1242 = vpack.c.b16 %v790, %v786
    %v1243 = vpack.c.b16 %v795, %v791
    %v1244 = vpack.c.b16 %v796, %v792
    %v1245 = vpack.c.b16 %v797, %v793
    %v1246 = vpack.c.b16 %v798, %v794
    %v1247 = vpack.c.b16 %v803, %v799
    %v1248 = vpack.c.b16 %v804, %v800
    %v1249 = vpack.c.b16 %v805, %v801
    %v1250 = vpack.c.b16 %v806, %v802
    %v1251 = vpack.c.b16 %v811, %v807
    %v1252 = vpack.c.b16 %v812, %v808
    %v1253 = vpack.c.b16 %v813, %v809
    %v1254 = vpack.c.b16 %v814, %v810
    %v1255 = vpack.c.b16 %v819, %v815
    %v1256 = vpack.c.b16 %v820, %v816
    %v1257 = vpack.c.b16 %v821, %v817
    %v1258 = vpack.c.b16 %v822, %v818
    %v1259 = vpack.c.b16 %v827, %v823
    %v1260 = vpack.c.b16 %v828, %v824
    %v1261 = vpack.c.b16 %v829, %v825
    %v1262 = vpack.c.b16 %v830, %v826
    %v1263 = vpack.c.b16 %v835, %v831
    %v1264 = vpack.c.b16 %v836, %v832
    %v1265 = vpack.c.b16 %v837, %v833
    %v1266 = vpack.c.b16 %v838, %v834
    %v1267 = vpack.c.b16 %v843, %v839
    %v1268 = vpack.c.b16 %v844, %v840
    %v1269 = vpack.c.b16 %v845, %v841
    %v1270 = vpack.c.b16 %v846, %v842
    %v1271 = vpack.c.b16 %v851, %v847
    %v1272 = vpack.c.b16 %v852, %v848
    %v1273 = vpack.c.b16 %v853, %v849
    %v1274 = vpack.c.b16 %v854, %v850
    %v1275 = vpack.c.b16 %v859, %v855
    %v1276 = vpack.c.b16 %v860, %v856
    %v1277 = vpack.c.b16 %v861, %v857
    %v1278 = vpack.c.b16 %v862, %v858
    %v1279 = vpack.c.b16 %v867, %v863
    %v1280 = vpack.c.b16 %v868, %v864
    %v1281 = vpack.c.b16 %v869, %v865
    %v1282 = vpack.c.b16 %v870, %v866
    %v1283 = vpack.c.b16 %v875, %v871
    %v1284 = vpack.c.b16 %v876, %v872
    %v1285 = vpack.c.b16 %v877, %v873
    %v1286 = vpack.c.b16 %v878, %v874
    %v1287 = vpack.c.b16 %v883, %v879
    %v1288 = vpack.c.b16 %v884, %v880
    %v1289 = vpack.c.b16 %v885, %v881
    %v1290 = vpack.c.b16 %v886, %v882
    %v1291 = vpack.c.b16 %v891, %v887
    %v1292 = vpack.c.b16 %v892, %v888
    %v1293 = vpack.c.b16 %v893, %v889
    %v1294 = vpack.c.b16 %v894, %v890
    %v1295 = vpack.c.b16 %v899, %v895
    %v1296 = vpack.c.b16 %v900, %v896
    %v1297 = vpack.c.b16 %v901, %v897
    %v1298 = vpack.c.b16 %v902, %v898
    %v1299 = vpack.c.b16 %v907, %v903
    %v1300 = vpack.c.b16 %v908, %v904
    %v1301 = vpack.c.b16 %v909, %v905
    %v1302 = vpack.c.b16 %v910, %v906
    %v1303 = vpack.c.b16 %v915, %v911
    %v1304 = vpack.c.b16 %v916, %v912
    %v1305 = vpack.c.b16 %v917, %v913
    %v1306 = vpack.c.b16 %v918, %v914
    %v1307 = vpack.c.b16 %v923, %v919
    %v1308 = vpack.c.b16 %v924, %v920
    %v1309 = vpack.c.b16 %v925, %v921
    %v1310 = vpack.c.b16 %v926, %v922
    %v1311 = vpack.c.b16 %v931, %v927
    %v1312 = vpack.c.b16 %v932, %v928
    %v1313 = vpack.c.b16 %v933, %v929
    %v1314 = vpack.c.b16 %v934, %v930
    %v1315 = vpack.c.b16 %v939, %v935
    %v1316 = vpack.c.b16 %v940, %v936
    %v1317 = vpack.c.b16 %v941, %v937
    %v1318 = vpack.c.b16 %v942, %v938
    %v1319 = vpack.c.b16 %v947, %v943
    %v1320 = vpack.c.b16 %v948, %v944
    %v1321 = vpack.c.b16 %v949, %v945
    %v1322 = vpack.c.b16 %v950, %v946
    %v1323 = vpack.c.b16 %v955, %v951
    %v1324 = vpack.c.b16 %v956, %v952
    %v1325 = vpack.c.b16 %v957, %v953
    %v1326 = vpack.c.b16 %v958, %v954
    %v1327 = vpack.c.b16 %v963, %v959
    %v1328 = vpack.c.b16 %v964, %v960
    %v1329 = vpack.c.b16 %v965, %v961
    %v1330 = vpack.c.b16 %v966, %v962
    %v1331 = vpack.c.b16 %v971, %v967
    %v1332 = vpack.c.b16 %v972, %v968
    %v1333 = vpack.c.b16 %v973, %v969
    %v1334 = vpack.c.b16 %v974, %v970
    %v1335 = vpack.c.b16 %v979, %v975
    %v1336 = vpack.c.b16 %v980, %v976
    %v1337 = vpack.c.b16 %v981, %v977
    %v1338 = vpack.c.b16 %v982, %v978
    %v1339 = vpack.c.b16 %v987, %v983
    %v1340 = vpack.c.b16 %v988, %v984
    %v1341 = vpack.c.b16 %v989, %v985
    %v1342 = vpack.c.b16 %v990, %v986
    %v1343 = vpack.c.b16 %v995, %v991
    %v1344 = vpack.c.b16 %v996, %v992
    %v1345 = vpack.c.b16 %v997, %v993
    %v1346 = vpack.c.b16 %v998, %v994
    %v1347 = vpack.c.b16 %v1003, %v999
    %v1348 = vpack.c.b16 %v1004, %v1000
    %v1349 = vpack.c.b16 %v1005, %v1001
    %v1350 = vpack.c.b16 %v1006, %v1002
    %v1351 = vpack.c.b16 %v1011, %v1007
    %v1352 = vpack.c.b16 %v1012, %v1008
    %v1353 = vpack.c.b16 %v1013, %v1009
    %v1354 = vpack.c.b16 %v1014, %v1010
    %v1355 = vpack.c.b16 %v1019, %v1015
    %v1356 = vpack.c.b16 %v1020, %v1016
    %v1357 = vpack.c.b16 %v1021, %v1017
    %v1358 = vpack.c.b16 %v1022, %v1018
    %v1359 = vpack.c.b16 %v1027, %v1023
    %v1360 = vpack.c.b16 %v1028, %v1024
    %v1361 = vpack.c.b16 %v1029, %v1025
    %v1362 = vpack.c.b16 %v1030, %v1026
    %v1363 = vpack.c.b16 %v1035, %v1031
    %v1364 = vpack.c.b16 %v1036, %v1032
    %v1365 = vpack.c.b16 %v1037, %v1033
    %v1366 = vpack.c.b16 %v1038, %v1034
    %v1367 = vpack.c.b16 %v1043, %v1039
    %v1368 = vpack.c.b16 %v1044, %v1040
    %v1369 = vpack.c.b16 %v1045, %v1041
    %v1370 = vpack.c.b16 %v1046, %v1042
    %v1371 = vpack.c.b16 %v1051, %v1047
    %v1372 = vpack.c.b16 %v1052, %v1048
    %v1373 = vpack.c.b16 %v1053, %v1049
    %v1374 = vpack.c.b16 %v1054, %v1050
    %v1375 = vpack.c.b16 %v1059, %v1055
    %v1376 = vpack.c.b16 %v1060, %v1056
    %v1377 = vpack.c.b16 %v1061, %v1057
    %v1378 = vpack.c.b16 %v1062, %v1058
    %v1379 = vpack.c.b16 %v1067, %v1063
    %v1380 = vpack.c.b16 %v1068, %v1064
    %v1381 = vpack.c.b16 %v1069, %v1065
    %v1382 = vpack.c.b16 %v1070, %v1066
    %v1383 = vpack.c.b16 %v1075, %v1071
    %v1384 = vpack.c.b16 %v1076, %v1072
    %v1385 = vpack.c.b16 %v1077, %v1073
    %v1386 = vpack.c.b16 %v1078, %v1074
    %v1387 = vpack.c.b16 %v1083, %v1079
    %v1388 = vpack.c.b16 %v1084, %v1080
    %v1389 = vpack.c.b16 %v1085, %v1081
    %v1390 = vpack.c.b16 %v1086, %v1082
    %v1391 = vpack.c.b16 %v1091, %v1087
    %v1392 = vpack.c.b16 %v1092, %v1088
    %v1393 = vpack.c.b16 %v1093, %v1089
    %v1394 = vpack.c.b16 %v1094, %v1090
    %v1395 = vpack.c.b16 %v1099, %v1095
    %v1396 = vpack.c.b16 %v1100, %v1096
    %v1397 = vpack.c.b16 %v1101, %v1097
    %v1398 = vpack.c.b16 %v1102, %v1098
    %v1399 = vpack.c.b16 %v1107, %v1103
    %v1400 = vpack.c.b16 %v1108, %v1104
    %v1401 = vpack.c.b16 %v1109, %v1105
    %v1402 = vpack.c.b16 %v1110, %v1106
    %v1403 = vpack.c.b16 %v1115, %v1111
    %v1404 = vpack.c.b16 %v1116, %v1112
    %v1405 = vpack.c.b16 %v1117, %v1113
    %v1406 = vpack.c.b16 %v1118, %v1114
    %v1407 = vpack.c.b16 %v1123, %v1119
    %v1408 = vpack.c.b16 %v1124, %v1120
    %v1409 = vpack.c.b16 %v1125, %v1121
    %v1410 = vpack.c.b16 %v1126, %v1122
    %v1411 = vpack.c.b16 %v1131, %v1127
    %v1412 = vpack.c.b16 %v1132, %v1128
    %v1413 = vpack.c.b16 %v1133, %v1129
    %v1414 = vpack.c.b16 %v1134, %v1130
    %v1415 = vpack.c.b16 %v1139, %v1135
    %v1416 = vpack.c.b16 %v1140, %v1136
    %v1417 = vpack.c.b16 %v1141, %v1137
    %v1418 = vpack.c.b16 %v1142, %v1138
    %v1419 = vpack.c.b16 %v1147, %v1143
    %v1420 = vpack.c.b16 %v1148, %v1144
    %v1421 = vpack.c.b16 %v1149, %v1145
    %v1422 = vpack.c.b16 %v1150, %v1146
    %v1423 = vpack.c.b16 %v1155, %v1151
    %v1424 = vpack.c.b16 %v1156, %v1152
    %v1425 = vpack.c.b16 %v1157, %v1153
    %v1426 = vpack.c.b16 %v1158, %v1154
    %v1427 = vpack.c.b16 %v1163, %v1159
    %v1428 = vpack.c.b16 %v1164, %v1160
    %v1429 = vpack.c.b16 %v1165, %v1161
    %v1430 = vpack.c.b16 %v1166, %v1162
    %v1431 = vpack.c.b16 %v1171, %v1167
    %v1432 = vpack.c.b16 %v1172, %v1168
    %v1433 = vpack.c.b16 %v1173, %v1169
    %v1434 = vpack.c.b16 %v1174, %v1170
    %v1435 = vpack.c.b16 %v1179, %v1175
    %v1436 = vpack.c.b16 %v1180, %v1176
    %v1437 = vpack.c.b16 %v1181, %v1177
    %v1438 = vpack.c.b16 %v1182, %v1178
    %1695 = vmatprep.subr.bf16.mxu0 %v1184
    %1696 = vmatpush1.bf16.msra.mxu0 %v1183
    %1697 = vmatprep.subr.bf16.mxu0 %v1188
    %1698 = vmatpush1.bf16.msra.mxu0 %v1187
    %1699 = vmatprep.subr.bf16.mxu0 %v1192
    %1700 = vmatpush1.bf16.msra.mxu0 %v1191
    %1701 = vmatprep.subr.bf16.mxu0 %v1196
    %1702 = vmatpush1.bf16.msra.mxu0 %v1195
    %1703 = vmatprep.subr.bf16.mxu0 %v1200
    %1704 = vmatpush1.bf16.msra.mxu0 %v1199
    %1705 = vmatprep.subr.bf16.mxu0 %v1204
    %1706 = vmatpush1.bf16.msra.mxu0 %v1203
    %1707 = vmatprep.subr.bf16.mxu0 %v1208
    %1708 = vmatpush1.bf16.msra.mxu0 %v1207
    %1709 = vmatprep.subr.bf16.mxu0 %v1212
    %1710 = vmatpush1.bf16.msra.mxu0 %v1211
    %1711 = vmatprep.subr.bf16.mxu0 %v1216
    %1712 = vmatpush1.bf16.msra.mxu0 %v1215
    %1713 = vmatprep.subr.bf16.mxu0 %v1220
    %1714 = vmatpush1.bf16.msra.mxu0 %v1219
    %1715 = vmatprep.subr.bf16.mxu0 %v1224
    %1716 = vmatpush1.bf16.msra.mxu0 %v1223
    %1717 = vmatprep.subr.bf16.mxu0 %v1228
    %1718 = vmatpush1.bf16.msra.mxu0 %v1227
    %1719 = vmatprep.subr.bf16.mxu0 %v1232
    %1720 = vmatpush1.bf16.msra.mxu0 %v1231
    %1721 = vmatprep.subr.bf16.mxu0 %v1236
    %1722 = vmatpush1.bf16.msra.mxu0 %v1235
    %1723 = vmatprep.subr.bf16.mxu0 %v1240
    %1724 = vmatpush1.bf16.msra.mxu0 %v1239
    %1725 = vmatprep.subr.bf16.mxu0 %v1244
    %1726 = vmatpush1.bf16.msra.mxu0 %v1243
    %1727 = vmatprep.mubr.bf16.mxu0 %v130
    %1728 = vmatmul.mubr.bf16.gmra.mrb[0].mxu0 %v129
    %v1729 = vpop.f32.mrb[0].mxu0
    %v1730 = vadd.f32 %v398, %v1729
    %v1731 = vpop.f32.mrb[0].mxu0
    %v1732 = vadd.f32 %v402, %v1731
    %v1733 = vpop.f32.mrb[0].mxu0
    %v1734 = vpop.f32.mrb[0].mxu0
    %1735 = vdwg.mxu0
    %1736 = vmatprep.subr.bf16.mxu0 %v1248
    %1737 = vmatpush1.bf16.msra.mxu0 %v1247
    %1738 = vmatprep.subr.bf16.mxu0 %v1252
    %1739 = vmatpush1.bf16.msra.mxu0 %v1251
    %1740 = vmatprep.subr.bf16.mxu0 %v1256
    %1741 = vmatpush1.bf16.msra.mxu0 %v1255
    %1742 = vmatprep.subr.bf16.mxu0 %v1260
    %1743 = vmatpush1.bf16.msra.mxu0 %v1259
    %1744 = vmatprep.subr.bf16.mxu0 %v1264
    %1745 = vmatpush1.bf16.msra.mxu0 %v1263
    %1746 = vmatprep.subr.bf16.mxu0 %v1268
    %1747 = vmatpush1.bf16.msra.mxu0 %v1267
    %1748 = vmatprep.subr.bf16.mxu0 %v1272
    %1749 = vmatpush1.bf16.msra.mxu0 %v1271
    %1750 = vmatprep.subr.bf16.mxu0 %v1276
    %1751 = vmatpush1.bf16.msra.mxu0 %v1275
    %1752 = vmatprep.subr.bf16.mxu0 %v1280
    %1753 = vmatpush1.bf16.msra.mxu0 %v1279
    %1754 = vmatprep.subr.bf16.mxu0 %v1284
    %1755 = vmatpush1.bf16.msra.mxu0 %v1283
    %1756 = vmatprep.subr.bf16.mxu0 %v1288
    %1757 = vmatpush1.bf16.msra.mxu0 %v1287
    %1758 = vmatprep.subr.bf16.mxu0 %v1292
    %1759 = vmatpush1.bf16.msra.mxu0 %v1291
    %1760 = vmatprep.subr.bf16.mxu0 %v1296
    %1761 = vmatpush1.bf16.msra.mxu0 %v1295
    %1762 = vmatprep.subr.bf16.mxu0 %v1300
    %1763 = vmatpush1.bf16.msra.mxu0 %v1299
    %1764 = vmatprep.subr.bf16.mxu0 %v1304
    %1765 = vmatpush1.bf16.msra.mxu0 %v1303
    %1766 = vmatprep.subr.bf16.mxu0 %v1308
    %1767 = vmatpush1.bf16.msra.mxu0 %v1307
    %1768 = vmatprep.mubr.bf16.mxu0 %v132
    %1769 = vmatmul.mubr.bf16.gmra.mrb[0].mxu0 %v131
    %v1770 = vpop.f32.mrb[0].mxu0
    %v1771 = vadd.f32 %v1730, %v1770
    %v1772 = vpop.f32.mrb[0].mxu0
    %v1773 = vadd.f32 %v1732, %v1772
    %v1774 = vpop.f32.mrb[0].mxu0
    %v1775 = vpop.f32.mrb[0].mxu0
    %1776 = vdwg.mxu0
    %1777 = vmatprep.subr.bf16.mxu0 %v1312
    %1778 = vmatpush1.bf16.msra.mxu0 %v1311
    %1779 = vmatprep.subr.bf16.mxu0 %v1316
    %1780 = vmatpush1.bf16.msra.mxu0 %v1315
    %1781 = vmatprep.subr.bf16.mxu0 %v1320
    %1782 = vmatpush1.bf16.msra.mxu0 %v1319
    %1783 = vmatprep.subr.bf16.mxu0 %v1324
    %1784 = vmatpush1.bf16.msra.mxu0 %v1323
    %1785 = vmatprep.subr.bf16.mxu0 %v1328
    %1786 = vmatpush1.bf16.msra.mxu0 %v1327
    %1787 = vmatprep.subr.bf16.mxu0 %v1332
    %1788 = vmatpush1.bf16.msra.mxu0 %v1331
    %1789 = vmatprep.subr.bf16.mxu0 %v1336
    %1790 = vmatpush1.bf16.msra.mxu0 %v1335
    %1791 = vmatprep.subr.bf16.mxu0 %v1340
    %1792 = vmatpush1.bf16.msra.mxu0 %v1339
    %1793 = vmatprep.subr.bf16.mxu0 %v1344
    %1794 = vmatpush1.bf16.msra.mxu0 %v1343
    %1795 = vmatprep.subr.bf16.mxu0 %v1348
    %1796 = vmatpush1.bf16.msra.mxu0 %v1347
    %1797 = vmatprep.subr.bf16.mxu0 %v1352
    %1798 = vmatpush1.bf16.msra.mxu0 %v1351
    %1799 = vmatprep.subr.bf16.mxu0 %v1356
    %1800 = vmatpush1.bf16.msra.mxu0 %v1355
    %1801 = vmatprep.subr.bf16.mxu0 %v1360
    %1802 = vmatpush1.bf16.msra.mxu0 %v1359
    %1803 = vmatprep.subr.bf16.mxu0 %v1364
    %1804 = vmatpush1.bf16.msra.mxu0 %v1363
    %1805 = vmatprep.subr.bf16.mxu0 %v1368
    %1806 = vmatpush1.bf16.msra.mxu0 %v1367
    %1807 = vmatprep.subr.bf16.mxu0 %v1372
    %1808 = vmatpush1.bf16.msra.mxu0 %v1371
    %1809 = vmatprep.mubr.bf16.mxu0 %v134
    %1810 = vmatmul.mubr.bf16.gmra.mrb[0].mxu0 %v133
    %v1811 = vpop.f32.mrb[0].mxu0
    %v1812 = vadd.f32 %v1771, %v1811
    %v1813 = vpop.f32.mrb[0].mxu0
    %v1814 = vadd.f32 %v1773, %v1813
    %v1815 = vpop.f32.mrb[0].mxu0
    %v1816 = vpop.f32.mrb[0].mxu0
    %1817 = vdwg.mxu0
    %1818 = vmatprep.subr.bf16.mxu0 %v1376
    %1819 = vmatpush1.bf16.msra.mxu0 %v1375
    %1820 = vmatprep.subr.bf16.mxu0 %v1380
    %1821 = vmatpush1.bf16.msra.mxu0 %v1379
    %1822 = vmatprep.subr.bf16.mxu0 %v1384
    %1823 = vmatpush1.bf16.msra.mxu0 %v1383
    %1824 = vmatprep.subr.bf16.mxu0 %v1388
    %1825 = vmatpush1.bf16.msra.mxu0 %v1387
    %1826 = vmatprep.subr.bf16.mxu0 %v1392
    %1827 = vmatpush1.bf16.msra.mxu0 %v1391
    %1828 = vmatprep.subr.bf16.mxu0 %v1396
    %1829 = vmatpush1.bf16.msra.mxu0 %v1395
    %1830 = vmatprep.subr.bf16.mxu0 %v1400
    %1831 = vmatpush1.bf16.msra.mxu0 %v1399
    %1832 = vmatprep.subr.bf16.mxu0 %v1404
    %1833 = vmatpush1.bf16.msra.mxu0 %v1403
    %1834 = vmatprep.subr.bf16.mxu0 %v1408
    %1835 = vmatpush1.bf16.msra.mxu0 %v1407
    %1836 = vmatprep.subr.bf16.mxu0 %v1412
    %1837 = vmatpush1.bf16.msra.mxu0 %v1411
    %1838 = vmatprep.subr.bf16.mxu0 %v1416
    %1839 = vmatpush1.bf16.msra.mxu0 %v1415
    %1840 = vmatprep.subr.bf16.mxu0 %v1420
    %1841 = vmatpush1.bf16.msra.mxu0 %v1419
    %1842 = vmatprep.subr.bf16.mxu0 %v1424
    %1843 = vmatpush1.bf16.msra.mxu0 %v1423
    %1844 = vmatprep.subr.bf16.mxu0 %v1428
    %1845 = vmatpush1.bf16.msra.mxu0 %v1427
    %1846 = vmatprep.subr.bf16.mxu0 %v1432
    %1847 = vmatpush1.bf16.msra.mxu0 %v1431
    %1848 = vmatprep.subr.bf16.mxu0 %v1436
    %1849 = vmatpush1.bf16.msra.mxu0 %v1435
    %1850 = vmatprep.mubr.bf16.mxu0 %v136
    %1851 = vmatmul.mubr.bf16.gmra.mrb[0].mxu0 %v135
    %v1852 = vpop.f32.mrb[0].mxu0
    %v1853 = vadd.f32 %v1812, %v1852
    %v1854 = vpop.f32.mrb[0].mxu0
    %v1855 = vadd.f32 %v1814, %v1854
    %v1856 = vpop.f32.mrb[0].mxu0
    %v1857 = vpop.f32.mrb[0].mxu0
    %1858 = vdwg.mxu0
    %1859 = vmatprep.subr.bf16.mxu0 %v1186
    %1860 = vmatpush1.bf16.msra.mxu0 %v1185
    %1861 = vmatprep.subr.bf16.mxu0 %v1190
    %1862 = vmatpush1.bf16.msra.mxu0 %v1189
    %1863 = vmatprep.subr.bf16.mxu0 %v1194
    %1864 = vmatpush1.bf16.msra.mxu0 %v1193
    %1865 = vmatprep.subr.bf16.mxu0 %v1198
    %1866 = vmatpush1.bf16.msra.mxu0 %v1197
    %1867 = vmatprep.subr.bf16.mxu0 %v1202
    %1868 = vmatpush1.bf16.msra.mxu0 %v1201
    %1869 = vmatprep.subr.bf16.mxu0 %v1206
    %1870 = vmatpush1.bf16.msra.mxu0 %v1205
    %1871 = vmatprep.subr.bf16.mxu0 %v1210
    %1872 = vmatpush1.bf16.msra.mxu0 %v1209
    %1873 = vmatprep.subr.bf16.mxu0 %v1214
    %1874 = vmatpush1.bf16.msra.mxu0 %v1213
    %1875 = vmatprep.subr.bf16.mxu0 %v1218
    %1876 = vmatpush1.bf16.msra.mxu0 %v1217
    %1877 = vmatprep.subr.bf16.mxu0 %v1222
    %1878 = vmatpush1.bf16.msra.mxu0 %v1221
    %1879 = vmatprep.subr.bf16.mxu0 %v1226
    %1880 = vmatpush1.bf16.msra.mxu0 %v1225
    %1881 = vmatprep.subr.bf16.mxu0 %v1230
    %1882 = vmatpush1.bf16.msra.mxu0 %v1229
    %1883 = vmatprep.subr.bf16.mxu0 %v1234
    %1884 = vmatpush1.bf16.msra.mxu0 %v1233
    %1885 = vmatprep.subr.bf16.mxu0 %v1238
    %1886 = vmatpush1.bf16.msra.mxu0 %v1237
    %1887 = vmatprep.subr.bf16.mxu0 %v1242
    %1888 = vmatpush1.bf16.msra.mxu0 %v1241
    %1889 = vmatprep.subr.bf16.mxu0 %v1246
    %1890 = vmatpush1.bf16.msra.mxu0 %v1245
    %1891 = vmatprep.mubr.bf16.mxu0 %v130
    %1892 = vmatmul.mubr.bf16.gmra.mrb[0].mxu0 %v129
    %v1893 = vpop.f32.mrb[0].mxu0
    %v1894 = vadd.f32 %v406, %v1893
    %v1895 = vpop.f32.mrb[0].mxu0
    %v1896 = vadd.f32 %v410, %v1895
    %v1897 = vpop.f32.mrb[0].mxu0
    %v1898 = vpop.f32.mrb[0].mxu0
    %1899 = vdwg.mxu0
    %1900 = vmatprep.subr.bf16.mxu0 %v1250
    %1901 = vmatpush1.bf16.msra.mxu0 %v1249
    %1902 = vmatprep.subr.bf16.mxu0 %v1254
    %1903 = vmatpush1.bf16.msra.mxu0 %v1253
    %1904 = vmatprep.subr.bf16.mxu0 %v1258
    %1905 = vmatpush1.bf16.msra.mxu0 %v1257
    %1906 = vmatprep.subr.bf16.mxu0 %v1262
    %1907 = vmatpush1.bf16.msra.mxu0 %v1261
    %1908 = vmatprep.subr.bf16.mxu0 %v1266
    %1909 = vmatpush1.bf16.msra.mxu0 %v1265
    %1910 = vmatprep.subr.bf16.mxu0 %v1270
    %1911 = vmatpush1.bf16.msra.mxu0 %v1269
    %1912 = vmatprep.subr.bf16.mxu0 %v1274
    %1913 = vmatpush1.bf16.msra.mxu0 %v1273
    %1914 = vmatprep.subr.bf16.mxu0 %v1278
    %1915 = vmatpush1.bf16.msra.mxu0 %v1277
    %1916 = vmatprep.subr.bf16.mxu0 %v1282
    %1917 = vmatpush1.bf16.msra.mxu0 %v1281
    %1918 = vmatprep.subr.bf16.mxu0 %v1286
    %1919 = vmatpush1.bf16.msra.mxu0 %v1285
    %1920 = vmatprep.subr.bf16.mxu0 %v1290
    %1921 = vmatpush1.bf16.msra.mxu0 %v1289
    %1922 = vmatprep.subr.bf16.mxu0 %v1294
    %1923 = vmatpush1.bf16.msra.mxu0 %v1293
    %1924 = vmatprep.subr.bf16.mxu0 %v1298
    %1925 = vmatpush1.bf16.msra.mxu0 %v1297
    %1926 = vmatprep.subr.bf16.mxu0 %v1302
    %1927 = vmatpush1.bf16.msra.mxu0 %v1301
    %1928 = vmatprep.subr.bf16.mxu0 %v1306
    %1929 = vmatpush1.bf16.msra.mxu0 %v1305
    %1930 = vmatprep.subr.bf16.mxu0 %v1310
    %1931 = vmatpush1.bf16.msra.mxu0 %v1309
    %1932 = vmatprep.mubr.bf16.mxu0 %v132
    %1933 = vmatmul.mubr.bf16.gmra.mrb[0].mxu0 %v131
    %v1934 = vpop.f32.mrb[0].mxu0
    %v1935 = vadd.f32 %v1894, %v1934
    %v1936 = vpop.f32.mrb[0].mxu0
    %v1937 = vadd.f32 %v1896, %v1936
    %v1938 = vpop.f32.mrb[0].mxu0
    %v1939 = vpop.f32.mrb[0].mxu0
    %1940 = vdwg.mxu0
    %1941 = vmatprep.subr.bf16.mxu0 %v1314
    %1942 = vmatpush1.bf16.msra.mxu0 %v1313
    %1943 = vmatprep.subr.bf16.mxu0 %v1318
    %1944 = vmatpush1.bf16.msra.mxu0 %v1317
    %1945 = vmatprep.subr.bf16.mxu0 %v1322
    %1946 = vmatpush1.bf16.msra.mxu0 %v1321
    %1947 = vmatprep.subr.bf16.mxu0 %v1326
    %1948 = vmatpush1.bf16.msra.mxu0 %v1325
    %1949 = vmatprep.subr.bf16.mxu0 %v1330
    %1950 = vmatpush1.bf16.msra.mxu0 %v1329
    %1951 = vmatprep.subr.bf16.mxu0 %v1334
    %1952 = vmatpush1.bf16.msra.mxu0 %v1333
    %1953 = vmatprep.subr.bf16.mxu0 %v1338
    %1954 = vmatpush1.bf16.msra.mxu0 %v1337
    %1955 = vmatprep.subr.bf16.mxu0 %v1342
    %1956 = vmatpush1.bf16.msra.mxu0 %v1341
    %1957 = vmatprep.subr.bf16.mxu0 %v1346
    %1958 = vmatpush1.bf16.msra.mxu0 %v1345
    %1959 = vmatprep.subr.bf16.mxu0 %v1350
    %1960 = vmatpush1.bf16.msra.mxu0 %v1349
    %1961 = vmatprep.subr.bf16.mxu0 %v1354
    %1962 = vmatpush1.bf16.msra.mxu0 %v1353
    %1963 = vmatprep.subr.bf16.mxu0 %v1358
    %1964 = vmatpush1.bf16.msra.mxu0 %v1357
    %1965 = vmatprep.subr.bf16.mxu0 %v1362
    %1966 = vmatpush1.bf16.msra.mxu0 %v1361
    %1967 = vmatprep.subr.bf16.mxu0 %v1366
    %1968 = vmatpush1.bf16.msra.mxu0 %v1365
    %1969 = vmatprep.subr.bf16.mxu0 %v1370
    %1970 = vmatpush1.bf16.msra.mxu0 %v1369
    %1971 = vmatprep.subr.bf16.mxu0 %v1374
    %1972 = vmatpush1.bf16.msra.mxu0 %v1373
    %1973 = vmatprep.mubr.bf16.mxu0 %v134
    %1974 = vmatmul.mubr.bf16.gmra.mrb[0].mxu0 %v133
    %v1975 = vpop.f32.mrb[0].mxu0
    %v1976 = vadd.f32 %v1935, %v1975
    %v1977 = vpop.f32.mrb[0].mxu0
    %v1978 = vadd.f32 %v1937, %v1977
    %v1979 = vpop.f32.mrb[0].mxu0
    %v1980 = vpop.f32.mrb[0].mxu0
    %1981 = vdwg.mxu0
    %1982 = vmatprep.subr.bf16.mxu0 %v1378
    %1983 = vmatpush1.bf16.msra.mxu0 %v1377
    %1984 = vmatprep.subr.bf16.mxu0 %v1382
    %1985 = vmatpush1.bf16.msra.mxu0 %v1381
    %1986 = vmatprep.subr.bf16.mxu0 %v1386
    %1987 = vmatpush1.bf16.msra.mxu0 %v1385
    %1988 = vmatprep.subr.bf16.mxu0 %v1390
    %1989 = vmatpush1.bf16.msra.mxu0 %v1389
    %1990 = vmatprep.subr.bf16.mxu0 %v1394
    %1991 = vmatpush1.bf16.msra.mxu0 %v1393
    %1992 = vmatprep.subr.bf16.mxu0 %v1398
    %1993 = vmatpush1.bf16.msra.mxu0 %v1397
    %1994 = vmatprep.subr.bf16.mxu0 %v1402
    %1995 = vmatpush1.bf16.msra.mxu0 %v1401
    %1996 = vmatprep.subr.bf16.mxu0 %v1406
    %1997 = vmatpush1.bf16.msra.mxu0 %v1405
    %1998 = vmatprep.subr.bf16.mxu0 %v1410
    %1999 = vmatpush1.bf16.msra.mxu0 %v1409
    %2000 = vmatprep.subr.bf16.mxu0 %v1414
    %2001 = vmatpush1.bf16.msra.mxu0 %v1413
    %2002 = vmatprep.subr.bf16.mxu0 %v1418
    %2003 = vmatpush1.bf16.msra.mxu0 %v1417
    %2004 = vmatprep.subr.bf16.mxu0 %v1422
    %2005 = vmatpush1.bf16.msra.mxu0 %v1421
    %2006 = vmatprep.subr.bf16.mxu0 %v1426
    %2007 = vmatpush1.bf16.msra.mxu0 %v1425
    %2008 = vmatprep.subr.bf16.mxu0 %v1430
    %2009 = vmatpush1.bf16.msra.mxu0 %v1429
    %2010 = vmatprep.subr.bf16.mxu0 %v1434
    %2011 = vmatpush1.bf16.msra.mxu0 %v1433
    %2012 = vmatprep.subr.bf16.mxu0 %v1438
    %2013 = vmatpush1.bf16.msra.mxu0 %v1437
    %2014 = vmatprep.mubr.bf16.mxu0 %v136
    %2015 = vmatmul.mubr.bf16.gmra.mrb[0].mxu0 %v135
    %v2016 = vpop.f32.mrb[0].mxu0
    %v2017 = vadd.f32 %v1976, %v2016
    %v2018 = vpop.f32.mrb[0].mxu0
    %v2019 = vadd.f32 %v1978, %v2018
    %v2020 = vpop.f32.mrb[0].mxu0
    %v2021 = vpop.f32.mrb[0].mxu0
    %2022 = vdwg.mxu0
    %v2023 = vmax.f32 %v1853, 0.0
    %v2024 = vmax.f32 %v1855, 0.0
    %v2025 = vmax.f32 %v2017, 0.0
    %v2026 = vmax.f32 %v2019, 0.0
    %v2027 = vpack.c.bf16 %v2023, %v2023
    %v2028 = vpack.c.bf16 %v2024, %v2024
    %v2029 = vpack.c.bf16 %v2025, %v2025
    %v2030 = vpack.c.bf16 %v2026, %v2026
    %v2031 = vld [vmem:[#allocation7] sm:$0xff]
    %v2032 = vld [vmem:[#allocation7 + $0x8] sm:$0xff]
    %v2033 = vld [vmem:[#allocation7 + $0x10] sm:$0xff]
    %v2034 = vld [vmem:[#allocation7 + $0x18] sm:$0xff]
    %v2035 = vld [vmem:[#allocation7 + $0x20] sm:$0xff]
    %v2036 = vld [vmem:[#allocation7 + $0x28] sm:$0xff]
    %v2037 = vld [vmem:[#allocation7 + $0x30] sm:$0xff]
    %v2038 = vld [vmem:[#allocation7 + $0x38] sm:$0xff]
    %v2039 = vld [vmem:[#allocation7 + $0x40] sm:$0xff]
    %v2040 = vld [vmem:[#allocation7 + $0x48] sm:$0xff]
    %v2041 = vld [vmem:[#allocation7 + $0x50] sm:$0xff]
    %v2042 = vld [vmem:[#allocation7 + $0x58] sm:$0xff]
    %v2043 = vld [vmem:[#allocation7 + $0x60] sm:$0xff]
    %v2044 = vld [vmem:[#allocation7 + $0x68] sm:$0xff]
    %v2045 = vld [vmem:[#allocation7 + $0x70] sm:$0xff]
    %v2046 = vld [vmem:[#allocation7 + $0x78] sm:$0xff]
    %v2047 = vld [vmem:[#allocation7 + $0x80] sm:$0xff]
    %v2048 = vld [vmem:[#allocation7 + $0x88] sm:$0xff]
    %v2049 = vld [vmem:[#allocation7 + $0x90] sm:$0xff]
    %v2050 = vld [vmem:[#allocation7 + $0x98] sm:$0xff]
    %v2051 = vld [vmem:[#allocation7 + $0xa0] sm:$0xff]
    %v2052 = vld [vmem:[#allocation7 + $0xa8] sm:$0xff]
    %v2053 = vld [vmem:[#allocation7 + $0xb0] sm:$0xff]
    %v2054 = vld [vmem:[#allocation7 + $0xb8] sm:$0xff]
    %v2055 = vld [vmem:[#allocation7 + $0xc0] sm:$0xff]
    %v2056 = vld [vmem:[#allocation7 + $0xc8] sm:$0xff]
    %v2057 = vld [vmem:[#allocation7 + $0xd0] sm:$0xff]
    %v2058 = vld [vmem:[#allocation7 + $0xd8] sm:$0xff]
    %v2059 = vld [vmem:[#allocation7 + $0xe0] sm:$0xff]
    %v2060 = vld [vmem:[#allocation7 + $0xe8] sm:$0xff]
    %v2061 = vld [vmem:[#allocation7 + $0xf0] sm:$0xff]
    %v2062 = vld [vmem:[#allocation7 + $0xf8] sm:$0xff]
    %v2063 = vld [vmem:[#allocation7 + $0x100] sm:$0xff]
    %v2064 = vld [vmem:[#allocation7 + $0x108] sm:$0xff]
    %v2065 = vld [vmem:[#allocation7 + $0x110] sm:$0xff]
    %v2066 = vld [vmem:[#allocation7 + $0x118] sm:$0xff]
    %v2067 = vld [vmem:[#allocation7 + $0x120] sm:$0xff]
    %v2068 = vld [vmem:[#allocation7 + $0x128] sm:$0xff]
    %v2069 = vld [vmem:[#allocation7 + $0x130] sm:$0xff]
    %v2070 = vld [vmem:[#allocation7 + $0x138] sm:$0xff]
    %v2071 = vld [vmem:[#allocation7 + $0x140] sm:$0xff]
    %v2072 = vld [vmem:[#allocation7 + $0x148] sm:$0xff]
    %v2073 = vld [vmem:[#allocation7 + $0x150] sm:$0xff]
    %v2074 = vld [vmem:[#allocation7 + $0x158] sm:$0xff]
    %v2075 = vld [vmem:[#allocation7 + $0x160] sm:$0xff]
    %v2076 = vld [vmem:[#allocation7 + $0x168] sm:$0xff]
    %v2077 = vld [vmem:[#allocation7 + $0x170] sm:$0xff]
    %v2078 = vld [vmem:[#allocation7 + $0x178] sm:$0xff]
    %v2079 = vld [vmem:[#allocation7 + $0x180] sm:$0xff]
    %v2080 = vld [vmem:[#allocation7 + $0x188] sm:$0xff]
    %v2081 = vld [vmem:[#allocation7 + $0x190] sm:$0xff]
    %v2082 = vld [vmem:[#allocation7 + $0x198] sm:$0xff]
    %v2083 = vld [vmem:[#allocation7 + $0x1a0] sm:$0xff]
    %v2084 = vld [vmem:[#allocation7 + $0x1a8] sm:$0xff]
    %v2085 = vld [vmem:[#allocation7 + $0x1b0] sm:$0xff]
    %v2086 = vld [vmem:[#allocation7 + $0x1b8] sm:$0xff]
    %v2087 = vld [vmem:[#allocation7 + $0x1c0] sm:$0xff]
    %v2088 = vld [vmem:[#allocation7 + $0x1c8] sm:$0xff]
    %v2089 = vld [vmem:[#allocation7 + $0x1d0] sm:$0xff]
    %v2090 = vld [vmem:[#allocation7 + $0x1d8] sm:$0xff]
    %v2091 = vld [vmem:[#allocation7 + $0x1e0] sm:$0xff]
    %v2092 = vld [vmem:[#allocation7 + $0x1e8] sm:$0xff]
    %v2093 = vld [vmem:[#allocation7 + $0x1f0] sm:$0xff]
    %v2094 = vld [vmem:[#allocation7 + $0x1f8] sm:$0xff]
    %v2095 = vld [vmem:[#allocation7 + $0x200] sm:$0xff]
    %v2096 = vld [vmem:[#allocation7 + $0x208] sm:$0xff]
    %v2097 = vld [vmem:[#allocation7 + $0x210] sm:$0xff]
    %v2098 = vld [vmem:[#allocation7 + $0x218] sm:$0xff]
    %v2099 = vld [vmem:[#allocation7 + $0x220] sm:$0xff]
    %v2100 = vld [vmem:[#allocation7 + $0x228] sm:$0xff]
    %v2101 = vld [vmem:[#allocation7 + $0x230] sm:$0xff]
    %v2102 = vld [vmem:[#allocation7 + $0x238] sm:$0xff]
    %v2103 = vld [vmem:[#allocation7 + $0x240] sm:$0xff]
    %v2104 = vld [vmem:[#allocation7 + $0x248] sm:$0xff]
    %v2105 = vld [vmem:[#allocation7 + $0x250] sm:$0xff]
    %v2106 = vld [vmem:[#allocation7 + $0x258] sm:$0xff]
    %v2107 = vld [vmem:[#allocation7 + $0x260] sm:$0xff]
    %v2108 = vld [vmem:[#allocation7 + $0x268] sm:$0xff]
    %v2109 = vld [vmem:[#allocation7 + $0x270] sm:$0xff]
    %v2110 = vld [vmem:[#allocation7 + $0x278] sm:$0xff]
    %v2111 = vld [vmem:[#allocation7 + $0x280] sm:$0xff]
    %v2112 = vld [vmem:[#allocation7 + $0x288] sm:$0xff]
    %v2113 = vld [vmem:[#allocation7 + $0x290] sm:$0xff]
    %v2114 = vld [vmem:[#allocation7 + $0x298] sm:$0xff]
    %v2115 = vld [vmem:[#allocation7 + $0x2a0] sm:$0xff]
    %v2116 = vld [vmem:[#allocation7 + $0x2a8] sm:$0xff]
    %v2117 = vld [vmem:[#allocation7 + $0x2b0] sm:$0xff]
    %v2118 = vld [vmem:[#allocation7 + $0x2b8] sm:$0xff]
    %v2119 = vld [vmem:[#allocation7 + $0x2c0] sm:$0xff]
    %v2120 = vld [vmem:[#allocation7 + $0x2c8] sm:$0xff]
    %v2121 = vld [vmem:[#allocation7 + $0x2d0] sm:$0xff]
    %v2122 = vld [vmem:[#allocation7 + $0x2d8] sm:$0xff]
    %v2123 = vld [vmem:[#allocation7 + $0x2e0] sm:$0xff]
    %v2124 = vld [vmem:[#allocation7 + $0x2e8] sm:$0xff]
    %v2125 = vld [vmem:[#allocation7 + $0x2f0] sm:$0xff]
    %v2126 = vld [vmem:[#allocation7 + $0x2f8] sm:$0xff]
    %v2127 = vld [vmem:[#allocation7 + $0x300] sm:$0xff]
    %v2128 = vld [vmem:[#allocation7 + $0x308] sm:$0xff]
    %v2129 = vld [vmem:[#allocation7 + $0x310] sm:$0xff]
    %v2130 = vld [vmem:[#allocation7 + $0x318] sm:$0xff]
    %v2131 = vld [vmem:[#allocation7 + $0x320] sm:$0xff]
    %v2132 = vld [vmem:[#allocation7 + $0x328] sm:$0xff]
    %v2133 = vld [vmem:[#allocation7 + $0x330] sm:$0xff]
    %v2134 = vld [vmem:[#allocation7 + $0x338] sm:$0xff]
    %v2135 = vld [vmem:[#allocation7 + $0x340] sm:$0xff]
    %v2136 = vld [vmem:[#allocation7 + $0x348] sm:$0xff]
    %v2137 = vld [vmem:[#allocation7 + $0x350] sm:$0xff]
    %v2138 = vld [vmem:[#allocation7 + $0x358] sm:$0xff]
    %v2139 = vld [vmem:[#allocation7 + $0x360] sm:$0xff]
    %v2140 = vld [vmem:[#allocation7 + $0x368] sm:$0xff]
    %v2141 = vld [vmem:[#allocation7 + $0x370] sm:$0xff]
    %v2142 = vld [vmem:[#allocation7 + $0x378] sm:$0xff]
    %v2143 = vld [vmem:[#allocation7 + $0x380] sm:$0xff]
    %v2144 = vld [vmem:[#allocation7 + $0x388] sm:$0xff]
    %v2145 = vld [vmem:[#allocation7 + $0x390] sm:$0xff]
    %v2146 = vld [vmem:[#allocation7 + $0x398] sm:$0xff]
    %v2147 = vld [vmem:[#allocation7 + $0x3a0] sm:$0xff]
    %v2148 = vld [vmem:[#allocation7 + $0x3a8] sm:$0xff]
    %v2149 = vld [vmem:[#allocation7 + $0x3b0] sm:$0xff]
    %v2150 = vld [vmem:[#allocation7 + $0x3b8] sm:$0xff]
    %v2151 = vld [vmem:[#allocation7 + $0x3c0] sm:$0xff]
    %v2152 = vld [vmem:[#allocation7 + $0x3c8] sm:$0xff]
    %v2153 = vld [vmem:[#allocation7 + $0x3d0] sm:$0xff]
    %v2154 = vld [vmem:[#allocation7 + $0x3d8] sm:$0xff]
    %v2155 = vld [vmem:[#allocation7 + $0x3e0] sm:$0xff]
    %v2156 = vld [vmem:[#allocation7 + $0x3e8] sm:$0xff]
    %v2157 = vld [vmem:[#allocation7 + $0x3f0] sm:$0xff]
    %v2158 = vld [vmem:[#allocation7 + $0x3f8] sm:$0xff]
    %v2159 = vld [vmem:[#allocation7 + $0x400] sm:$0xff]
    %v2160 = vld [vmem:[#allocation7 + $0x408] sm:$0xff]
    %v2161 = vld [vmem:[#allocation7 + $0x410] sm:$0xff]
    %v2162 = vld [vmem:[#allocation7 + $0x418] sm:$0xff]
    %v2163 = vld [vmem:[#allocation7 + $0x420] sm:$0xff]
    %v2164 = vld [vmem:[#allocation7 + $0x428] sm:$0xff]
    %v2165 = vld [vmem:[#allocation7 + $0x430] sm:$0xff]
    %v2166 = vld [vmem:[#allocation7 + $0x438] sm:$0xff]
    %v2167 = vld [vmem:[#allocation7 + $0x440] sm:$0xff]
    %v2168 = vld [vmem:[#allocation7 + $0x448] sm:$0xff]
    %v2169 = vld [vmem:[#allocation7 + $0x450] sm:$0xff]
    %v2170 = vld [vmem:[#allocation7 + $0x458] sm:$0xff]
    %v2171 = vld [vmem:[#allocation7 + $0x460] sm:$0xff]
    %v2172 = vld [vmem:[#allocation7 + $0x468] sm:$0xff]
    %v2173 = vld [vmem:[#allocation7 + $0x470] sm:$0xff]
    %v2174 = vld [vmem:[#allocation7 + $0x478] sm:$0xff]
    %v2175 = vld [vmem:[#allocation7 + $0x480] sm:$0xff]
    %v2176 = vld [vmem:[#allocation7 + $0x488] sm:$0xff]
    %v2177 = vld [vmem:[#allocation7 + $0x490] sm:$0xff]
    %v2178 = vld [vmem:[#allocation7 + $0x498] sm:$0xff]
    %v2179 = vld [vmem:[#allocation7 + $0x4a0] sm:$0xff]
    %v2180 = vld [vmem:[#allocation7 + $0x4a8] sm:$0xff]
    %v2181 = vld [vmem:[#allocation7 + $0x4b0] sm:$0xff]
    %v2182 = vld [vmem:[#allocation7 + $0x4b8] sm:$0xff]
    %v2183 = vld [vmem:[#allocation7 + $0x4c0] sm:$0xff]
    %v2184 = vld [vmem:[#allocation7 + $0x4c8] sm:$0xff]
    %v2185 = vld [vmem:[#allocation7 + $0x4d0] sm:$0xff]
    %v2186 = vld [vmem:[#allocation7 + $0x4d8] sm:$0xff]
    %v2187 = vld [vmem:[#allocation7 + $0x4e0] sm:$0xff]
    %v2188 = vld [vmem:[#allocation7 + $0x4e8] sm:$0xff]
    %v2189 = vld [vmem:[#allocation7 + $0x4f0] sm:$0xff]
    %v2190 = vld [vmem:[#allocation7 + $0x4f8] sm:$0xff]
    %v2191 = vld [vmem:[#allocation7 + $0x500] sm:$0xff]
    %v2192 = vld [vmem:[#allocation7 + $0x508] sm:$0xff]
    %v2193 = vld [vmem:[#allocation7 + $0x510] sm:$0xff]
    %v2194 = vld [vmem:[#allocation7 + $0x518] sm:$0xff]
    %v2195 = vld [vmem:[#allocation7 + $0x520] sm:$0xff]
    %v2196 = vld [vmem:[#allocation7 + $0x528] sm:$0xff]
    %v2197 = vld [vmem:[#allocation7 + $0x530] sm:$0xff]
    %v2198 = vld [vmem:[#allocation7 + $0x538] sm:$0xff]
    %v2199 = vld [vmem:[#allocation7 + $0x540] sm:$0xff]
    %v2200 = vld [vmem:[#allocation7 + $0x548] sm:$0xff]
    %v2201 = vld [vmem:[#allocation7 + $0x550] sm:$0xff]
    %v2202 = vld [vmem:[#allocation7 + $0x558] sm:$0xff]
    %v2203 = vld [vmem:[#allocation7 + $0x560] sm:$0xff]
    %v2204 = vld [vmem:[#allocation7 + $0x568] sm:$0xff]
    %v2205 = vld [vmem:[#allocation7 + $0x570] sm:$0xff]
    %v2206 = vld [vmem:[#allocation7 + $0x578] sm:$0xff]
    %v2207 = vld [vmem:[#allocation7 + $0x580] sm:$0xff]
    %v2208 = vld [vmem:[#allocation7 + $0x588] sm:$0xff]
    %v2209 = vld [vmem:[#allocation7 + $0x590] sm:$0xff]
    %v2210 = vld [vmem:[#allocation7 + $0x598] sm:$0xff]
    %v2211 = vld [vmem:[#allocation7 + $0x5a0] sm:$0xff]
    %v2212 = vld [vmem:[#allocation7 + $0x5a8] sm:$0xff]
    %v2213 = vld [vmem:[#allocation7 + $0x5b0] sm:$0xff]
    %v2214 = vld [vmem:[#allocation7 + $0x5b8] sm:$0xff]
    %v2215 = vld [vmem:[#allocation7 + $0x5c0] sm:$0xff]
    %v2216 = vld [vmem:[#allocation7 + $0x5c8] sm:$0xff]
    %v2217 = vld [vmem:[#allocation7 + $0x5d0] sm:$0xff]
    %v2218 = vld [vmem:[#allocation7 + $0x5d8] sm:$0xff]
    %v2219 = vld [vmem:[#allocation7 + $0x5e0] sm:$0xff]
    %v2220 = vld [vmem:[#allocation7 + $0x5e8] sm:$0xff]
    %v2221 = vld [vmem:[#allocation7 + $0x5f0] sm:$0xff]
    %v2222 = vld [vmem:[#allocation7 + $0x5f8] sm:$0xff]
    %v2223 = vld [vmem:[%s4] sm:$0x3f]
    %v2225 = vlaneseq
    %v2226 = vshrl.u32 %v2225, 7
    %v2227 = vsub.s32 0, %v2226
    %v2228 = vrot.slane %v2223, %v2227
    %v2229 = vlaneseq
    %v2230 = vshrl.u32 %v2229, 7
    %v2231 = vsub.s32 1, %v2230
    %v2232 = vrot.slane %v2223, %v2231
    %v2233 = vlaneseq
    %v2234 = vshrl.u32 %v2233, 7
    %v2235 = vsub.s32 2, %v2234
    %v2236 = vrot.slane %v2223, %v2235
    %v2237 = vlaneseq
    %v2238 = vshrl.u32 %v2237, 7
    %v2239 = vsub.s32 3, %v2238
    %v2240 = vrot.slane %v2223, %v2239
    %v2241 = vlaneseq
    %v2242 = vshrl.u32 %v2241, 7
    %v2243 = vsub.s32 4, %v2242
    %v2244 = vrot.slane %v2223, %v2243
    %v2245 = vlaneseq
    %v2246 = vshrl.u32 %v2245, 7
    %v2247 = vsub.s32 5, %v2246
    %v2248 = vrot.slane %v2223, %v2247
    %v2447 = vunpack.c.l.b16 %v2031
    %v2448 = vunpack.c.h.b16 %v2031
    %v2449 = vunpack.c.l.b16 %v2032
    %v2450 = vunpack.c.h.b16 %v2032
    %v2451 = vunpack.c.l.b16 %v2033
    %v2452 = vunpack.c.h.b16 %v2033
    %v2453 = vunpack.c.l.b16 %v2034
    %v2454 = vunpack.c.h.b16 %v2034
    %v2455 = vunpack.c.l.b16 %v2035
    %v2456 = vunpack.c.h.b16 %v2035
    %v2457 = vunpack.c.l.b16 %v2036
    %v2458 = vunpack.c.h.b16 %v2036
    %v2459 = vunpack.c.l.b16 %v2037
    %v2460 = vunpack.c.h.b16 %v2037
    %v2461 = vunpack.c.l.b16 %v2038
    %v2462 = vunpack.c.h.b16 %v2038
    %v2463 = vunpack.c.l.b16 %v2039
    %v2464 = vunpack.c.h.b16 %v2039
    %v2465 = vunpack.c.l.b16 %v2040
    %v2466 = vunpack.c.h.b16 %v2040
    %v2467 = vunpack.c.l.b16 %v2041
    %v2468 = vunpack.c.h.b16 %v2041
    %v2469 = vunpack.c.l.b16 %v2042
    %v2470 = vunpack.c.h.b16 %v2042
    %v2471 = vunpack.c.l.b16 %v2043
    %v2472 = vunpack.c.h.b16 %v2043
    %v2473 = vunpack.c.l.b16 %v2044
    %v2474 = vunpack.c.h.b16 %v2044
    %v2475 = vunpack.c.l.b16 %v2045
    %v2476 = vunpack.c.h.b16 %v2045
    %v2477 = vunpack.c.l.b16 %v2046
    %v2478 = vunpack.c.h.b16 %v2046
    %v2479 = vunpack.c.l.b16 %v2047
    %v2480 = vunpack.c.h.b16 %v2047
    %v2481 = vunpack.c.l.b16 %v2048
    %v2482 = vunpack.c.h.b16 %v2048
    %v2483 = vunpack.c.l.b16 %v2049
    %v2484 = vunpack.c.h.b16 %v2049
    %v2485 = vunpack.c.l.b16 %v2050
    %v2486 = vunpack.c.h.b16 %v2050
    %v2487 = vunpack.c.l.b16 %v2051
    %v2488 = vunpack.c.h.b16 %v2051
    %v2489 = vunpack.c.l.b16 %v2052
    %v2490 = vunpack.c.h.b16 %v2052
    %v2491 = vunpack.c.l.b16 %v2053
    %v2492 = vunpack.c.h.b16 %v2053
    %v2493 = vunpack.c.l.b16 %v2054
    %v2494 = vunpack.c.h.b16 %v2054
    %v2495 = vunpack.c.l.b16 %v2055
    %v2496 = vunpack.c.h.b16 %v2055
    %v2497 = vunpack.c.l.b16 %v2056
    %v2498 = vunpack.c.h.b16 %v2056
    %v2499 = vunpack.c.l.b16 %v2057
    %v2500 = vunpack.c.h.b16 %v2057
    %v2501 = vunpack.c.l.b16 %v2058
    %v2502 = vunpack.c.h.b16 %v2058
    %v2503 = vunpack.c.l.b16 %v2059
    %v2504 = vunpack.c.h.b16 %v2059
    %v2505 = vunpack.c.l.b16 %v2060
    %v2506 = vunpack.c.h.b16 %v2060
    %v2507 = vunpack.c.l.b16 %v2061
    %v2508 = vunpack.c.h.b16 %v2061
    %v2509 = vunpack.c.l.b16 %v2062
    %v2510 = vunpack.c.h.b16 %v2062
    %v2511 = vunpack.c.l.b16 %v2063
    %v2512 = vunpack.c.h.b16 %v2063
    %v2513 = vunpack.c.l.b16 %v2064
    %v2514 = vunpack.c.h.b16 %v2064
    %v2515 = vunpack.c.l.b16 %v2065
    %v2516 = vunpack.c.h.b16 %v2065
    %v2517 = vunpack.c.l.b16 %v2066
    %v2518 = vunpack.c.h.b16 %v2066
    %v2519 = vunpack.c.l.b16 %v2067
    %v2520 = vunpack.c.h.b16 %v2067
    %v2521 = vunpack.c.l.b16 %v2068
    %v2522 = vunpack.c.h.b16 %v2068
    %v2523 = vunpack.c.l.b16 %v2069
    %v2524 = vunpack.c.h.b16 %v2069
    %v2525 = vunpack.c.l.b16 %v2070
    %v2526 = vunpack.c.h.b16 %v2070
    %v2527 = vunpack.c.l.b16 %v2071
    %v2528 = vunpack.c.h.b16 %v2071
    %v2529 = vunpack.c.l.b16 %v2072
    %v2530 = vunpack.c.h.b16 %v2072
    %v2531 = vunpack.c.l.b16 %v2073
    %v2532 = vunpack.c.h.b16 %v2073
    %v2533 = vunpack.c.l.b16 %v2074
    %v2534 = vunpack.c.h.b16 %v2074
    %v2535 = vunpack.c.l.b16 %v2075
    %v2536 = vunpack.c.h.b16 %v2075
    %v2537 = vunpack.c.l.b16 %v2076
    %v2538 = vunpack.c.h.b16 %v2076
    %v2539 = vunpack.c.l.b16 %v2077
    %v2540 = vunpack.c.h.b16 %v2077
    %v2541 = vunpack.c.l.b16 %v2078
    %v2542 = vunpack.c.h.b16 %v2078
    %v2543 = vunpack.c.l.b16 %v2079
    %v2544 = vunpack.c.h.b16 %v2079
    %v2545 = vunpack.c.l.b16 %v2080
    %v2546 = vunpack.c.h.b16 %v2080
    %v2547 = vunpack.c.l.b16 %v2081
    %v2548 = vunpack.c.h.b16 %v2081
    %v2549 = vunpack.c.l.b16 %v2082
    %v2550 = vunpack.c.h.b16 %v2082
    %v2551 = vunpack.c.l.b16 %v2083
    %v2552 = vunpack.c.h.b16 %v2083
    %v2553 = vunpack.c.l.b16 %v2084
    %v2554 = vunpack.c.h.b16 %v2084
    %v2555 = vunpack.c.l.b16 %v2085
    %v2556 = vunpack.c.h.b16 %v2085
    %v2557 = vunpack.c.l.b16 %v2086
    %v2558 = vunpack.c.h.b16 %v2086
    %v2559 = vunpack.c.l.b16 %v2087
    %v2560 = vunpack.c.h.b16 %v2087
    %v2561 = vunpack.c.l.b16 %v2088
    %v2562 = vunpack.c.h.b16 %v2088
    %v2563 = vunpack.c.l.b16 %v2089
    %v2564 = vunpack.c.h.b16 %v2089
    %v2565 = vunpack.c.l.b16 %v2090
    %v2566 = vunpack.c.h.b16 %v2090
    %v2567 = vunpack.c.l.b16 %v2091
    %v2568 = vunpack.c.h.b16 %v2091
    %v2569 = vunpack.c.l.b16 %v2092
    %v2570 = vunpack.c.h.b16 %v2092
    %v2571 = vunpack.c.l.b16 %v2093
    %v2572 = vunpack.c.h.b16 %v2093
    %v2573 = vunpack.c.l.b16 %v2094
    %v2574 = vunpack.c.h.b16 %v2094
    %v2575 = vunpack.c.l.b16 %v2095
    %v2576 = vunpack.c.h.b16 %v2095
    %v2577 = vunpack.c.l.b16 %v2096
    %v2578 = vunpack.c.h.b16 %v2096
    %v2579 = vunpack.c.l.b16 %v2097
    %v2580 = vunpack.c.h.b16 %v2097
    %v2581 = vunpack.c.l.b16 %v2098
    %v2582 = vunpack.c.h.b16 %v2098
    %v2583 = vunpack.c.l.b16 %v2099
    %v2584 = vunpack.c.h.b16 %v2099
    %v2585 = vunpack.c.l.b16 %v2100
    %v2586 = vunpack.c.h.b16 %v2100
    %v2587 = vunpack.c.l.b16 %v2101
    %v2588 = vunpack.c.h.b16 %v2101
    %v2589 = vunpack.c.l.b16 %v2102
    %v2590 = vunpack.c.h.b16 %v2102
    %v2591 = vunpack.c.l.b16 %v2103
    %v2592 = vunpack.c.h.b16 %v2103
    %v2593 = vunpack.c.l.b16 %v2104
    %v2594 = vunpack.c.h.b16 %v2104
    %v2595 = vunpack.c.l.b16 %v2105
    %v2596 = vunpack.c.h.b16 %v2105
    %v2597 = vunpack.c.l.b16 %v2106
    %v2598 = vunpack.c.h.b16 %v2106
    %v2599 = vunpack.c.l.b16 %v2107
    %v2600 = vunpack.c.h.b16 %v2107
    %v2601 = vunpack.c.l.b16 %v2108
    %v2602 = vunpack.c.h.b16 %v2108
    %v2603 = vunpack.c.l.b16 %v2109
    %v2604 = vunpack.c.h.b16 %v2109
    %v2605 = vunpack.c.l.b16 %v2110
    %v2606 = vunpack.c.h.b16 %v2110
    %v2607 = vunpack.c.l.b16 %v2111
    %v2608 = vunpack.c.h.b16 %v2111
    %v2609 = vunpack.c.l.b16 %v2112
    %v2610 = vunpack.c.h.b16 %v2112
    %v2611 = vunpack.c.l.b16 %v2113
    %v2612 = vunpack.c.h.b16 %v2113
    %v2613 = vunpack.c.l.b16 %v2114
    %v2614 = vunpack.c.h.b16 %v2114
    %v2615 = vunpack.c.l.b16 %v2115
    %v2616 = vunpack.c.h.b16 %v2115
    %v2617 = vunpack.c.l.b16 %v2116
    %v2618 = vunpack.c.h.b16 %v2116
    %v2619 = vunpack.c.l.b16 %v2117
    %v2620 = vunpack.c.h.b16 %v2117
    %v2621 = vunpack.c.l.b16 %v2118
    %v2622 = vunpack.c.h.b16 %v2118
    %v2623 = vunpack.c.l.b16 %v2119
    %v2624 = vunpack.c.h.b16 %v2119
    %v2625 = vunpack.c.l.b16 %v2120
    %v2626 = vunpack.c.h.b16 %v2120
    %v2627 = vunpack.c.l.b16 %v2121
    %v2628 = vunpack.c.h.b16 %v2121
    %v2629 = vunpack.c.l.b16 %v2122
    %v2630 = vunpack.c.h.b16 %v2122
    %v2631 = vunpack.c.l.b16 %v2123
    %v2632 = vunpack.c.h.b16 %v2123
    %v2633 = vunpack.c.l.b16 %v2124
    %v2634 = vunpack.c.h.b16 %v2124
    %v2635 = vunpack.c.l.b16 %v2125
    %v2636 = vunpack.c.h.b16 %v2125
    %v2637 = vunpack.c.l.b16 %v2126
    %v2638 = vunpack.c.h.b16 %v2126
    %v2639 = vunpack.c.l.b16 %v2127
    %v2640 = vunpack.c.h.b16 %v2127
    %v2641 = vunpack.c.l.b16 %v2128
    %v2642 = vunpack.c.h.b16 %v2128
    %v2643 = vunpack.c.l.b16 %v2129
    %v2644 = vunpack.c.h.b16 %v2129
    %v2645 = vunpack.c.l.b16 %v2130
    %v2646 = vunpack.c.h.b16 %v2130
    %v2647 = vunpack.c.l.b16 %v2131
    %v2648 = vunpack.c.h.b16 %v2131
    %v2649 = vunpack.c.l.b16 %v2132
    %v2650 = vunpack.c.h.b16 %v2132
    %v2651 = vunpack.c.l.b16 %v2133
    %v2652 = vunpack.c.h.b16 %v2133
    %v2653 = vunpack.c.l.b16 %v2134
    %v2654 = vunpack.c.h.b16 %v2134
    %v2655 = vunpack.c.l.b16 %v2135
    %v2656 = vunpack.c.h.b16 %v2135
    %v2657 = vunpack.c.l.b16 %v2136
    %v2658 = vunpack.c.h.b16 %v2136
    %v2659 = vunpack.c.l.b16 %v2137
    %v2660 = vunpack.c.h.b16 %v2137
    %v2661 = vunpack.c.l.b16 %v2138
    %v2662 = vunpack.c.h.b16 %v2138
    %v2663 = vunpack.c.l.b16 %v2139
    %v2664 = vunpack.c.h.b16 %v2139
    %v2665 = vunpack.c.l.b16 %v2140
    %v2666 = vunpack.c.h.b16 %v2140
    %v2667 = vunpack.c.l.b16 %v2141
    %v2668 = vunpack.c.h.b16 %v2141
    %v2669 = vunpack.c.l.b16 %v2142
    %v2670 = vunpack.c.h.b16 %v2142
    %v2671 = vunpack.c.l.b16 %v2143
    %v2672 = vunpack.c.h.b16 %v2143
    %v2673 = vunpack.c.l.b16 %v2144
    %v2674 = vunpack.c.h.b16 %v2144
    %v2675 = vunpack.c.l.b16 %v2145
    %v2676 = vunpack.c.h.b16 %v2145
    %v2677 = vunpack.c.l.b16 %v2146
    %v2678 = vunpack.c.h.b16 %v2146
    %v2679 = vunpack.c.l.b16 %v2147
    %v2680 = vunpack.c.h.b16 %v2147
    %v2681 = vunpack.c.l.b16 %v2148
    %v2682 = vunpack.c.h.b16 %v2148
    %v2683 = vunpack.c.l.b16 %v2149
    %v2684 = vunpack.c.h.b16 %v2149
    %v2685 = vunpack.c.l.b16 %v2150
    %v2686 = vunpack.c.h.b16 %v2150
    %v2687 = vunpack.c.l.b16 %v2151
    %v2688 = vunpack.c.h.b16 %v2151
    %v2689 = vunpack.c.l.b16 %v2152
    %v2690 = vunpack.c.h.b16 %v2152
    %v2691 = vunpack.c.l.b16 %v2153
    %v2692 = vunpack.c.h.b16 %v2153
    %v2693 = vunpack.c.l.b16 %v2154
    %v2694 = vunpack.c.h.b16 %v2154
    %v2695 = vunpack.c.l.b16 %v2155
    %v2696 = vunpack.c.h.b16 %v2155
    %v2697 = vunpack.c.l.b16 %v2156
    %v2698 = vunpack.c.h.b16 %v2156
    %v2699 = vunpack.c.l.b16 %v2157
    %v2700 = vunpack.c.h.b16 %v2157
    %v2701 = vunpack.c.l.b16 %v2158
    %v2702 = vunpack.c.h.b16 %v2158
    %v2703 = vunpack.c.l.b16 %v2159
    %v2704 = vunpack.c.h.b16 %v2159
    %v2705 = vunpack.c.l.b16 %v2160
    %v2706 = vunpack.c.h.b16 %v2160
    %v2707 = vunpack.c.l.b16 %v2161
    %v2708 = vunpack.c.h.b16 %v2161
    %v2709 = vunpack.c.l.b16 %v2162
    %v2710 = vunpack.c.h.b16 %v2162
    %v2711 = vunpack.c.l.b16 %v2163
    %v2712 = vunpack.c.h.b16 %v2163
    %v2713 = vunpack.c.l.b16 %v2164
    %v2714 = vunpack.c.h.b16 %v2164
    %v2715 = vunpack.c.l.b16 %v2165
    %v2716 = vunpack.c.h.b16 %v2165
    %v2717 = vunpack.c.l.b16 %v2166
    %v2718 = vunpack.c.h.b16 %v2166
    %v2719 = vunpack.c.l.b16 %v2167
    %v2720 = vunpack.c.h.b16 %v2167
    %v2721 = vunpack.c.l.b16 %v2168
    %v2722 = vunpack.c.h.b16 %v2168
    %v2723 = vunpack.c.l.b16 %v2169
    %v2724 = vunpack.c.h.b16 %v2169
    %v2725 = vunpack.c.l.b16 %v2170
    %v2726 = vunpack.c.h.b16 %v2170
    %v2727 = vunpack.c.l.b16 %v2171
    %v2728 = vunpack.c.h.b16 %v2171
    %v2729 = vunpack.c.l.b16 %v2172
    %v2730 = vunpack.c.h.b16 %v2172
    %v2731 = vunpack.c.l.b16 %v2173
    %v2732 = vunpack.c.h.b16 %v2173
    %v2733 = vunpack.c.l.b16 %v2174
    %v2734 = vunpack.c.h.b16 %v2174
    %v2735 = vunpack.c.l.b16 %v2175
    %v2736 = vunpack.c.h.b16 %v2175
    %v2737 = vunpack.c.l.b16 %v2176
    %v2738 = vunpack.c.h.b16 %v2176
    %v2739 = vunpack.c.l.b16 %v2177
    %v2740 = vunpack.c.h.b16 %v2177
    %v2741 = vunpack.c.l.b16 %v2178
    %v2742 = vunpack.c.h.b16 %v2178
    %v2743 = vunpack.c.l.b16 %v2179
    %v2744 = vunpack.c.h.b16 %v2179
    %v2745 = vunpack.c.l.b16 %v2180
    %v2746 = vunpack.c.h.b16 %v2180
    %v2747 = vunpack.c.l.b16 %v2181
    %v2748 = vunpack.c.h.b16 %v2181
    %v2749 = vunpack.c.l.b16 %v2182
    %v2750 = vunpack.c.h.b16 %v2182
    %v2751 = vunpack.c.l.b16 %v2183
    %v2752 = vunpack.c.h.b16 %v2183
    %v2753 = vunpack.c.l.b16 %v2184
    %v2754 = vunpack.c.h.b16 %v2184
    %v2755 = vunpack.c.l.b16 %v2185
    %v2756 = vunpack.c.h.b16 %v2185
    %v2757 = vunpack.c.l.b16 %v2186
    %v2758 = vunpack.c.h.b16 %v2186
    %v2759 = vunpack.c.l.b16 %v2187
    %v2760 = vunpack.c.h.b16 %v2187
    %v2761 = vunpack.c.l.b16 %v2188
    %v2762 = vunpack.c.h.b16 %v2188
    %v2763 = vunpack.c.l.b16 %v2189
    %v2764 = vunpack.c.h.b16 %v2189
    %v2765 = vunpack.c.l.b16 %v2190
    %v2766 = vunpack.c.h.b16 %v2190
    %v2767 = vunpack.c.l.b16 %v2191
    %v2768 = vunpack.c.h.b16 %v2191
    %v2769 = vunpack.c.l.b16 %v2192
    %v2770 = vunpack.c.h.b16 %v2192
    %v2771 = vunpack.c.l.b16 %v2193
    %v2772 = vunpack.c.h.b16 %v2193
    %v2773 = vunpack.c.l.b16 %v2194
    %v2774 = vunpack.c.h.b16 %v2194
    %v2775 = vunpack.c.l.b16 %v2195
    %v2776 = vunpack.c.h.b16 %v2195
    %v2777 = vunpack.c.l.b16 %v2196
    %v2778 = vunpack.c.h.b16 %v2196
    %v2779 = vunpack.c.l.b16 %v2197
    %v2780 = vunpack.c.h.b16 %v2197
    %v2781 = vunpack.c.l.b16 %v2198
    %v2782 = vunpack.c.h.b16 %v2198
    %v2783 = vunpack.c.l.b16 %v2199
    %v2784 = vunpack.c.h.b16 %v2199
    %v2785 = vunpack.c.l.b16 %v2200
    %v2786 = vunpack.c.h.b16 %v2200
    %v2787 = vunpack.c.l.b16 %v2201
    %v2788 = vunpack.c.h.b16 %v2201
    %v2789 = vunpack.c.l.b16 %v2202
    %v2790 = vunpack.c.h.b16 %v2202
    %v2791 = vunpack.c.l.b16 %v2203
    %v2792 = vunpack.c.h.b16 %v2203
    %v2793 = vunpack.c.l.b16 %v2204
    %v2794 = vunpack.c.h.b16 %v2204
    %v2795 = vunpack.c.l.b16 %v2205
    %v2796 = vunpack.c.h.b16 %v2205
    %v2797 = vunpack.c.l.b16 %v2206
    %v2798 = vunpack.c.h.b16 %v2206
    %v2799 = vunpack.c.l.b16 %v2207
    %v2800 = vunpack.c.h.b16 %v2207
    %v2801 = vunpack.c.l.b16 %v2208
    %v2802 = vunpack.c.h.b16 %v2208
    %v2803 = vunpack.c.l.b16 %v2209
    %v2804 = vunpack.c.h.b16 %v2209
    %v2805 = vunpack.c.l.b16 %v2210
    %v2806 = vunpack.c.h.b16 %v2210
    %v2807 = vunpack.c.l.b16 %v2211
    %v2808 = vunpack.c.h.b16 %v2211
    %v2809 = vunpack.c.l.b16 %v2212
    %v2810 = vunpack.c.h.b16 %v2212
    %v2811 = vunpack.c.l.b16 %v2213
    %v2812 = vunpack.c.h.b16 %v2213
    %v2813 = vunpack.c.l.b16 %v2214
    %v2814 = vunpack.c.h.b16 %v2214
    %v2815 = vunpack.c.l.b16 %v2215
    %v2816 = vunpack.c.h.b16 %v2215
    %v2817 = vunpack.c.l.b16 %v2216
    %v2818 = vunpack.c.h.b16 %v2216
    %v2819 = vunpack.c.l.b16 %v2217
    %v2820 = vunpack.c.h.b16 %v2217
    %v2821 = vunpack.c.l.b16 %v2218
    %v2822 = vunpack.c.h.b16 %v2218
    %v2823 = vunpack.c.l.b16 %v2219
    %v2824 = vunpack.c.h.b16 %v2219
    %v2825 = vunpack.c.l.b16 %v2220
    %v2826 = vunpack.c.h.b16 %v2220
    %v2827 = vunpack.c.l.b16 %v2221
    %v2828 = vunpack.c.h.b16 %v2221
    %v2829 = vunpack.c.l.b16 %v2222
    %v2830 = vunpack.c.h.b16 %v2222
    %v2831 = vpack.c.b16 %v2453, %v2447
    %v2832 = vpack.c.b16 %v2454, %v2448
    %v2833 = vpack.c.b16 %v2455, %v2449
    %v2834 = vpack.c.b16 %v2456, %v2450
    %v2835 = vpack.c.b16 %v2457, %v2451
    %v2836 = vpack.c.b16 %v2458, %v2452
    %v2837 = vpack.c.b16 %v2465, %v2459
    %v2838 = vpack.c.b16 %v2466, %v2460
    %v2839 = vpack.c.b16 %v2467, %v2461
    %v2840 = vpack.c.b16 %v2468, %v2462
    %v2841 = vpack.c.b16 %v2469, %v2463
    %v2842 = vpack.c.b16 %v2470, %v2464
    %v2843 = vpack.c.b16 %v2477, %v2471
    %v2844 = vpack.c.b16 %v2478, %v2472
    %v2845 = vpack.c.b16 %v2479, %v2473
    %v2846 = vpack.c.b16 %v2480, %v2474
    %v2847 = vpack.c.b16 %v2481, %v2475
    %v2848 = vpack.c.b16 %v2482, %v2476
    %v2849 = vpack.c.b16 %v2489, %v2483
    %v2850 = vpack.c.b16 %v2490, %v2484
    %v2851 = vpack.c.b16 %v2491, %v2485
    %v2852 = vpack.c.b16 %v2492, %v2486
    %v2853 = vpack.c.b16 %v2493, %v2487
    %v2854 = vpack.c.b16 %v2494, %v2488
    %v2855 = vpack.c.b16 %v2501, %v2495
    %v2856 = vpack.c.b16 %v2502, %v2496
    %v2857 = vpack.c.b16 %v2503, %v2497
    %v2858 = vpack.c.b16 %v2504, %v2498
    %v2859 = vpack.c.b16 %v2505, %v2499
    %v2860 = vpack.c.b16 %v2506, %v2500
    %v2861 = vpack.c.b16 %v2513, %v2507
    %v2862 = vpack.c.b16 %v2514, %v2508
    %v2863 = vpack.c.b16 %v2515, %v2509
    %v2864 = vpack.c.b16 %v2516, %v2510
    %v2865 = vpack.c.b16 %v2517, %v2511
    %v2866 = vpack.c.b16 %v2518, %v2512
    %v2867 = vpack.c.b16 %v2525, %v2519
    %v2868 = vpack.c.b16 %v2526, %v2520
    %v2869 = vpack.c.b16 %v2527, %v2521
    %v2870 = vpack.c.b16 %v2528, %v2522
    %v2871 = vpack.c.b16 %v2529, %v2523
    %v2872 = vpack.c.b16 %v2530, %v2524
    %v2873 = vpack.c.b16 %v2537, %v2531
    %v2874 = vpack.c.b16 %v2538, %v2532
    %v2875 = vpack.c.b16 %v2539, %v2533
    %v2876 = vpack.c.b16 %v2540, %v2534
    %v2877 = vpack.c.b16 %v2541, %v2535
    %v2878 = vpack.c.b16 %v2542, %v2536
    %v2879 = vpack.c.b16 %v2549, %v2543
    %v2880 = vpack.c.b16 %v2550, %v2544
    %v2881 = vpack.c.b16 %v2551, %v2545
    %v2882 = vpack.c.b16 %v2552, %v2546
    %v2883 = vpack.c.b16 %v2553, %v2547
    %v2884 = vpack.c.b16 %v2554, %v2548
    %v2885 = vpack.c.b16 %v2561, %v2555
    %v2886 = vpack.c.b16 %v2562, %v2556
    %v2887 = vpack.c.b16 %v2563, %v2557
    %v2888 = vpack.c.b16 %v2564, %v2558
    %v2889 = vpack.c.b16 %v2565, %v2559
    %v2890 = vpack.c.b16 %v2566, %v2560
    %v2891 = vpack.c.b16 %v2573, %v2567
    %v2892 = vpack.c.b16 %v2574, %v2568
    %v2893 = vpack.c.b16 %v2575, %v2569
    %v2894 = vpack.c.b16 %v2576, %v2570
    %v2895 = vpack.c.b16 %v2577, %v2571
    %v2896 = vpack.c.b16 %v2578, %v2572
    %v2897 = vpack.c.b16 %v2585, %v2579
    %v2898 = vpack.c.b16 %v2586, %v2580
    %v2899 = vpack.c.b16 %v2587, %v2581
    %v2900 = vpack.c.b16 %v2588, %v2582
    %v2901 = vpack.c.b16 %v2589, %v2583
    %v2902 = vpack.c.b16 %v2590, %v2584
    %v2903 = vpack.c.b16 %v2597, %v2591
    %v2904 = vpack.c.b16 %v2598, %v2592
    %v2905 = vpack.c.b16 %v2599, %v2593
    %v2906 = vpack.c.b16 %v2600, %v2594
    %v2907 = vpack.c.b16 %v2601, %v2595
    %v2908 = vpack.c.b16 %v2602, %v2596
    %v2909 = vpack.c.b16 %v2609, %v2603
    %v2910 = vpack.c.b16 %v2610, %v2604
    %v2911 = vpack.c.b16 %v2611, %v2605
    %v2912 = vpack.c.b16 %v2612, %v2606
    %v2913 = vpack.c.b16 %v2613, %v2607
    %v2914 = vpack.c.b16 %v2614, %v2608
    %v2915 = vpack.c.b16 %v2621, %v2615
    %v2916 = vpack.c.b16 %v2622, %v2616
    %v2917 = vpack.c.b16 %v2623, %v2617
    %v2918 = vpack.c.b16 %v2624, %v2618
    %v2919 = vpack.c.b16 %v2625, %v2619
    %v2920 = vpack.c.b16 %v2626, %v2620
    %v2921 = vpack.c.b16 %v2633, %v2627
    %v2922 = vpack.c.b16 %v2634, %v2628
    %v2923 = vpack.c.b16 %v2635, %v2629
    %v2924 = vpack.c.b16 %v2636, %v2630
    %v2925 = vpack.c.b16 %v2637, %v2631
    %v2926 = vpack.c.b16 %v2638, %v2632
    %v2927 = vpack.c.b16 %v2645, %v2639
    %v2928 = vpack.c.b16 %v2646, %v2640
    %v2929 = vpack.c.b16 %v2647, %v2641
    %v2930 = vpack.c.b16 %v2648, %v2642
    %v2931 = vpack.c.b16 %v2649, %v2643
    %v2932 = vpack.c.b16 %v2650, %v2644
    %v2933 = vpack.c.b16 %v2657, %v2651
    %v2934 = vpack.c.b16 %v2658, %v2652
    %v2935 = vpack.c.b16 %v2659, %v2653
    %v2936 = vpack.c.b16 %v2660, %v2654
    %v2937 = vpack.c.b16 %v2661, %v2655
    %v2938 = vpack.c.b16 %v2662, %v2656
    %v2939 = vpack.c.b16 %v2669, %v2663
    %v2940 = vpack.c.b16 %v2670, %v2664
    %v2941 = vpack.c.b16 %v2671, %v2665
    %v2942 = vpack.c.b16 %v2672, %v2666
    %v2943 = vpack.c.b16 %v2673, %v2667
    %v2944 = vpack.c.b16 %v2674, %v2668
    %v2945 = vpack.c.b16 %v2681, %v2675
    %v2946 = vpack.c.b16 %v2682, %v2676
    %v2947 = vpack.c.b16 %v2683, %v2677
    %v2948 = vpack.c.b16 %v2684, %v2678
    %v2949 = vpack.c.b16 %v2685, %v2679
    %v2950 = vpack.c.b16 %v2686, %v2680
    %v2951 = vpack.c.b16 %v2693, %v2687
    %v2952 = vpack.c.b16 %v2694, %v2688
    %v2953 = vpack.c.b16 %v2695, %v2689
    %v2954 = vpack.c.b16 %v2696, %v2690
    %v2955 = vpack.c.b16 %v2697, %v2691
    %v2956 = vpack.c.b16 %v2698, %v2692
    %v2957 = vpack.c.b16 %v2705, %v2699
    %v2958 = vpack.c.b16 %v2706, %v2700
    %v2959 = vpack.c.b16 %v2707, %v2701
    %v2960 = vpack.c.b16 %v2708, %v2702
    %v2961 = vpack.c.b16 %v2709, %v2703
    %v2962 = vpack.c.b16 %v2710, %v2704
    %v2963 = vpack.c.b16 %v2717, %v2711
    %v2964 = vpack.c.b16 %v2718, %v2712
    %v2965 = vpack.c.b16 %v2719, %v2713
    %v2966 = vpack.c.b16 %v2720, %v2714
    %v2967 = vpack.c.b16 %v2721, %v2715
    %v2968 = vpack.c.b16 %v2722, %v2716
    %v2969 = vpack.c.b16 %v2729, %v2723
    %v2970 = vpack.c.b16 %v2730, %v2724
    %v2971 = vpack.c.b16 %v2731, %v2725
    %v2972 = vpack.c.b16 %v2732, %v2726
    %v2973 = vpack.c.b16 %v2733, %v2727
    %v2974 = vpack.c.b16 %v2734, %v2728
    %v2975 = vpack.c.b16 %v2741, %v2735
    %v2976 = vpack.c.b16 %v2742, %v2736
    %v2977 = vpack.c.b16 %v2743, %v2737
    %v2978 = vpack.c.b16 %v2744, %v2738
    %v2979 = vpack.c.b16 %v2745, %v2739
    %v2980 = vpack.c.b16 %v2746, %v2740
    %v2981 = vpack.c.b16 %v2753, %v2747
    %v2982 = vpack.c.b16 %v2754, %v2748
    %v2983 = vpack.c.b16 %v2755, %v2749
    %v2984 = vpack.c.b16 %v2756, %v2750
    %v2985 = vpack.c.b16 %v2757, %v2751
    %v2986 = vpack.c.b16 %v2758, %v2752
    %v2987 = vpack.c.b16 %v2765, %v2759
    %v2988 = vpack.c.b16 %v2766, %v2760
    %v2989 = vpack.c.b16 %v2767, %v2761
    %v2990 = vpack.c.b16 %v2768, %v2762
    %v2991 = vpack.c.b16 %v2769, %v2763
    %v2992 = vpack.c.b16 %v2770, %v2764
    %v2993 = vpack.c.b16 %v2777, %v2771
    %v2994 = vpack.c.b16 %v2778, %v2772
    %v2995 = vpack.c.b16 %v2779, %v2773
    %v2996 = vpack.c.b16 %v2780, %v2774
    %v2997 = vpack.c.b16 %v2781, %v2775
    %v2998 = vpack.c.b16 %v2782, %v2776
    %v2999 = vpack.c.b16 %v2789, %v2783
    %v3000 = vpack.c.b16 %v2790, %v2784
    %v3001 = vpack.c.b16 %v2791, %v2785
    %v3002 = vpack.c.b16 %v2792, %v2786
    %v3003 = vpack.c.b16 %v2793, %v2787
    %v3004 = vpack.c.b16 %v2794, %v2788
    %v3005 = vpack.c.b16 %v2801, %v2795
    %v3006 = vpack.c.b16 %v2802, %v2796
    %v3007 = vpack.c.b16 %v2803, %v2797
    %v3008 = vpack.c.b16 %v2804, %v2798
    %v3009 = vpack.c.b16 %v2805, %v2799
    %v3010 = vpack.c.b16 %v2806, %v2800
    %v3011 = vpack.c.b16 %v2813, %v2807
    %v3012 = vpack.c.b16 %v2814, %v2808
    %v3013 = vpack.c.b16 %v2815, %v2809
    %v3014 = vpack.c.b16 %v2816, %v2810
    %v3015 = vpack.c.b16 %v2817, %v2811
    %v3016 = vpack.c.b16 %v2818, %v2812
    %v3017 = vpack.c.b16 %v2825, %v2819
    %v3018 = vpack.c.b16 %v2826, %v2820
    %v3019 = vpack.c.b16 %v2827, %v2821
    %v3020 = vpack.c.b16 %v2828, %v2822
    %v3021 = vpack.c.b16 %v2829, %v2823
    %v3022 = vpack.c.b16 %v2830, %v2824
    %3215 = vmatprep.subr.bf16.mxu0 %v2832
    %3216 = vmatpush1.bf16.msra.mxu0 %v2831
    %3217 = vmatprep.subr.bf16.mxu0 %v2838
    %3218 = vmatpush1.bf16.msra.mxu0 %v2837
    %3219 = vmatprep.subr.bf16.mxu0 %v2844
    %3220 = vmatpush1.bf16.msra.mxu0 %v2843
    %3221 = vmatprep.subr.bf16.mxu0 %v2850
    %3222 = vmatpush1.bf16.msra.mxu0 %v2849
    %3223 = vmatprep.subr.bf16.mxu0 %v2856
    %3224 = vmatpush1.bf16.msra.mxu0 %v2855
    %3225 = vmatprep.subr.bf16.mxu0 %v2862
    %3226 = vmatpush1.bf16.msra.mxu0 %v2861
    %3227 = vmatprep.subr.bf16.mxu0 %v2868
    %3228 = vmatpush1.bf16.msra.mxu0 %v2867
    %3229 = vmatprep.subr.bf16.mxu0 %v2874
    %3230 = vmatpush1.bf16.msra.mxu0 %v2873
    %3231 = vmatprep.subr.bf16.mxu0 %v2880
    %3232 = vmatpush1.bf16.msra.mxu0 %v2879
    %3233 = vmatprep.subr.bf16.mxu0 %v2886
    %3234 = vmatpush1.bf16.msra.mxu0 %v2885
    %3235 = vmatprep.subr.bf16.mxu0 %v2892
    %3236 = vmatpush1.bf16.msra.mxu0 %v2891
    %3237 = vmatprep.subr.bf16.mxu0 %v2898
    %3238 = vmatpush1.bf16.msra.mxu0 %v2897
    %3239 = vmatprep.subr.bf16.mxu0 %v2904
    %3240 = vmatpush1.bf16.msra.mxu0 %v2903
    %3241 = vmatprep.subr.bf16.mxu0 %v2910
    %3242 = vmatpush1.bf16.msra.mxu0 %v2909
    %3243 = vmatprep.subr.bf16.mxu0 %v2916
    %3244 = vmatpush1.bf16.msra.mxu0 %v2915
    %3245 = vmatprep.subr.bf16.mxu0 %v2922
    %3246 = vmatpush1.bf16.msra.mxu0 %v2921
    %3247 = vmatprep.mubr.bf16.mxu0 %v2028
    %3248 = vmatmul.mubr.bf16.gmra.mrb[0].mxu0 %v2027
    %v3249 = vpop.f32.mrb[0].mxu0
    %v3250 = vadd.f32 %v2228, %v3249
    %v3251 = vpop.f32.mrb[0].mxu0
    %v3252 = vadd.f32 %v2232, %v3251
    %v3253 = vpop.f32.mrb[0].mxu0
    %v3254 = vpop.f32.mrb[0].mxu0
    %3255 = vdwg.mxu0
    %3256 = vmatprep.subr.bf16.mxu0 %v2928
    %3257 = vmatpush1.bf16.msra.mxu0 %v2927
    %3258 = vmatprep.subr.bf16.mxu0 %v2934
    %3259 = vmatpush1.bf16.msra.mxu0 %v2933
    %3260 = vmatprep.subr.bf16.mxu0 %v2940
    %3261 = vmatpush1.bf16.msra.mxu0 %v2939
    %3262 = vmatprep.subr.bf16.mxu0 %v2946
    %3263 = vmatpush1.bf16.msra.mxu0 %v2945
    %3264 = vmatprep.subr.bf16.mxu0 %v2952
    %3265 = vmatpush1.bf16.msra.mxu0 %v2951
    %3266 = vmatprep.subr.bf16.mxu0 %v2958
    %3267 = vmatpush1.bf16.msra.mxu0 %v2957
    %3268 = vmatprep.subr.bf16.mxu0 %v2964
    %3269 = vmatpush1.bf16.msra.mxu0 %v2963
    %3270 = vmatprep.subr.bf16.mxu0 %v2970
    %3271 = vmatpush1.bf16.msra.mxu0 %v2969
    %3272 = vmatprep.subr.bf16.mxu0 %v2976
    %3273 = vmatpush1.bf16.msra.mxu0 %v2975
    %3274 = vmatprep.subr.bf16.mxu0 %v2982
    %3275 = vmatpush1.bf16.msra.mxu0 %v2981
    %3276 = vmatprep.subr.bf16.mxu0 %v2988
    %3277 = vmatpush1.bf16.msra.mxu0 %v2987
    %3278 = vmatprep.subr.bf16.mxu0 %v2994
    %3279 = vmatpush1.bf16.msra.mxu0 %v2993
    %3280 = vmatprep.subr.bf16.mxu0 %v3000
    %3281 = vmatpush1.bf16.msra.mxu0 %v2999
    %3282 = vmatprep.subr.bf16.mxu0 %v3006
    %3283 = vmatpush1.bf16.msra.mxu0 %v3005
    %3284 = vmatprep.subr.bf16.mxu0 %v3012
    %3285 = vmatpush1.bf16.msra.mxu0 %v3011
    %3286 = vmatprep.subr.bf16.mxu0 %v3018
    %3287 = vmatpush1.bf16.msra.mxu0 %v3017
    %3288 = vmatprep.mubr.bf16.mxu0 %v2030
    %3289 = vmatmul.mubr.bf16.gmra.mrb[0].mxu0 %v2029
    %v3290 = vpop.f32.mrb[0].mxu0
    %v3291 = vadd.f32 %v3250, %v3290
    %v3292 = vpop.f32.mrb[0].mxu0
    %v3293 = vadd.f32 %v3252, %v3292
    %v3294 = vpop.f32.mrb[0].mxu0
    %v3295 = vpop.f32.mrb[0].mxu0
    %3296 = vdwg.mxu0
    %3297 = vmatprep.subr.bf16.mxu0 %v2834
    %3298 = vmatpush1.bf16.msra.mxu0 %v2833
    %3299 = vmatprep.subr.bf16.mxu0 %v2840
    %3300 = vmatpush1.bf16.msra.mxu0 %v2839
    %3301 = vmatprep.subr.bf16.mxu0 %v2846
    %3302 = vmatpush1.bf16.msra.mxu0 %v2845
    %3303 = vmatprep.subr.bf16.mxu0 %v2852
    %3304 = vmatpush1.bf16.msra.mxu0 %v2851
    %3305 = vmatprep.subr.bf16.mxu0 %v2858
    %3306 = vmatpush1.bf16.msra.mxu0 %v2857
    %3307 = vmatprep.subr.bf16.mxu0 %v2864
    %3308 = vmatpush1.bf16.msra.mxu0 %v2863
    %3309 = vmatprep.subr.bf16.mxu0 %v2870
    %3310 = vmatpush1.bf16.msra.mxu0 %v2869
    %3311 = vmatprep.subr.bf16.mxu0 %v2876
    %3312 = vmatpush1.bf16.msra.mxu0 %v2875
    %3313 = vmatprep.subr.bf16.mxu0 %v2882
    %3314 = vmatpush1.bf16.msra.mxu0 %v2881
    %3315 = vmatprep.subr.bf16.mxu0 %v2888
    %3316 = vmatpush1.bf16.msra.mxu0 %v2887
    %3317 = vmatprep.subr.bf16.mxu0 %v2894
    %3318 = vmatpush1.bf16.msra.mxu0 %v2893
    %3319 = vmatprep.subr.bf16.mxu0 %v2900
    %3320 = vmatpush1.bf16.msra.mxu0 %v2899
    %3321 = vmatprep.subr.bf16.mxu0 %v2906
    %3322 = vmatpush1.bf16.msra.mxu0 %v2905
    %3323 = vmatprep.subr.bf16.mxu0 %v2912
    %3324 = vmatpush1.bf16.msra.mxu0 %v2911
    %3325 = vmatprep.subr.bf16.mxu0 %v2918
    %3326 = vmatpush1.bf16.msra.mxu0 %v2917
    %3327 = vmatprep.subr.bf16.mxu0 %v2924
    %3328 = vmatpush1.bf16.msra.mxu0 %v2923
    %3329 = vmatprep.mubr.bf16.mxu0 %v2028
    %3330 = vmatmul.mubr.bf16.gmra.mrb[0].mxu0 %v2027
    %v3331 = vpop.f32.mrb[0].mxu0
    %v3332 = vadd.f32 %v2236, %v3331
    %v3333 = vpop.f32.mrb[0].mxu0
    %v3334 = vadd.f32 %v2240, %v3333
    %v3335 = vpop.f32.mrb[0].mxu0
    %v3336 = vpop.f32.mrb[0].mxu0
    %3337 = vdwg.mxu0
    %3338 = vmatprep.subr.bf16.mxu0 %v2930
    %3339 = vmatpush1.bf16.msra.mxu0 %v2929
    %3340 = vmatprep.subr.bf16.mxu0 %v2936
    %3341 = vmatpush1.bf16.msra.mxu0 %v2935
    %3342 = vmatprep.subr.bf16.mxu0 %v2942
    %3343 = vmatpush1.bf16.msra.mxu0 %v2941
    %3344 = vmatprep.subr.bf16.mxu0 %v2948
    %3345 = vmatpush1.bf16.msra.mxu0 %v2947
    %3346 = vmatprep.subr.bf16.mxu0 %v2954
    %3347 = vmatpush1.bf16.msra.mxu0 %v2953
    %3348 = vmatprep.subr.bf16.mxu0 %v2960
    %3349 = vmatpush1.bf16.msra.mxu0 %v2959
    %3350 = vmatprep.subr.bf16.mxu0 %v2966
    %3351 = vmatpush1.bf16.msra.mxu0 %v2965
    %3352 = vmatprep.subr.bf16.mxu0 %v2972
    %3353 = vmatpush1.bf16.msra.mxu0 %v2971
    %3354 = vmatprep.subr.bf16.mxu0 %v2978
    %3355 = vmatpush1.bf16.msra.mxu0 %v2977
    %3356 = vmatprep.subr.bf16.mxu0 %v2984
    %3357 = vmatpush1.bf16.msra.mxu0 %v2983
    %3358 = vmatprep.subr.bf16.mxu0 %v2990
    %3359 = vmatpush1.bf16.msra.mxu0 %v2989
    %3360 = vmatprep.subr.bf16.mxu0 %v2996
    %3361 = vmatpush1.bf16.msra.mxu0 %v2995
    %3362 = vmatprep.subr.bf16.mxu0 %v3002
    %3363 = vmatpush1.bf16.msra.mxu0 %v3001
    %3364 = vmatprep.subr.bf16.mxu0 %v3008
    %3365 = vmatpush1.bf16.msra.mxu0 %v3007
    %3366 = vmatprep.subr.bf16.mxu0 %v3014
    %3367 = vmatpush1.bf16.msra.mxu0 %v3013
    %3368 = vmatprep.subr.bf16.mxu0 %v3020
    %3369 = vmatpush1.bf16.msra.mxu0 %v3019
    %3370 = vmatprep.mubr.bf16.mxu0 %v2030
    %3371 = vmatmul.mubr.bf16.gmra.mrb[0].mxu0 %v2029
    %v3372 = vpop.f32.mrb[0].mxu0
    %v3373 = vadd.f32 %v3332, %v3372
    %v3374 = vpop.f32.mrb[0].mxu0
    %v3375 = vadd.f32 %v3334, %v3374
    %v3376 = vpop.f32.mrb[0].mxu0
    %v3377 = vpop.f32.mrb[0].mxu0
    %3378 = vdwg.mxu0
    %3379 = vmatprep.subr.bf16.mxu0 %v2836
    %3380 = vmatpush1.bf16.msra.mxu0 %v2835
    %3381 = vmatprep.subr.bf16.mxu0 %v2842
    %3382 = vmatpush1.bf16.msra.mxu0 %v2841
    %3383 = vmatprep.subr.bf16.mxu0 %v2848
    %3384 = vmatpush1.bf16.msra.mxu0 %v2847
    %3385 = vmatprep.subr.bf16.mxu0 %v2854
    %3386 = vmatpush1.bf16.msra.mxu0 %v2853
    %3387 = vmatprep.subr.bf16.mxu0 %v2860
    %3388 = vmatpush1.bf16.msra.mxu0 %v2859
    %3389 = vmatprep.subr.bf16.mxu0 %v2866
    %3390 = vmatpush1.bf16.msra.mxu0 %v2865
    %3391 = vmatprep.subr.bf16.mxu0 %v2872
    %3392 = vmatpush1.bf16.msra.mxu0 %v2871
    %3393 = vmatprep.subr.bf16.mxu0 %v2878
    %3394 = vmatpush1.bf16.msra.mxu0 %v2877
    %3395 = vmatprep.subr.bf16.mxu0 %v2884
    %3396 = vmatpush1.bf16.msra.mxu0 %v2883
    %3397 = vmatprep.subr.bf16.mxu0 %v2890
    %3398 = vmatpush1.bf16.msra.mxu0 %v2889
    %3399 = vmatprep.subr.bf16.mxu0 %v2896
    %3400 = vmatpush1.bf16.msra.mxu0 %v2895
    %3401 = vmatprep.subr.bf16.mxu0 %v2902
    %3402 = vmatpush1.bf16.msra.mxu0 %v2901
    %3403 = vmatprep.subr.bf16.mxu0 %v2908
    %3404 = vmatpush1.bf16.msra.mxu0 %v2907
    %3405 = vmatprep.subr.bf16.mxu0 %v2914
    %3406 = vmatpush1.bf16.msra.mxu0 %v2913
    %3407 = vmatprep.subr.bf16.mxu0 %v2920
    %3408 = vmatpush1.bf16.msra.mxu0 %v2919
    %3409 = vmatprep.subr.bf16.mxu0 %v2926
    %3410 = vmatpush1.bf16.msra.mxu0 %v2925
    %3411 = vmatprep.mubr.bf16.mxu0 %v2028
    %3412 = vmatmul.mubr.bf16.gmra.mrb[0].mxu0 %v2027
    %v3413 = vpop.f32.mrb[0].mxu0
    %v3414 = vadd.f32 %v2244, %v3413
    %v3415 = vpop.f32.mrb[0].mxu0
    %v3416 = vadd.f32 %v2248, %v3415
    %v3417 = vpop.f32.mrb[0].mxu0
    %v3418 = vpop.f32.mrb[0].mxu0
    %3419 = vdwg.mxu0
    %3420 = vmatprep.subr.bf16.mxu0 %v2932
    %3421 = vmatpush1.bf16.msra.mxu0 %v2931
    %3422 = vmatprep.subr.bf16.mxu0 %v2938
    %3423 = vmatpush1.bf16.msra.mxu0 %v2937
    %3424 = vmatprep.subr.bf16.mxu0 %v2944
    %3425 = vmatpush1.bf16.msra.mxu0 %v2943
    %3426 = vmatprep.subr.bf16.mxu0 %v2950
    %3427 = vmatpush1.bf16.msra.mxu0 %v2949
    %3428 = vmatprep.subr.bf16.mxu0 %v2956
    %3429 = vmatpush1.bf16.msra.mxu0 %v2955
    %3430 = vmatprep.subr.bf16.mxu0 %v2962
    %3431 = vmatpush1.bf16.msra.mxu0 %v2961
    %3432 = vmatprep.subr.bf16.mxu0 %v2968
    %3433 = vmatpush1.bf16.msra.mxu0 %v2967
    %3434 = vmatprep.subr.bf16.mxu0 %v2974
    %3435 = vmatpush1.bf16.msra.mxu0 %v2973
    %3436 = vmatprep.subr.bf16.mxu0 %v2980
    %3437 = vmatpush1.bf16.msra.mxu0 %v2979
    %3438 = vmatprep.subr.bf16.mxu0 %v2986
    %3439 = vmatpush1.bf16.msra.mxu0 %v2985
    %3440 = vmatprep.subr.bf16.mxu0 %v2992
    %3441 = vmatpush1.bf16.msra.mxu0 %v2991
    %3442 = vmatprep.subr.bf16.mxu0 %v2998
    %3443 = vmatpush1.bf16.msra.mxu0 %v2997
    %3444 = vmatprep.subr.bf16.mxu0 %v3004
    %3445 = vmatpush1.bf16.msra.mxu0 %v3003
    %3446 = vmatprep.subr.bf16.mxu0 %v3010
    %3447 = vmatpush1.bf16.msra.mxu0 %v3009
    %3448 = vmatprep.subr.bf16.mxu0 %v3016
    %3449 = vmatpush1.bf16.msra.mxu0 %v3015
    %3450 = vmatprep.subr.bf16.mxu0 %v3022
    %3451 = vmatpush1.bf16.msra.mxu0 %v3021
    %3452 = vmatprep.mubr.bf16.mxu0 %v2030
    %3453 = vmatmul.mubr.bf16.gmra.mrb[0].mxu0 %v2029
    %v3454 = vpop.f32.mrb[0].mxu0
    %v3455 = vadd.f32 %v3414, %v3454
    %v3456 = vpop.f32.mrb[0].mxu0
    %v3457 = vadd.f32 %v3416, %v3456
    %v3458 = vpop.f32.mrb[0].mxu0
    %v3459 = vpop.f32.mrb[0].mxu0
    %3460 = vdwg.mxu0
    %v3461 = vmax.f32 %v3291, 0.0
    %v3462 = vmax.f32 %v3293, 0.0
    %v3463 = vmax.f32 %v3373, 0.0
    %v3464 = vmax.f32 %v3375, 0.0
    %v3465 = vmax.f32 %v3455, 0.0
    %v3466 = vmax.f32 %v3457, 0.0
    %v3467 = vpack.c.bf16 %v3461, %v3461
    %v3468 = vpack.c.bf16 %v3462, %v3462
    %v3469 = vpack.c.bf16 %v3463, %v3463
    %v3470 = vpack.c.bf16 %v3464, %v3464
    %v3471 = vpack.c.bf16 %v3465, %v3465
    %v3472 = vpack.c.bf16 %v3466, %v3466
    %v3473 = vld [vmem:[#allocation8] sm:$0xf]
    %v3474 = vld [vmem:[#allocation8 + $0x4] sm:$0xf]
    %v3475 = vld [vmem:[#allocation8 + $0x8] sm:$0xf]
    %v3476 = vld [vmem:[#allocation8 + $0xc] sm:$0xf]
    %v3477 = vld [vmem:[#allocation8 + $0x10] sm:$0xf]
    %v3478 = vld [vmem:[#allocation8 + $0x14] sm:$0xf]
    %v3479 = vld [vmem:[#allocation8 + $0x18] sm:$0xf]
    %v3480 = vld [vmem:[#allocation8 + $0x1c] sm:$0xf]
    %v3481 = vld [vmem:[#allocation8 + $0x20] sm:$0xf]
    %v3482 = vld [vmem:[#allocation8 + $0x24] sm:$0xf]
    %v3483 = vld [vmem:[#allocation8 + $0x28] sm:$0xf]
    %v3484 = vld [vmem:[#allocation8 + $0x2c] sm:$0xf]
    %v3485 = vld [vmem:[#allocation8 + $0x30] sm:$0xf]
    %v3486 = vld [vmem:[#allocation8 + $0x34] sm:$0xf]
    %v3487 = vld [vmem:[#allocation8 + $0x38] sm:$0xf]
    %v3488 = vld [vmem:[#allocation8 + $0x3c] sm:$0xf]
    %v3489 = vld [vmem:[#allocation8 + $0x40] sm:$0xf]
    %v3490 = vld [vmem:[#allocation8 + $0x44] sm:$0xf]
    %v3491 = vld [vmem:[#allocation8 + $0x48] sm:$0xf]
    %v3492 = vld [vmem:[#allocation8 + $0x4c] sm:$0xf]
    %v3493 = vld [vmem:[#allocation8 + $0x50] sm:$0xf]
    %v3494 = vld [vmem:[#allocation8 + $0x54] sm:$0xf]
    %v3495 = vld [vmem:[#allocation8 + $0x58] sm:$0xf]
    %v3496 = vld [vmem:[#allocation8 + $0x5c] sm:$0xf]
    %v3497 = vld [vmem:[#allocation8 + $0x60] sm:$0xf]
    %v3498 = vld [vmem:[#allocation8 + $0x64] sm:$0xf]
    %v3499 = vld [vmem:[#allocation8 + $0x68] sm:$0xf]
    %v3500 = vld [vmem:[#allocation8 + $0x6c] sm:$0xf]
    %v3501 = vld [vmem:[#allocation8 + $0x70] sm:$0xf]
    %v3502 = vld [vmem:[#allocation8 + $0x74] sm:$0xf]
    %v3503 = vld [vmem:[#allocation8 + $0x78] sm:$0xf]
    %v3504 = vld [vmem:[#allocation8 + $0x7c] sm:$0xf]
    %v3505 = vld [vmem:[#allocation8 + $0x80] sm:$0xf]
    %v3506 = vld [vmem:[#allocation8 + $0x84] sm:$0xf]
    %v3507 = vld [vmem:[#allocation8 + $0x88] sm:$0xf]
    %v3508 = vld [vmem:[#allocation8 + $0x8c] sm:$0xf]
    %v3509 = vld [vmem:[#allocation8 + $0x90] sm:$0xf]
    %v3510 = vld [vmem:[#allocation8 + $0x94] sm:$0xf]
    %v3511 = vld [vmem:[#allocation8 + $0x98] sm:$0xf]
    %v3512 = vld [vmem:[#allocation8 + $0x9c] sm:$0xf]
    %v3513 = vld [vmem:[#allocation8 + $0xa0] sm:$0xf]
    %v3514 = vld [vmem:[#allocation8 + $0xa4] sm:$0xf]
    %v3515 = vld [vmem:[#allocation8 + $0xa8] sm:$0xf]
    %v3516 = vld [vmem:[#allocation8 + $0xac] sm:$0xf]
    %v3517 = vld [vmem:[#allocation8 + $0xb0] sm:$0xf]
    %v3518 = vld [vmem:[#allocation8 + $0xb4] sm:$0xf]
    %v3519 = vld [vmem:[#allocation8 + $0xb8] sm:$0xf]
    %v3520 = vld [vmem:[#allocation8 + $0xbc] sm:$0xf]
    %v3521 = vld [vmem:[#allocation8 + $0xc0] sm:$0xf]
    %v3522 = vld [vmem:[#allocation8 + $0xc4] sm:$0xf]
    %v3523 = vld [vmem:[#allocation8 + $0xc8] sm:$0xf]
    %v3524 = vld [vmem:[#allocation8 + $0xcc] sm:$0xf]
    %v3525 = vld [vmem:[#allocation8 + $0xd0] sm:$0xf]
    %v3526 = vld [vmem:[#allocation8 + $0xd4] sm:$0xf]
    %v3527 = vld [vmem:[#allocation8 + $0xd8] sm:$0xf]
    %v3528 = vld [vmem:[#allocation8 + $0xdc] sm:$0xf]
    %v3529 = vld [vmem:[#allocation8 + $0xe0] sm:$0xf]
    %v3530 = vld [vmem:[#allocation8 + $0xe4] sm:$0xf]
    %v3531 = vld [vmem:[#allocation8 + $0xe8] sm:$0xf]
    %v3532 = vld [vmem:[#allocation8 + $0xec] sm:$0xf]
    %v3533 = vld [vmem:[#allocation8 + $0xf0] sm:$0xf]
    %v3534 = vld [vmem:[#allocation8 + $0xf4] sm:$0xf]
    %v3535 = vld [vmem:[#allocation8 + $0xf8] sm:$0xf]
    %v3536 = vld [vmem:[#allocation8 + $0xfc] sm:$0xf]
    %v3537 = vld [vmem:[#allocation8 + $0x100] sm:$0xf]
    %v3538 = vld [vmem:[#allocation8 + $0x104] sm:$0xf]
    %v3539 = vld [vmem:[#allocation8 + $0x108] sm:$0xf]
    %v3540 = vld [vmem:[#allocation8 + $0x10c] sm:$0xf]
    %v3541 = vld [vmem:[#allocation8 + $0x110] sm:$0xf]
    %v3542 = vld [vmem:[#allocation8 + $0x114] sm:$0xf]
    %v3543 = vld [vmem:[#allocation8 + $0x118] sm:$0xf]
    %v3544 = vld [vmem:[#allocation8 + $0x11c] sm:$0xf]
    %v3545 = vld [vmem:[#allocation8 + $0x120] sm:$0xf]
    %v3546 = vld [vmem:[#allocation8 + $0x124] sm:$0xf]
    %v3547 = vld [vmem:[#allocation8 + $0x128] sm:$0xf]
    %v3548 = vld [vmem:[#allocation8 + $0x12c] sm:$0xf]
    %v3549 = vld [vmem:[#allocation8 + $0x130] sm:$0xf]
    %v3550 = vld [vmem:[#allocation8 + $0x134] sm:$0xf]
    %v3551 = vld [vmem:[#allocation8 + $0x138] sm:$0xf]
    %v3552 = vld [vmem:[#allocation8 + $0x13c] sm:$0xf]
    %v3553 = vld [vmem:[#allocation8 + $0x140] sm:$0xf]
    %v3554 = vld [vmem:[#allocation8 + $0x144] sm:$0xf]
    %v3555 = vld [vmem:[#allocation8 + $0x148] sm:$0xf]
    %v3556 = vld [vmem:[#allocation8 + $0x14c] sm:$0xf]
    %v3557 = vld [vmem:[#allocation8 + $0x150] sm:$0xf]
    %v3558 = vld [vmem:[#allocation8 + $0x154] sm:$0xf]
    %v3559 = vld [vmem:[#allocation8 + $0x158] sm:$0xf]
    %v3560 = vld [vmem:[#allocation8 + $0x15c] sm:$0xf]
    %v3561 = vld [vmem:[#allocation8 + $0x160] sm:$0xf]
    %v3562 = vld [vmem:[#allocation8 + $0x164] sm:$0xf]
    %v3563 = vld [vmem:[#allocation8 + $0x168] sm:$0xf]
    %v3564 = vld [vmem:[#allocation8 + $0x16c] sm:$0xf]
    %v3565 = vld [vmem:[#allocation8 + $0x170] sm:$0xf]
    %v3566 = vld [vmem:[#allocation8 + $0x174] sm:$0xf]
    %v3567 = vld [vmem:[#allocation8 + $0x178] sm:$0xf]
    %v3568 = vld [vmem:[#allocation8 + $0x17c] sm:$0xf]
    %v3569 = vld [vmem:[%s6] sm:$0x1]
    %v3571 = vlaneseq
    %v3572 = vshrl.u32 %v3571, 7
    %v3573 = vsub.s32 0, %v3572
    %v3574 = vrot.slane %v3569, %v3573
    %v3672 = vunpack.c.l.b16 %v3473
    %v3673 = vunpack.c.l.b16 %v3474
    %v3674 = vunpack.c.l.b16 %v3475
    %v3675 = vunpack.c.l.b16 %v3476
    %v3676 = vunpack.c.l.b16 %v3477
    %v3677 = vunpack.c.l.b16 %v3478
    %v3678 = vunpack.c.l.b16 %v3479
    %v3679 = vunpack.c.l.b16 %v3480
    %v3680 = vunpack.c.l.b16 %v3481
    %v3681 = vunpack.c.l.b16 %v3482
    %v3682 = vunpack.c.l.b16 %v3483
    %v3683 = vunpack.c.l.b16 %v3484
    %v3684 = vunpack.c.l.b16 %v3485
    %v3685 = vunpack.c.l.b16 %v3486
    %v3686 = vunpack.c.l.b16 %v3487
    %v3687 = vunpack.c.l.b16 %v3488
    %v3688 = vunpack.c.l.b16 %v3489
    %v3689 = vunpack.c.l.b16 %v3490
    %v3690 = vunpack.c.l.b16 %v3491
    %v3691 = vunpack.c.l.b16 %v3492
    %v3692 = vunpack.c.l.b16 %v3493
    %v3693 = vunpack.c.l.b16 %v3494
    %v3694 = vunpack.c.l.b16 %v3495
    %v3695 = vunpack.c.l.b16 %v3496
    %v3696 = vunpack.c.l.b16 %v3497
    %v3697 = vunpack.c.l.b16 %v3498
    %v3698 = vunpack.c.l.b16 %v3499
    %v3699 = vunpack.c.l.b16 %v3500
    %v3700 = vunpack.c.l.b16 %v3501
    %v3701 = vunpack.c.l.b16 %v3502
    %v3702 = vunpack.c.l.b16 %v3503
    %v3703 = vunpack.c.l.b16 %v3504
    %v3704 = vunpack.c.l.b16 %v3505
    %v3705 = vunpack.c.l.b16 %v3506
    %v3706 = vunpack.c.l.b16 %v3507
    %v3707 = vunpack.c.l.b16 %v3508
    %v3708 = vunpack.c.l.b16 %v3509
    %v3709 = vunpack.c.l.b16 %v3510
    %v3710 = vunpack.c.l.b16 %v3511
    %v3711 = vunpack.c.l.b16 %v3512
    %v3712 = vunpack.c.l.b16 %v3513
    %v3713 = vunpack.c.l.b16 %v3514
    %v3714 = vunpack.c.l.b16 %v3515
    %v3715 = vunpack.c.l.b16 %v3516
    %v3716 = vunpack.c.l.b16 %v3517
    %v3717 = vunpack.c.l.b16 %v3518
    %v3718 = vunpack.c.l.b16 %v3519
    %v3719 = vunpack.c.l.b16 %v3520
    %v3720 = vunpack.c.l.b16 %v3521
    %v3721 = vunpack.c.l.b16 %v3522
    %v3722 = vunpack.c.l.b16 %v3523
    %v3723 = vunpack.c.l.b16 %v3524
    %v3724 = vunpack.c.l.b16 %v3525
    %v3725 = vunpack.c.l.b16 %v3526
    %v3726 = vunpack.c.l.b16 %v3527
    %v3727 = vunpack.c.l.b16 %v3528
    %v3728 = vunpack.c.l.b16 %v3529
    %v3729 = vunpack.c.l.b16 %v3530
    %v3730 = vunpack.c.l.b16 %v3531
    %v3731 = vunpack.c.l.b16 %v3532
    %v3732 = vunpack.c.l.b16 %v3533
    %v3733 = vunpack.c.l.b16 %v3534
    %v3734 = vunpack.c.l.b16 %v3535
    %v3735 = vunpack.c.l.b16 %v3536
    %v3736 = vunpack.c.l.b16 %v3537
    %v3737 = vunpack.c.l.b16 %v3538
    %v3738 = vunpack.c.l.b16 %v3539
    %v3739 = vunpack.c.l.b16 %v3540
    %v3740 = vunpack.c.l.b16 %v3541
    %v3741 = vunpack.c.l.b16 %v3542
    %v3742 = vunpack.c.l.b16 %v3543
    %v3743 = vunpack.c.l.b16 %v3544
    %v3744 = vunpack.c.l.b16 %v3545
    %v3745 = vunpack.c.l.b16 %v3546
    %v3746 = vunpack.c.l.b16 %v3547
    %v3747 = vunpack.c.l.b16 %v3548
    %v3748 = vunpack.c.l.b16 %v3549
    %v3749 = vunpack.c.l.b16 %v3550
    %v3750 = vunpack.c.l.b16 %v3551
    %v3751 = vunpack.c.l.b16 %v3552
    %v3752 = vunpack.c.l.b16 %v3553
    %v3753 = vunpack.c.l.b16 %v3554
    %v3754 = vunpack.c.l.b16 %v3555
    %v3755 = vunpack.c.l.b16 %v3556
    %v3756 = vunpack.c.l.b16 %v3557
    %v3757 = vunpack.c.l.b16 %v3558
    %v3758 = vunpack.c.l.b16 %v3559
    %v3759 = vunpack.c.l.b16 %v3560
    %v3760 = vunpack.c.l.b16 %v3561
    %v3761 = vunpack.c.l.b16 %v3562
    %v3762 = vunpack.c.l.b16 %v3563
    %v3763 = vunpack.c.l.b16 %v3564
    %v3764 = vunpack.c.l.b16 %v3565
    %v3765 = vunpack.c.l.b16 %v3566
    %v3766 = vunpack.c.l.b16 %v3567
    %v3767 = vunpack.c.l.b16 %v3568
    %v3768 = vpack.c.b16 %v3673, %v3672
    %v3769 = vpack.c.b16 %v3675, %v3674
    %v3770 = vpack.c.b16 %v3677, %v3676
    %v3771 = vpack.c.b16 %v3679, %v3678
    %v3772 = vpack.c.b16 %v3681, %v3680
    %v3773 = vpack.c.b16 %v3683, %v3682
    %v3774 = vpack.c.b16 %v3685, %v3684
    %v3775 = vpack.c.b16 %v3687, %v3686
    %v3776 = vpack.c.b16 %v3689, %v3688
    %v3777 = vpack.c.b16 %v3691, %v3690
    %v3778 = vpack.c.b16 %v3693, %v3692
    %v3779 = vpack.c.b16 %v3695, %v3694
    %v3780 = vpack.c.b16 %v3697, %v3696
    %v3781 = vpack.c.b16 %v3699, %v3698
    %v3782 = vpack.c.b16 %v3701, %v3700
    %v3783 = vpack.c.b16 %v3703, %v3702
    %v3784 = vpack.c.b16 %v3705, %v3704
    %v3785 = vpack.c.b16 %v3707, %v3706
    %v3786 = vpack.c.b16 %v3709, %v3708
    %v3787 = vpack.c.b16 %v3711, %v3710
    %v3788 = vpack.c.b16 %v3713, %v3712
    %v3789 = vpack.c.b16 %v3715, %v3714
    %v3790 = vpack.c.b16 %v3717, %v3716
    %v3791 = vpack.c.b16 %v3719, %v3718
    %v3792 = vpack.c.b16 %v3721, %v3720
    %v3793 = vpack.c.b16 %v3723, %v3722
    %v3794 = vpack.c.b16 %v3725, %v3724
    %v3795 = vpack.c.b16 %v3727, %v3726
    %v3796 = vpack.c.b16 %v3729, %v3728
    %v3797 = vpack.c.b16 %v3731, %v3730
    %v3798 = vpack.c.b16 %v3733, %v3732
    %v3799 = vpack.c.b16 %v3735, %v3734
    %v3800 = vpack.c.b16 %v3737, %v3736
    %v3801 = vpack.c.b16 %v3739, %v3738
    %v3802 = vpack.c.b16 %v3741, %v3740
    %v3803 = vpack.c.b16 %v3743, %v3742
    %v3804 = vpack.c.b16 %v3745, %v3744
    %v3805 = vpack.c.b16 %v3747, %v3746
    %v3806 = vpack.c.b16 %v3749, %v3748
    %v3807 = vpack.c.b16 %v3751, %v3750
    %v3808 = vpack.c.b16 %v3753, %v3752
    %v3809 = vpack.c.b16 %v3755, %v3754
    %v3810 = vpack.c.b16 %v3757, %v3756
    %v3811 = vpack.c.b16 %v3759, %v3758
    %v3812 = vpack.c.b16 %v3761, %v3760
    %v3813 = vpack.c.b16 %v3763, %v3762
    %v3814 = vpack.c.b16 %v3765, %v3764
    %v3815 = vpack.c.b16 %v3767, %v3766
    %3864 = vmatprep.subr.bf16.mxu0 0
    %3865 = vmatpush1.bf16.msra.mxu0 %v3768
    %3866 = vmatprep.subr.bf16.mxu0 0
    %3867 = vmatpush1.bf16.msra.mxu0 %v3769
    %3868 = vmatprep.subr.bf16.mxu0 0
    %3869 = vmatpush1.bf16.msra.mxu0 %v3770
    %3870 = vmatprep.subr.bf16.mxu0 0
    %3871 = vmatpush1.bf16.msra.mxu0 %v3771
    %3872 = vmatprep.subr.bf16.mxu0 0
    %3873 = vmatpush1.bf16.msra.mxu0 %v3772
    %3874 = vmatprep.subr.bf16.mxu0 0
    %3875 = vmatpush1.bf16.msra.mxu0 %v3773
    %3876 = vmatprep.subr.bf16.mxu0 0
    %3877 = vmatpush1.bf16.msra.mxu0 %v3774
    %3878 = vmatprep.subr.bf16.mxu0 0
    %3879 = vmatpush1.bf16.msra.mxu0 %v3775
    %3880 = vmatprep.subr.bf16.mxu0 0
    %3881 = vmatpush1.bf16.msra.mxu0 %v3776
    %3882 = vmatprep.subr.bf16.mxu0 0
    %3883 = vmatpush1.bf16.msra.mxu0 %v3777
    %3884 = vmatprep.subr.bf16.mxu0 0
    %3885 = vmatpush1.bf16.msra.mxu0 %v3778
    %3886 = vmatprep.subr.bf16.mxu0 0
    %3887 = vmatpush1.bf16.msra.mxu0 %v3779
    %3888 = vmatprep.subr.bf16.mxu0 0
    %3889 = vmatpush1.bf16.msra.mxu0 %v3780
    %3890 = vmatprep.subr.bf16.mxu0 0
    %3891 = vmatpush1.bf16.msra.mxu0 %v3781
    %3892 = vmatprep.subr.bf16.mxu0 0
    %3893 = vmatpush1.bf16.msra.mxu0 %v3782
    %3894 = vmatprep.subr.bf16.mxu0 0
    %3895 = vmatpush1.bf16.msra.mxu0 %v3783
    %3896 = vmatprep.mubr.bf16.mxu0 %v3468
    %3897 = vmatmul.mubr.bf16.gmra.mrb[0].mxu0 %v3467
    %v3898 = vpop.f32.mrb[0].mxu0
    %v3899 = vadd.f32 %v3574, %v3898
    %v3900 = vpop.f32.mrb[0].mxu0
    %v3901 = vpop.f32.mrb[0].mxu0
    %v3902 = vpop.f32.mrb[0].mxu0
    %3903 = vdwg.mxu0
    %3904 = vmatprep.subr.bf16.mxu0 0
    %3905 = vmatpush1.bf16.msra.mxu0 %v3784
    %3906 = vmatprep.subr.bf16.mxu0 0
    %3907 = vmatpush1.bf16.msra.mxu0 %v3785
    %3908 = vmatprep.subr.bf16.mxu0 0
    %3909 = vmatpush1.bf16.msra.mxu0 %v3786
    %3910 = vmatprep.subr.bf16.mxu0 0
    %3911 = vmatpush1.bf16.msra.mxu0 %v3787
    %3912 = vmatprep.subr.bf16.mxu0 0
    %3913 = vmatpush1.bf16.msra.mxu0 %v3788
    %3914 = vmatprep.subr.bf16.mxu0 0
    %3915 = vmatpush1.bf16.msra.mxu0 %v3789
    %3916 = vmatprep.subr.bf16.mxu0 0
    %3917 = vmatpush1.bf16.msra.mxu0 %v3790
    %3918 = vmatprep.subr.bf16.mxu0 0
    %3919 = vmatpush1.bf16.msra.mxu0 %v3791
    %3920 = vmatprep.subr.bf16.mxu0 0
    %3921 = vmatpush1.bf16.msra.mxu0 %v3792
    %3922 = vmatprep.subr.bf16.mxu0 0
    %3923 = vmatpush1.bf16.msra.mxu0 %v3793
    %3924 = vmatprep.subr.bf16.mxu0 0
    %3925 = vmatpush1.bf16.msra.mxu0 %v3794
    %3926 = vmatprep.subr.bf16.mxu0 0
    %3927 = vmatpush1.bf16.msra.mxu0 %v3795
    %3928 = vmatprep.subr.bf16.mxu0 0
    %3929 = vmatpush1.bf16.msra.mxu0 %v3796
    %3930 = vmatprep.subr.bf16.mxu0 0
    %3931 = vmatpush1.bf16.msra.mxu0 %v3797
    %3932 = vmatprep.subr.bf16.mxu0 0
    %3933 = vmatpush1.bf16.msra.mxu0 %v3798
    %3934 = vmatprep.subr.bf16.mxu0 0
    %3935 = vmatpush1.bf16.msra.mxu0 %v3799
    %3936 = vmatprep.mubr.bf16.mxu0 %v3470
    %3937 = vmatmul.mubr.bf16.gmra.mrb[0].mxu0 %v3469
    %v3938 = vpop.f32.mrb[0].mxu0
    %v3939 = vadd.f32 %v3899, %v3938
    %v3940 = vpop.f32.mrb[0].mxu0
    %v3941 = vpop.f32.mrb[0].mxu0
    %v3942 = vpop.f32.mrb[0].mxu0
    %3943 = vdwg.mxu0
    %3944 = vmatprep.subr.bf16.mxu0 0
    %3945 = vmatpush1.bf16.msra.mxu0 %v3800
    %3946 = vmatprep.subr.bf16.mxu0 0
    %3947 = vmatpush1.bf16.msra.mxu0 %v3801
    %3948 = vmatprep.subr.bf16.mxu0 0
    %3949 = vmatpush1.bf16.msra.mxu0 %v3802
    %3950 = vmatprep.subr.bf16.mxu0 0
    %3951 = vmatpush1.bf16.msra.mxu0 %v3803
    %3952 = vmatprep.subr.bf16.mxu0 0
    %3953 = vmatpush1.bf16.msra.mxu0 %v3804
    %3954 = vmatprep.subr.bf16.mxu0 0
    %3955 = vmatpush1.bf16.msra.mxu0 %v3805
    %3956 = vmatprep.subr.bf16.mxu0 0
    %3957 = vmatpush1.bf16.msra.mxu0 %v3806
    %3958 = vmatprep.subr.bf16.mxu0 0
    %3959 = vmatpush1.bf16.msra.mxu0 %v3807
    %3960 = vmatprep.subr.bf16.mxu0 0
    %3961 = vmatpush1.bf16.msra.mxu0 %v3808
    %3962 = vmatprep.subr.bf16.mxu0 0
    %3963 = vmatpush1.bf16.msra.mxu0 %v3809
    %3964 = vmatprep.subr.bf16.mxu0 0
    %3965 = vmatpush1.bf16.msra.mxu0 %v3810
    %3966 = vmatprep.subr.bf16.mxu0 0
    %3967 = vmatpush1.bf16.msra.mxu0 %v3811
    %3968 = vmatprep.subr.bf16.mxu0 0
    %3969 = vmatpush1.bf16.msra.mxu0 %v3812
    %3970 = vmatprep.subr.bf16.mxu0 0
    %3971 = vmatpush1.bf16.msra.mxu0 %v3813
    %3972 = vmatprep.subr.bf16.mxu0 0
    %3973 = vmatpush1.bf16.msra.mxu0 %v3814
    %3974 = vmatprep.subr.bf16.mxu0 0
    %3975 = vmatpush1.bf16.msra.mxu0 %v3815
    %3976 = vmatprep.mubr.bf16.mxu0 %v3472
    %3977 = vmatmul.mubr.bf16.gmra.mrb[0].mxu0 %v3471
    %v3978 = vpop.f32.mrb[0].mxu0
    %v3979 = vadd.f32 %v3939, %v3978
    %v3980 = vpop.f32.mrb[0].mxu0
    %v3981 = vpop.f32.mrb[0].mxu0
    %v3982 = vpop.f32.mrb[0].mxu0
    %3983 = vdwg.mxu0
    %3984 = vst [vmem:[#allocation10] sm:$0x3] %v3979
    // Predicated region
    $region46: #{tpu_custom_call.1} parent=1 // pred_check
      _
    $region47: #{tpu_custom_call.1} parent=1 // pred_check_branch
      %3986 = sbr.rel (0) target = $region49
    $region48: #{tpu_custom_call.1} parent=1 // pred_region
      %s3988 = ssub.s32 32, 32
      %3989 = vsyncadd [#allocation4], %s3988
      %s3991 = sshll.u32 [#allocation10], 4
      %s3992 = int_to_ptr.vmem [resolvable:$true] %s3991
      %3994 = dma.vmem_to_hbm [thread:$0]  %s3992, 32, %s7, [#allocation4]
    $region49: #{tpu_custom_call.1} parent=1 // pred_fallthru
      _
    // Predicated region
    $region50: #{tpu_custom_call.1} parent=1 // pred_check
      _
    $region51: #{tpu_custom_call.1} parent=1 // pred_check_branch
      %3996 = sbr.rel (0) target = $region53
    $region52: #{tpu_custom_call.1} parent=1 // pred_region
      %3997 = dma.done [#allocation4], 32
    $region53: #{tpu_custom_call.1} parent=1 // pred_fallthru
      _
    %3998 = vsyncpa [#allocation3], 1
    %3999 = vsyncpa [#allocation6], 1
    %4000 = vsyncpa [#allocation9], 1
    %4001 = vsyncpa [#allocation4], 1

// kernel: tpu_custom_call.1
$region0: #{tpu_custom_call.1}
  #allocation0 [shape = 'u32[]', space=smem, size = 0x4, offset = 0x4, fixed_abs, tag = 'smem constant byte address 0x4 - core index']
  #allocation1 [shape = 'u32[144,128]{1,0:T(1,128)}', space=vmem, size = 0x12000, scoped, tag = 'internal scratch']
  %s0 = inlined_call_operand.hbm [shape: f32[2,1024], index: 0, kind: input, shape index: {}]
  %s1 = inlined_call_operand.hbm [shape: bf16[1024,512], index: 1, kind: input, shape index: {}]
  %s2 = inlined_call_operand.vmem [shape: f32[1,512], index: 2, kind: input, shape index: {}]
  %s3 = inlined_call_operand.hbm [shape: bf16[512,768], index: 3, kind: input, shape index: {}]
  %s4 = inlined_call_operand.vmem [shape: f32[1,768], index: 4, kind: input, shape index: {}]
  %s5 = inlined_call_operand.hbm [shape: bf16[768,128], index: 5, kind: input, shape index: {}]
  %s6 = inlined_call_operand.vmem [shape: f32[1,128], index: 6, kind: input, shape index: {}]
  %s7 = inlined_call_operand.hbm [shape: f32[2,128], index: 7, kind: output, shape index: {}]
  %s8 = sld [smem:[#allocation0]]
  $region54: #{tpu_custom_call.1} parent=0
    _
  %s10 = ssub.s32 1, %s8
  %s11 = scalar_select 0, %s10, %s8
  $region1: #{tpu_custom_call.1} parent=0
    #allocation2 [shape = 'u8[8192]{0}', space=vmem, size = 0x2000, scoped, tag = 'input window, operand 0, single buffered']
    #allocation3 [shape = 's32[1]{0}', space=sflag, size = 0x4, scoped, tag = 'scoped memory for tpu_custom_call.1']
    #allocation4 [shape = 's32[1]{0}', space=sflag, size = 0x4, scoped, tag = 'scoped memory for tpu_custom_call.1']
    #allocation5 [shape = 'u8[1048576]{0}', space=vmem, size = 0x100000, scoped, tag = 'input window, operand 1, single buffered']
    #allocation6 [shape = 's32[1]{0}', space=sflag, size = 0x4, scoped, tag = 'scoped memory for tpu_custom_call.1']
    #allocation7 [shape = 'u8[786432]{0}', space=vmem, size = 0xc0000, scoped, tag = 'input window, operand 3, single buffered']
    #allocation8 [shape = 'u8[196608]{0}', space=vmem, size = 0x30000, scoped, tag = 'input window, operand 5, single buffered']
    #allocation9 [shape = 's32[1]{0}', space=sflag, size = 0x4, scoped, tag = 'scoped memory for tpu_custom_call.1']
    #allocation10 [shape = 'u8[1024]{0}', space=vmem, size = 0x400, scoped, tag = 'output window, operand 0, single buffered']
    %12 = vsyncpa [#allocation3], 0
    %13 = vsyncpa [#allocation6], 0
    %14 = vsyncpa [#allocation9], 0
    %15 = vsyncpa [#allocation4], 0
    // Predicated region
    $region2: #{tpu_custom_call.1} parent=1 // pred_check
      _
    $region3: #{tpu_custom_call.1} parent=1 // pred_check_branch
      %17 = sbr.rel (0) target = $region5
    $region4: #{tpu_custom_call.1} parent=1 // pred_region
      %s19 = ssub.s32 256, 256
      %20 = vsyncadd [#allocation3], %s19
      %s22 = sshll.u32 [#allocation2], 4
      %s23 = int_to_ptr.vmem [resolvable:$true] %s22
      %25 = dma.hbm_to_vmem [thread:$0]  %s0, 256, %s23, [#allocation3]
    $region5: #{tpu_custom_call.1} parent=1 // pred_fallthru
      _
    // Predicated region
    $region6: #{tpu_custom_call.1} parent=1 // pred_check
      _
    $region7: #{tpu_custom_call.1} parent=1 // pred_check_branch
      %27 = sbr.rel (0) target = $region9
    $region8: #{tpu_custom_call.1} parent=1 // pred_region
      %s29 = ssub.s32 32768, 32768
      %30 = vsyncadd [#allocation6], %s29
      %s31 = sshll.u32 [#allocation5], 4
      %s32 = int_to_ptr.vmem [resolvable:$true] %s31
      %37 = dma.hbm_to_vmem [thread:$0]  %s1, 32768, %s32, [#allocation6], 256, 256, 16
    $region9: #{tpu_custom_call.1} parent=1 // pred_fallthru
      _
    // Predicated region
    $region10: #{tpu_custom_call.1} parent=1 // pred_check
      _
    $region11: #{tpu_custom_call.1} parent=1 // pred_check_branch
      %39 = sbr.rel (0) target = $region13
    $region12: #{tpu_custom_call.1} parent=1 // pred_region
      _
    $region13: #{tpu_custom_call.1} parent=1 // pred_fallthru
      _
    // Predicated region
    $region14: #{tpu_custom_call.1} parent=1 // pred_check
      _
    $region15: #{tpu_custom_call.1} parent=1 // pred_check_branch
      %41 = sbr.rel (0) target = $region17
    $region16: #{tpu_custom_call.1} parent=1 // pred_region
      %s43 = ssub.s32 24576, 24576
      %44 = vsyncadd [#allocation6], %s43
      %s45 = sshll.u32 [#allocation7], 4
      %s46 = int_to_ptr.vmem [resolvable:$true] %s45
      %51 = dma.hbm_to_vmem [thread:$0]  %s3, 24576, %s46, [#allocation6], 384, 384, 24
    $region17: #{tpu_custom_call.1} parent=1 // pred_fallthru
      _
    // Predicated region
    $region18: #{tpu_custom_call.1} parent=1 // pred_check
      _
    $region19: #{tpu_custom_call.1} parent=1 // pred_check_branch
      %53 = sbr.rel (0) target = $region21
    $region20: #{tpu_custom_call.1} parent=1 // pred_region
      _
    $region21: #{tpu_custom_call.1} parent=1 // pred_fallthru
      _
    // Predicated region
    $region22: #{tpu_custom_call.1} parent=1 // pred_check
      _
    $region23: #{tpu_custom_call.1} parent=1 // pred_check_branch
      %55 = sbr.rel (0) target = $region25
    $region24: #{tpu_custom_call.1} parent=1 // pred_region
      %s57 = ssub.s32 6144, 6144
      %58 = vsyncadd [#allocation9], %s57
      %s59 = sshll.u32 [#allocation8], 4
      %s60 = int_to_ptr.vmem [resolvable:$true] %s59
      %65 = dma.hbm_to_vmem [thread:$0]  %s5, 6144, %s60, [#allocation9], 64, 64, 4
    $region25: #{tpu_custom_call.1} parent=1 // pred_fallthru
      _
    // Predicated region
    $region26: #{tpu_custom_call.1} parent=1 // pred_check
      _
    $region27: #{tpu_custom_call.1} parent=1 // pred_check_branch
      %67 = sbr.rel (0) target = $region29
    $region28: #{tpu_custom_call.1} parent=1 // pred_region
      _
    $region29: #{tpu_custom_call.1} parent=1 // pred_fallthru
      _
    // Predicated region
    $region30: #{tpu_custom_call.1} parent=1 // pred_check
      _
    $region31: #{tpu_custom_call.1} parent=1 // pred_check_branch
      %69 = sbr.rel (0) target = $region33
    $region32: #{tpu_custom_call.1} parent=1 // pred_region
      %70 = dma.done [#allocation3], 256
    $region33: #{tpu_custom_call.1} parent=1 // pred_fallthru
      _
    // Predicated region
    $region34: #{tpu_custom_call.1} parent=1 // pred_check
      _
    $region35: #{tpu_custom_call.1} parent=1 // pred_check_branch
      %72 = sbr.rel (0) target = $region37
    $region36: #{tpu_custom_call.1} parent=1 // pred_region
      %73 = dma.done [#allocation6], 32768
    $region37: #{tpu_custom_call.1} parent=1 // pred_fallthru
      _
    // Predicated region
    $region38: #{tpu_custom_call.1} parent=1 // pred_check
      _
    $region39: #{tpu_custom_call.1} parent=1 // pred_check_branch
      %75 = sbr.rel (0) target = $region41
    $region40: #{tpu_custom_call.1} parent=1 // pred_region
      %76 = dma.done [#allocation6], 24576
    $region41: #{tpu_custom_call.1} parent=1 // pred_fallthru
      _
    // Predicated region
    $region42: #{tpu_custom_call.1} parent=1 // pred_check
      _
    $region43: #{tpu_custom_call.1} parent=1 // pred_check_branch
      %78 = sbr.rel (0) target = $region45
    $region44: #{tpu_custom_call.1} parent=1 // pred_region
      %79 = dma.done [#allocation9], 6144
    $region45: #{tpu_custom_call.1} parent=1 // pred_fallthru
      _
    %v81 = vld [vmem:[#allocation2] sm:$0xff]
    %v82 = vld [vmem:[#allocation2 + $0x8] sm:$0xff]
    %v83 = vmax.f32 %v81, 0.0
    %v84 = vmax.f32 %v82, 0.0
    %v87 = vcombine.high %v83, %v83
    %v89 = vunpack.c.l.s4 1983009808
    %v90 = vunpack.c.0.s8 %v89
    %v91 = vlaneseq
    %v92 = vshrl.u32 %v91, 7
    %v93 = vsub.s32 %v90, %v92
    %v94 = vrot.slane %v83, %v93
    %v96 = vunpack.c.l.s4 1983009808
    %v97 = vunpack.c.0.s8 %v96
    %v98 = vlaneseq
    %v99 = vshrl.u32 %v98, 7
    %v100 = vsub.s32 %v97, %v99
    %v101 = vrot.slane %v87, %v100
    %v102 = vcombine.high %v94, %v94
    %v103 = vcombine.high %v101, %v101
    %v104 = vcombine.high %v84, %v84
    %v106 = vunpack.c.l.s4 1983009808
    %v107 = vunpack.c.0.s8 %v106
    %v108 = vlaneseq
    %v109 = vshrl.u32 %v108, 7
    %v110 = vsub.s32 %v107, %v109
    %v111 = vrot.slane %v84, %v110
    %v113 = vunpack.c.l.s4 1983009808
    %v114 = vunpack.c.0.s8 %v113
    %v115 = vlaneseq
    %v116 = vshrl.u32 %v115, 7
    %v117 = vsub.s32 %v114, %v116
    %v118 = vrot.slane %v104, %v117
    %v119 = vcombine.high %v111, %v111
    %v120 = vcombine.high %v118, %v118
    %v129 = vpack.c.bf16 %v94, %v94
    %v130 = vpack.c.bf16 %v102, %v102
    %v131 = vpack.c.bf16 %v101, %v101
    %v132 = vpack.c.bf16 %v103, %v103
    %v133 = vpack.c.bf16 %v111, %v111
    %v134 = vpack.c.bf16 %v119, %v119
    %v135 = vpack.c.bf16 %v118, %v118
    %v136 = vpack.c.bf16 %v120, %v120
    %v137 = vld [vmem:[#allocation5] sm:$0xff]
    %v138 = vld [vmem:[#allocation5 + $0x8] sm:$0xff]
    %v139 = vld [vmem:[#allocation5 + $0x10] sm:$0xff]
    %v140 = vld [vmem:[#allocation5 + $0x18] sm:$0xff]
    %v141 = vld [vmem:[#allocation5 + $0x20] sm:$0xff]
    %v142 = vld [vmem:[#allocation5 + $0x28] sm:$0xff]
    %v143 = vld [vmem:[#allocation5 + $0x30] sm:$0xff]
    %v144 = vld [vmem:[#allocation5 + $0x38] sm:$0xff]
    %v145 = vld [vmem:[#allocation5 + $0x40] sm:$0xff]
    %v146 = vld [vmem:[#allocation5 + $0x48] sm:$0xff]
    %v147 = vld [vmem:[#allocation5 + $0x50] sm:$0xff]
    %v148 = vld [vmem:[#allocation5 + $0x58] sm:$0xff]
    %v149 = vld [vmem:[#allocation5 + $0x60] sm:$0xff]
    %v150 = vld [vmem:[#allocation5 + $0x68] sm:$0xff]
    %v151 = vld [vmem:[#allocation5 + $0x70] sm:$0xff]
    %v152 = vld [vmem:[#allocation5 + $0x78] sm:$0xff]
    %v153 = vld [vmem:[#allocation5 + $0x80] sm:$0xff]
    %v154 = vld [vmem:[#allocation5 + $0x88] sm:$0xff]
    %v155 = vld [vmem:[#allocation5 + $0x90] sm:$0xff]
    %v156 = vld [vmem:[#allocation5 + $0x98] sm:$0xff]
    %v157 = vld [vmem:[#allocation5 + $0xa0] sm:$0xff]
    %v158 = vld [vmem:[#allocation5 + $0xa8] sm:$0xff]
    %v159 = vld [vmem:[#allocation5 + $0xb0] sm:$0xff]
    %v160 = vld [vmem:[#allocation5 + $0xb8] sm:$0xff]
    %v161 = vld [vmem:[#allocation5 + $0xc0] sm:$0xff]
    %v162 = vld [vmem:[#allocation5 + $0xc8] sm:$0xff]
    %v163 = vld [vmem:[#allocation5 + $0xd0] sm:$0xff]
    %v164 = vld [vmem:[#allocation5 + $0xd8] sm:$0xff]
    %v165 = vld [vmem:[#allocation5 + $0xe0] sm:$0xff]
    %v166 = vld [vmem:[#allocation5 + $0xe8] sm:$0xff]
    %v167 = vld [vmem:[#allocation5 + $0xf0] sm:$0xff]
    %v168 = vld [vmem:[#allocation5 + $0xf8] sm:$0xff]
    %v169 = vld [vmem:[#allocation5 + $0x100] sm:$0xff]
    %v170 = vld [vmem:[#allocation5 + $0x108] sm:$0xff]
    %v171 = vld [vmem:[#allocation5 + $0x110] sm:$0xff]
    %v172 = vld [vmem:[#allocation5 + $0x118] sm:$0xff]
    %v173 = vld [vmem:[#allocation5 + $0x120] sm:$0xff]
    %v174 = vld [vmem:[#allocation5 + $0x128] sm:$0xff]
    %v175 = vld [vmem:[#allocation5 + $0x130] sm:$0xff]
    %v176 = vld [vmem:[#allocation5 + $0x138] sm:$0xff]
    %v177 = vld [vmem:[#allocation5 + $0x140] sm:$0xff]
    %v178 = vld [vmem:[#allocation5 + $0x148] sm:$0xff]
    %v179 = vld [vmem:[#allocation5 + $0x150] sm:$0xff]
    %v180 = vld [vmem:[#allocation5 + $0x158] sm:$0xff]
    %v181 = vld [vmem:[#allocation5 + $0x160] sm:$0xff]
    %v182 = vld [vmem:[#allocation5 + $0x168] sm:$0xff]
    %v183 = vld [vmem:[#allocation5 + $0x170] sm:$0xff]
    %v184 = vld [vmem:[#allocation5 + $0x178] sm:$0xff]
    %v185 = vld [vmem:[#allocation5 + $0x180] sm:$0xff]
    %v186 = vld [vmem:[#allocation5 + $0x188] sm:$0xff]
    %v187 = vld [vmem:[#allocation5 + $0x190] sm:$0xff]
    %v188 = vld [vmem:[#allocation5 + $0x198] sm:$0xff]
    %v189 = vld [vmem:[#allocation5 + $0x1a0] sm:$0xff]
    %v190 = vld [vmem:[#allocation5 + $0x1a8] sm:$0xff]
    %v191 = vld [vmem:[#allocation5 + $0x1b0] sm:$0xff]
    %v192 = vld [vmem:[#allocation5 + $0x1b8] sm:$0xff]
    %v193 = vld [vmem:[#allocation5 + $0x1c0] sm:$0xff]
    %v194 = vld [vmem:[#allocation5 + $0x1c8] sm:$0xff]
    %v195 = vld [vmem:[#allocation5 + $0x1d0] sm:$0xff]
    %v196 = vld [vmem:[#allocation5 + $0x1d8] sm:$0xff]
    %v197 = vld [vmem:[#allocation5 + $0x1e0] sm:$0xff]
    %v198 = vld [vmem:[#allocation5 + $0x1e8] sm:$0xff]
    %v199 = vld [vmem:[#allocation5 + $0x1f0] sm:$0xff]
    %v200 = vld [vmem:[#allocation5 + $0x1f8] sm:$0xff]
    %v201 = vld [vmem:[#allocation5 + $0x200] sm:$0xff]
    %v202 = vld [vmem:[#allocation5 + $0x208] sm:$0xff]
    %v203 = vld [vmem:[#allocation5 + $0x210] sm:$0xff]
    %v204 = vld [vmem:[#allocation5 + $0x218] sm:$0xff]
    %v205 = vld [vmem:[#allocation5 + $0x220] sm:$0xff]
    %v206 = vld [vmem:[#allocation5 + $0x228] sm:$0xff]
    %v207 = vld [vmem:[#allocation5 + $0x230] sm:$0xff]
    %v208 = vld [vmem:[#allocation5 + $0x238] sm:$0xff]
    %v209 = vld [vmem:[#allocation5 + $0x240] sm:$0xff]
    %v210 = vld [vmem:[#allocation5 + $0x248] sm:$0xff]
    %v211 = vld [vmem:[#allocation5 + $0x250] sm:$0xff]
    %v212 = vld [vmem:[#allocation5 + $0x258] sm:$0xff]
    %v213 = vld [vmem:[#allocation5 + $0x260] sm:$0xff]
    %v214 = vld [vmem:[#allocation5 + $0x268] sm:$0xff]
    %v215 = vld [vmem:[#allocation5 + $0x270] sm:$0xff]
    %v216 = vld [vmem:[#allocation5 + $0x278] sm:$0xff]
    %v217 = vld [vmem:[#allocation5 + $0x280] sm:$0xff]
    %v218 = vld [vmem:[#allocation5 + $0x288] sm:$0xff]
    %v219 = vld [vmem:[#allocation5 + $0x290] sm:$0xff]
    %v220 = vld [vmem:[#allocation5 + $0x298] sm:$0xff]
    %v221 = vld [vmem:[#allocation5 + $0x2a0] sm:$0xff]
    %v222 = vld [vmem:[#allocation5 + $0x2a8] sm:$0xff]
    %v223 = vld [vmem:[#allocation5 + $0x2b0] sm:$0xff]
    %v224 = vld [vmem:[#allocation5 + $0x2b8] sm:$0xff]
    %v225 = vld [vmem:[#allocation5 + $0x2c0] sm:$0xff]
    %v226 = vld [vmem:[#allocation5 + $0x2c8] sm:$0xff]
    %v227 = vld [vmem:[#allocation5 + $0x2d0] sm:$0xff]
    %v228 = vld [vmem:[#allocation5 + $0x2d8] sm:$0xff]
    %v229 = vld [vmem:[#allocation5 + $0x2e0] sm:$0xff]
    %v230 = vld [vmem:[#allocation5 + $0x2e8] sm:$0xff]
    %v231 = vld [vmem:[#allocation5 + $0x2f0] sm:$0xff]
    %v232 = vld [vmem:[#allocation5 + $0x2f8] sm:$0xff]
    %v233 = vld [vmem:[#allocation5 + $0x300] sm:$0xff]
    %v234 = vld [vmem:[#allocation5 + $0x308] sm:$0xff]
    %v235 = vld [vmem:[#allocation5 + $0x310] sm:$0xff]
    %v236 = vld [vmem:[#allocation5 + $0x318] sm:$0xff]
    %v237 = vld [vmem:[#allocation5 + $0x320] sm:$0xff]
    %v238 = vld [vmem:[#allocation5 + $0x328] sm:$0xff]
    %v239 = vld [vmem:[#allocation5 + $0x330] sm:$0xff]
    %v240 = vld [vmem:[#allocation5 + $0x338] sm:$0xff]
    %v241 = vld [vmem:[#allocation5 + $0x340] sm:$0xff]
    %v242 = vld [vmem:[#allocation5 + $0x348] sm:$0xff]
    %v243 = vld [vmem:[#allocation5 + $0x350] sm:$0xff]
    %v244 = vld [vmem:[#allocation5 + $0x358] sm:$0xff]
    %v245 = vld [vmem:[#allocation5 + $0x360] sm:$0xff]
    %v246 = vld [vmem:[#allocation5 + $0x368] sm:$0xff]
    %v247 = vld [vmem:[#allocation5 + $0x370] sm:$0xff]
    %v248 = vld [vmem:[#allocation5 + $0x378] sm:$0xff]
    %v249 = vld [vmem:[#allocation5 + $0x380] sm:$0xff]
    %v250 = vld [vmem:[#allocation5 + $0x388] sm:$0xff]
    %v251 = vld [vmem:[#allocation5 + $0x390] sm:$0xff]
    %v252 = vld [vmem:[#allocation5 + $0x398] sm:$0xff]
    %v253 = vld [vmem:[#allocation5 + $0x3a0] sm:$0xff]
    %v254 = vld [vmem:[#allocation5 + $0x3a8] sm:$0xff]
    %v255 = vld [vmem:[#allocation5 + $0x3b0] sm:$0xff]
    %v256 = vld [vmem:[#allocation5 + $0x3b8] sm:$0xff]
    %v257 = vld [vmem:[#allocation5 + $0x3c0] sm:$0xff]
    %v258 = vld [vmem:[#allocation5 + $0x3c8] sm:$0xff]
    %v259 = vld [vmem:[#allocation5 + $0x3d0] sm:$0xff]
    %v260 = vld [vmem:[#allocation5 + $0x3d8] sm:$0xff]
    %v261 = vld [vmem:[#allocation5 + $0x3e0] sm:$0xff]
    %v262 = vld [vmem:[#allocation5 + $0x3e8] sm:$0xff]
    %v263 = vld [vmem:[#allocation5 + $0x3f0] sm:$0xff]
    %v264 = vld [vmem:[#allocation5 + $0x3f8] sm:$0xff]
    %v265 = vld [vmem:[#allocation5 + $0x400] sm:$0xff]
    %v266 = vld [vmem:[#allocation5 + $0x408] sm:$0xff]
    %v267 = vld [vmem:[#allocation5 + $0x410] sm:$0xff]
    %v268 = vld [vmem:[#allocation5 + $0x418] sm:$0xff]
    %v269 = vld [vmem:[#allocation5 + $0x420] sm:$0xff]
    %v270 = vld [vmem:[#allocation5 + $0x428] sm:$0xff]
    %v271 = vld [vmem:[#allocation5 + $0x430] sm:$0xff]
    %v272 = vld [vmem:[#allocation5 + $0x438] sm:$0xff]
    %v273 = vld [vmem:[#allocation5 + $0x440] sm:$0xff]
    %v274 = vld [vmem:[#allocation5 + $0x448] sm:$0xff]
    %v275 = vld [vmem:[#allocation5 + $0x450] sm:$0xff]
    %v276 = vld [vmem:[#allocation5 + $0x458] sm:$0xff]
    %v277 = vld [vmem:[#allocation5 + $0x460] sm:$0xff]
    %v278 = vld [vmem:[#allocation5 + $0x468] sm:$0xff]
    %v279 = vld [vmem:[#allocation5 + $0x470] sm:$0xff]
    %v280 = vld [vmem:[#allocation5 + $0x478] sm:$0xff]
    %v281 = vld [vmem:[#allocation5 + $0x480] sm:$0xff]
    %v282 = vld [vmem:[#allocation5 + $0x488] sm:$0xff]
    %v283 = vld [vmem:[#allocation5 + $0x490] sm:$0xff]
    %v284 = vld [vmem:[#allocation5 + $0x498] sm:$0xff]
    %v285 = vld [vmem:[#allocation5 + $0x4a0] sm:$0xff]
    %v286 = vld [vmem:[#allocation5 + $0x4a8] sm:$0xff]
    %v287 = vld [vmem:[#allocation5 + $0x4b0] sm:$0xff]
    %v288 = vld [vmem:[#allocation5 + $0x4b8] sm:$0xff]
    %v289 = vld [vmem:[#allocation5 + $0x4c0] sm:$0xff]
    %v290 = vld [vmem:[#allocation5 + $0x4c8] sm:$0xff]
    %v291 = vld [vmem:[#allocation5 + $0x4d0] sm:$0xff]
    %v292 = vld [vmem:[#allocation5 + $0x4d8] sm:$0xff]
    %v293 = vld [vmem:[#allocation5 + $0x4e0] sm:$0xff]
    %v294 = vld [vmem:[#allocation5 + $0x4e8] sm:$0xff]
    %v295 = vld [vmem:[#allocation5 + $0x4f0] sm:$0xff]
    %v296 = vld [vmem:[#allocation5 + $0x4f8] sm:$0xff]
    %v297 = vld [vmem:[#allocation5 + $0x500] sm:$0xff]
    %v298 = vld [vmem:[#allocation5 + $0x508] sm:$0xff]
    %v299 = vld [vmem:[#allocation5 + $0x510] sm:$0xff]
    %v300 = vld [vmem:[#allocation5 + $0x518] sm:$0xff]
    %v301 = vld [vmem:[#allocation5 + $0x520] sm:$0xff]
    %v302 = vld [vmem:[#allocation5 + $0x528] sm:$0xff]
    %v303 = vld [vmem:[#allocation5 + $0x530] sm:$0xff]
    %v304 = vld [vmem:[#allocation5 + $0x538] sm:$0xff]
    %v305 = vld [vmem:[#allocation5 + $0x540] sm:$0xff]
    %v306 = vld [vmem:[#allocation5 + $0x548] sm:$0xff]
    %v307 = vld [vmem:[#allocation5 + $0x550] sm:$0xff]
    %v308 = vld [vmem:[#allocation5 + $0x558] sm:$0xff]
    %v309 = vld [vmem:[#allocation5 + $0x560] sm:$0xff]
    %v310 = vld [vmem:[#allocation5 + $0x568] sm:$0xff]
    %v311 = vld [vmem:[#allocation5 + $0x570] sm:$0xff]
    %v312 = vld [vmem:[#allocation5 + $0x578] sm:$0xff]
    %v313 = vld [vmem:[#allocation5 + $0x580] sm:$0xff]
    %v314 = vld [vmem:[#allocation5 + $0x588] sm:$0xff]
    %v315 = vld [vmem:[#allocation5 + $0x590] sm:$0xff]
    %v316 = vld [vmem:[#allocation5 + $0x598] sm:$0xff]
    %v317 = vld [vmem:[#allocation5 + $0x5a0] sm:$0xff]
    %v318 = vld [vmem:[#allocation5 + $0x5a8] sm:$0xff]
    %v319 = vld [vmem:[#allocation5 + $0x5b0] sm:$0xff]
    %v320 = vld [vmem:[#allocation5 + $0x5b8] sm:$0xff]
    %v321 = vld [vmem:[#allocation5 + $0x5c0] sm:$0xff]
    %v322 = vld [vmem:[#allocation5 + $0x5c8] sm:$0xff]
    %v323 = vld [vmem:[#allocation5 + $0x5d0] sm:$0xff]
    %v324 = vld [vmem:[#allocation5 + $0x5d8] sm:$0xff]
    %v325 = vld [vmem:[#allocation5 + $0x5e0] sm:$0xff]
    %v326 = vld [vmem:[#allocation5 + $0x5e8] sm:$0xff]
    %v327 = vld [vmem:[#allocation5 + $0x5f0] sm:$0xff]
    %v328 = vld [vmem:[#allocation5 + $0x5f8] sm:$0xff]
    %v329 = vld [vmem:[#allocation5 + $0x600] sm:$0xff]
    %v330 = vld [vmem:[#allocation5 + $0x608] sm:$0xff]
    %v331 = vld [vmem:[#allocation5 + $0x610] sm:$0xff]
    %v332 = vld [vmem:[#allocation5 + $0x618] sm:$0xff]
    %v333 = vld [vmem:[#allocation5 + $0x620] sm:$0xff]
    %v334 = vld [vmem:[#allocation5 + $0x628] sm:$0xff]
    %v335 = vld [vmem:[#allocation5 + $0x630] sm:$0xff]
    %v336 = vld [vmem:[#allocation5 + $0x638] sm:$0xff]
    %v337 = vld [vmem:[#allocation5 + $0x640] sm:$0xff]
    %v338 = vld [vmem:[#allocation5 + $0x648] sm:$0xff]
    %v339 = vld [vmem:[#allocation5 + $0x650] sm:$0xff]
    %v340 = vld [vmem:[#allocation5 + $0x658] sm:$0xff]
    %v341 = vld [vmem:[#allocation5 + $0x660] sm:$0xff]
    %v342 = vld [vmem:[#allocation5 + $0x668] sm:$0xff]
    %v343 = vld [vmem:[#allocation5 + $0x670] sm:$0xff]
    %v344 = vld [vmem:[#allocation5 + $0x678] sm:$0xff]
    %v345 = vld [vmem:[#allocation5 + $0x680] sm:$0xff]
    %v346 = vld [vmem:[#allocation5 + $0x688] sm:$0xff]
    %v347 = vld [vmem:[#allocation5 + $0x690] sm:$0xff]
    %v348 = vld [vmem:[#allocation5 + $0x698] sm:$0xff]
    %v349 = vld [vmem:[#allocation5 + $0x6a0] sm:$0xff]
    %v350 = vld [vmem:[#allocation5 + $0x6a8] sm:$0xff]
    %v351 = vld [vmem:[#allocation5 + $0x6b0] sm:$0xff]
    %v352 = vld [vmem:[#allocation5 + $0x6b8] sm:$0xff]
    %v353 = vld [vmem:[#allocation5 + $0x6c0] sm:$0xff]
    %v354 = vld [vmem:[#allocation5 + $0x6c8] sm:$0xff]
    %v355 = vld [vmem:[#allocation5 + $0x6d0] sm:$0xff]
    %v356 = vld [vmem:[#allocation5 + $0x6d8] sm:$0xff]
    %v357 = vld [vmem:[#allocation5 + $0x6e0] sm:$0xff]
    %v358 = vld [vmem:[#allocation5 + $0x6e8] sm:$0xff]
    %v359 = vld [vmem:[#allocation5 + $0x6f0] sm:$0xff]
    %v360 = vld [vmem:[#allocation5 + $0x6f8] sm:$0xff]
    %v361 = vld [vmem:[#allocation5 + $0x700] sm:$0xff]
    %v362 = vld [vmem:[#allocation5 + $0x708] sm:$0xff]
    %v363 = vld [vmem:[#allocation5 + $0x710] sm:$0xff]
    %v364 = vld [vmem:[#allocation5 + $0x718] sm:$0xff]
    %v365 = vld [vmem:[#allocation5 + $0x720] sm:$0xff]
    %v366 = vld [vmem:[#allocation5 + $0x728] sm:$0xff]
    %v367 = vld [vmem:[#allocation5 + $0x730] sm:$0xff]
    %v368 = vld [vmem:[#allocation5 + $0x738] sm:$0xff]
    %v369 = vld [vmem:[#allocation5 + $0x740] sm:$0xff]
    %v370 = vld [vmem:[#allocation5 + $0x748] sm:$0xff]
    %v371 = vld [vmem:[#allocation5 + $0x750] sm:$0xff]
    %v372 = vld [vmem:[#allocation5 + $0x758] sm:$0xff]
    %v373 = vld [vmem:[#allocation5 + $0x760] sm:$0xff]
    %v374 = vld [vmem:[#allocation5 + $0x768] sm:$0xff]
    %v375 = vld [vmem:[#allocation5 + $0x770] sm:$0xff]
    %v376 = vld [vmem:[#allocation5 + $0x778] sm:$0xff]
    %v377 = vld [vmem:[#allocation5 + $0x780] sm:$0xff]
    %v378 = vld [vmem:[#allocation5 + $0x788] sm:$0xff]
    %v379 = vld [vmem:[#allocation5 + $0x790] sm:$0xff]
    %v380 = vld [vmem:[#allocation5 + $0x798] sm:$0xff]
    %v381 = vld [vmem:[#allocation5 + $0x7a0] sm:$0xff]
    %v382 = vld [vmem:[#allocation5 + $0x7a8] sm:$0xff]
    %v383 = vld [vmem:[#allocation5 + $0x7b0] sm:$0xff]
    %v384 = vld [vmem:[#allocation5 + $0x7b8] sm:$0xff]
    %v385 = vld [vmem:[#allocation5 + $0x7c0] sm:$0xff]
    %v386 = vld [vmem:[#allocation5 + $0x7c8] sm:$0xff]
    %v387 = vld [vmem:[#allocation5 + $0x7d0] sm:$0xff]
    %v388 = vld [vmem:[#allocation5 + $0x7d8] sm:$0xff]
    %v389 = vld [vmem:[#allocation5 + $0x7e0] sm:$0xff]
    %v390 = vld [vmem:[#allocation5 + $0x7e8] sm:$0xff]
    %v391 = vld [vmem:[#allocation5 + $0x7f0] sm:$0xff]
    %v392 = vld [vmem:[#allocation5 + $0x7f8] sm:$0xff]
    %v393 = vld [vmem:[%s2] sm:$0xf]
    %v395 = vlaneseq
    %v396 = vshrl.u32 %v395, 7
    %v397 = vsub.s32 0, %v396
    %v398 = vrot.slane %v393, %v397
    %v399 = vlaneseq
    %v400 = vshrl.u32 %v399, 7
    %v401 = vsub.s32 1, %v400
    %v402 = vrot.slane %v393, %v401
    %v403 = vlaneseq
    %v404 = vshrl.u32 %v403, 7
    %v405 = vsub.s32 2, %v404
    %v406 = vrot.slane %v393, %v405
    %v407 = vlaneseq
    %v408 = vshrl.u32 %v407, 7
    %v409 = vsub.s32 3, %v408
    %v410 = vrot.slane %v393, %v409
    %v671 = vunpack.c.l.b16 %v137
    %v672 = vunpack.c.h.b16 %v137
    %v673 = vunpack.c.l.b16 %v138
    %v674 = vunpack.c.h.b16 %v138
    %v675 = vunpack.c.l.b16 %v139
    %v676 = vunpack.c.h.b16 %v139
    %v677 = vunpack.c.l.b16 %v140
    %v678 = vunpack.c.h.b16 %v140
    %v679 = vunpack.c.l.b16 %v141
    %v680 = vunpack.c.h.b16 %v141
    %v681 = vunpack.c.l.b16 %v142
    %v682 = vunpack.c.h.b16 %v142
    %v683 = vunpack.c.l.b16 %v143
    %v684 = vunpack.c.h.b16 %v143
    %v685 = vunpack.c.l.b16 %v144
    %v686 = vunpack.c.h.b16 %v144
    %v687 = vunpack.c.l.b16 %v145
    %v688 = vunpack.c.h.b16 %v145
    %v689 = vunpack.c.l.b16 %v146
    %v690 = vunpack.c.h.b16 %v146
    %v691 = vunpack.c.l.b16 %v147
    %v692 = vunpack.c.h.b16 %v147
    %v693 = vunpack.c.l.b16 %v148
    %v694 = vunpack.c.h.b16 %v148
    %v695 = vunpack.c.l.b16 %v149
    %v696 = vunpack.c.h.b16 %v149
    %v697 = vunpack.c.l.b16 %v150
    %v698 = vunpack.c.h.b16 %v150
    %v699 = vunpack.c.l.b16 %v151
    %v700 = vunpack.c.h.b16 %v151
    %v701 = vunpack.c.l.b16 %v152
    %v702 = vunpack.c.h.b16 %v152
    %v703 = vunpack.c.l.b16 %v153
    %v704 = vunpack.c.h.b16 %v153
    %v705 = vunpack.c.l.b16 %v154
    %v706 = vunpack.c.h.b16 %v154
    %v707 = vunpack.c.l.b16 %v155
    %v708 = vunpack.c.h.b16 %v155
    %v709 = vunpack.c.l.b16 %v156
    %v710 = vunpack.c.h.b16 %v156
    %v711 = vunpack.c.l.b16 %v157
    %v712 = vunpack.c.h.b16 %v157
    %v713 = vunpack.c.l.b16 %v158
    %v714 = vunpack.c.h.b16 %v158
    %v715 = vunpack.c.l.b16 %v159
    %v716 = vunpack.c.h.b16 %v159
    %v717 = vunpack.c.l.b16 %v160
    %v718 = vunpack.c.h.b16 %v160
    %v719 = vunpack.c.l.b16 %v161
    %v720 = vunpack.c.h.b16 %v161
    %v721 = vunpack.c.l.b16 %v162
    %v722 = vunpack.c.h.b16 %v162
    %v723 = vunpack.c.l.b16 %v163
    %v724 = vunpack.c.h.b16 %v163
    %v725 = vunpack.c.l.b16 %v164
    %v726 = vunpack.c.h.b16 %v164
    %v727 = vunpack.c.l.b16 %v165
    %v728 = vunpack.c.h.b16 %v165
    %v729 = vunpack.c.l.b16 %v166
    %v730 = vunpack.c.h.b16 %v166
    %v731 = vunpack.c.l.b16 %v167
    %v732 = vunpack.c.h.b16 %v167
    %v733 = vunpack.c.l.b16 %v168
    %v734 = vunpack.c.h.b16 %v168
    %v735 = vunpack.c.l.b16 %v169
    %v736 = vunpack.c.h.b16 %v169
    %v737 = vunpack.c.l.b16 %v170
    %v738 = vunpack.c.h.b16 %v170
    %v739 = vunpack.c.l.b16 %v171
    %v740 = vunpack.c.h.b16 %v171
    %v741 = vunpack.c.l.b16 %v172
    %v742 = vunpack.c.h.b16 %v172
    %v743 = vunpack.c.l.b16 %v173
    %v744 = vunpack.c.h.b16 %v173
    %v745 = vunpack.c.l.b16 %v174
    %v746 = vunpack.c.h.b16 %v174
    %v747 = vunpack.c.l.b16 %v175
    %v748 = vunpack.c.h.b16 %v175
    %v749 = vunpack.c.l.b16 %v176
    %v750 = vunpack.c.h.b16 %v176
    %v751 = vunpack.c.l.b16 %v177
    %v752 = vunpack.c.h.b16 %v177
    %v753 = vunpack.c.l.b16 %v178
    %v754 = vunpack.c.h.b16 %v178
    %v755 = vunpack.c.l.b16 %v179
    %v756 = vunpack.c.h.b16 %v179
    %v757 = vunpack.c.l.b16 %v180
    %v758 = vunpack.c.h.b16 %v180
    %v759 = vunpack.c.l.b16 %v181
    %v760 = vunpack.c.h.b16 %v181
    %v761 = vunpack.c.l.b16 %v182
    %v762 = vunpack.c.h.b16 %v182
    %v763 = vunpack.c.l.b16 %v183
    %v764 = vunpack.c.h.b16 %v183
    %v765 = vunpack.c.l.b16 %v184
    %v766 = vunpack.c.h.b16 %v184
    %v767 = vunpack.c.l.b16 %v185
    %v768 = vunpack.c.h.b16 %v185
    %v769 = vunpack.c.l.b16 %v186
    %v770 = vunpack.c.h.b16 %v186
    %v771 = vunpack.c.l.b16 %v187
    %v772 = vunpack.c.h.b16 %v187
    %v773 = vunpack.c.l.b16 %v188
    %v774 = vunpack.c.h.b16 %v188
    %v775 = vunpack.c.l.b16 %v189
    %v776 = vunpack.c.h.b16 %v189
    %v777 = vunpack.c.l.b16 %v190
    %v778 = vunpack.c.h.b16 %v190
    %v779 = vunpack.c.l.b16 %v191
    %v780 = vunpack.c.h.b16 %v191
    %v781 = vunpack.c.l.b16 %v192
    %v782 = vunpack.c.h.b16 %v192
    %v783 = vunpack.c.l.b16 %v193
    %v784 = vunpack.c.h.b16 %v193
    %v785 = vunpack.c.l.b16 %v194
    %v786 = vunpack.c.h.b16 %v194
    %v787 = vunpack.c.l.b16 %v195
    %v788 = vunpack.c.h.b16 %v195
    %v789 = vunpack.c.l.b16 %v196
    %v790 = vunpack.c.h.b16 %v196
    %v791 = vunpack.c.l.b16 %v197
    %v792 = vunpack.c.h.b16 %v197
    %v793 = vunpack.c.l.b16 %v198
    %v794 = vunpack.c.h.b16 %v198
    %v795 = vunpack.c.l.b16 %v199
    %v796 = vunpack.c.h.b16 %v199
    %v797 = vunpack.c.l.b16 %v200
    %v798 = vunpack.c.h.b16 %v200
    %v799 = vunpack.c.l.b16 %v201
    %v800 = vunpack.c.h.b16 %v201
    %v801 = vunpack.c.l.b16 %v202
    %v802 = vunpack.c.h.b16 %v202
    %v803 = vunpack.c.l.b16 %v203
    %v804 = vunpack.c.h.b16 %v203
    %v805 = vunpack.c.l.b16 %v204
    %v806 = vunpack.c.h.b16 %v204
    %v807 = vunpack.c.l.b16 %v205
    %v808 = vunpack.c.h.b16 %v205
    %v809 = vunpack.c.l.b16 %v206
    %v810 = vunpack.c.h.b16 %v206
    %v811 = vunpack.c.l.b16 %v207
    %v812 = vunpack.c.h.b16 %v207
    %v813 = vunpack.c.l.b16 %v208
    %v814 = vunpack.c.h.b16 %v208
    %v815 = vunpack.c.l.b16 %v209
    %v816 = vunpack.c.h.b16 %v209
    %v817 = vunpack.c.l.b16 %v210
    %v818 = vunpack.c.h.b16 %v210
    %v819 = vunpack.c.l.b16 %v211
    %v820 = vunpack.c.h.b16 %v211
    %v821 = vunpack.c.l.b16 %v212
    %v822 = vunpack.c.h.b16 %v212
    %v823 = vunpack.c.l.b16 %v213
    %v824 = vunpack.c.h.b16 %v213
    %v825 = vunpack.c.l.b16 %v214
    %v826 = vunpack.c.h.b16 %v214
    %v827 = vunpack.c.l.b16 %v215
    %v828 = vunpack.c.h.b16 %v215
    %v829 = vunpack.c.l.b16 %v216
    %v830 = vunpack.c.h.b16 %v216
    %v831 = vunpack.c.l.b16 %v217
    %v832 = vunpack.c.h.b16 %v217
    %v833 = vunpack.c.l.b16 %v218
    %v834 = vunpack.c.h.b16 %v218
    %v835 = vunpack.c.l.b16 %v219
    %v836 = vunpack.c.h.b16 %v219
    %v837 = vunpack.c.l.b16 %v220
    %v838 = vunpack.c.h.b16 %v220
    %v839 = vunpack.c.l.b16 %v221
    %v840 = vunpack.c.h.b16 %v221
    %v841 = vunpack.c.l.b16 %v222
    %v842 = vunpack.c.h.b16 %v222
    %v843 = vunpack.c.l.b16 %v223
    %v844 = vunpack.c.h.b16 %v223
    %v845 = vunpack.c.l.b16 %v224
    %v846 = vunpack.c.h.b16 %v224
    %v847 = vunpack.c.l.b16 %v225
    %v848 = vunpack.c.h.b16 %v225
    %v849 = vunpack.c.l.b16 %v226
    %v850 = vunpack.c.h.b16 %v226
    %v851 = vunpack.c.l.b16 %v227
    %v852 = vunpack.c.h.b16 %v227
    %v853 = vunpack.c.l.b16 %v228
    %v854 = vunpack.c.h.b16 %v228
    %v855 = vunpack.c.l.b16 %v229
    %v856 = vunpack.c.h.b16 %v229
    %v857 = vunpack.c.l.b16 %v230
    %v858 = vunpack.c.h.b16 %v230
    %v859 = vunpack.c.l.b16 %v231
    %v860 = vunpack.c.h.b16 %v231
    %v861 = vunpack.c.l.b16 %v232
    %v862 = vunpack.c.h.b16 %v232
    %v863 = vunpack.c.l.b16 %v233
    %v864 = vunpack.c.h.b16 %v233
    %v865 = vunpack.c.l.b16 %v234
    %v866 = vunpack.c.h.b16 %v234
    %v867 = vunpack.c.l.b16 %v235
    %v868 = vunpack.c.h.b16 %v235
    %v869 = vunpack.c.l.b16 %v236
    %v870 = vunpack.c.h.b16 %v236
    %v871 = vunpack.c.l.b16 %v237
    %v872 = vunpack.c.h.b16 %v237
    %v873 = vunpack.c.l.b16 %v238
    %v874 = vunpack.c.h.b16 %v238
    %v875 = vunpack.c.l.b16 %v239
    %v876 = vunpack.c.h.b16 %v239
    %v877 = vunpack.c.l.b16 %v240
    %v878 = vunpack.c.h.b16 %v240
    %v879 = vunpack.c.l.b16 %v241
    %v880 = vunpack.c.h.b16 %v241
    %v881 = vunpack.c.l.b16 %v242
    %v882 = vunpack.c.h.b16 %v242
    %v883 = vunpack.c.l.b16 %v243
    %v884 = vunpack.c.h.b16 %v243
    %v885 = vunpack.c.l.b16 %v244
    %v886 = vunpack.c.h.b16 %v244
    %v887 = vunpack.c.l.b16 %v245
    %v888 = vunpack.c.h.b16 %v245
    %v889 = vunpack.c.l.b16 %v246
    %v890 = vunpack.c.h.b16 %v246
    %v891 = vunpack.c.l.b16 %v247
    %v892 = vunpack.c.h.b16 %v247
    %v893 = vunpack.c.l.b16 %v248
    %v894 = vunpack.c.h.b16 %v248
    %v895 = vunpack.c.l.b16 %v249
    %v896 = vunpack.c.h.b16 %v249
    %v897 = vunpack.c.l.b16 %v250
    %v898 = vunpack.c.h.b16 %v250
    %v899 = vunpack.c.l.b16 %v251
    %v900 = vunpack.c.h.b16 %v251
    %v901 = vunpack.c.l.b16 %v252
    %v902 = vunpack.c.h.b16 %v252
    %v903 = vunpack.c.l.b16 %v253
    %v904 = vunpack.c.h.b16 %v253
    %v905 = vunpack.c.l.b16 %v254
    %v906 = vunpack.c.h.b16 %v254
    %v907 = vunpack.c.l.b16 %v255
    %v908 = vunpack.c.h.b16 %v255
    %v909 = vunpack.c.l.b16 %v256
    %v910 = vunpack.c.h.b16 %v256
    %v911 = vunpack.c.l.b16 %v257
    %v912 = vunpack.c.h.b16 %v257
    %v913 = vunpack.c.l.b16 %v258
    %v914 = vunpack.c.h.b16 %v258
    %v915 = vunpack.c.l.b16 %v259
    %v916 = vunpack.c.h.b16 %v259
    %v917 = vunpack.c.l.b16 %v260
    %v918 = vunpack.c.h.b16 %v260
    %v919 = vunpack.c.l.b16 %v261
    %v920 = vunpack.c.h.b16 %v261
    %v921 = vunpack.c.l.b16 %v262
    %v922 = vunpack.c.h.b16 %v262
    %v923 = vunpack.c.l.b16 %v263
    %v924 = vunpack.c.h.b16 %v263
    %v925 = vunpack.c.l.b16 %v264
    %v926 = vunpack.c.h.b16 %v264
    %v927 = vunpack.c.l.b16 %v265
    %v928 = vunpack.c.h.b16 %v265
    %v929 = vunpack.c.l.b16 %v266
    %v930 = vunpack.c.h.b16 %v266
    %v931 = vunpack.c.l.b16 %v267
    %v932 = vunpack.c.h.b16 %v267
    %v933 = vunpack.c.l.b16 %v268
    %v934 = vunpack.c.h.b16 %v268
    %v935 = vunpack.c.l.b16 %v269
    %v936 = vunpack.c.h.b16 %v269
    %v937 = vunpack.c.l.b16 %v270
    %v938 = vunpack.c.h.b16 %v270
    %v939 = vunpack.c.l.b16 %v271
    %v940 = vunpack.c.h.b16 %v271
    %v941 = vunpack.c.l.b16 %v272
    %v942 = vunpack.c.h.b16 %v272
    %v943 = vunpack.c.l.b16 %v273
    %v944 = vunpack.c.h.b16 %v273
    %v945 = vunpack.c.l.b16 %v274
    %v946 = vunpack.c.h.b16 %v274
    %v947 = vunpack.c.l.b16 %v275
    %v948 = vunpack.c.h.b16 %v275
    %v949 = vunpack.c.l.b16 %v276
    %v950 = vunpack.c.h.b16 %v276
    %v951 = vunpack.c.l.b16 %v277
    %v952 = vunpack.c.h.b16 %v277
    %v953 = vunpack.c.l.b16 %v278
    %v954 = vunpack.c.h.b16 %v278
    %v955 = vunpack.c.l.b16 %v279
    %v956 = vunpack.c.h.b16 %v279
    %v957 = vunpack.c.l.b16 %v280
    %v958 = vunpack.c.h.b16 %v280
    %v959 = vunpack.c.l.b16 %v281
    %v960 = vunpack.c.h.b16 %v281
    %v961 = vunpack.c.l.b16 %v282
    %v962 = vunpack.c.h.b16 %v282
    %v963 = vunpack.c.l.b16 %v283
    %v964 = vunpack.c.h.b16 %v283
    %v965 = vunpack.c.l.b16 %v284
    %v966 = vunpack.c.h.b16 %v284
    %v967 = vunpack.c.l.b16 %v285
    %v968 = vunpack.c.h.b16 %v285
    %v969 = vunpack.c.l.b16 %v286
    %v970 = vunpack.c.h.b16 %v286
    %v971 = vunpack.c.l.b16 %v287
    %v972 = vunpack.c.h.b16 %v287
    %v973 = vunpack.c.l.b16 %v288
    %v974 = vunpack.c.h.b16 %v288
    %v975 = vunpack.c.l.b16 %v289
    %v976 = vunpack.c.h.b16 %v289
    %v977 = vunpack.c.l.b16 %v290
    %v978 = vunpack.c.h.b16 %v290
    %v979 = vunpack.c.l.b16 %v291
    %v980 = vunpack.c.h.b16 %v291
    %v981 = vunpack.c.l.b16 %v292
    %v982 = vunpack.c.h.b16 %v292
    %v983 = vunpack.c.l.b16 %v293
    %v984 = vunpack.c.h.b16 %v293
    %v985 = vunpack.c.l.b16 %v294
    %v986 = vunpack.c.h.b16 %v294
    %v987 = vunpack.c.l.b16 %v295
    %v988 = vunpack.c.h.b16 %v295
    %v989 = vunpack.c.l.b16 %v296
    %v990 = vunpack.c.h.b16 %v296
    %v991 = vunpack.c.l.b16 %v297
    %v992 = vunpack.c.h.b16 %v297
    %v993 = vunpack.c.l.b16 %v298
    %v994 = vunpack.c.h.b16 %v298
    %v995 = vunpack.c.l.b16 %v299
    %v996 = vunpack.c.h.b16 %v299
    %v997 = vunpack.c.l.b16 %v300
    %v998 = vunpack.c.h.b16 %v300
    %v999 = vunpack.c.l.b16 %v301
    %v1000 = vunpack.c.h.b16 %v301
    %v1001 = vunpack.c.l.b16 %v302
    %v1002 = vunpack.c.h.b16 %v302
    %v1003 = vunpack.c.l.b16 %v303
    %v1004 = vunpack.c.h.b16 %v303
    %v1005 = vunpack.c.l.b16 %v304
    %v1006 = vunpack.c.h.b16 %v304
    %v1007 = vunpack.c.l.b16 %v305
    %v1008 = vunpack.c.h.b16 %v305
    %v1009 = vunpack.c.l.b16 %v306
    %v1010 = vunpack.c.h.b16 %v306
    %v1011 = vunpack.c.l.b16 %v307
    %v1012 = vunpack.c.h.b16 %v307
    %v1013 = vunpack.c.l.b16 %v308
    %v1014 = vunpack.c.h.b16 %v308
    %v1015 = vunpack.c.l.b16 %v309
    %v1016 = vunpack.c.h.b16 %v309
    %v1017 = vunpack.c.l.b16 %v310
    %v1018 = vunpack.c.h.b16 %v310
    %v1019 = vunpack.c.l.b16 %v311
    %v1020 = vunpack.c.h.b16 %v311
    %v1021 = vunpack.c.l.b16 %v312
    %v1022 = vunpack.c.h.b16 %v312
    %v1023 = vunpack.c.l.b16 %v313
    %v1024 = vunpack.c.h.b16 %v313
    %v1025 = vunpack.c.l.b16 %v314
    %v1026 = vunpack.c.h.b16 %v314
    %v1027 = vunpack.c.l.b16 %v315
    %v1028 = vunpack.c.h.b16 %v315
    %v1029 = vunpack.c.l.b16 %v316
    %v1030 = vunpack.c.h.b16 %v316
    %v1031 = vunpack.c.l.b16 %v317
    %v1032 = vunpack.c.h.b16 %v317
    %v1033 = vunpack.c.l.b16 %v318
    %v1034 = vunpack.c.h.b16 %v318
    %v1035 = vunpack.c.l.b16 %v319
    %v1036 = vunpack.c.h.b16 %v319
    %v1037 = vunpack.c.l.b16 %v320
    %v1038 = vunpack.c.h.b16 %v320
    %v1039 = vunpack.c.l.b16 %v321
    %v1040 = vunpack.c.h.b16 %v321
    %v1041 = vunpack.c.l.b16 %v322
    %v1042 = vunpack.c.h.b16 %v322
    %v1043 = vunpack.c.l.b16 %v323
    %v1044 = vunpack.c.h.b16 %v323
    %v1045 = vunpack.c.l.b16 %v324
    %v1046 = vunpack.c.h.b16 %v324
    %v1047 = vunpack.c.l.b16 %v325
    %v1048 = vunpack.c.h.b16 %v325
    %v1049 = vunpack.c.l.b16 %v326
    %v1050 = vunpack.c.h.b16 %v326
    %v1051 = vunpack.c.l.b16 %v327
    %v1052 = vunpack.c.h.b16 %v327
    %v1053 = vunpack.c.l.b16 %v328
    %v1054 = vunpack.c.h.b16 %v328
    %v1055 = vunpack.c.l.b16 %v329
    %v1056 = vunpack.c.h.b16 %v329
    %v1057 = vunpack.c.l.b16 %v330
    %v1058 = vunpack.c.h.b16 %v330
    %v1059 = vunpack.c.l.b16 %v331
    %v1060 = vunpack.c.h.b16 %v331
    %v1061 = vunpack.c.l.b16 %v332
    %v1062 = vunpack.c.h.b16 %v332
    %v1063 = vunpack.c.l.b16 %v333
    %v1064 = vunpack.c.h.b16 %v333
    %v1065 = vunpack.c.l.b16 %v334
    %v1066 = vunpack.c.h.b16 %v334
    %v1067 = vunpack.c.l.b16 %v335
    %v1068 = vunpack.c.h.b16 %v335
    %v1069 = vunpack.c.l.b16 %v336
    %v1070 = vunpack.c.h.b16 %v336
    %v1071 = vunpack.c.l.b16 %v337
    %v1072 = vunpack.c.h.b16 %v337
    %v1073 = vunpack.c.l.b16 %v338
    %v1074 = vunpack.c.h.b16 %v338
    %v1075 = vunpack.c.l.b16 %v339
    %v1076 = vunpack.c.h.b16 %v339
    %v1077 = vunpack.c.l.b16 %v340
    %v1078 = vunpack.c.h.b16 %v340
    %v1079 = vunpack.c.l.b16 %v341
    %v1080 = vunpack.c.h.b16 %v341
    %v1081 = vunpack.c.l.b16 %v342
    %v1082 = vunpack.c.h.b16 %v342
    %v1083 = vunpack.c.l.b16 %v343
    %v1084 = vunpack.c.h.b16 %v343
    %v1085 = vunpack.c.l.b16 %v344
    %v1086 = vunpack.c.h.b16 %v344
    %v1087 = vunpack.c.l.b16 %v345
    %v1088 = vunpack.c.h.b16 %v345
    %v1089 = vunpack.c.l.b16 %v346
    %v1090 = vunpack.c.h.b16 %v346
    %v1091 = vunpack.c.l.b16 %v347
    %v1092 = vunpack.c.h.b16 %v347
    %v1093 = vunpack.c.l.b16 %v348
    %v1094 = vunpack.c.h.b16 %v348
    %v1095 = vunpack.c.l.b16 %v349
    %v1096 = vunpack.c.h.b16 %v349
    %v1097 = vunpack.c.l.b16 %v350
    %v1098 = vunpack.c.h.b16 %v350
    %v1099 = vunpack.c.l.b16 %v351
    %v1100 = vunpack.c.h.b16 %v351
    %v1101 = vunpack.c.l.b16 %v352
    %v1102 = vunpack.c.h.b16 %v352
    %v1103 = vunpack.c.l.b16 %v353
    %v1104 = vunpack.c.h.b16 %v353
    %v1105 = vunpack.c.l.b16 %v354
    %v1106 = vunpack.c.h.b16 %v354
    %v1107 = vunpack.c.l.b16 %v355
    %v1108 = vunpack.c.h.b16 %v355
    %v1109 = vunpack.c.l.b16 %v356
    %v1110 = vunpack.c.h.b16 %v356
    %v1111 = vunpack.c.l.b16 %v357
    %v1112 = vunpack.c.h.b16 %v357
    %v1113 = vunpack.c.l.b16 %v358
    %v1114 = vunpack.c.h.b16 %v358
    %v1115 = vunpack.c.l.b16 %v359
    %v1116 = vunpack.c.h.b16 %v359
    %v1117 = vunpack.c.l.b16 %v360
    %v1118 = vunpack.c.h.b16 %v360
    %v1119 = vunpack.c.l.b16 %v361
    %v1120 = vunpack.c.h.b16 %v361
    %v1121 = vunpack.c.l.b16 %v362
    %v1122 = vunpack.c.h.b16 %v362
    %v1123 = vunpack.c.l.b16 %v363
    %v1124 = vunpack.c.h.b16 %v363
    %v1125 = vunpack.c.l.b16 %v364
    %v1126 = vunpack.c.h.b16 %v364
    %v1127 = vunpack.c.l.b16 %v365
    %v1128 = vunpack.c.h.b16 %v365
    %v1129 = vunpack.c.l.b16 %v366
    %v1130 = vunpack.c.h.b16 %v366
    %v1131 = vunpack.c.l.b16 %v367
    %v1132 = vunpack.c.h.b16 %v367
    %v1133 = vunpack.c.l.b16 %v368
    %v1134 = vunpack.c.h.b16 %v368
    %v1135 = vunpack.c.l.b16 %v369
    %v1136 = vunpack.c.h.b16 %v369
    %v1137 = vunpack.c.l.b16 %v370
    %v1138 = vunpack.c.h.b16 %v370
    %v1139 = vunpack.c.l.b16 %v371
    %v1140 = vunpack.c.h.b16 %v371
    %v1141 = vunpack.c.l.b16 %v372
    %v1142 = vunpack.c.h.b16 %v372
    %v1143 = vunpack.c.l.b16 %v373
    %v1144 = vunpack.c.h.b16 %v373
    %v1145 = vunpack.c.l.b16 %v374
    %v1146 = vunpack.c.h.b16 %v374
    %v1147 = vunpack.c.l.b16 %v375
    %v1148 = vunpack.c.h.b16 %v375
    %v1149 = vunpack.c.l.b16 %v376
    %v1150 = vunpack.c.h.b16 %v376
    %v1151 = vunpack.c.l.b16 %v377
    %v1152 = vunpack.c.h.b16 %v377
    %v1153 = vunpack.c.l.b16 %v378
    %v1154 = vunpack.c.h.b16 %v378
    %v1155 = vunpack.c.l.b16 %v379
    %v1156 = vunpack.c.h.b16 %v379
    %v1157 = vunpack.c.l.b16 %v380
    %v1158 = vunpack.c.h.b16 %v380
    %v1159 = vunpack.c.l.b16 %v381
    %v1160 = vunpack.c.h.b16 %v381
    %v1161 = vunpack.c.l.b16 %v382
    %v1162 = vunpack.c.h.b16 %v382
    %v1163 = vunpack.c.l.b16 %v383
    %v1164 = vunpack.c.h.b16 %v383
    %v1165 = vunpack.c.l.b16 %v384
    %v1166 = vunpack.c.h.b16 %v384
    %v1167 = vunpack.c.l.b16 %v385
    %v1168 = vunpack.c.h.b16 %v385
    %v1169 = vunpack.c.l.b16 %v386
    %v1170 = vunpack.c.h.b16 %v386
    %v1171 = vunpack.c.l.b16 %v387
    %v1172 = vunpack.c.h.b16 %v387
    %v1173 = vunpack.c.l.b16 %v388
    %v1174 = vunpack.c.h.b16 %v388
    %v1175 = vunpack.c.l.b16 %v389
    %v1176 = vunpack.c.h.b16 %v389
    %v1177 = vunpack.c.l.b16 %v390
    %v1178 = vunpack.c.h.b16 %v390
    %v1179 = vunpack.c.l.b16 %v391
    %v1180 = vunpack.c.h.b16 %v391
    %v1181 = vunpack.c.l.b16 %v392
    %v1182 = vunpack.c.h.b16 %v392
    %v1183 = vpack.c.b16 %v675, %v671
    %v1184 = vpack.c.b16 %v676, %v672
    %v1185 = vpack.c.b16 %v677, %v673
    %v1186 = vpack.c.b16 %v678, %v674
    %v1187 = vpack.c.b16 %v683, %v679
    %v1188 = vpack.c.b16 %v684, %v680
    %v1189 = vpack.c.b16 %v685, %v681
    %v1190 = vpack.c.b16 %v686, %v682
    %v1191 = vpack.c.b16 %v691, %v687
    %v1192 = vpack.c.b16 %v692, %v688
    %v1193 = vpack.c.b16 %v693, %v689
    %v1194 = vpack.c.b16 %v694, %v690
    %v1195 = vpack.c.b16 %v699, %v695
    %v1196 = vpack.c.b16 %v700, %v696
    %v1197 = vpack.c.b16 %v701, %v697
    %v1198 = vpack.c.b16 %v702, %v698
    %v1199 = vpack.c.b16 %v707, %v703
    %v1200 = vpack.c.b16 %v708, %v704
    %v1201 = vpack.c.b16 %v709, %v705
    %v1202 = vpack.c.b16 %v710, %v706
    %v1203 = vpack.c.b16 %v715, %v711
    %v1204 = vpack.c.b16 %v716, %v712
    %v1205 = vpack.c.b16 %v717, %v713
    %v1206 = vpack.c.b16 %v718, %v714
    %v1207 = vpack.c.b16 %v723, %v719
    %v1208 = vpack.c.b16 %v724, %v720
    %v1209 = vpack.c.b16 %v725, %v721
    %v1210 = vpack.c.b16 %v726, %v722
    %v1211 = vpack.c.b16 %v731, %v727
    %v1212 = vpack.c.b16 %v732, %v728
    %v1213 = vpack.c.b16 %v733, %v729
    %v1214 = vpack.c.b16 %v734, %v730
    %v1215 = vpack.c.b16 %v739, %v735
    %v1216 = vpack.c.b16 %v740, %v736
    %v1217 = vpack.c.b16 %v741, %v737
    %v1218 = vpack.c.b16 %v742, %v738
    %v1219 = vpack.c.b16 %v747, %v743
    %v1220 = vpack.c.b16 %v748, %v744
    %v1221 = vpack.c.b16 %v749, %v745
    %v1222 = vpack.c.b16 %v750, %v746
    %v1223 = vpack.c.b16 %v755, %v751
    %v1224 = vpack.c.b16 %v756, %v752
    %v1225 = vpack.c.b16 %v757, %v753
    %v1226 = vpack.c.b16 %v758, %v754
    %v1227 = vpack.c.b16 %v763, %v759
    %v1228 = vpack.c.b16 %v764, %v760
    %v1229 = vpack.c.b16 %v765, %v761
    %v1230 = vpack.c.b16 %v766, %v762
    %v1231 = vpack.c.b16 %v771, %v767
    %v1232 = vpack.c.b16 %v772, %v768
    %v1233 = vpack.c.b16 %v773, %v769
    %v1234 = vpack.c.b16 %v774, %v770
    %v1235 = vpack.c.b16 %v779, %v775
    %v1236 = vpack.c.b16 %v780, %v776
    %v1237 = vpack.c.b16 %v781, %v777
    %v1238 = vpack.c.b16 %v782, %v778
    %v1239 = vpack.c.b16 %v787, %v783
    %v1240 = vpack.c.b16 %v788, %v784
    %v1241 = vpack.c.b16 %v789, %v785
    %v1242 = vpack.c.b16 %v790, %v786
    %v1243 = vpack.c.b16 %v795, %v791
    %v1244 = vpack.c.b16 %v796, %v792
    %v1245 = vpack.c.b16 %v797, %v793
    %v1246 = vpack.c.b16 %v798, %v794
    %v1247 = vpack.c.b16 %v803, %v799
    %v1248 = vpack.c.b16 %v804, %v800
    %v1249 = vpack.c.b16 %v805, %v801
    %v1250 = vpack.c.b16 %v806, %v802
    %v1251 = vpack.c.b16 %v811, %v807
    %v1252 = vpack.c.b16 %v812, %v808
    %v1253 = vpack.c.b16 %v813, %v809
    %v1254 = vpack.c.b16 %v814, %v810
    %v1255 = vpack.c.b16 %v819, %v815
    %v1256 = vpack.c.b16 %v820, %v816
    %v1257 = vpack.c.b16 %v821, %v817
    %v1258 = vpack.c.b16 %v822, %v818
    %v1259 = vpack.c.b16 %v827, %v823
    %v1260 = vpack.c.b16 %v828, %v824
    %v1261 = vpack.c.b16 %v829, %v825
    %v1262 = vpack.c.b16 %v830, %v826
    %v1263 = vpack.c.b16 %v835, %v831
    %v1264 = vpack.c.b16 %v836, %v832
    %v1265 = vpack.c.b16 %v837, %v833
    %v1266 = vpack.c.b16 %v838, %v834
    %v1267 = vpack.c.b16 %v843, %v839
    %v1268 = vpack.c.b16 %v844, %v840
    %v1269 = vpack.c.b16 %v845, %v841
    %v1270 = vpack.c.b16 %v846, %v842
    %v1271 = vpack.c.b16 %v851, %v847
    %v1272 = vpack.c.b16 %v852, %v848
    %v1273 = vpack.c.b16 %v853, %v849
    %v1274 = vpack.c.b16 %v854, %v850
    %v1275 = vpack.c.b16 %v859, %v855
    %v1276 = vpack.c.b16 %v860, %v856
    %v1277 = vpack.c.b16 %v861, %v857
    %v1278 = vpack.c.b16 %v862, %v858
    %v1279 = vpack.c.b16 %v867, %v863
    %v1280 = vpack.c.b16 %v868, %v864
    %v1281 = vpack.c.b16 %v869, %v865
    %v1282 = vpack.c.b16 %v870, %v866
    %v1283 = vpack.c.b16 %v875, %v871
    %v1284 = vpack.c.b16 %v876, %v872
    %v1285 = vpack.c.b16 %v877, %v873
    %v1286 = vpack.c.b16 %v878, %v874
    %v1287 = vpack.c.b16 %v883, %v879
    %v1288 = vpack.c.b16 %v884, %v880
    %v1289 = vpack.c.b16 %v885, %v881
    %v1290 = vpack.c.b16 %v886, %v882
    %v1291 = vpack.c.b16 %v891, %v887
    %v1292 = vpack.c.b16 %v892, %v888
    %v1293 = vpack.c.b16 %v893, %v889
    %v1294 = vpack.c.b16 %v894, %v890
    %v1295 = vpack.c.b16 %v899, %v895
    %v1296 = vpack.c.b16 %v900, %v896
    %v1297 = vpack.c.b16 %v901, %v897
    %v1298 = vpack.c.b16 %v902, %v898
    %v1299 = vpack.c.b16 %v907, %v903
    %v1300 = vpack.c.b16 %v908, %v904
    %v1301 = vpack.c.b16 %v909, %v905
    %v1302 = vpack.c.b16 %v910, %v906
    %v1303 = vpack.c.b16 %v915, %v911
    %v1304 = vpack.c.b16 %v916, %v912
    %v1305 = vpack.c.b16 %v917, %v913
    %v1306 = vpack.c.b16 %v918, %v914
    %v1307 = vpack.c.b16 %v923, %v919
    %v1308 = vpack.c.b16 %v924, %v920
    %v1309 = vpack.c.b16 %v925, %v921
    %v1310 = vpack.c.b16 %v926, %v922
    %v1311 = vpack.c.b16 %v931, %v927
    %v1312 = vpack.c.b16 %v932, %v928
    %v1313 = vpack.c.b16 %v933, %v929
    %v1314 = vpack.c.b16 %v934, %v930
    %v1315 = vpack.c.b16 %v939, %v935
    %v1316 = vpack.c.b16 %v940, %v936
    %v1317 = vpack.c.b16 %v941, %v937
    %v1318 = vpack.c.b16 %v942, %v938
    %v1319 = vpack.c.b16 %v947, %v943
    %v1320 = vpack.c.b16 %v948, %v944
    %v1321 = vpack.c.b16 %v949, %v945
    %v1322 = vpack.c.b16 %v950, %v946
    %v1323 = vpack.c.b16 %v955, %v951
    %v1324 = vpack.c.b16 %v956, %v952
    %v1325 = vpack.c.b16 %v957, %v953
    %v1326 = vpack.c.b16 %v958, %v954
    %v1327 = vpack.c.b16 %v963, %v959
    %v1328 = vpack.c.b16 %v964, %v960
    %v1329 = vpack.c.b16 %v965, %v961
    %v1330 = vpack.c.b16 %v966, %v962
    %v1331 = vpack.c.b16 %v971, %v967
    %v1332 = vpack.c.b16 %v972, %v968
    %v1333 = vpack.c.b16 %v973, %v969
    %v1334 = vpack.c.b16 %v974, %v970
    %v1335 = vpack.c.b16 %v979, %v975
    %v1336 = vpack.c.b16 %v980, %v976
    %v1337 = vpack.c.b16 %v981, %v977
    %v1338 = vpack.c.b16 %v982, %v978
    %v1339 = vpack.c.b16 %v987, %v983
    %v1340 = vpack.c.b16 %v988, %v984
    %v1341 = vpack.c.b16 %v989, %v985
    %v1342 = vpack.c.b16 %v990, %v986
    %v1343 = vpack.c.b16 %v995, %v991
    %v1344 = vpack.c.b16 %v996, %v992
    %v1345 = vpack.c.b16 %v997, %v993
    %v1346 = vpack.c.b16 %v998, %v994
    %v1347 = vpack.c.b16 %v1003, %v999
    %v1348 = vpack.c.b16 %v1004, %v1000
    %v1349 = vpack.c.b16 %v1005, %v1001
    %v1350 = vpack.c.b16 %v1006, %v1002
    %v1351 = vpack.c.b16 %v1011, %v1007
    %v1352 = vpack.c.b16 %v1012, %v1008
    %v1353 = vpack.c.b16 %v1013, %v1009
    %v1354 = vpack.c.b16 %v1014, %v1010
    %v1355 = vpack.c.b16 %v1019, %v1015
    %v1356 = vpack.c.b16 %v1020, %v1016
    %v1357 = vpack.c.b16 %v1021, %v1017
    %v1358 = vpack.c.b16 %v1022, %v1018
    %v1359 = vpack.c.b16 %v1027, %v1023
    %v1360 = vpack.c.b16 %v1028, %v1024
    %v1361 = vpack.c.b16 %v1029, %v1025
    %v1362 = vpack.c.b16 %v1030, %v1026
    %v1363 = vpack.c.b16 %v1035, %v1031
    %v1364 = vpack.c.b16 %v1036, %v1032
    %v1365 = vpack.c.b16 %v1037, %v1033
    %v1366 = vpack.c.b16 %v1038, %v1034
    %v1367 = vpack.c.b16 %v1043, %v1039
    %v1368 = vpack.c.b16 %v1044, %v1040
    %v1369 = vpack.c.b16 %v1045, %v1041
    %v1370 = vpack.c.b16 %v1046, %v1042
    %v1371 = vpack.c.b16 %v1051, %v1047
    %v1372 = vpack.c.b16 %v1052, %v1048
    %v1373 = vpack.c.b16 %v1053, %v1049
    %v1374 = vpack.c.b16 %v1054, %v1050
    %v1375 = vpack.c.b16 %v1059, %v1055
    %v1376 = vpack.c.b16 %v1060, %v1056
    %v1377 = vpack.c.b16 %v1061, %v1057
    %v1378 = vpack.c.b16 %v1062, %v1058
    %v1379 = vpack.c.b16 %v1067, %v1063
    %v1380 = vpack.c.b16 %v1068, %v1064
    %v1381 = vpack.c.b16 %v1069, %v1065
    %v1382 = vpack.c.b16 %v1070, %v1066
    %v1383 = vpack.c.b16 %v1075, %v1071
    %v1384 = vpack.c.b16 %v1076, %v1072
    %v1385 = vpack.c.b16 %v1077, %v1073
    %v1386 = vpack.c.b16 %v1078, %v1074
    %v1387 = vpack.c.b16 %v1083, %v1079
    %v1388 = vpack.c.b16 %v1084, %v1080
    %v1389 = vpack.c.b16 %v1085, %v1081
    %v1390 = vpack.c.b16 %v1086, %v1082
    %v1391 = vpack.c.b16 %v1091, %v1087
    %v1392 = vpack.c.b16 %v1092, %v1088
    %v1393 = vpack.c.b16 %v1093, %v1089
    %v1394 = vpack.c.b16 %v1094, %v1090
    %v1395 = vpack.c.b16 %v1099, %v1095
    %v1396 = vpack.c.b16 %v1100, %v1096
    %v1397 = vpack.c.b16 %v1101, %v1097
    %v1398 = vpack.c.b16 %v1102, %v1098
    %v1399 = vpack.c.b16 %v1107, %v1103
    %v1400 = vpack.c.b16 %v1108, %v1104
    %v1401 = vpack.c.b16 %v1109, %v1105
    %v1402 = vpack.c.b16 %v1110, %v1106
    %v1403 = vpack.c.b16 %v1115, %v1111
    %v1404 = vpack.c.b16 %v1116, %v1112
    %v1405 = vpack.c.b16 %v1117, %v1113
    %v1406 = vpack.c.b16 %v1118, %v1114
    %v1407 = vpack.c.b16 %v1123, %v1119
    %v1408 = vpack.c.b16 %v1124, %v1120
    %v1409 = vpack.c.b16 %v1125, %v1121
    %v1410 = vpack.c.b16 %v1126, %v1122
    %v1411 = vpack.c.b16 %v1131, %v1127
    %v1412 = vpack.c.b16 %v1132, %v1128
    %v1413 = vpack.c.b16 %v1133, %v1129
    %v1414 = vpack.c.b16 %v1134, %v1130
    %v1415 = vpack.c.b16 %v1139, %v1135
    %v1416 = vpack.c.b16 %v1140, %v1136
    %v1417 = vpack.c.b16 %v1141, %v1137
    %v1418 = vpack.c.b16 %v1142, %v1138
    %v1419 = vpack.c.b16 %v1147, %v1143
    %v1420 = vpack.c.b16 %v1148, %v1144
    %v1421 = vpack.c.b16 %v1149, %v1145
    %v1422 = vpack.c.b16 %v1150, %v1146
    %v1423 = vpack.c.b16 %v1155, %v1151
    %v1424 = vpack.c.b16 %v1156, %v1152
    %v1425 = vpack.c.b16 %v1157, %v1153
    %v1426 = vpack.c.b16 %v1158, %v1154
    %v1427 = vpack.c.b16 %v1163, %v1159
    %v1428 = vpack.c.b16 %v1164, %v1160
    %v1429 = vpack.c.b16 %v1165, %v1161
    %v1430 = vpack.c.b16 %v1166, %v1162
    %v1431 = vpack.c.b16 %v1171, %v1167
    %v1432 = vpack.c.b16 %v1172, %v1168
    %v1433 = vpack.c.b16 %v1173, %v1169
    %v1434 = vpack.c.b16 %v1174, %v1170
    %v1435 = vpack.c.b16 %v1179, %v1175
    %v1436 = vpack.c.b16 %v1180, %v1176
    %v1437 = vpack.c.b16 %v1181, %v1177
    %v1438 = vpack.c.b16 %v1182, %v1178
    %1695 = vmatprep.subr.bf16.mxu0 %v1184
    %1696 = vmatpush1.bf16.msra.mxu0 %v1183
    %1697 = vmatprep.subr.bf16.mxu0 %v1188
    %1698 = vmatpush1.bf16.msra.mxu0 %v1187
    %1699 = vmatprep.subr.bf16.mxu0 %v1192
    %1700 = vmatpush1.bf16.msra.mxu0 %v1191
    %1701 = vmatprep.subr.bf16.mxu0 %v1196
    %1702 = vmatpush1.bf16.msra.mxu0 %v1195
    %1703 = vmatprep.subr.bf16.mxu0 %v1200
    %1704 = vmatpush1.bf16.msra.mxu0 %v1199
    %1705 = vmatprep.subr.bf16.mxu0 %v1204
    %1706 = vmatpush1.bf16.msra.mxu0 %v1203
    %1707 = vmatprep.subr.bf16.mxu0 %v1208
    %1708 = vmatpush1.bf16.msra.mxu0 %v1207
    %1709 = vmatprep.subr.bf16.mxu0 %v1212
    %1710 = vmatpush1.bf16.msra.mxu0 %v1211
    %1711 = vmatprep.subr.bf16.mxu0 %v1216
    %1712 = vmatpush1.bf16.msra.mxu0 %v1215
    %1713 = vmatprep.subr.bf16.mxu0 %v1220
    %1714 = vmatpush1.bf16.msra.mxu0 %v1219
    %1715 = vmatprep.subr.bf16.mxu0 %v1224
    %1716 = vmatpush1.bf16.msra.mxu0 %v1223
    %1717 = vmatprep.subr.bf16.mxu0 %v1228
    %1718 = vmatpush1.bf16.msra.mxu0 %v1227
    %1719 = vmatprep.subr.bf16.mxu0 %v1232
    %1720 = vmatpush1.bf16.msra.mxu0 %v1231
    %1721 = vmatprep.subr.bf16.mxu0 %v1236
    %1722 = vmatpush1.bf16.msra.mxu0 %v1235
    %1723 = vmatprep.subr.bf16.mxu0 %v1240
    %1724 = vmatpush1.bf16.msra.mxu0 %v1239
    %1725 = vmatprep.subr.bf16.mxu0 %v1244
    %1726 = vmatpush1.bf16.msra.mxu0 %v1243
    %1727 = vmatprep.mubr.bf16.mxu0 %v130
    %1728 = vmatmul.mubr.bf16.gmra.mrb[0].mxu0 %v129
    %v1729 = vpop.f32.mrb[0].mxu0
    %v1730 = vadd.f32 %v398, %v1729
    %v1731 = vpop.f32.mrb[0].mxu0
    %v1732 = vadd.f32 %v402, %v1731
    %v1733 = vpop.f32.mrb[0].mxu0
    %v1734 = vpop.f32.mrb[0].mxu0
    %1735 = vdwg.mxu0
    %1736 = vmatprep.subr.bf16.mxu0 %v1248
    %1737 = vmatpush1.bf16.msra.mxu0 %v1247
    %1738 = vmatprep.subr.bf16.mxu0 %v1252
    %1739 = vmatpush1.bf16.msra.mxu0 %v1251
    %1740 = vmatprep.subr.bf16.mxu0 %v1256
    %1741 = vmatpush1.bf16.msra.mxu0 %v1255
    %1742 = vmatprep.subr.bf16.mxu0 %v1260
    %1743 = vmatpush1.bf16.msra.mxu0 %v1259
    %1744 = vmatprep.subr.bf16.mxu0 %v1264
    %1745 = vmatpush1.bf16.msra.mxu0 %v1263
    %1746 = vmatprep.subr.bf16.mxu0 %v1268
    %1747 = vmatpush1.bf16.msra.mxu0 %v1267
    %1748 = vmatprep.subr.bf16.mxu0 %v1272
    %1749 = vmatpush1.bf16.msra.mxu0 %v1271
    %1750 = vmatprep.subr.bf16.mxu0 %v1276
    %1751 = vmatpush1.bf16.msra.mxu0 %v1275
    %1752 = vmatprep.subr.bf16.mxu0 %v1280
    %1753 = vmatpush1.bf16.msra.mxu0 %v1279
    %1754 = vmatprep.subr.bf16.mxu0 %v1284
    %1755 = vmatpush1.bf16.msra.mxu0 %v1283
    %1756 = vmatprep.subr.bf16.mxu0 %v1288
    %1757 = vmatpush1.bf16.msra.mxu0 %v1287
    %1758 = vmatprep.subr.bf16.mxu0 %v1292
    %1759 = vmatpush1.bf16.msra.mxu0 %v1291
    %1760 = vmatprep.subr.bf16.mxu0 %v1296
    %1761 = vmatpush1.bf16.msra.mxu0 %v1295
    %1762 = vmatprep.subr.bf16.mxu0 %v1300
    %1763 = vmatpush1.bf16.msra.mxu0 %v1299
    %1764 = vmatprep.subr.bf16.mxu0 %v1304
    %1765 = vmatpush1.bf16.msra.mxu0 %v1303
    %1766 = vmatprep.subr.bf16.mxu0 %v1308
    %1767 = vmatpush1.bf16.msra.mxu0 %v1307
    %1768 = vmatprep.mubr.bf16.mxu0 %v132
    %1769 = vmatmul.mubr.bf16.gmra.mrb[0].mxu0 %v131
    %v1770 = vpop.f32.mrb[0].mxu0
    %v1771 = vadd.f32 %v1730, %v1770
    %v1772 = vpop.f32.mrb[0].mxu0
    %v1773 = vadd.f32 %v1732, %v1772
    %v1774 = vpop.f32.mrb[0].mxu0
    %v1775 = vpop.f32.mrb[0].mxu0
    %1776 = vdwg.mxu0
    %1777 = vmatprep.subr.bf16.mxu0 %v1312
    %1778 = vmatpush1.bf16.msra.mxu0 %v1311
    %1779 = vmatprep.subr.bf16.mxu0 %v1316
    %1780 = vmatpush1.bf16.msra.mxu0 %v1315
    %1781 = vmatprep.subr.bf16.mxu0 %v1320
    %1782 = vmatpush1.bf16.msra.mxu0 %v1319
    %1783 = vmatprep.subr.bf16.mxu0 %v1324
    %1784 = vmatpush1.bf16.msra.mxu0 %v1323
    %1785 = vmatprep.subr.bf16.mxu0 %v1328
    %1786 = vmatpush1.bf16.msra.mxu0 %v1327
    %1787 = vmatprep.subr.bf16.mxu0 %v1332
    %1788 = vmatpush1.bf16.msra.mxu0 %v1331
    %1789 = vmatprep.subr.bf16.mxu0 %v1336
    %1790 = vmatpush1.bf16.msra.mxu0 %v1335
    %1791 = vmatprep.subr.bf16.mxu0 %v1340
    %1792 = vmatpush1.bf16.msra.mxu0 %v1339
    %1793 = vmatprep.subr.bf16.mxu0 %v1344
    %1794 = vmatpush1.bf16.msra.mxu0 %v1343
    %1795 = vmatprep.subr.bf16.mxu0 %v1348
    %1796 = vmatpush1.bf16.msra.mxu0 %v1347
    %1797 = vmatprep.subr.bf16.mxu0 %v1352
    %1798 = vmatpush1.bf16.msra.mxu0 %v1351
    %1799 = vmatprep.subr.bf16.mxu0 %v1356
    %1800 = vmatpush1.bf16.msra.mxu0 %v1355
    %1801 = vmatprep.subr.bf16.mxu0 %v1360
    %1802 = vmatpush1.bf16.msra.mxu0 %v1359
    %1803 = vmatprep.subr.bf16.mxu0 %v1364
    %1804 = vmatpush1.bf16.msra.mxu0 %v1363
    %1805 = vmatprep.subr.bf16.mxu0 %v1368
    %1806 = vmatpush1.bf16.msra.mxu0 %v1367
    %1807 = vmatprep.subr.bf16.mxu0 %v1372
    %1808 = vmatpush1.bf16.msra.mxu0 %v1371
    %1809 = vmatprep.mubr.bf16.mxu0 %v134
    %1810 = vmatmul.mubr.bf16.gmra.mrb[0].mxu0 %v133
    %v1811 = vpop.f32.mrb[0].mxu0
    %v1812 = vadd.f32 %v1771, %v1811
    %v1813 = vpop.f32.mrb[0].mxu0
    %v1814 = vadd.f32 %v1773, %v1813
    %v1815 = vpop.f32.mrb[0].mxu0
    %v1816 = vpop.f32.mrb[0].mxu0
    %1817 = vdwg.mxu0
    %1818 = vmatprep.subr.bf16.mxu0 %v1376
    %1819 = vmatpush1.bf16.msra.mxu0 %v1375
    %1820 = vmatprep.subr.bf16.mxu0 %v1380
    %1821 = vmatpush1.bf16.msra.mxu0 %v1379
    %1822 = vmatprep.subr.bf16.mxu0 %v1384
    %1823 = vmatpush1.bf16.msra.mxu0 %v1383
    %1824 = vmatprep.subr.bf16.mxu0 %v1388
    %1825 = vmatpush1.bf16.msra.mxu0 %v1387
    %1826 = vmatprep.subr.bf16.mxu0 %v1392
    %1827 = vmatpush1.bf16.msra.mxu0 %v1391
    %1828 = vmatprep.subr.bf16.mxu0 %v1396
    %1829 = vmatpush1.bf16.msra.mxu0 %v1395
    %1830 = vmatprep.subr.bf16.mxu0 %v1400
    %1831 = vmatpush1.bf16.msra.mxu0 %v1399
    %1832 = vmatprep.subr.bf16.mxu0 %v1404
    %1833 = vmatpush1.bf16.msra.mxu0 %v1403
    %1834 = vmatprep.subr.bf16.mxu0 %v1408
    %1835 = vmatpush1.bf16.msra.mxu0 %v1407
    %1836 = vmatprep.subr.bf16.mxu0 %v1412
    %1837 = vmatpush1.bf16.msra.mxu0 %v1411
    %1838 = vmatprep.subr.bf16.mxu0 %v1416
    %1839 = vmatpush1.bf16.msra.mxu0 %v1415
    %1840 = vmatprep.subr.bf16.mxu0 %v1420
    %1841 = vmatpush1.bf16.msra.mxu0 %v1419
    %1842 = vmatprep.subr.bf16.mxu0 %v1424
    %1843 = vmatpush1.bf16.msra.mxu0 %v1423
    %1844 = vmatprep.subr.bf16.mxu0 %v1428
    %1845 = vmatpush1.bf16.msra.mxu0 %v1427
    %1846 = vmatprep.subr.bf16.mxu0 %v1432
    %1847 = vmatpush1.bf16.msra.mxu0 %v1431
    %1848 = vmatprep.subr.bf16.mxu0 %v1436
    %1849 = vmatpush1.bf16.msra.mxu0 %v1435
    %1850 = vmatprep.mubr.bf16.mxu0 %v136
    %1851 = vmatmul.mubr.bf16.gmra.mrb[0].mxu0 %v135
    %v1852 = vpop.f32.mrb[0].mxu0
    %v1853 = vadd.f32 %v1812, %v1852
    %v1854 = vpop.f32.mrb[0].mxu0
    %v1855 = vadd.f32 %v1814, %v1854
    %v1856 = vpop.f32.mrb[0].mxu0
    %v1857 = vpop.f32.mrb[0].mxu0
    %1858 = vdwg.mxu0
    %1859 = vmatprep.subr.bf16.mxu0 %v1186
    %1860 = vmatpush1.bf16.msra.mxu0 %v1185
    %1861 = vmatprep.subr.bf16.mxu0 %v1190
    %1862 = vmatpush1.bf16.msra.mxu0 %v1189
    %1863 = vmatprep.subr.bf16.mxu0 %v1194
    %1864 = vmatpush1.bf16.msra.mxu0 %v1193
    %1865 = vmatprep.subr.bf16.mxu0 %v1198
    %1866 = vmatpush1.bf16.msra.mxu0 %v1197
    %1867 = vmatprep.subr.bf16.mxu0 %v1202
    %1868 = vmatpush1.bf16.msra.mxu0 %v1201
    %1869 = vmatprep.subr.bf16.mxu0 %v1206
    %1870 = vmatpush1.bf16.msra.mxu0 %v1205
    %1871 = vmatprep.subr.bf16.mxu0 %v1210
    %1872 = vmatpush1.bf16.msra.mxu0 %v1209
    %1873 = vmatprep.subr.bf16.mxu0 %v1214
    %1874 = vmatpush1.bf16.msra.mxu0 %v1213
    %1875 = vmatprep.subr.bf16.mxu0 %v1218
    %1876 = vmatpush1.bf16.msra.mxu0 %v1217
    %1877 = vmatprep.subr.bf16.mxu0 %v1222
    %1878 = vmatpush1.bf16.msra.mxu0 %v1221
    %1879 = vmatprep.subr.bf16.mxu0 %v1226
    %1880 = vmatpush1.bf16.msra.mxu0 %v1225
    %1881 = vmatprep.subr.bf16.mxu0 %v1230
    %1882 = vmatpush1.bf16.msra.mxu0 %v1229
    %1883 = vmatprep.subr.bf16.mxu0 %v1234
    %1884 = vmatpush1.bf16.msra.mxu0 %v1233
    %1885 = vmatprep.subr.bf16.mxu0 %v1238
    %1886 = vmatpush1.bf16.msra.mxu0 %v1237
    %1887 = vmatprep.subr.bf16.mxu0 %v1242
    %1888 = vmatpush1.bf16.msra.mxu0 %v1241
    %1889 = vmatprep.subr.bf16.mxu0 %v1246
    %1890 = vmatpush1.bf16.msra.mxu0 %v1245
    %1891 = vmatprep.mubr.bf16.mxu0 %v130
    %1892 = vmatmul.mubr.bf16.gmra.mrb[0].mxu0 %v129
    %v1893 = vpop.f32.mrb[0].mxu0
    %v1894 = vadd.f32 %v406, %v1893
    %v1895 = vpop.f32.mrb[0].mxu0
    %v1896 = vadd.f32 %v410, %v1895
    %v1897 = vpop.f32.mrb[0].mxu0
    %v1898 = vpop.f32.mrb[0].mxu0
    %1899 = vdwg.mxu0
    %1900 = vmatprep.subr.bf16.mxu0 %v1250
    %1901 = vmatpush1.bf16.msra.mxu0 %v1249
    %1902 = vmatprep.subr.bf16.mxu0 %v1254
    %1903 = vmatpush1.bf16.msra.mxu0 %v1253
    %1904 = vmatprep.subr.bf16.mxu0 %v1258
    %1905 = vmatpush1.bf16.msra.mxu0 %v1257
    %1906 = vmatprep.subr.bf16.mxu0 %v1262
    %1907 = vmatpush1.bf16.msra.mxu0 %v1261
    %1908 = vmatprep.subr.bf16.mxu0 %v1266
    %1909 = vmatpush1.bf16.msra.mxu0 %v1265
    %1910 = vmatprep.subr.bf16.mxu0 %v1270
    %1911 = vmatpush1.bf16.msra.mxu0 %v1269
    %1912 = vmatprep.subr.bf16.mxu0 %v1274
    %1913 = vmatpush1.bf16.msra.mxu0 %v1273
    %1914 = vmatprep.subr.bf16.mxu0 %v1278
    %1915 = vmatpush1.bf16.msra.mxu0 %v1277
    %1916 = vmatprep.subr.bf16.mxu0 %v1282
    %1917 = vmatpush1.bf16.msra.mxu0 %v1281
    %1918 = vmatprep.subr.bf16.mxu0 %v1286
    %1919 = vmatpush1.bf16.msra.mxu0 %v1285
    %1920 = vmatprep.subr.bf16.mxu0 %v1290
    %1921 = vmatpush1.bf16.msra.mxu0 %v1289
    %1922 = vmatprep.subr.bf16.mxu0 %v1294
    %1923 = vmatpush1.bf16.msra.mxu0 %v1293
    %1924 = vmatprep.subr.bf16.mxu0 %v1298
    %1925 = vmatpush1.bf16.msra.mxu0 %v1297
    %1926 = vmatprep.subr.bf16.mxu0 %v1302
    %1927 = vmatpush1.bf16.msra.mxu0 %v1301
    %1928 = vmatprep.subr.bf16.mxu0 %v1306
    %1929 = vmatpush1.bf16.msra.mxu0 %v1305
    %1930 = vmatprep.subr.bf16.mxu0 %v1310
    %1931 = vmatpush1.bf16.msra.mxu0 %v1309
    %1932 = vmatprep.mubr.bf16.mxu0 %v132
    %1933 = vmatmul.mubr.bf16.gmra.mrb[0].mxu0 %v131
    %v1934 = vpop.f32.mrb[0].mxu0
    %v1935 = vadd.f32 %v1894, %v1934
    %v1936 = vpop.f32.mrb[0].mxu0
    %v1937 = vadd.f32 %v1896, %v1936
    %v1938 = vpop.f32.mrb[0].mxu0
    %v1939 = vpop.f32.mrb[0].mxu0
    %1940 = vdwg.mxu0
    %1941 = vmatprep.subr.bf16.mxu0 %v1314
    %1942 = vmatpush1.bf16.msra.mxu0 %v1313
    %1943 = vmatprep.subr.bf16.mxu0 %v1318
    %1944 = vmatpush1.bf16.msra.mxu0 %v1317
    %1945 = vmatprep.subr.bf16.mxu0 %v1322
    %1946 = vmatpush1.bf16.msra.mxu0 %v1321
    %1947 = vmatprep.subr.bf16.mxu0 %v1326
    %1948 = vmatpush1.bf16.msra.mxu0 %v1325
    %1949 = vmatprep.subr.bf16.mxu0 %v1330
    %1950 = vmatpush1.bf16.msra.mxu0 %v1329
    %1951 = vmatprep.subr.bf16.mxu0 %v1334
    %1952 = vmatpush1.bf16.msra.mxu0 %v1333
    %1953 = vmatprep.subr.bf16.mxu0 %v1338
    %1954 = vmatpush1.bf16.msra.mxu0 %v1337
    %1955 = vmatprep.subr.bf16.mxu0 %v1342
    %1956 = vmatpush1.bf16.msra.mxu0 %v1341
    %1957 = vmatprep.subr.bf16.mxu0 %v1346
    %1958 = vmatpush1.bf16.msra.mxu0 %v1345
    %1959 = vmatprep.subr.bf16.mxu0 %v1350
    %1960 = vmatpush1.bf16.msra.mxu0 %v1349
    %1961 = vmatprep.subr.bf16.mxu0 %v1354
    %1962 = vmatpush1.bf16.msra.mxu0 %v1353
    %1963 = vmatprep.subr.bf16.mxu0 %v1358
    %1964 = vmatpush1.bf16.msra.mxu0 %v1357
    %1965 = vmatprep.subr.bf16.mxu0 %v1362
    %1966 = vmatpush1.bf16.msra.mxu0 %v1361
    %1967 = vmatprep.subr.bf16.mxu0 %v1366
    %1968 = vmatpush1.bf16.msra.mxu0 %v1365
    %1969 = vmatprep.subr.bf16.mxu0 %v1370
    %1970 = vmatpush1.bf16.msra.mxu0 %v1369
    %1971 = vmatprep.subr.bf16.mxu0 %v1374
    %1972 = vmatpush1.bf16.msra.mxu0 %v1373
    %1973 = vmatprep.mubr.bf16.mxu0 %v134
    %1974 = vmatmul.mubr.bf16.gmra.mrb[0].mxu0 %v133
    %v1975 = vpop.f32.mrb[0].mxu0
    %v1976 = vadd.f32 %v1935, %v1975
    %v1977 = vpop.f32.mrb[0].mxu0
    %v1978 = vadd.f32 %v1937, %v1977
    %v1979 = vpop.f32.mrb[0].mxu0
    %v1980 = vpop.f32.mrb[0].mxu0
    %1981 = vdwg.mxu0
    %1982 = vmatprep.subr.bf16.mxu0 %v1378
    %1983 = vmatpush1.bf16.msra.mxu0 %v1377
    %1984 = vmatprep.subr.bf16.mxu0 %v1382
    %1985 = vmatpush1.bf16.msra.mxu0 %v1381
    %1986 = vmatprep.subr.bf16.mxu0 %v1386
    %1987 = vmatpush1.bf16.msra.mxu0 %v1385
    %1988 = vmatprep.subr.bf16.mxu0 %v1390
    %1989 = vmatpush1.bf16.msra.mxu0 %v1389
    %1990 = vmatprep.subr.bf16.mxu0 %v1394
    %1991 = vmatpush1.bf16.msra.mxu0 %v1393
    %1992 = vmatprep.subr.bf16.mxu0 %v1398
    %1993 = vmatpush1.bf16.msra.mxu0 %v1397
    %1994 = vmatprep.subr.bf16.mxu0 %v1402
    %1995 = vmatpush1.bf16.msra.mxu0 %v1401
    %1996 = vmatprep.subr.bf16.mxu0 %v1406
    %1997 = vmatpush1.bf16.msra.mxu0 %v1405
    %1998 = vmatprep.subr.bf16.mxu0 %v1410
    %1999 = vmatpush1.bf16.msra.mxu0 %v1409
    %2000 = vmatprep.subr.bf16.mxu0 %v1414
    %2001 = vmatpush1.bf16.msra.mxu0 %v1413
    %2002 = vmatprep.subr.bf16.mxu0 %v1418
    %2003 = vmatpush1.bf16.msra.mxu0 %v1417
    %2004 = vmatprep.subr.bf16.mxu0 %v1422
    %2005 = vmatpush1.bf16.msra.mxu0 %v1421
    %2006 = vmatprep.subr.bf16.mxu0 %v1426
    %2007 = vmatpush1.bf16.msra.mxu0 %v1425
    %2008 = vmatprep.subr.bf16.mxu0 %v1430
    %2009 = vmatpush1.bf16.msra.mxu0 %v1429
    %2010 = vmatprep.subr.bf16.mxu0 %v1434
    %2011 = vmatpush1.bf16.msra.mxu0 %v1433
    %2012 = vmatprep.subr.bf16.mxu0 %v1438
    %2013 = vmatpush1.bf16.msra.mxu0 %v1437
    %2014 = vmatprep.mubr.bf16.mxu0 %v136
    %2015 = vmatmul.mubr.bf16.gmra.mrb[0].mxu0 %v135
    %v2016 = vpop.f32.mrb[0].mxu0
    %v2017 = vadd.f32 %v1976, %v2016
    %v2018 = vpop.f32.mrb[0].mxu0
    %v2019 = vadd.f32 %v1978, %v2018
    %v2020 = vpop.f32.mrb[0].mxu0
    %v2021 = vpop.f32.mrb[0].mxu0
    %2022 = vdwg.mxu0
    %v2023 = vmax.f32 %v1853, 0.0
    %v2024 = vmax.f32 %v1855, 0.0
    %v2025 = vmax.f32 %v2017, 0.0
    %v2026 = vmax.f32 %v2019, 0.0
    %v2027 = vpack.c.bf16 %v2023, %v2023
    %v2028 = vpack.c.bf16 %v2024, %v2024
    %v2029 = vpack.c.bf16 %v2025, %v2025
    %v2030 = vpack.c.bf16 %v2026, %v2026
    %v2031 = vld [vmem:[#allocation7] sm:$0xff]
    %v2032 = vld [vmem:[#allocation7 + $0x8] sm:$0xff]
    %v2033 = vld [vmem:[#allocation7 + $0x10] sm:$0xff]
    %v2034 = vld [vmem:[#allocation7 + $0x18] sm:$0xff]
    %v2035 = vld [vmem:[#allocation7 + $0x20] sm:$0xff]
    %v2036 = vld [vmem:[#allocation7 + $0x28] sm:$0xff]
    %v2037 = vld [vmem:[#allocation7 + $0x30] sm:$0xff]
    %v2038 = vld [vmem:[#allocation7 + $0x38] sm:$0xff]
    %v2039 = vld [vmem:[#allocation7 + $0x40] sm:$0xff]
    %v2040 = vld [vmem:[#allocation7 + $0x48] sm:$0xff]
    %v2041 = vld [vmem:[#allocation7 + $0x50] sm:$0xff]
    %v2042 = vld [vmem:[#allocation7 + $0x58] sm:$0xff]
    %v2043 = vld [vmem:[#allocation7 + $0x60] sm:$0xff]
    %v2044 = vld [vmem:[#allocation7 + $0x68] sm:$0xff]
    %v2045 = vld [vmem:[#allocation7 + $0x70] sm:$0xff]
    %v2046 = vld [vmem:[#allocation7 + $0x78] sm:$0xff]
    %v2047 = vld [vmem:[#allocation7 + $0x80] sm:$0xff]
    %v2048 = vld [vmem:[#allocation7 + $0x88] sm:$0xff]
    %v2049 = vld [vmem:[#allocation7 + $0x90] sm:$0xff]
    %v2050 = vld [vmem:[#allocation7 + $0x98] sm:$0xff]
    %v2051 = vld [vmem:[#allocation7 + $0xa0] sm:$0xff]
    %v2052 = vld [vmem:[#allocation7 + $0xa8] sm:$0xff]
    %v2053 = vld [vmem:[#allocation7 + $0xb0] sm:$0xff]
    %v2054 = vld [vmem:[#allocation7 + $0xb8] sm:$0xff]
    %v2055 = vld [vmem:[#allocation7 + $0xc0] sm:$0xff]
    %v2056 = vld [vmem:[#allocation7 + $0xc8] sm:$0xff]
    %v2057 = vld [vmem:[#allocation7 + $0xd0] sm:$0xff]
    %v2058 = vld [vmem:[#allocation7 + $0xd8] sm:$0xff]
    %v2059 = vld [vmem:[#allocation7 + $0xe0] sm:$0xff]
    %v2060 = vld [vmem:[#allocation7 + $0xe8] sm:$0xff]
    %v2061 = vld [vmem:[#allocation7 + $0xf0] sm:$0xff]
    %v2062 = vld [vmem:[#allocation7 + $0xf8] sm:$0xff]
    %v2063 = vld [vmem:[#allocation7 + $0x100] sm:$0xff]
    %v2064 = vld [vmem:[#allocation7 + $0x108] sm:$0xff]
    %v2065 = vld [vmem:[#allocation7 + $0x110] sm:$0xff]
    %v2066 = vld [vmem:[#allocation7 + $0x118] sm:$0xff]
    %v2067 = vld [vmem:[#allocation7 + $0x120] sm:$0xff]
    %v2068 = vld [vmem:[#allocation7 + $0x128] sm:$0xff]
    %v2069 = vld [vmem:[#allocation7 + $0x130] sm:$0xff]
    %v2070 = vld [vmem:[#allocation7 + $0x138] sm:$0xff]
    %v2071 = vld [vmem:[#allocation7 + $0x140] sm:$0xff]
    %v2072 = vld [vmem:[#allocation7 + $0x148] sm:$0xff]
    %v2073 = vld [vmem:[#allocation7 + $0x150] sm:$0xff]
    %v2074 = vld [vmem:[#allocation7 + $0x158] sm:$0xff]
    %v2075 = vld [vmem:[#allocation7 + $0x160] sm:$0xff]
    %v2076 = vld [vmem:[#allocation7 + $0x168] sm:$0xff]
    %v2077 = vld [vmem:[#allocation7 + $0x170] sm:$0xff]
    %v2078 = vld [vmem:[#allocation7 + $0x178] sm:$0xff]
    %v2079 = vld [vmem:[#allocation7 + $0x180] sm:$0xff]
    %v2080 = vld [vmem:[#allocation7 + $0x188] sm:$0xff]
    %v2081 = vld [vmem:[#allocation7 + $0x190] sm:$0xff]
    %v2082 = vld [vmem:[#allocation7 + $0x198] sm:$0xff]
    %v2083 = vld [vmem:[#allocation7 + $0x1a0] sm:$0xff]
    %v2084 = vld [vmem:[#allocation7 + $0x1a8] sm:$0xff]
    %v2085 = vld [vmem:[#allocation7 + $0x1b0] sm:$0xff]
    %v2086 = vld [vmem:[#allocation7 + $0x1b8] sm:$0xff]
    %v2087 = vld [vmem:[#allocation7 + $0x1c0] sm:$0xff]
    %v2088 = vld [vmem:[#allocation7 + $0x1c8] sm:$0xff]
    %v2089 = vld [vmem:[#allocation7 + $0x1d0] sm:$0xff]
    %v2090 = vld [vmem:[#allocation7 + $0x1d8] sm:$0xff]
    %v2091 = vld [vmem:[#allocation7 + $0x1e0] sm:$0xff]
    %v2092 = vld [vmem:[#allocation7 + $0x1e8] sm:$0xff]
    %v2093 = vld [vmem:[#allocation7 + $0x1f0] sm:$0xff]
    %v2094 = vld [vmem:[#allocation7 + $0x1f8] sm:$0xff]
    %v2095 = vld [vmem:[#allocation7 + $0x200] sm:$0xff]
    %v2096 = vld [vmem:[#allocation7 + $0x208] sm:$0xff]
    %v2097 = vld [vmem:[#allocation7 + $0x210] sm:$0xff]
    %v2098 = vld [vmem:[#allocation7 + $0x218] sm:$0xff]
    %v2099 = vld [vmem:[#allocation7 + $0x220] sm:$0xff]
    %v2100 = vld [vmem:[#allocation7 + $0x228] sm:$0xff]
    %v2101 = vld [vmem:[#allocation7 + $0x230] sm:$0xff]
    %v2102 = vld [vmem:[#allocation7 + $0x238] sm:$0xff]
    %v2103 = vld [vmem:[#allocation7 + $0x240] sm:$0xff]
    %v2104 = vld [vmem:[#allocation7 + $0x248] sm:$0xff]
    %v2105 = vld [vmem:[#allocation7 + $0x250] sm:$0xff]
    %v2106 = vld [vmem:[#allocation7 + $0x258] sm:$0xff]
    %v2107 = vld [vmem:[#allocation7 + $0x260] sm:$0xff]
    %v2108 = vld [vmem:[#allocation7 + $0x268] sm:$0xff]
    %v2109 = vld [vmem:[#allocation7 + $0x270] sm:$0xff]
    %v2110 = vld [vmem:[#allocation7 + $0x278] sm:$0xff]
    %v2111 = vld [vmem:[#allocation7 + $0x280] sm:$0xff]
    %v2112 = vld [vmem:[#allocation7 + $0x288] sm:$0xff]
    %v2113 = vld [vmem:[#allocation7 + $0x290] sm:$0xff]
    %v2114 = vld [vmem:[#allocation7 + $0x298] sm:$0xff]
    %v2115 = vld [vmem:[#allocation7 + $0x2a0] sm:$0xff]
    %v2116 = vld [vmem:[#allocation7 + $0x2a8] sm:$0xff]
    %v2117 = vld [vmem:[#allocation7 + $0x2b0] sm:$0xff]
    %v2118 = vld [vmem:[#allocation7 + $0x2b8] sm:$0xff]
    %v2119 = vld [vmem:[#allocation7 + $0x2c0] sm:$0xff]
    %v2120 = vld [vmem:[#allocation7 + $0x2c8] sm:$0xff]
    %v2121 = vld [vmem:[#allocation7 + $0x2d0] sm:$0xff]
    %v2122 = vld [vmem:[#allocation7 + $0x2d8] sm:$0xff]
    %v2123 = vld [vmem:[#allocation7 + $0x2e0] sm:$0xff]
    %v2124 = vld [vmem:[#allocation7 + $0x2e8] sm:$0xff]
    %v2125 = vld [vmem:[#allocation7 + $0x2f0] sm:$0xff]
    %v2126 = vld [vmem:[#allocation7 + $0x2f8] sm:$0xff]
    %v2127 = vld [vmem:[#allocation7 + $0x300] sm:$0xff]
    %v2128 = vld [vmem:[#allocation7 + $0x308] sm:$0xff]
    %v2129 = vld [vmem:[#allocation7 + $0x310] sm:$0xff]
    %v2130 = vld [vmem:[#allocation7 + $0x318] sm:$0xff]
    %v2131 = vld [vmem:[#allocation7 + $0x320] sm:$0xff]
    %v2132 = vld [vmem:[#allocation7 + $0x328] sm:$0xff]
    %v2133 = vld [vmem:[#allocation7 + $0x330] sm:$0xff]
    %v2134 = vld [vmem:[#allocation7 + $0x338] sm:$0xff]
    %v2135 = vld [vmem:[#allocation7 + $0x340] sm:$0xff]
    %v2136 = vld [vmem:[#allocation7 + $0x348] sm:$0xff]
    %v2137 = vld [vmem:[#allocation7 + $0x350] sm:$0xff]
    %v2138 = vld [vmem:[#allocation7 + $0x358] sm:$0xff]
    %v2139 = vld [vmem:[#allocation7 + $0x360] sm:$0xff]
    %v2140 = vld [vmem:[#allocation7 + $0x368] sm:$0xff]
    %v2141 = vld [vmem:[#allocation7 + $0x370] sm:$0xff]
    %v2142 = vld [vmem:[#allocation7 + $0x378] sm:$0xff]
    %v2143 = vld [vmem:[#allocation7 + $0x380] sm:$0xff]
    %v2144 = vld [vmem:[#allocation7 + $0x388] sm:$0xff]
    %v2145 = vld [vmem:[#allocation7 + $0x390] sm:$0xff]
    %v2146 = vld [vmem:[#allocation7 + $0x398] sm:$0xff]
    %v2147 = vld [vmem:[#allocation7 + $0x3a0] sm:$0xff]
    %v2148 = vld [vmem:[#allocation7 + $0x3a8] sm:$0xff]
    %v2149 = vld [vmem:[#allocation7 + $0x3b0] sm:$0xff]
    %v2150 = vld [vmem:[#allocation7 + $0x3b8] sm:$0xff]
    %v2151 = vld [vmem:[#allocation7 + $0x3c0] sm:$0xff]
    %v2152 = vld [vmem:[#allocation7 + $0x3c8] sm:$0xff]
    %v2153 = vld [vmem:[#allocation7 + $0x3d0] sm:$0xff]
    %v2154 = vld [vmem:[#allocation7 + $0x3d8] sm:$0xff]
    %v2155 = vld [vmem:[#allocation7 + $0x3e0] sm:$0xff]
    %v2156 = vld [vmem:[#allocation7 + $0x3e8] sm:$0xff]
    %v2157 = vld [vmem:[#allocation7 + $0x3f0] sm:$0xff]
    %v2158 = vld [vmem:[#allocation7 + $0x3f8] sm:$0xff]
    %v2159 = vld [vmem:[#allocation7 + $0x400] sm:$0xff]
    %v2160 = vld [vmem:[#allocation7 + $0x408] sm:$0xff]
    %v2161 = vld [vmem:[#allocation7 + $0x410] sm:$0xff]
    %v2162 = vld [vmem:[#allocation7 + $0x418] sm:$0xff]
    %v2163 = vld [vmem:[#allocation7 + $0x420] sm:$0xff]
    %v2164 = vld [vmem:[#allocation7 + $0x428] sm:$0xff]
    %v2165 = vld [vmem:[#allocation7 + $0x430] sm:$0xff]
    %v2166 = vld [vmem:[#allocation7 + $0x438] sm:$0xff]
    %v2167 = vld [vmem:[#allocation7 + $0x440] sm:$0xff]
    %v2168 = vld [vmem:[#allocation7 + $0x448] sm:$0xff]
    %v2169 = vld [vmem:[#allocation7 + $0x450] sm:$0xff]
    %v2170 = vld [vmem:[#allocation7 + $0x458] sm:$0xff]
    %v2171 = vld [vmem:[#allocation7 + $0x460] sm:$0xff]
    %v2172 = vld [vmem:[#allocation7 + $0x468] sm:$0xff]
    %v2173 = vld [vmem:[#allocation7 + $0x470] sm:$0xff]
    %v2174 = vld [vmem:[#allocation7 + $0x478] sm:$0xff]
    %v2175 = vld [vmem:[#allocation7 + $0x480] sm:$0xff]
    %v2176 = vld [vmem:[#allocation7 + $0x488] sm:$0xff]
    %v2177 = vld [vmem:[#allocation7 + $0x490] sm:$0xff]
    %v2178 = vld [vmem:[#allocation7 + $0x498] sm:$0xff]
    %v2179 = vld [vmem:[#allocation7 + $0x4a0] sm:$0xff]
    %v2180 = vld [vmem:[#allocation7 + $0x4a8] sm:$0xff]
    %v2181 = vld [vmem:[#allocation7 + $0x4b0] sm:$0xff]
    %v2182 = vld [vmem:[#allocation7 + $0x4b8] sm:$0xff]
    %v2183 = vld [vmem:[#allocation7 + $0x4c0] sm:$0xff]
    %v2184 = vld [vmem:[#allocation7 + $0x4c8] sm:$0xff]
    %v2185 = vld [vmem:[#allocation7 + $0x4d0] sm:$0xff]
    %v2186 = vld [vmem:[#allocation7 + $0x4d8] sm:$0xff]
    %v2187 = vld [vmem:[#allocation7 + $0x4e0] sm:$0xff]
    %v2188 = vld [vmem:[#allocation7 + $0x4e8] sm:$0xff]
    %v2189 = vld [vmem:[#allocation7 + $0x4f0] sm:$0xff]
    %v2190 = vld [vmem:[#allocation7 + $0x4f8] sm:$0xff]
    %v2191 = vld [vmem:[#allocation7 + $0x500] sm:$0xff]
    %v2192 = vld [vmem:[#allocation7 + $0x508] sm:$0xff]
    %v2193 = vld [vmem:[#allocation7 + $0x510] sm:$0xff]
    %v2194 = vld [vmem:[#allocation7 + $0x518] sm:$0xff]
    %v2195 = vld [vmem:[#allocation7 + $0x520] sm:$0xff]
    %v2196 = vld [vmem:[#allocation7 + $0x528] sm:$0xff]
    %v2197 = vld [vmem:[#allocation7 + $0x530] sm:$0xff]
    %v2198 = vld [vmem:[#allocation7 + $0x538] sm:$0xff]
    %v2199 = vld [vmem:[#allocation7 + $0x540] sm:$0xff]
    %v2200 = vld [vmem:[#allocation7 + $0x548] sm:$0xff]
    %v2201 = vld [vmem:[#allocation7 + $0x550] sm:$0xff]
    %v2202 = vld [vmem:[#allocation7 + $0x558] sm:$0xff]
    %v2203 = vld [vmem:[#allocation7 + $0x560] sm:$0xff]
    %v2204 = vld [vmem:[#allocation7 + $0x568] sm:$0xff]
    %v2205 = vld [vmem:[#allocation7 + $0x570] sm:$0xff]
    %v2206 = vld [vmem:[#allocation7 + $0x578] sm:$0xff]
    %v2207 = vld [vmem:[#allocation7 + $0x580] sm:$0xff]
    %v2208 = vld [vmem:[#allocation7 + $0x588] sm:$0xff]
    %v2209 = vld [vmem:[#allocation7 + $0x590] sm:$0xff]
    %v2210 = vld [vmem:[#allocation7 + $0x598] sm:$0xff]
    %v2211 = vld [vmem:[#allocation7 + $0x5a0] sm:$0xff]
    %v2212 = vld [vmem:[#allocation7 + $0x5a8] sm:$0xff]
    %v2213 = vld [vmem:[#allocation7 + $0x5b0] sm:$0xff]
    %v2214 = vld [vmem:[#allocation7 + $0x5b8] sm:$0xff]
    %v2215 = vld [vmem:[#allocation7 + $0x5c0] sm:$0xff]
    %v2216 = vld [vmem:[#allocation7 + $0x5c8] sm:$0xff]
    %v2217 = vld [vmem:[#allocation7 + $0x5d0] sm:$0xff]
    %v2218 = vld [vmem:[#allocation7 + $0x5d8] sm:$0xff]
    %v2219 = vld [vmem:[#allocation7 + $0x5e0] sm:$0xff]
    %v2220 = vld [vmem:[#allocation7 + $0x5e8] sm:$0xff]
    %v2221 = vld [vmem:[#allocation7 + $0x5f0] sm:$0xff]
    %v2222 = vld [vmem:[#allocation7 + $0x5f8] sm:$0xff]
    %v2223 = vld [vmem:[%s4] sm:$0x3f]
    %v2225 = vlaneseq
    %v2226 = vshrl.u32 %v2225, 7
    %v2227 = vsub.s32 0, %v2226
    %v2228 = vrot.slane %v2223, %v2227
    %v2229 = vlaneseq
    %v2230 = vshrl.u32 %v2229, 7
    %v2231 = vsub.s32 1, %v2230
    %v2232 = vrot.slane %v2223, %v2231
    %v2233 = vlaneseq
    %v2234 = vshrl.u32 %v2233, 7
    %v2235 = vsub.s32 2, %v2234
    %v2236 = vrot.slane %v2223, %v2235
    %v2237 = vlaneseq
    %v2238 = vshrl.u32 %v2237, 7
    %v2239 = vsub.s32 3, %v2238
    %v2240 = vrot.slane %v2223, %v2239
    %v2241 = vlaneseq
    %v2242 = vshrl.u32 %v2241, 7
    %v2243 = vsub.s32 4, %v2242
    %v2244 = vrot.slane %v2223, %v2243
    %v2245 = vlaneseq
    %v2246 = vshrl.u32 %v2245, 7
    %v2247 = vsub.s32 5, %v2246
    %v2248 = vrot.slane %v2223, %v2247
    %v2447 = vunpack.c.l.b16 %v2031
    %v2448 = vunpack.c.h.b16 %v2031
    %v2449 = vunpack.c.l.b16 %v2032
    %v2450 = vunpack.c.h.b16 %v2032
    %v2451 = vunpack.c.l.b16 %v2033
    %v2452 = vunpack.c.h.b16 %v2033
    %v2453 = vunpack.c.l.b16 %v2034
    %v2454 = vunpack.c.h.b16 %v2034
    %v2455 = vunpack.c.l.b16 %v2035
    %v2456 = vunpack.c.h.b16 %v2035
    %v2457 = vunpack.c.l.b16 %v2036
    %v2458 = vunpack.c.h.b16 %v2036
    %v2459 = vunpack.c.l.b16 %v2037
    %v2460 = vunpack.c.h.b16 %v2037
    %v2461 = vunpack.c.l.b16 %v2038
    %v2462 = vunpack.c.h.b16 %v2038
    %v2463 = vunpack.c.l.b16 %v2039
    %v2464 = vunpack.c.h.b16 %v2039
    %v2465 = vunpack.c.l.b16 %v2040
    %v2466 = vunpack.c.h.b16 %v2040
    %v2467 = vunpack.c.l.b16 %v2041
    %v2468 = vunpack.c.h.b16 %v2041
    %v2469 = vunpack.c.l.b16 %v2042
    %v2470 = vunpack.c.h.b16 %v2042
    %v2471 = vunpack.c.l.b16 %v2043
    %v2472 = vunpack.c.h.b16 %v2043
    %v2473 = vunpack.c.l.b16 %v2044
    %v2474 = vunpack.c.h.b16 %v2044
    %v2475 = vunpack.c.l.b16 %v2045
    %v2476 = vunpack.c.h.b16 %v2045
    %v2477 = vunpack.c.l.b16 %v2046
    %v2478 = vunpack.c.h.b16 %v2046
    %v2479 = vunpack.c.l.b16 %v2047
    %v2480 = vunpack.c.h.b16 %v2047
    %v2481 = vunpack.c.l.b16 %v2048
    %v2482 = vunpack.c.h.b16 %v2048
    %v2483 = vunpack.c.l.b16 %v2049
    %v2484 = vunpack.c.h.b16 %v2049
    %v2485 = vunpack.c.l.b16 %v2050
    %v2486 = vunpack.c.h.b16 %v2050
    %v2487 = vunpack.c.l.b16 %v2051
    %v2488 = vunpack.c.h.b16 %v2051
    %v2489 = vunpack.c.l.b16 %v2052
    %v2490 = vunpack.c.h.b16 %v2052
    %v2491 = vunpack.c.l.b16 %v2053
    %v2492 = vunpack.c.h.b16 %v2053
    %v2493 = vunpack.c.l.b16 %v2054
    %v2494 = vunpack.c.h.b16 %v2054
    %v2495 = vunpack.c.l.b16 %v2055
    %v2496 = vunpack.c.h.b16 %v2055
    %v2497 = vunpack.c.l.b16 %v2056
    %v2498 = vunpack.c.h.b16 %v2056
    %v2499 = vunpack.c.l.b16 %v2057
    %v2500 = vunpack.c.h.b16 %v2057
    %v2501 = vunpack.c.l.b16 %v2058
    %v2502 = vunpack.c.h.b16 %v2058
    %v2503 = vunpack.c.l.b16 %v2059
    %v2504 = vunpack.c.h.b16 %v2059
    %v2505 = vunpack.c.l.b16 %v2060
    %v2506 = vunpack.c.h.b16 %v2060
    %v2507 = vunpack.c.l.b16 %v2061
    %v2508 = vunpack.c.h.b16 %v2061
    %v2509 = vunpack.c.l.b16 %v2062
    %v2510 = vunpack.c.h.b16 %v2062
    %v2511 = vunpack.c.l.b16 %v2063
    %v2512 = vunpack.c.h.b16 %v2063
    %v2513 = vunpack.c.l.b16 %v2064
    %v2514 = vunpack.c.h.b16 %v2064
    %v2515 = vunpack.c.l.b16 %v2065
    %v2516 = vunpack.c.h.b16 %v2065
    %v2517 = vunpack.c.l.b16 %v2066
    %v2518 = vunpack.c.h.b16 %v2066
    %v2519 = vunpack.c.l.b16 %v2067
    %v2520 = vunpack.c.h.b16 %v2067
    %v2521 = vunpack.c.l.b16 %v2068
    %v2522 = vunpack.c.h.b16 %v2068
    %v2523 = vunpack.c.l.b16 %v2069
    %v2524 = vunpack.c.h.b16 %v2069
    %v2525 = vunpack.c.l.b16 %v2070
    %v2526 = vunpack.c.h.b16 %v2070
    %v2527 = vunpack.c.l.b16 %v2071
    %v2528 = vunpack.c.h.b16 %v2071
    %v2529 = vunpack.c.l.b16 %v2072
    %v2530 = vunpack.c.h.b16 %v2072
    %v2531 = vunpack.c.l.b16 %v2073
    %v2532 = vunpack.c.h.b16 %v2073
    %v2533 = vunpack.c.l.b16 %v2074
    %v2534 = vunpack.c.h.b16 %v2074
    %v2535 = vunpack.c.l.b16 %v2075
    %v2536 = vunpack.c.h.b16 %v2075
    %v2537 = vunpack.c.l.b16 %v2076
    %v2538 = vunpack.c.h.b16 %v2076
    %v2539 = vunpack.c.l.b16 %v2077
    %v2540 = vunpack.c.h.b16 %v2077
    %v2541 = vunpack.c.l.b16 %v2078
    %v2542 = vunpack.c.h.b16 %v2078
    %v2543 = vunpack.c.l.b16 %v2079
    %v2544 = vunpack.c.h.b16 %v2079
    %v2545 = vunpack.c.l.b16 %v2080
    %v2546 = vunpack.c.h.b16 %v2080
    %v2547 = vunpack.c.l.b16 %v2081
    %v2548 = vunpack.c.h.b16 %v2081
    %v2549 = vunpack.c.l.b16 %v2082
    %v2550 = vunpack.c.h.b16 %v2082
    %v2551 = vunpack.c.l.b16 %v2083
    %v2552 = vunpack.c.h.b16 %v2083
    %v2553 = vunpack.c.l.b16 %v2084
    %v2554 = vunpack.c.h.b16 %v2084
    %v2555 = vunpack.c.l.b16 %v2085
    %v2556 = vunpack.c.h.b16 %v2085
    %v2557 = vunpack.c.l.b16 %v2086
    %v2558 = vunpack.c.h.b16 %v2086
    %v2559 = vunpack.c.l.b16 %v2087
    %v2560 = vunpack.c.h.b16 %v2087
    %v2561 = vunpack.c.l.b16 %v2088
    %v2562 = vunpack.c.h.b16 %v2088
    %v2563 = vunpack.c.l.b16 %v2089
    %v2564 = vunpack.c.h.b16 %v2089
    %v2565 = vunpack.c.l.b16 %v2090
    %v2566 = vunpack.c.h.b16 %v2090
    %v2567 = vunpack.c.l.b16 %v2091
    %v2568 = vunpack.c.h.b16 %v2091
    %v2569 = vunpack.c.l.b16 %v2092
    %v2570 = vunpack.c.h.b16 %v2092
    %v2571 = vunpack.c.l.b16 %v2093
    %v2572 = vunpack.c.h.b16 %v2093
    %v2573 = vunpack.c.l.b16 %v2094
    %v2574 = vunpack.c.h.b16 %v2094
    %v2575 = vunpack.c.l.b16 %v2095
    %v2576 = vunpack.c.h.b16 %v2095
    %v2577 = vunpack.c.l.b16 %v2096
    %v2578 = vunpack.c.h.b16 %v2096
    %v2579 = vunpack.c.l.b16 %v2097
    %v2580 = vunpack.c.h.b16 %v2097
    %v2581 = vunpack.c.l.b16 %v2098
    %v2582 = vunpack.c.h.b16 %v2098
    %v2583 = vunpack.c.l.b16 %v2099
    %v2584 = vunpack.c.h.b16 %v2099
    %v2585 = vunpack.c.l.b16 %v2100
    %v2586 = vunpack.c.h.b16 %v2100
    %v2587 = vunpack.c.l.b16 %v2101
    %v2588 = vunpack.c.h.b16 %v2101
    %v2589 = vunpack.c.l.b16 %v2102
    %v2590 = vunpack.c.h.b16 %v2102
    %v2591 = vunpack.c.l.b16 %v2103
    %v2592 = vunpack.c.h.b16 %v2103
    %v2593 = vunpack.c.l.b16 %v2104
    %v2594 = vunpack.c.h.b16 %v2104
    %v2595 = vunpack.c.l.b16 %v2105
    %v2596 = vunpack.c.h.b16 %v2105
    %v2597 = vunpack.c.l.b16 %v2106
    %v2598 = vunpack.c.h.b16 %v2106
    %v2599 = vunpack.c.l.b16 %v2107
    %v2600 = vunpack.c.h.b16 %v2107
    %v2601 = vunpack.c.l.b16 %v2108
    %v2602 = vunpack.c.h.b16 %v2108
    %v2603 = vunpack.c.l.b16 %v2109
    %v2604 = vunpack.c.h.b16 %v2109
    %v2605 = vunpack.c.l.b16 %v2110
    %v2606 = vunpack.c.h.b16 %v2110
    %v2607 = vunpack.c.l.b16 %v2111
    %v2608 = vunpack.c.h.b16 %v2111
    %v2609 = vunpack.c.l.b16 %v2112
    %v2610 = vunpack.c.h.b16 %v2112
    %v2611 = vunpack.c.l.b16 %v2113
    %v2612 = vunpack.c.h.b16 %v2113
    %v2613 = vunpack.c.l.b16 %v2114
    %v2614 = vunpack.c.h.b16 %v2114
    %v2615 = vunpack.c.l.b16 %v2115
    %v2616 = vunpack.c.h.b16 %v2115
    %v2617 = vunpack.c.l.b16 %v2116
    %v2618 = vunpack.c.h.b16 %v2116
    %v2619 = vunpack.c.l.b16 %v2117
    %v2620 = vunpack.c.h.b16 %v2117
    %v2621 = vunpack.c.l.b16 %v2118
    %v2622 = vunpack.c.h.b16 %v2118
    %v2623 = vunpack.c.l.b16 %v2119
    %v2624 = vunpack.c.h.b16 %v2119
    %v2625 = vunpack.c.l.b16 %v2120
    %v2626 = vunpack.c.h.b16 %v2120
    %v2627 = vunpack.c.l.b16 %v2121
    %v2628 = vunpack.c.h.b16 %v2121
    %v2629 = vunpack.c.l.b16 %v2122
    %v2630 = vunpack.c.h.b16 %v2122
    %v2631 = vunpack.c.l.b16 %v2123
    %v2632 = vunpack.c.h.b16 %v2123
    %v2633 = vunpack.c.l.b16 %v2124
    %v2634 = vunpack.c.h.b16 %v2124
    %v2635 = vunpack.c.l.b16 %v2125
    %v2636 = vunpack.c.h.b16 %v2125
    %v2637 = vunpack.c.l.b16 %v2126
    %v2638 = vunpack.c.h.b16 %v2126
    %v2639 = vunpack.c.l.b16 %v2127
    %v2640 = vunpack.c.h.b16 %v2127
    %v2641 = vunpack.c.l.b16 %v2128
    %v2642 = vunpack.c.h.b16 %v2128
    %v2643 = vunpack.c.l.b16 %v2129
    %v2644 = vunpack.c.h.b16 %v2129
    %v2645 = vunpack.c.l.b16 %v2130
    %v2646 = vunpack.c.h.b16 %v2130
    %v2647 = vunpack.c.l.b16 %v2131
    %v2648 = vunpack.c.h.b16 %v2131
    %v2649 = vunpack.c.l.b16 %v2132
    %v2650 = vunpack.c.h.b16 %v2132
    %v2651 = vunpack.c.l.b16 %v2133
    %v2652 = vunpack.c.h.b16 %v2133
    %v2653 = vunpack.c.l.b16 %v2134
    %v2654 = vunpack.c.h.b16 %v2134
    %v2655 = vunpack.c.l.b16 %v2135
    %v2656 = vunpack.c.h.b16 %v2135
    %v2657 = vunpack.c.l.b16 %v2136
    %v2658 = vunpack.c.h.b16 %v2136
    %v2659 = vunpack.c.l.b16 %v2137
    %v2660 = vunpack.c.h.b16 %v2137
    %v2661 = vunpack.c.l.b16 %v2138
    %v2662 = vunpack.c.h.b16 %v2138
    %v2663 = vunpack.c.l.b16 %v2139
    %v2664 = vunpack.c.h.b16 %v2139
    %v2665 = vunpack.c.l.b16 %v2140
    %v2666 = vunpack.c.h.b16 %v2140
    %v2667 = vunpack.c.l.b16 %v2141
    %v2668 = vunpack.c.h.b16 %v2141
    %v2669 = vunpack.c.l.b16 %v2142
    %v2670 = vunpack.c.h.b16 %v2142
    %v2671 = vunpack.c.l.b16 %v2143
    %v2672 = vunpack.c.h.b16 %v2143
    %v2673 = vunpack.c.l.b16 %v2144
    %v2674 = vunpack.c.h.b16 %v2144
    %v2675 = vunpack.c.l.b16 %v2145
    %v2676 = vunpack.c.h.b16 %v2145
    %v2677 = vunpack.c.l.b16 %v2146
    %v2678 = vunpack.c.h.b16 %v2146
    %v2679 = vunpack.c.l.b16 %v2147
    %v2680 = vunpack.c.h.b16 %v2147
    %v2681 = vunpack.c.l.b16 %v2148
    %v2682 = vunpack.c.h.b16 %v2148
    %v2683 = vunpack.c.l.b16 %v2149
    %v2684 = vunpack.c.h.b16 %v2149
    %v2685 = vunpack.c.l.b16 %v2150
    %v2686 = vunpack.c.h.b16 %v2150
    %v2687 = vunpack.c.l.b16 %v2151
    %v2688 = vunpack.c.h.b16 %v2151
    %v2689 = vunpack.c.l.b16 %v2152
    %v2690 = vunpack.c.h.b16 %v2152
    %v2691 = vunpack.c.l.b16 %v2153
    %v2692 = vunpack.c.h.b16 %v2153
    %v2693 = vunpack.c.l.b16 %v2154
    %v2694 = vunpack.c.h.b16 %v2154
    %v2695 = vunpack.c.l.b16 %v2155
    %v2696 = vunpack.c.h.b16 %v2155
    %v2697 = vunpack.c.l.b16 %v2156
    %v2698 = vunpack.c.h.b16 %v2156
    %v2699 = vunpack.c.l.b16 %v2157
    %v2700 = vunpack.c.h.b16 %v2157
    %v2701 = vunpack.c.l.b16 %v2158
    %v2702 = vunpack.c.h.b16 %v2158
    %v2703 = vunpack.c.l.b16 %v2159
    %v2704 = vunpack.c.h.b16 %v2159
    %v2705 = vunpack.c.l.b16 %v2160
    %v2706 = vunpack.c.h.b16 %v2160
    %v2707 = vunpack.c.l.b16 %v2161
    %v2708 = vunpack.c.h.b16 %v2161
    %v2709 = vunpack.c.l.b16 %v2162
    %v2710 = vunpack.c.h.b16 %v2162
    %v2711 = vunpack.c.l.b16 %v2163
    %v2712 = vunpack.c.h.b16 %v2163
    %v2713 = vunpack.c.l.b16 %v2164
    %v2714 = vunpack.c.h.b16 %v2164
    %v2715 = vunpack.c.l.b16 %v2165
    %v2716 = vunpack.c.h.b16 %v2165
    %v2717 = vunpack.c.l.b16 %v2166
    %v2718 = vunpack.c.h.b16 %v2166
    %v2719 = vunpack.c.l.b16 %v2167
    %v2720 = vunpack.c.h.b16 %v2167
    %v2721 = vunpack.c.l.b16 %v2168
    %v2722 = vunpack.c.h.b16 %v2168
    %v2723 = vunpack.c.l.b16 %v2169
    %v2724 = vunpack.c.h.b16 %v2169
    %v2725 = vunpack.c.l.b16 %v2170
    %v2726 = vunpack.c.h.b16 %v2170
    %v2727 = vunpack.c.l.b16 %v2171
    %v2728 = vunpack.c.h.b16 %v2171
    %v2729 = vunpack.c.l.b16 %v2172
    %v2730 = vunpack.c.h.b16 %v2172
    %v2731 = vunpack.c.l.b16 %v2173
    %v2732 = vunpack.c.h.b16 %v2173
    %v2733 = vunpack.c.l.b16 %v2174
    %v2734 = vunpack.c.h.b16 %v2174
    %v2735 = vunpack.c.l.b16 %v2175
    %v2736 = vunpack.c.h.b16 %v2175
    %v2737 = vunpack.c.l.b16 %v2176
    %v2738 = vunpack.c.h.b16 %v2176
    %v2739 = vunpack.c.l.b16 %v2177
    %v2740 = vunpack.c.h.b16 %v2177
    %v2741 = vunpack.c.l.b16 %v2178
    %v2742 = vunpack.c.h.b16 %v2178
    %v2743 = vunpack.c.l.b16 %v2179
    %v2744 = vunpack.c.h.b16 %v2179
    %v2745 = vunpack.c.l.b16 %v2180
    %v2746 = vunpack.c.h.b16 %v2180
    %v2747 = vunpack.c.l.b16 %v2181
    %v2748 = vunpack.c.h.b16 %v2181
    %v2749 = vunpack.c.l.b16 %v2182
    %v2750 = vunpack.c.h.b16 %v2182
    %v2751 = vunpack.c.l.b16 %v2183
    %v2752 = vunpack.c.h.b16 %v2183
    %v2753 = vunpack.c.l.b16 %v2184
    %v2754 = vunpack.c.h.b16 %v2184
    %v2755 = vunpack.c.l.b16 %v2185
    %v2756 = vunpack.c.h.b16 %v2185
    %v2757 = vunpack.c.l.b16 %v2186
    %v2758 = vunpack.c.h.b16 %v2186
    %v2759 = vunpack.c.l.b16 %v2187
    %v2760 = vunpack.c.h.b16 %v2187
    %v2761 = vunpack.c.l.b16 %v2188
    %v2762 = vunpack.c.h.b16 %v2188
    %v2763 = vunpack.c.l.b16 %v2189
    %v2764 = vunpack.c.h.b16 %v2189
    %v2765 = vunpack.c.l.b16 %v2190
    %v2766 = vunpack.c.h.b16 %v2190
    %v2767 = vunpack.c.l.b16 %v2191
    %v2768 = vunpack.c.h.b16 %v2191
    %v2769 = vunpack.c.l.b16 %v2192
    %v2770 = vunpack.c.h.b16 %v2192
    %v2771 = vunpack.c.l.b16 %v2193
    %v2772 = vunpack.c.h.b16 %v2193
    %v2773 = vunpack.c.l.b16 %v2194
    %v2774 = vunpack.c.h.b16 %v2194
    %v2775 = vunpack.c.l.b16 %v2195
    %v2776 = vunpack.c.h.b16 %v2195
    %v2777 = vunpack.c.l.b16 %v2196
    %v2778 = vunpack.c.h.b16 %v2196
    %v2779 = vunpack.c.l.b16 %v2197
    %v2780 = vunpack.c.h.b16 %v2197
    %v2781 = vunpack.c.l.b16 %v2198
    %v2782 = vunpack.c.h.b16 %v2198
    %v2783 = vunpack.c.l.b16 %v2199
    %v2784 = vunpack.c.h.b16 %v2199
    %v2785 = vunpack.c.l.b16 %v2200
    %v2786 = vunpack.c.h.b16 %v2200
    %v2787 = vunpack.c.l.b16 %v2201
    %v2788 = vunpack.c.h.b16 %v2201
    %v2789 = vunpack.c.l.b16 %v2202
    %v2790 = vunpack.c.h.b16 %v2202
    %v2791 = vunpack.c.l.b16 %v2203
    %v2792 = vunpack.c.h.b16 %v2203
    %v2793 = vunpack.c.l.b16 %v2204
    %v2794 = vunpack.c.h.b16 %v2204
    %v2795 = vunpack.c.l.b16 %v2205
    %v2796 = vunpack.c.h.b16 %v2205
    %v2797 = vunpack.c.l.b16 %v2206
    %v2798 = vunpack.c.h.b16 %v2206
    %v2799 = vunpack.c.l.b16 %v2207
    %v2800 = vunpack.c.h.b16 %v2207
    %v2801 = vunpack.c.l.b16 %v2208
    %v2802 = vunpack.c.h.b16 %v2208
    %v2803 = vunpack.c.l.b16 %v2209
    %v2804 = vunpack.c.h.b16 %v2209
    %v2805 = vunpack.c.l.b16 %v2210
    %v2806 = vunpack.c.h.b16 %v2210
    %v2807 = vunpack.c.l.b16 %v2211
    %v2808 = vunpack.c.h.b16 %v2211
    %v2809 = vunpack.c.l.b16 %v2212
    %v2810 = vunpack.c.h.b16 %v2212
    %v2811 = vunpack.c.l.b16 %v2213
    %v2812 = vunpack.c.h.b16 %v2213
    %v2813 = vunpack.c.l.b16 %v2214
    %v2814 = vunpack.c.h.b16 %v2214
    %v2815 = vunpack.c.l.b16 %v2215
    %v2816 = vunpack.c.h.b16 %v2215
    %v2817 = vunpack.c.l.b16 %v2216
    %v2818 = vunpack.c.h.b16 %v2216
    %v2819 = vunpack.c.l.b16 %v2217
    %v2820 = vunpack.c.h.b16 %v2217
    %v2821 = vunpack.c.l.b16 %v2218
    %v2822 = vunpack.c.h.b16 %v2218
    %v2823 = vunpack.c.l.b16 %v2219
    %v2824 = vunpack.c.h.b16 %v2219
    %v2825 = vunpack.c.l.b16 %v2220
    %v2826 = vunpack.c.h.b16 %v2220
    %v2827 = vunpack.c.l.b16 %v2221
    %v2828 = vunpack.c.h.b16 %v2221
    %v2829 = vunpack.c.l.b16 %v2222
    %v2830 = vunpack.c.h.b16 %v2222
    %v2831 = vpack.c.b16 %v2453, %v2447
    %v2832 = vpack.c.b16 %v2454, %v2448
    %v2833 = vpack.c.b16 %v2455, %v2449
    %v2834 = vpack.c.b16 %v2456, %v2450
    %v2835 = vpack.c.b16 %v2457, %v2451
    %v2836 = vpack.c.b16 %v2458, %v2452
    %v2837 = vpack.c.b16 %v2465, %v2459
    %v2838 = vpack.c.b16 %v2466, %v2460
    %v2839 = vpack.c.b16 %v2467, %v2461
    %v2840 = vpack.c.b16 %v2468, %v2462
    %v2841 = vpack.c.b16 %v2469, %v2463
    %v2842 = vpack.c.b16 %v2470, %v2464
    %v2843 = vpack.c.b16 %v2477, %v2471
    %v2844 = vpack.c.b16 %v2478, %v2472
    %v2845 = vpack.c.b16 %v2479, %v2473
    %v2846 = vpack.c.b16 %v2480, %v2474
    %v2847 = vpack.c.b16 %v2481, %v2475
    %v2848 = vpack.c.b16 %v2482, %v2476
    %v2849 = vpack.c.b16 %v2489, %v2483
    %v2850 = vpack.c.b16 %v2490, %v2484
    %v2851 = vpack.c.b16 %v2491, %v2485
    %v2852 = vpack.c.b16 %v2492, %v2486
    %v2853 = vpack.c.b16 %v2493, %v2487
    %v2854 = vpack.c.b16 %v2494, %v2488
    %v2855 = vpack.c.b16 %v2501, %v2495
    %v2856 = vpack.c.b16 %v2502, %v2496
    %v2857 = vpack.c.b16 %v2503, %v2497
    %v2858 = vpack.c.b16 %v2504, %v2498
    %v2859 = vpack.c.b16 %v2505, %v2499
    %v2860 = vpack.c.b16 %v2506, %v2500
    %v2861 = vpack.c.b16 %v2513, %v2507
    %v2862 = vpack.c.b16 %v2514, %v2508
    %v2863 = vpack.c.b16 %v2515, %v2509
    %v2864 = vpack.c.b16 %v2516, %v2510
    %v2865 = vpack.c.b16 %v2517, %v2511
    %v2866 = vpack.c.b16 %v2518, %v2512
    %v2867 = vpack.c.b16 %v2525, %v2519
    %v2868 = vpack.c.b16 %v2526, %v2520
    %v2869 = vpack.c.b16 %v2527, %v2521
    %v2870 = vpack.c.b16 %v2528, %v2522
    %v2871 = vpack.c.b16 %v2529, %v2523
    %v2872 = vpack.c.b16 %v2530, %v2524
    %v2873 = vpack.c.b16 %v2537, %v2531
    %v2874 = vpack.c.b16 %v2538, %v2532
    %v2875 = vpack.c.b16 %v2539, %v2533
    %v2876 = vpack.c.b16 %v2540, %v2534
    %v2877 = vpack.c.b16 %v2541, %v2535
    %v2878 = vpack.c.b16 %v2542, %v2536
    %v2879 = vpack.c.b16 %v2549, %v2543
    %v2880 = vpack.c.b16 %v2550, %v2544
    %v2881 = vpack.c.b16 %v2551, %v2545
    %v2882 = vpack.c.b16 %v2552, %v2546
    %v2883 = vpack.c.b16 %v2553, %v2547
    %v2884 = vpack.c.b16 %v2554, %v2548
    %v2885 = vpack.c.b16 %v2561, %v2555
    %v2886 = vpack.c.b16 %v2562, %v2556
    %v2887 = vpack.c.b16 %v2563, %v2557
    %v2888 = vpack.c.b16 %v2564, %v2558
    %v2889 = vpack.c.b16 %v2565, %v2559
    %v2890 = vpack.c.b16 %v2566, %v2560
    %v2891 = vpack.c.b16 %v2573, %v2567
    %v2892 = vpack.c.b16 %v2574, %v2568
    %v2893 = vpack.c.b16 %v2575, %v2569
    %v2894 = vpack.c.b16 %v2576, %v2570
    %v2895 = vpack.c.b16 %v2577, %v2571
    %v2896 = vpack.c.b16 %v2578, %v2572
    %v2897 = vpack.c.b16 %v2585, %v2579
    %v2898 = vpack.c.b16 %v2586, %v2580
    %v2899 = vpack.c.b16 %v2587, %v2581
    %v2900 = vpack.c.b16 %v2588, %v2582
    %v2901 = vpack.c.b16 %v2589, %v2583
    %v2902 = vpack.c.b16 %v2590, %v2584
    %v2903 = vpack.c.b16 %v2597, %v2591
    %v2904 = vpack.c.b16 %v2598, %v2592
    %v2905 = vpack.c.b16 %v2599, %v2593
    %v2906 = vpack.c.b16 %v2600, %v2594
    %v2907 = vpack.c.b16 %v2601, %v2595
    %v2908 = vpack.c.b16 %v2602, %v2596
    %v2909 = vpack.c.b16 %v2609, %v2603
    %v2910 = vpack.c.b16 %v2610, %v2604
    %v2911 = vpack.c.b16 %v2611, %v2605
    %v2912 = vpack.c.b16 %v2612, %v2606
    %v2913 = vpack.c.b16 %v2613, %v2607
    %v2914 = vpack.c.b16 %v2614, %v2608
    %v2915 = vpack.c.b16 %v2621, %v2615
    %v2916 = vpack.c.b16 %v2622, %v2616
    %v2917 = vpack.c.b16 %v2623, %v2617
    %v2918 = vpack.c.b16 %v2624, %v2618
    %v2919 = vpack.c.b16 %v2625, %v2619
    %v2920 = vpack.c.b16 %v2626, %v2620
    %v2921 = vpack.c.b16 %v2633, %v2627
    %v2922 = vpack.c.b16 %v2634, %v2628
    %v2923 = vpack.c.b16 %v2635, %v2629
    %v2924 = vpack.c.b16 %v2636, %v2630
    %v2925 = vpack.c.b16 %v2637, %v2631
    %v2926 = vpack.c.b16 %v2638, %v2632
    %v2927 = vpack.c.b16 %v2645, %v2639
    %v2928 = vpack.c.b16 %v2646, %v2640
    %v2929 = vpack.c.b16 %v2647, %v2641
    %v2930 = vpack.c.b16 %v2648, %v2642
    %v2931 = vpack.c.b16 %v2649, %v2643
    %v2932 = vpack.c.b16 %v2650, %v2644
    %v2933 = vpack.c.b16 %v2657, %v2651
    %v2934 = vpack.c.b16 %v2658, %v2652
    %v2935 = vpack.c.b16 %v2659, %v2653
    %v2936 = vpack.c.b16 %v2660, %v2654
    %v2937 = vpack.c.b16 %v2661, %v2655
    %v2938 = vpack.c.b16 %v2662, %v2656
    %v2939 = vpack.c.b16 %v2669, %v2663
    %v2940 = vpack.c.b16 %v2670, %v2664
    %v2941 = vpack.c.b16 %v2671, %v2665
    %v2942 = vpack.c.b16 %v2672, %v2666
    %v2943 = vpack.c.b16 %v2673, %v2667
    %v2944 = vpack.c.b16 %v2674, %v2668
    %v2945 = vpack.c.b16 %v2681, %v2675
    %v2946 = vpack.c.b16 %v2682, %v2676
    %v2947 = vpack.c.b16 %v2683, %v2677
    %v2948 = vpack.c.b16 %v2684, %v2678
    %v2949 = vpack.c.b16 %v2685, %v2679
    %v2950 = vpack.c.b16 %v2686, %v2680
    %v2951 = vpack.c.b16 %v2693, %v2687
    %v2952 = vpack.c.b16 %v2694, %v2688
    %v2953 = vpack.c.b16 %v2695, %v2689
    %v2954 = vpack.c.b16 %v2696, %v2690
    %v2955 = vpack.c.b16 %v2697, %v2691
    %v2956 = vpack.c.b16 %v2698, %v2692
    %v2957 = vpack.c.b16 %v2705, %v2699
    %v2958 = vpack.c.b16 %v2706, %v2700
    %v2959 = vpack.c.b16 %v2707, %v2701
    %v2960 = vpack.c.b16 %v2708, %v2702
    %v2961 = vpack.c.b16 %v2709, %v2703
    %v2962 = vpack.c.b16 %v2710, %v2704
    %v2963 = vpack.c.b16 %v2717, %v2711
    %v2964 = vpack.c.b16 %v2718, %v2712
    %v2965 = vpack.c.b16 %v2719, %v2713
    %v2966 = vpack.c.b16 %v2720, %v2714
    %v2967 = vpack.c.b16 %v2721, %v2715
    %v2968 = vpack.c.b16 %v2722, %v2716
    %v2969 = vpack.c.b16 %v2729, %v2723
    %v2970 = vpack.c.b16 %v2730, %v2724
    %v2971 = vpack.c.b16 %v2731, %v2725
    %v2972 = vpack.c.b16 %v2732, %v2726
    %v2973 = vpack.c.b16 %v2733, %v2727
    %v2974 = vpack.c.b16 %v2734, %v2728
    %v2975 = vpack.c.b16 %v2741, %v2735
    %v2976 = vpack.c.b16 %v2742, %v2736
    %v2977 = vpack.c.b16 %v2743, %v2737
    %v2978 = vpack.c.b16 %v2744, %v2738
    %v2979 = vpack.c.b16 %v2745, %v2739
    %v2980 = vpack.c.b16 %v2746, %v2740
    %v2981 = vpack.c.b16 %v2753, %v2747
    %v2982 = vpack.c.b16 %v2754, %v2748
    %v2983 = vpack.c.b16 %v2755, %v2749
    %v2984 = vpack.c.b16 %v2756, %v2750
    %v2985 = vpack.c.b16 %v2757, %v2751
    %v2986 = vpack.c.b16 %v2758, %v2752
    %v2987 = vpack.c.b16 %v2765, %v2759
    %v2988 = vpack.c.b16 %v2766, %v2760
    %v2989 = vpack.c.b16 %v2767, %v2761
    %v2990 = vpack.c.b16 %v2768, %v2762
    %v2991 = vpack.c.b16 %v2769, %v2763
    %v2992 = vpack.c.b16 %v2770, %v2764
    %v2993 = vpack.c.b16 %v2777, %v2771
    %v2994 = vpack.c.b16 %v2778, %v2772
    %v2995 = vpack.c.b16 %v2779, %v2773
    %v2996 = vpack.c.b16 %v2780, %v2774
    %v2997 = vpack.c.b16 %v2781, %v2775
    %v2998 = vpack.c.b16 %v2782, %v2776
    %v2999 = vpack.c.b16 %v2789, %v2783
    %v3000 = vpack.c.b16 %v2790, %v2784
    %v3001 = vpack.c.b16 %v2791, %v2785
    %v3002 = vpack.c.b16 %v2792, %v2786
    %v3003 = vpack.c.b16 %v2793, %v2787
    %v3004 = vpack.c.b16 %v2794, %v2788
    %v3005 = vpack.c.b16 %v2801, %v2795
    %v3006 = vpack.c.b16 %v2802, %v2796
    %v3007 = vpack.c.b16 %v2803, %v2797
    %v3008 = vpack.c.b16 %v2804, %v2798
    %v3009 = vpack.c.b16 %v2805, %v2799
    %v3010 = vpack.c.b16 %v2806, %v2800
    %v3011 = vpack.c.b16 %v2813, %v2807
    %v3012 = vpack.c.b16 %v2814, %v2808
    %v3013 = vpack.c.b16 %v2815, %v2809
    %v3014 = vpack.c.b16 %v2816, %v2810
    %v3015 = vpack.c.b16 %v2817, %v2811
    %v3016 = vpack.c.b16 %v2818, %v2812
    %v3017 = vpack.c.b16 %v2825, %v2819
    %v3018 = vpack.c.b16 %v2826, %v2820
    %v3019 = vpack.c.b16 %v2827, %v2821
    %v3020 = vpack.c.b16 %v2828, %v2822
    %v3021 = vpack.c.b16 %v2829, %v2823
    %v3022 = vpack.c.b16 %v2830, %v2824
    %3215 = vmatprep.subr.bf16.mxu0 %v2832
    %3216 = vmatpush1.bf16.msra.mxu0 %v2831
    %3217 = vmatprep.subr.bf16.mxu0 %v2838
    %3218 = vmatpush1.bf16.msra.mxu0 %v2837
    %3219 = vmatprep.subr.bf16.mxu0 %v2844
    %3220 = vmatpush1.bf16.msra.mxu0 %v2843
    %3221 = vmatprep.subr.bf16.mxu0 %v2850
    %3222 = vmatpush1.bf16.msra.mxu0 %v2849
    %3223 = vmatprep.subr.bf16.mxu0 %v2856
    %3224 = vmatpush1.bf16.msra.mxu0 %v2855
    %3225 = vmatprep.subr.bf16.mxu0 %v2862
    %3226 = vmatpush1.bf16.msra.mxu0 %v2861
    %3227 = vmatprep.subr.bf16.mxu0 %v2868
    %3228 = vmatpush1.bf16.msra.mxu0 %v2867
    %3229 = vmatprep.subr.bf16.mxu0 %v2874
    %3230 = vmatpush1.bf16.msra.mxu0 %v2873
    %3231 = vmatprep.subr.bf16.mxu0 %v2880
    %3232 = vmatpush1.bf16.msra.mxu0 %v2879
    %3233 = vmatprep.subr.bf16.mxu0 %v2886
    %3234 = vmatpush1.bf16.msra.mxu0 %v2885
    %3235 = vmatprep.subr.bf16.mxu0 %v2892
    %3236 = vmatpush1.bf16.msra.mxu0 %v2891
    %3237 = vmatprep.subr.bf16.mxu0 %v2898
    %3238 = vmatpush1.bf16.msra.mxu0 %v2897
    %3239 = vmatprep.subr.bf16.mxu0 %v2904
    %3240 = vmatpush1.bf16.msra.mxu0 %v2903
    %3241 = vmatprep.subr.bf16.mxu0 %v2910
    %3242 = vmatpush1.bf16.msra.mxu0 %v2909
    %3243 = vmatprep.subr.bf16.mxu0 %v2916
    %3244 = vmatpush1.bf16.msra.mxu0 %v2915
    %3245 = vmatprep.subr.bf16.mxu0 %v2922
    %3246 = vmatpush1.bf16.msra.mxu0 %v2921
    %3247 = vmatprep.mubr.bf16.mxu0 %v2028
    %3248 = vmatmul.mubr.bf16.gmra.mrb[0].mxu0 %v2027
    %v3249 = vpop.f32.mrb[0].mxu0
    %v3250 = vadd.f32 %v2228, %v3249
    %v3251 = vpop.f32.mrb[0].mxu0
    %v3252 = vadd.f32 %v2232, %v3251
    %v3253 = vpop.f32.mrb[0].mxu0
    %v3254 = vpop.f32.mrb[0].mxu0
    %3255 = vdwg.mxu0
    %3256 = vmatprep.subr.bf16.mxu0 %v2928
    %3257 = vmatpush1.bf16.msra.mxu0 %v2927
    %3258 = vmatprep.subr.bf16.mxu0 %v2934
    %3259 = vmatpush1.bf16.msra.mxu0 %v2933
    %3260 = vmatprep.subr.bf16.mxu0 %v2940
    %3261 = vmatpush1.bf16.msra.mxu0 %v2939
    %3262 = vmatprep.subr.bf16.mxu0 %v2946
    %3263 = vmatpush1.bf16.msra.mxu0 %v2945
    %3264 = vmatprep.subr.bf16.mxu0 %v2952
    %3265 = vmatpush1.bf16.msra.mxu0 %v2951
    %3266 = vmatprep.subr.bf16.mxu0 %v2958
    %3267 = vmatpush1.bf16.msra.mxu0 %v2957
    %3268 = vmatprep.subr.bf16.mxu0 %v2964
    %3269 = vmatpush1.bf16.msra.mxu0 %v2963
    %3270 = vmatprep.subr.bf16.mxu0 %v2970
    %3271 = vmatpush1.bf16.msra.mxu0 %v2969
    %3272 = vmatprep.subr.bf16.mxu0 %v2976
    %3273 = vmatpush1.bf16.msra.mxu0 %v2975
    %3274 = vmatprep.subr.bf16.mxu0 %v2982
    %3275 = vmatpush1.bf16.msra.mxu0 %v2981
    %3276 = vmatprep.subr.bf16.mxu0 %v2988
    %3277 = vmatpush1.bf16.msra.mxu0 %v2987
    %3278 = vmatprep.subr.bf16.mxu0 %v2994
    %3279 = vmatpush1.bf16.msra.mxu0 %v2993
    %3280 = vmatprep.subr.bf16.mxu0 %v3000
    %3281 = vmatpush1.bf16.msra.mxu0 %v2999
    %3282 = vmatprep.subr.bf16.mxu0 %v3006
    %3283 = vmatpush1.bf16.msra.mxu0 %v3005
    %3284 = vmatprep.subr.bf16.mxu0 %v3012
    %3285 = vmatpush1.bf16.msra.mxu0 %v3011
    %3286 = vmatprep.subr.bf16.mxu0 %v3018
    %3287 = vmatpush1.bf16.msra.mxu0 %v3017
    %3288 = vmatprep.mubr.bf16.mxu0 %v2030
    %3289 = vmatmul.mubr.bf16.gmra.mrb[0].mxu0 %v2029
    %v3290 = vpop.f32.mrb[0].mxu0
    %v3291 = vadd.f32 %v3250, %v3290
    %v3292 = vpop.f32.mrb[0].mxu0
    %v3293 = vadd.f32 %v3252, %v3292
    %v3294 = vpop.f32.mrb[0].mxu0
    %v3295 = vpop.f32.mrb[0].mxu0
    %3296 = vdwg.mxu0
    %3297 = vmatprep.subr.bf16.mxu0 %v2834
    %3298 = vmatpush1.bf16.msra.mxu0 %v2833
    %3299 = vmatprep.subr.bf16.mxu0 %v2840
    %3300 = vmatpush1.bf16.msra.mxu0 %v2839
    %3301 = vmatprep.subr.bf16.mxu0 %v2846
    %3302 = vmatpush1.bf16.msra.mxu0 %v2845
    %3303 = vmatprep.subr.bf16.mxu0 %v2852
    %3304 = vmatpush1.bf16.msra.mxu0 %v2851
    %3305 = vmatprep.subr.bf16.mxu0 %v2858
    %3306 = vmatpush1.bf16.msra.mxu0 %v2857
    %3307 = vmatprep.subr.bf16.mxu0 %v2864
    %3308 = vmatpush1.bf16.msra.mxu0 %v2863
    %3309 = vmatprep.subr.bf16.mxu0 %v2870
    %3310 = vmatpush1.bf16.msra.mxu0 %v2869
    %3311 = vmatprep.subr.bf16.mxu0 %v2876
    %3312 = vmatpush1.bf16.msra.mxu0 %v2875
    %3313 = vmatprep.subr.bf16.mxu0 %v2882
    %3314 = vmatpush1.bf16.msra.mxu0 %v2881
    %3315 = vmatprep.subr.bf16.mxu0 %v2888
    %3316 = vmatpush1.bf16.msra.mxu0 %v2887
    %3317 = vmatprep.subr.bf16.mxu0 %v2894
    %3318 = vmatpush1.bf16.msra.mxu0 %v2893
    %3319 = vmatprep.subr.bf16.mxu0 %v2900
    %3320 = vmatpush1.bf16.msra.mxu0 %v2899
    %3321 = vmatprep.subr.bf16.mxu0 %v2906
    %3322 = vmatpush1.bf16.msra.mxu0 %v2905
    %3323 = vmatprep.subr.bf16.mxu0 %v2912
    %3324 = vmatpush1.bf16.msra.mxu0 %v2911
    %3325 = vmatprep.subr.bf16.mxu0 %v2918
    %3326 = vmatpush1.bf16.msra.mxu0 %v2917
    %3327 = vmatprep.subr.bf16.mxu0 %v2924
    %3328 = vmatpush1.bf16.msra.mxu0 %v2923
    %3329 = vmatprep.mubr.bf16.mxu0 %v2028
    %3330 = vmatmul.mubr.bf16.gmra.mrb[0].mxu0 %v2027
    %v3331 = vpop.f32.mrb[0].mxu0
    %v3332 = vadd.f32 %v2236, %v3331
    %v3333 = vpop.f32.mrb[0].mxu0
    %v3334 = vadd.f32 %v2240, %v3333
    %v3335 = vpop.f32.mrb[0].mxu0
    %v3336 = vpop.f32.mrb[0].mxu0
    %3337 = vdwg.mxu0
    %3338 = vmatprep.subr.bf16.mxu0 %v2930
    %3339 = vmatpush1.bf16.msra.mxu0 %v2929
    %3340 = vmatprep.subr.bf16.mxu0 %v2936
    %3341 = vmatpush1.bf16.msra.mxu0 %v2935
    %3342 = vmatprep.subr.bf16.mxu0 %v2942
    %3343 = vmatpush1.bf16.msra.mxu0 %v2941
    %3344 = vmatprep.subr.bf16.mxu0 %v2948
    %3345 = vmatpush1.bf16.msra.mxu0 %v2947
    %3346 = vmatprep.subr.bf16.mxu0 %v2954
    %3347 = vmatpush1.bf16.msra.mxu0 %v2953
    %3348 = vmatprep.subr.bf16.mxu0 %v2960
    %3349 = vmatpush1.bf16.msra.mxu0 %v2959
    %3350 = vmatprep.subr.bf16.mxu0 %v2966
    %3351 = vmatpush1.bf16.msra.mxu0 %v2965
    %3352 = vmatprep.subr.bf16.mxu0 %v2972
    %3353 = vmatpush1.bf16.msra.mxu0 %v2971
    %3354 = vmatprep.subr.bf16.mxu0 %v2978
    %3355 = vmatpush1.bf16.msra.mxu0 %v2977
    %3356 = vmatprep.subr.bf16.mxu0 %v2984
    %3357 = vmatpush1.bf16.msra.mxu0 %v2983
    %3358 = vmatprep.subr.bf16.mxu0 %v2990
    %3359 = vmatpush1.bf16.msra.mxu0 %v2989
    %3360 = vmatprep.subr.bf16.mxu0 %v2996
    %3361 = vmatpush1.bf16.msra.mxu0 %v2995
    %3362 = vmatprep.subr.bf16.mxu0 %v3002
    %3363 = vmatpush1.bf16.msra.mxu0 %v3001
    %3364 = vmatprep.subr.bf16.mxu0 %v3008
    %3365 = vmatpush1.bf16.msra.mxu0 %v3007
    %3366 = vmatprep.subr.bf16.mxu0 %v3014
    %3367 = vmatpush1.bf16.msra.mxu0 %v3013
    %3368 = vmatprep.subr.bf16.mxu0 %v3020
    %3369 = vmatpush1.bf16.msra.mxu0 %v3019
    %3370 = vmatprep.mubr.bf16.mxu0 %v2030
    %3371 = vmatmul.mubr.bf16.gmra.mrb[0].mxu0 %v2029
    %v3372 = vpop.f32.mrb[0].mxu0
    %v3373 = vadd.f32 %v3332, %v3372
    %v3374 = vpop.f32.mrb[0].mxu0
    %v3375 = vadd.f32 %v3334, %v3374
    %v3376 = vpop.f32.mrb[0].mxu0
    %v3377 = vpop.f32.mrb[0].mxu0
    %3378 = vdwg.mxu0
    %3379 = vmatprep.subr.bf16.mxu0 %v2836
    %3380 = vmatpush1.bf16.msra.mxu0 %v2835
    %3381 = vmatprep.subr.bf16.mxu0 %v2842
    %3382 = vmatpush1.bf16.msra.mxu0 %v2841
    %3383 = vmatprep.subr.bf16.mxu0 %v2848
    %3384 = vmatpush1.bf16.msra.mxu0 %v2847
    %3385 = vmatprep.subr.bf16.mxu0 %v2854
    %3386 = vmatpush1.bf16.msra.mxu0 %v2853
    %3387 = vmatprep.subr.bf16.mxu0 %v2860
    %3388 = vmatpush1.bf16.msra.mxu0 %v2859
    %3389 = vmatprep.subr.bf16.mxu0 %v2866
    %3390 = vmatpush1.bf16.msra.mxu0 %v2865
    %3391 = vmatprep.subr.bf16.mxu0 %v2872
    %3392 = vmatpush1.bf16.msra.mxu0 %v2871
    %3393 = vmatprep.subr.bf16.mxu0 %v2878
    %3394 = vmatpush1.bf16.msra.mxu0 %v2877
    %3395 = vmatprep.subr.bf16.mxu0 %v2884
    %3396 = vmatpush1.bf16.msra.mxu0 %v2883
    %3397 = vmatprep.subr.bf16.mxu0 %v2890
    %3398 = vmatpush1.bf16.msra.mxu0 %v2889
    %3399 = vmatprep.subr.bf16.mxu0 %v2896
    %3400 = vmatpush1.bf16.msra.mxu0 %v2895
    %3401 = vmatprep.subr.bf16.mxu0 %v2902
    %3402 = vmatpush1.bf16.msra.mxu0 %v2901
    %3403 = vmatprep.subr.bf16.mxu0 %v2908
    %3404 = vmatpush1.bf16.msra.mxu0 %v2907
    %3405 = vmatprep.subr.bf16.mxu0 %v2914
    %3406 = vmatpush1.bf16.msra.mxu0 %v2913
    %3407 = vmatprep.subr.bf16.mxu0 %v2920
    %3408 = vmatpush1.bf16.msra.mxu0 %v2919
    %3409 = vmatprep.subr.bf16.mxu0 %v2926
    %3410 = vmatpush1.bf16.msra.mxu0 %v2925
    %3411 = vmatprep.mubr.bf16.mxu0 %v2028
    %3412 = vmatmul.mubr.bf16.gmra.mrb[0].mxu0 %v2027
    %v3413 = vpop.f32.mrb[0].mxu0
    %v3414 = vadd.f32 %v2244, %v3413
    %v3415 = vpop.f32.mrb[0].mxu0
    %v3416 = vadd.f32 %v2248, %v3415
    %v3417 = vpop.f32.mrb[0].mxu0
    %v3418 = vpop.f32.mrb[0].mxu0
    %3419 = vdwg.mxu0
    %3420 = vmatprep.subr.bf16.mxu0 %v2932
    %3421 = vmatpush1.bf16.msra.mxu0 %v2931
    %3422 = vmatprep.subr.bf16.mxu0 %v2938
    %3423 = vmatpush1.bf16.msra.mxu0 %v2937
    %3424 = vmatprep.subr.bf16.mxu0 %v2944
    %3425 = vmatpush1.bf16.msra.mxu0 %v2943
    %3426 = vmatprep.subr.bf16.mxu0 %v2950
    %3427 = vmatpush1.bf16.msra.mxu0 %v2949
    %3428 = vmatprep.subr.bf16.mxu0 %v2956
    %3429 = vmatpush1.bf16.msra.mxu0 %v2955
    %3430 = vmatprep.subr.bf16.mxu0 %v2962
    %3431 = vmatpush1.bf16.msra.mxu0 %v2961
    %3432 = vmatprep.subr.bf16.mxu0 %v2968
    %3433 = vmatpush1.bf16.msra.mxu0 %v2967
    %3434 = vmatprep.subr.bf16.mxu0 %v2974
    %3435 = vmatpush1.bf16.msra.mxu0 %v2973
    %3436 = vmatprep.subr.bf16.mxu0 %v2980
    %3437 = vmatpush1.bf16.msra.mxu0 %v2979
    %3438 = vmatprep.subr.bf16.mxu0 %v2986
    %3439 = vmatpush1.bf16.msra.mxu0 %v2985
    %3440 = vmatprep.subr.bf16.mxu0 %v2992
    %3441 = vmatpush1.bf16.msra.mxu0 %v2991
    %3442 = vmatprep.subr.bf16.mxu0 %v2998
    %3443 = vmatpush1.bf16.msra.mxu0 %v2997
    %3444 = vmatprep.subr.bf16.mxu0 %v3004
    %3445 = vmatpush1.bf16.msra.mxu0 %v3003
    %3446 = vmatprep.subr.bf16.mxu0 %v3010
    %3447 = vmatpush1.bf16.msra.mxu0 %v3009
    %3448 = vmatprep.subr.bf16.mxu0 %v3016
    %3449 = vmatpush1.bf16.msra.mxu0 %v3015
    %3450 = vmatprep.subr.bf16.mxu0 %v3022
    %3451 = vmatpush1.bf16.msra.mxu0 %v3021
    %3452 = vmatprep.mubr.bf16.mxu0 %v2030
    %3453 = vmatmul.mubr.bf16.gmra.mrb[0].mxu0 %v2029
    %v3454 = vpop.f32.mrb[0].mxu0
    %v3455 = vadd.f32 %v3414, %v3454
    %v3456 = vpop.f32.mrb[0].mxu0
    %v3457 = vadd.f32 %v3416, %v3456
    %v3458 = vpop.f32.mrb[0].mxu0
    %v3459 = vpop.f32.mrb[0].mxu0
    %3460 = vdwg.mxu0
    %v3461 = vmax.f32 %v3291, 0.0
    %v3462 = vmax.f32 %v3293, 0.0
    %v3463 = vmax.f32 %v3373, 0.0
    %v3464 = vmax.f32 %v3375, 0.0
    %v3465 = vmax.f32 %v3455, 0.0
    %v3466 = vmax.f32 %v3457, 0.0
    %v3467 = vpack.c.bf16 %v3461, %v3461
    %v3468 = vpack.c.bf16 %v3462, %v3462
    %v3469 = vpack.c.bf16 %v3463, %v3463
    %v3470 = vpack.c.bf16 %v3464, %v3464
    %v3471 = vpack.c.bf16 %v3465, %v3465
    %v3472 = vpack.c.bf16 %v3466, %v3466
    %v3473 = vld [vmem:[#allocation8] sm:$0xf]
    %v3474 = vld [vmem:[#allocation8 + $0x4] sm:$0xf]
    %v3475 = vld [vmem:[#allocation8 + $0x8] sm:$0xf]
    %v3476 = vld [vmem:[#allocation8 + $0xc] sm:$0xf]
    %v3477 = vld [vmem:[#allocation8 + $0x10] sm:$0xf]
    %v3478 = vld [vmem:[#allocation8 + $0x14] sm:$0xf]
    %v3479 = vld [vmem:[#allocation8 + $0x18] sm:$0xf]
    %v3480 = vld [vmem:[#allocation8 + $0x1c] sm:$0xf]
    %v3481 = vld [vmem:[#allocation8 + $0x20] sm:$0xf]
    %v3482 = vld [vmem:[#allocation8 + $0x24] sm:$0xf]
    %v3483 = vld [vmem:[#allocation8 + $0x28] sm:$0xf]
    %v3484 = vld [vmem:[#allocation8 + $0x2c] sm:$0xf]
    %v3485 = vld [vmem:[#allocation8 + $0x30] sm:$0xf]
    %v3486 = vld [vmem:[#allocation8 + $0x34] sm:$0xf]
    %v3487 = vld [vmem:[#allocation8 + $0x38] sm:$0xf]
    %v3488 = vld [vmem:[#allocation8 + $0x3c] sm:$0xf]
    %v3489 = vld [vmem:[#allocation8 + $0x40] sm:$0xf]
    %v3490 = vld [vmem:[#allocation8 + $0x44] sm:$0xf]
    %v3491 = vld [vmem:[#allocation8 + $0x48] sm:$0xf]
    %v3492 = vld [vmem:[#allocation8 + $0x4c] sm:$0xf]
    %v3493 = vld [vmem:[#allocation8 + $0x50] sm:$0xf]
    %v3494 = vld [vmem:[#allocation8 + $0x54] sm:$0xf]
    %v3495 = vld [vmem:[#allocation8 + $0x58] sm:$0xf]
    %v3496 = vld [vmem:[#allocation8 + $0x5c] sm:$0xf]
    %v3497 = vld [vmem:[#allocation8 + $0x60] sm:$0xf]
    %v3498 = vld [vmem:[#allocation8 + $0x64] sm:$0xf]
    %v3499 = vld [vmem:[#allocation8 + $0x68] sm:$0xf]
    %v3500 = vld [vmem:[#allocation8 + $0x6c] sm:$0xf]
    %v3501 = vld [vmem:[#allocation8 + $0x70] sm:$0xf]
    %v3502 = vld [vmem:[#allocation8 + $0x74] sm:$0xf]
    %v3503 = vld [vmem:[#allocation8 + $0x78] sm:$0xf]
    %v3504 = vld [vmem:[#allocation8 + $0x7c] sm:$0xf]
    %v3505 = vld [vmem:[#allocation8 + $0x80] sm:$0xf]
    %v3506 = vld [vmem:[#allocation8 + $0x84] sm:$0xf]
    %v3507 = vld [vmem:[#allocation8 + $0x88] sm:$0xf]
    %v3508 = vld [vmem:[#allocation8 + $0x8c] sm:$0xf]
    %v3509 = vld [vmem:[#allocation8 + $0x90] sm:$0xf]
    %v3510 = vld [vmem:[#allocation8 + $0x94] sm:$0xf]
    %v3511 = vld [vmem:[#allocation8 + $0x98] sm:$0xf]
    %v3512 = vld [vmem:[#allocation8 + $0x9c] sm:$0xf]
    %v3513 = vld [vmem:[#allocation8 + $0xa0] sm:$0xf]
    %v3514 = vld [vmem:[#allocation8 + $0xa4] sm:$0xf]
    %v3515 = vld [vmem:[#allocation8 + $0xa8] sm:$0xf]
    %v3516 = vld [vmem:[#allocation8 + $0xac] sm:$0xf]
    %v3517 = vld [vmem:[#allocation8 + $0xb0] sm:$0xf]
    %v3518 = vld [vmem:[#allocation8 + $0xb4] sm:$0xf]
    %v3519 = vld [vmem:[#allocation8 + $0xb8] sm:$0xf]
    %v3520 = vld [vmem:[#allocation8 + $0xbc] sm:$0xf]
    %v3521 = vld [vmem:[#allocation8 + $0xc0] sm:$0xf]
    %v3522 = vld [vmem:[#allocation8 + $0xc4] sm:$0xf]
    %v3523 = vld [vmem:[#allocation8 + $0xc8] sm:$0xf]
    %v3524 = vld [vmem:[#allocation8 + $0xcc] sm:$0xf]
    %v3525 = vld [vmem:[#allocation8 + $0xd0] sm:$0xf]
    %v3526 = vld [vmem:[#allocation8 + $0xd4] sm:$0xf]
    %v3527 = vld [vmem:[#allocation8 + $0xd8] sm:$0xf]
    %v3528 = vld [vmem:[#allocation8 + $0xdc] sm:$0xf]
    %v3529 = vld [vmem:[#allocation8 + $0xe0] sm:$0xf]
    %v3530 = vld [vmem:[#allocation8 + $0xe4] sm:$0xf]
    %v3531 = vld [vmem:[#allocation8 + $0xe8] sm:$0xf]
    %v3532 = vld [vmem:[#allocation8 + $0xec] sm:$0xf]
    %v3533 = vld [vmem:[#allocation8 + $0xf0] sm:$0xf]
    %v3534 = vld [vmem:[#allocation8 + $0xf4] sm:$0xf]
    %v3535 = vld [vmem:[#allocation8 + $0xf8] sm:$0xf]
    %v3536 = vld [vmem:[#allocation8 + $0xfc] sm:$0xf]
    %v3537 = vld [vmem:[#allocation8 + $0x100] sm:$0xf]
    %v3538 = vld [vmem:[#allocation8 + $0x104] sm:$0xf]
    %v3539 = vld [vmem:[#allocation8 + $0x108] sm:$0xf]
    %v3540 = vld [vmem:[#allocation8 + $0x10c] sm:$0xf]
    %v3541 = vld [vmem:[#allocation8 + $0x110] sm:$0xf]
    %v3542 = vld [vmem:[#allocation8 + $0x114] sm:$0xf]
    %v3543 = vld [vmem:[#allocation8 + $0x118] sm:$0xf]
    %v3544 = vld [vmem:[#allocation8 + $0x11c] sm:$0xf]
    %v3545 = vld [vmem:[#allocation8 + $0x120] sm:$0xf]
    %v3546 = vld [vmem:[#allocation8 + $0x124] sm:$0xf]
    %v3547 = vld [vmem:[#allocation8 + $0x128] sm:$0xf]
    %v3548 = vld [vmem:[#allocation8 + $0x12c] sm:$0xf]
    %v3549 = vld [vmem:[#allocation8 + $0x130] sm:$0xf]
    %v3550 = vld [vmem:[#allocation8 + $0x134] sm:$0xf]
    %v3551 = vld [vmem:[#allocation8 + $0x138] sm:$0xf]
    %v3552 = vld [vmem:[#allocation8 + $0x13c] sm:$0xf]
    %v3553 = vld [vmem:[#allocation8 + $0x140] sm:$0xf]
    %v3554 = vld [vmem:[#allocation8 + $0x144] sm:$0xf]
    %v3555 = vld [vmem:[#allocation8 + $0x148] sm:$0xf]
    %v3556 = vld [vmem:[#allocation8 + $0x14c] sm:$0xf]
    %v3557 = vld [vmem:[#allocation8 + $0x150] sm:$0xf]
    %v3558 = vld [vmem:[#allocation8 + $0x154] sm:$0xf]
    %v3559 = vld [vmem:[#allocation8 + $0x158] sm:$0xf]
    %v3560 = vld [vmem:[#allocation8 + $0x15c] sm:$0xf]
    %v3561 = vld [vmem:[#allocation8 + $0x160] sm:$0xf]
    %v3562 = vld [vmem:[#allocation8 + $0x164] sm:$0xf]
    %v3563 = vld [vmem:[#allocation8 + $0x168] sm:$0xf]
    %v3564 = vld [vmem:[#allocation8 + $0x16c] sm:$0xf]
    %v3565 = vld [vmem:[#allocation8 + $0x170] sm:$0xf]
    %v3566 = vld [vmem:[#allocation8 + $0x174] sm:$0xf]
    %v3567 = vld [vmem:[#allocation8 + $0x178] sm:$0xf]
    %v3568 = vld [vmem:[#allocation8 + $0x17c] sm:$0xf]
    %v3569 = vld [vmem:[%s6] sm:$0x1]
    %v3571 = vlaneseq
    %v3572 = vshrl.u32 %v3571, 7
    %v3573 = vsub.s32 0, %v3572
    %v3574 = vrot.slane %v3569, %v3573
    %v3672 = vunpack.c.l.b16 %v3473
    %v3673 = vunpack.c.l.b16 %v3474
    %v3674 = vunpack.c.l.b16 %v3475
    %v3675 = vunpack.c.l.b16 %v3476
    %v3676 = vunpack.c.l.b16 %v3477
    %v3677 = vunpack.c.l.b16 %v3478
    %v3678 = vunpack.c.l.b16 %v3479
    %v3679 = vunpack.c.l.b16 %v3480
    %v3680 = vunpack.c.l.b16 %v3481
    %v3681 = vunpack.c.l.b16 %v3482
    %v3682 = vunpack.c.l.b16 %v3483
    %v3683 = vunpack.c.l.b16 %v3484
    %v3684 = vunpack.c.l.b16 %v3485
    %v3685 = vunpack.c.l.b16 %v3486
    %v3686 = vunpack.c.l.b16 %v3487
    %v3687 = vunpack.c.l.b16 %v3488
    %v3688 = vunpack.c.l.b16 %v3489
    %v3689 = vunpack.c.l.b16 %v3490
    %v3690 = vunpack.c.l.b16 %v3491
    %v3691 = vunpack.c.l.b16 %v3492
    %v3692 = vunpack.c.l.b16 %v3493
    %v3693 = vunpack.c.l.b16 %v3494
    %v3694 = vunpack.c.l.b16 %v3495
    %v3695 = vunpack.c.l.b16 %v3496
    %v3696 = vunpack.c.l.b16 %v3497
    %v3697 = vunpack.c.l.b16 %v3498
    %v3698 = vunpack.c.l.b16 %v3499
    %v3699 = vunpack.c.l.b16 %v3500
    %v3700 = vunpack.c.l.b16 %v3501
    %v3701 = vunpack.c.l.b16 %v3502
    %v3702 = vunpack.c.l.b16 %v3503
    %v3703 = vunpack.c.l.b16 %v3504
    %v3704 = vunpack.c.l.b16 %v3505
    %v3705 = vunpack.c.l.b16 %v3506
    %v3706 = vunpack.c.l.b16 %v3507
    %v3707 = vunpack.c.l.b16 %v3508
    %v3708 = vunpack.c.l.b16 %v3509
    %v3709 = vunpack.c.l.b16 %v3510
    %v3710 = vunpack.c.l.b16 %v3511
    %v3711 = vunpack.c.l.b16 %v3512
    %v3712 = vunpack.c.l.b16 %v3513
    %v3713 = vunpack.c.l.b16 %v3514
    %v3714 = vunpack.c.l.b16 %v3515
    %v3715 = vunpack.c.l.b16 %v3516
    %v3716 = vunpack.c.l.b16 %v3517
    %v3717 = vunpack.c.l.b16 %v3518
    %v3718 = vunpack.c.l.b16 %v3519
    %v3719 = vunpack.c.l.b16 %v3520
    %v3720 = vunpack.c.l.b16 %v3521
    %v3721 = vunpack.c.l.b16 %v3522
    %v3722 = vunpack.c.l.b16 %v3523
    %v3723 = vunpack.c.l.b16 %v3524
    %v3724 = vunpack.c.l.b16 %v3525
    %v3725 = vunpack.c.l.b16 %v3526
    %v3726 = vunpack.c.l.b16 %v3527
    %v3727 = vunpack.c.l.b16 %v3528
    %v3728 = vunpack.c.l.b16 %v3529
    %v3729 = vunpack.c.l.b16 %v3530
    %v3730 = vunpack.c.l.b16 %v3531
    %v3731 = vunpack.c.l.b16 %v3532
    %v3732 = vunpack.c.l.b16 %v3533
    %v3733 = vunpack.c.l.b16 %v3534
    %v3734 = vunpack.c.l.b16 %v3535
    %v3735 = vunpack.c.l.b16 %v3536
    %v3736 = vunpack.c.l.b16 %v3537
    %v3737 = vunpack.c.l.b16 %v3538
    %v3738 = vunpack.c.l.b16 %v3539
    %v3739 = vunpack.c.l.b16 %v3540
    %v3740 = vunpack.c.l.b16 %v3541
    %v3741 = vunpack.c.l.b16 %v3542
    %v3742 = vunpack.c.l.b16 %v3543
    %v3743 = vunpack.c.l.b16 %v3544
    %v3744 = vunpack.c.l.b16 %v3545
    %v3745 = vunpack.c.l.b16 %v3546
    %v3746 = vunpack.c.l.b16 %v3547
    %v3747 = vunpack.c.l.b16 %v3548
    %v3748 = vunpack.c.l.b16 %v3549
    %v3749 = vunpack.c.l.b16 %v3550
    %v3750 = vunpack.c.l.b16 %v3551
    %v3751 = vunpack.c.l.b16 %v3552
    %v3752 = vunpack.c.l.b16 %v3553
    %v3753 = vunpack.c.l.b16 %v3554
    %v3754 = vunpack.c.l.b16 %v3555
    %v3755 = vunpack.c.l.b16 %v3556
    %v3756 = vunpack.c.l.b16 %v3557
    %v3757 = vunpack.c.l.b16 %v3558
    %v3758 = vunpack.c.l.b16 %v3559
    %v3759 = vunpack.c.l.b16 %v3560
    %v3760 = vunpack.c.l.b16 %v3561
    %v3761 = vunpack.c.l.b16 %v3562
    %v3762 = vunpack.c.l.b16 %v3563
    %v3763 = vunpack.c.l.b16 %v3564
    %v3764 = vunpack.c.l.b16 %v3565
    %v3765 = vunpack.c.l.b16 %v3566
    %v3766 = vunpack.c.l.b16 %v3567
    %v3767 = vunpack.c.l.b16 %v3568
    %v3768 = vpack.c.b16 %v3673, %v3672
    %v3769 = vpack.c.b16 %v3675, %v3674
    %v3770 = vpack.c.b16 %v3677, %v3676
    %v3771 = vpack.c.b16 %v3679, %v3678
    %v3772 = vpack.c.b16 %v3681, %v3680
    %v3773 = vpack.c.b16 %v3683, %v3682
    %v3774 = vpack.c.b16 %v3685, %v3684
    %v3775 = vpack.c.b16 %v3687, %v3686
    %v3776 = vpack.c.b16 %v3689, %v3688
    %v3777 = vpack.c.b16 %v3691, %v3690
    %v3778 = vpack.c.b16 %v3693, %v3692
    %v3779 = vpack.c.b16 %v3695, %v3694
    %v3780 = vpack.c.b16 %v3697, %v3696
    %v3781 = vpack.c.b16 %v3699, %v3698
    %v3782 = vpack.c.b16 %v3701, %v3700
    %v3783 = vpack.c.b16 %v3703, %v3702
    %v3784 = vpack.c.b16 %v3705, %v3704
    %v3785 = vpack.c.b16 %v3707, %v3706
    %v3786 = vpack.c.b16 %v3709, %v3708
    %v3787 = vpack.c.b16 %v3711, %v3710
    %v3788 = vpack.c.b16 %v3713, %v3712
    %v3789 = vpack.c.b16 %v3715, %v3714
    %v3790 = vpack.c.b16 %v3717, %v3716
    %v3791 = vpack.c.b16 %v3719, %v3718
    %v3792 = vpack.c.b16 %v3721, %v3720
    %v3793 = vpack.c.b16 %v3723, %v3722
    %v3794 = vpack.c.b16 %v3725, %v3724
    %v3795 = vpack.c.b16 %v3727, %v3726
    %v3796 = vpack.c.b16 %v3729, %v3728
    %v3797 = vpack.c.b16 %v3731, %v3730
    %v3798 = vpack.c.b16 %v3733, %v3732
    %v3799 = vpack.c.b16 %v3735, %v3734
    %v3800 = vpack.c.b16 %v3737, %v3736
    %v3801 = vpack.c.b16 %v3739, %v3738
    %v3802 = vpack.c.b16 %v3741, %v3740
    %v3803 = vpack.c.b16 %v3743, %v3742
    %v3804 = vpack.c.b16 %v3745, %v3744
    %v3805 = vpack.c.b16 %v3747, %v3746
    %v3806 = vpack.c.b16 %v3749, %v3748
    %v3807 = vpack.c.b16 %v3751, %v3750
    %v3808 = vpack.c.b16 %v3753, %v3752
    %v3809 = vpack.c.b16 %v3755, %v3754
    %v3810 = vpack.c.b16 %v3757, %v3756
    %v3811 = vpack.c.b16 %v3759, %v3758
    %v3812 = vpack.c.b16 %v3761, %v3760
    %v3813 = vpack.c.b16 %v3763, %v3762
    %v3814 = vpack.c.b16 %v3765, %v3764
    %v3815 = vpack.c.b16 %v3767, %v3766
    %3864 = vmatprep.subr.bf16.mxu0 0
    %3865 = vmatpush1.bf16.msra.mxu0 %v3768
    %3866 = vmatprep.subr.bf16.mxu0 0
    %3867 = vmatpush1.bf16.msra.mxu0 %v3769
    %3868 = vmatprep.subr.bf16.mxu0 0
    %3869 = vmatpush1.bf16.msra.mxu0 %v3770
    %3870 = vmatprep.subr.bf16.mxu0 0
    %3871 = vmatpush1.bf16.msra.mxu0 %v3771
    %3872 = vmatprep.subr.bf16.mxu0 0
    %3873 = vmatpush1.bf16.msra.mxu0 %v3772
    %3874 = vmatprep.subr.bf16.mxu0 0
    %3875 = vmatpush1.bf16.msra.mxu0 %v3773
    %3876 = vmatprep.subr.bf16.mxu0 0
    %3877 = vmatpush1.bf16.msra.mxu0 %v3774
    %3878 = vmatprep.subr.bf16.mxu0 0
    %3879 = vmatpush1.bf16.msra.mxu0 %v3775
    %3880 = vmatprep.subr.bf16.mxu0 0
    %3881 = vmatpush1.bf16.msra.mxu0 %v3776
    %3882 = vmatprep.subr.bf16.mxu0 0
    %3883 = vmatpush1.bf16.msra.mxu0 %v3777
    %3884 = vmatprep.subr.bf16.mxu0 0
    %3885 = vmatpush1.bf16.msra.mxu0 %v3778
    %3886 = vmatprep.subr.bf16.mxu0 0
    %3887 = vmatpush1.bf16.msra.mxu0 %v3779
    %3888 = vmatprep.subr.bf16.mxu0 0
    %3889 = vmatpush1.bf16.msra.mxu0 %v3780
    %3890 = vmatprep.subr.bf16.mxu0 0
    %3891 = vmatpush1.bf16.msra.mxu0 %v3781
    %3892 = vmatprep.subr.bf16.mxu0 0
    %3893 = vmatpush1.bf16.msra.mxu0 %v3782
    %3894 = vmatprep.subr.bf16.mxu0 0
    %3895 = vmatpush1.bf16.msra.mxu0 %v3783
    %3896 = vmatprep.mubr.bf16.mxu0 %v3468
    %3897 = vmatmul.mubr.bf16.gmra.mrb[0].mxu0 %v3467
    %v3898 = vpop.f32.mrb[0].mxu0
    %v3899 = vadd.f32 %v3574, %v3898
    %v3900 = vpop.f32.mrb[0].mxu0
    %v3901 = vpop.f32.mrb[0].mxu0
    %v3902 = vpop.f32.mrb[0].mxu0
    %3903 = vdwg.mxu0
    %3904 = vmatprep.subr.bf16.mxu0 0
    %3905 = vmatpush1.bf16.msra.mxu0 %v3784
    %3906 = vmatprep.subr.bf16.mxu0 0
    %3907 = vmatpush1.bf16.msra.mxu0 %v3785
    %3908 = vmatprep.subr.bf16.mxu0 0
    %3909 = vmatpush1.bf16.msra.mxu0 %v3786
    %3910 = vmatprep.subr.bf16.mxu0 0
    %3911 = vmatpush1.bf16.msra.mxu0 %v3787
    %3912 = vmatprep.subr.bf16.mxu0 0
    %3913 = vmatpush1.bf16.msra.mxu0 %v3788
    %3914 = vmatprep.subr.bf16.mxu0 0
    %3915 = vmatpush1.bf16.msra.mxu0 %v3789
    %3916 = vmatprep.subr.bf16.mxu0 0
    %3917 = vmatpush1.bf16.msra.mxu0 %v3790
    %3918 = vmatprep.subr.bf16.mxu0 0
    %3919 = vmatpush1.bf16.msra.mxu0 %v3791
    %3920 = vmatprep.subr.bf16.mxu0 0
    %3921 = vmatpush1.bf16.msra.mxu0 %v3792
    %3922 = vmatprep.subr.bf16.mxu0 0
    %3923 = vmatpush1.bf16.msra.mxu0 %v3793
    %3924 = vmatprep.subr.bf16.mxu0 0
    %3925 = vmatpush1.bf16.msra.mxu0 %v3794
    %3926 = vmatprep.subr.bf16.mxu0 0
    %3927 = vmatpush1.bf16.msra.mxu0 %v3795
    %3928 = vmatprep.subr.bf16.mxu0 0
    %3929 = vmatpush1.bf16.msra.mxu0 %v3796
    %3930 = vmatprep.subr.bf16.mxu0 0
    %3931 = vmatpush1.bf16.msra.mxu0 %v3797
    %3932 = vmatprep.subr.bf16.mxu0 0
    %3933 = vmatpush1.bf16.msra.mxu0 %v3798
    %3934 = vmatprep.subr.bf16.mxu0 0
    %3935 = vmatpush1.bf16.msra.mxu0 %v3799
    %3936 = vmatprep.mubr.bf16.mxu0 %v3470
    %3937 = vmatmul.mubr.bf16.gmra.mrb[0].mxu0 %v3469
    %v3938 = vpop.f32.mrb[0].mxu0
    %v3939 = vadd.f32 %v3899, %v3938
    %v3940 = vpop.f32.mrb[0].mxu0
    %v3941 = vpop.f32.mrb[0].mxu0
    %v3942 = vpop.f32.mrb[0].mxu0
    %3943 = vdwg.mxu0
    %3944 = vmatprep.subr.bf16.mxu0 0
    %3945 = vmatpush1.bf16.msra.mxu0 %v3800
    %3946 = vmatprep.subr.bf16.mxu0 0
    %3947 = vmatpush1.bf16.msra.mxu0 %v3801
    %3948 = vmatprep.subr.bf16.mxu0 0
    %3949 = vmatpush1.bf16.msra.mxu0 %v3802
    %3950 = vmatprep.subr.bf16.mxu0 0
    %3951 = vmatpush1.bf16.msra.mxu0 %v3803
    %3952 = vmatprep.subr.bf16.mxu0 0
    %3953 = vmatpush1.bf16.msra.mxu0 %v3804
    %3954 = vmatprep.subr.bf16.mxu0 0
    %3955 = vmatpush1.bf16.msra.mxu0 %v3805
    %3956 = vmatprep.subr.bf16.mxu0 0
    %3957 = vmatpush1.bf16.msra.mxu0 %v3806
    %3958 = vmatprep.subr.bf16.mxu0 0
    %3959 = vmatpush1.bf16.msra.mxu0 %v3807
    %3960 = vmatprep.subr.bf16.mxu0 0
    %3961 = vmatpush1.bf16.msra.mxu0 %v3808
    %3962 = vmatprep.subr.bf16.mxu0 0
    %3963 = vmatpush1.bf16.msra.mxu0 %v3809
    %3964 = vmatprep.subr.bf16.mxu0 0
    %3965 = vmatpush1.bf16.msra.mxu0 %v3810
    %3966 = vmatprep.subr.bf16.mxu0 0
    %3967 = vmatpush1.bf16.msra.mxu0 %v3811
    %3968 = vmatprep.subr.bf16.mxu0 0
    %3969 = vmatpush1.bf16.msra.mxu0 %v3812
    %3970 = vmatprep.subr.bf16.mxu0 0
    %3971 = vmatpush1.bf16.msra.mxu0 %v3813
    %3972 = vmatprep.subr.bf16.mxu0 0
    %3973 = vmatpush1.bf16.msra.mxu0 %v3814
    %3974 = vmatprep.subr.bf16.mxu0 0
    %3975 = vmatpush1.bf16.msra.mxu0 %v3815
    %3976 = vmatprep.mubr.bf16.mxu0 %v3472
    %3977 = vmatmul.mubr.bf16.gmra.mrb[0].mxu0 %v3471
    %v3978 = vpop.f32.mrb[0].mxu0
    %v3979 = vadd.f32 %v3939, %v3978
    %v3980 = vpop.f32.mrb[0].mxu0
    %v3981 = vpop.f32.mrb[0].mxu0
    %v3982 = vpop.f32.mrb[0].mxu0
    %3983 = vdwg.mxu0
    %3984 = vst [vmem:[#allocation10] sm:$0x3] %v3979
    // Predicated region
    $region46: #{tpu_custom_call.1} parent=1 // pred_check
      _
    $region47: #{tpu_custom_call.1} parent=1 // pred_check_branch
      %3986 = sbr.rel (0) target = $region49
    $region48: #{tpu_custom_call.1} parent=1 // pred_region
      %s3988 = ssub.s32 32, 32
      %3989 = vsyncadd [#allocation4], %s3988
      %s3991 = sshll.u32 [#allocation10], 4
      %s3992 = int_to_ptr.vmem [resolvable:$true] %s3991
      %3994 = dma.vmem_to_hbm [thread:$0]  %s3992, 32, %s7, [#allocation4]
    $region49: #{tpu_custom_call.1} parent=1 // pred_fallthru
      _
    // Predicated region
    $region50: #{tpu_custom_call.1} parent=1 // pred_check
      _
    $region51: #{tpu_custom_call.1} parent=1 // pred_check_branch
      %3996 = sbr.rel (0) target = $region53
    $region52: #{tpu_custom_call.1} parent=1 // pred_region
      %3997 = dma.done [#allocation4], 32
    $region53: #{tpu_custom_call.1} parent=1 // pred_fallthru
      _
    %3998 = vsyncpa [#allocation3], 1
    %3999 = vsyncpa [#allocation6], 1
    %4000 = vsyncpa [#allocation9], 1
    %4001 = vsyncpa [#allocation4], 1

</llo_original>
